<compile_context>
chip_gen: v7x
topology: tpu7x:2x2x1
jax: 0.10.0
libtpu: 0.0.40
codegen_flags: <defaults>
</compile_context>

<pallas_src>
import jax
import jax.numpy as jnp
from jax.experimental import pallas as pl
from jax.experimental.pallas import tpu as pltpu


# ----------------------------------------------------------------------------
# Helpers
# ----------------------------------------------------------------------------
def _round_up(x: int, m: int) -> int:
    return ((x + m - 1) // m) * m


def _pad_gate_dim(a, h: int, hp: int):
    """Pad the trailing gate-concatenated dim (4*h, PyTorch order i,f,g,o) to (4*hp)."""
    lead = a.shape[:-1]
    a4 = a.reshape(lead + (4, h))
    pad = [(0, 0)] * len(lead) + [(0, 0), (0, hp - h)]
    return jnp.pad(a4, pad).reshape(lead + (4 * hp,))


# ----------------------------------------------------------------------------
# Fused kernel: all LSTM layers + MLP head in one pallas_call (no grid).
# ----------------------------------------------------------------------------
def _make_fused_kernel(num_lstm_layers: int, num_mlp_layers: int,
                       T: int, Bp: int, Hp: int):
    def kernel(*refs):
        idx = 0
        x_ref = refs[idx]; idx += 1
        lstm_refs = refs[idx: idx + 3 * num_lstm_layers]; idx += 3 * num_lstm_layers
        mlp_refs = refs[idx: idx + 2 * num_mlp_layers]; idx += 2 * num_mlp_layers
        out_ref = refs[idx]; idx += 1
        gx_scr, act_scr, h_scr, c_scr = refs[idx: idx + 4]

        for l in range(num_lstm_layers):
            wih_ref = lstm_refs[3 * l]      # (Din_p, 4*Hp)  bf16
            whh_ref = lstm_refs[3 * l + 1]  # (Hp,    4*Hp)  bf16
            b_ref = lstm_refs[3 * l + 2]    # (1,     4*Hp)  f32  (b_ih + b_hh)

            # --- Input projection for every timestep in ONE matmul (bias folded once). ---
            xin = x_ref[...] if l == 0 else act_scr[...]          # (T, Bp, Din_p)
            d_in = xin.shape[-1]
            x2d = xin.reshape(T * Bp, d_in).astype(jnp.bfloat16)
            gx = jnp.dot(x2d, wih_ref[...], preferred_element_type=jnp.float32)
            gx = gx + b_ref[...]
            gx_scr[...] = gx.reshape(T, Bp, 4 * Hp)

            h_scr[...] = jnp.zeros_like(h_scr)
            c_scr[...] = jnp.zeros_like(c_scr)

            write_act = l < num_lstm_layers - 1   # last layer's per-step h is not needed

            # --- Serial recurrence: only h @ W_hh + elementwise gates per step. ---
            def step(t, carry, whh_ref=whh_ref, write_act=write_act):
                gates = gx_scr[t] + jnp.dot(
                    h_scr[...].astype(jnp.bfloat16), whh_ref[...],
                    preferred_element_type=jnp.float32)            # (Bp, 4*Hp) f32
                # Gate slices are 128-lane aligned (Hp is a multiple of 128).
                i_g = jax.nn.sigmoid(gates[:, 0 * Hp:1 * Hp])
                f_g = jax.nn.sigmoid(gates[:, 1 * Hp:2 * Hp])
                g_g = jnp.tanh(gates[:, 2 * Hp:3 * Hp])
                o_g = jax.nn.sigmoid(gates[:, 3 * Hp:4 * Hp])
                c = f_g * c_scr[...] + i_g * g_g
                h = o_g * jnp.tanh(c)
                c_scr[...] = c
                h_scr[...] = h
                if write_act:
                    act_scr[t] = h
                return carry

            jax.lax.fori_loop(0, T, step, 0, unroll=True)

        # --- MLP head on the final hidden state of the top layer (out[:, -1, :]). ---
        h = h_scr[...]                                             # (Bp, Hp) f32
        for m in range(num_mlp_layers):
            w_ref = mlp_refs[2 * m]
            b_ref = mlp_refs[2 * m + 1]
            h = jnp.dot(h.astype(jnp.bfloat16), w_ref[...],
                        preferred_element_type=jnp.float32) + b_ref[...]
            if m < num_mlp_layers - 1:
                h = jnp.maximum(h, 0.0)   # ReLU; dropout is a no-op in eval mode
        out_ref[...] = h.astype(out_ref.dtype)

    return kernel


def _fused_forward_call(x_pad, lstm_w, mlp_w, hp: int, op: int):
    """x_pad: (T, Bp, Fp) time-major padded input. Returns padded output (Bp, Op)."""
    T, bp, _ = x_pad.shape
    kernel = _make_fused_kernel(len(lstm_w), len(mlp_w), T, bp, hp)

    args = [x_pad]
    for (wih, whh, b) in lstm_w:
        args += [wih, whh, b]
    for (w, b) in mlp_w:
        args += [w, b]

    return pl.pallas_call(
        kernel,
        out_shape=jax.ShapeDtypeStruct((bp, op), jnp.float32),
        scratch_shapes=[
            pltpu.VMEM((T, bp, 4 * hp), jnp.float32),  # precomputed x-projection gates
            pltpu.VMEM((T, bp, hp), jnp.float32),      # inter-layer activations
            pltpu.VMEM((bp, hp), jnp.float32),         # h state
            pltpu.VMEM((bp, hp), jnp.float32),         # c state
        ],
        compiler_params=pltpu.CompilerParams(vmem_limit_bytes=32 * 1024 * 1024),
    )(*args)


# ----------------------------------------------------------------------------
# Parameter init (PyTorch-style uniform ranges) and one-time preparation.
# ----------------------------------------------------------------------------
def init_params(key, num_features, hidden_size, output_size,
                num_lstm_layers, num_hidden_layers):
    params = {"lstm": [], "mlp": []}
    k_lstm = 1.0 / jnp.sqrt(hidden_size)

    for layer in range(num_lstm_layers):
        in_sz = num_features if layer == 0 else hidden_size
        key, k1, k2, k3, k4 = jax.random.split(key, 5)
        w_ih = jax.random.uniform(k1, (4 * hidden_size, in_sz), jnp.float32, -k_lstm, k_lstm)
        w_hh = jax.random.uniform(k2, (4 * hidden_size, hidden_size), jnp.float32, -k_lstm, k_lstm)
        b_ih = jax.random.uniform(k3, (4 * hidden_size,), jnp.float32, -k_lstm, k_lstm)
        b_hh = jax.random.uniform(k4, (4 * hidden_size,), jnp.float32, -k_lstm, k_lstm)
        params["lstm"].append((w_ih, w_hh, b_ih, b_hh))

    # MLP: num_hidden_layers x (hidden -> hidden) + (hidden -> output)
    dims = [(hidden_size, hidden_size)] * num_hidden_layers + [(hidden_size, output_size)]
    for fan_in, fan_out in dims:
        key, k1, k2 = jax.random.split(key, 3)
        bound = 1.0 / jnp.sqrt(fan_in)
        w = jax.random.uniform(k1, (fan_out, fan_in), jnp.float32, -bound, bound)
        b = jax.random.uniform(k2, (fan_out,), jnp.float32, -bound, bound)
        params["mlp"].append((w, b))
    return params


def prepare_params(params, num_features, hidden_size, output_size):
    """Transpose, pad to (8,128) tiles, fold biases, cast matmul weights to bf16 — once."""
    h = hidden_size
    fp = _round_up(num_features, 128)
    hp = _round_up(hidden_size, 128)
    op = _round_up(output_size, 128)

    lstm_prepared = []
    for layer, (w_ih, w_hh, b_ih, b_hh) in enumerate(params["lstm"]):
        in_sz = w_ih.shape[1]
        in_p = fp if layer == 0 else hp
        wih_t = _pad_gate_dim(jnp.transpose(w_ih), h, hp)                     # (in_sz, 4hp)
        wih_t = jnp.pad(wih_t, ((0, in_p - in_sz), (0, 0))).astype(jnp.bfloat16)
        whh_t = _pad_gate_dim(jnp.transpose(w_hh), h, hp)                     # (h, 4hp)
        whh_t = jnp.pad(whh_t, ((0, hp - h), (0, 0))).astype(jnp.bfloat16)
        b = _pad_gate_dim(b_ih + b_hh, h, hp).reshape(1, 4 * hp).astype(jnp.float32)
        lstm_prepared.append((wih_t, whh_t, b))

    mlp_prepared = []
    n = len(params["mlp"])
    for i, (w, b) in enumerate(params["mlp"]):
        fan_out, fan_in = w.shape
        out_p = op if i == n - 1 else hp
        wt = jnp.pad(jnp.transpose(w), ((0, hp - fan_in), (0, out_p - fan_out)))
        bt = jnp.pad(b, (0, out_p - fan_out)).reshape(1, out_p)
        mlp_prepared.append((wt.astype(jnp.bfloat16), bt.astype(jnp.float32)))

    return tuple(lstm_prepared), tuple(mlp_prepared), (fp, hp, op)


# ----------------------------------------------------------------------------
# Full model (mirrors LSTM.forward: squeeze(1) -> LSTM -> out[:, -1, :] -> MLP).
# ----------------------------------------------------------------------------
def build_model(key, num_features, output_size=1, num_lstm_layers=3,
                num_hidden_layers=2, hidden_size=100, dropout=0.1):
    del dropout  # eval-mode no-op
    params = init_params(key, num_features, hidden_size, output_size,
                         num_lstm_layers, num_hidden_layers)
    lstm_w, mlp_w, (fp, hp, op) = prepare_params(params, num_features, hidden_size, output_size)

    @jax.jit
    def forward(x):
        # x: (B, 1, T, F) -> squeeze(dim=1) -> (B, T, F), batch_first LSTM semantics.
        x = jnp.squeeze(x, axis=1)
        b, _, f = x.shape
        bp = _round_up(max(b, 1), 8)
        xt = jnp.transpose(x, (1, 0, 2)).astype(jnp.float32)       # time-major (T, B, F)
        xt = jnp.pad(xt, ((0, 0), (0, bp - b), (0, fp - f)))       # (T, Bp, Fp)
        out_p = _fused_forward_call(xt, lstm_w, mlp_w, hp, op)     # (Bp, Op)
        return out_p[:b, :output_size]

    return forward, params


if __name__ == "__main__":
    B, T = 2, 8
    num_features = 4
    hidden_size = 32
    output_size = 1
    num_lstm_layers = 3
    num_hidden_layers = 2

    key = jax.random.PRNGKey(0)
    key, pkey, xkey = jax.random.split(key, 3)

    forward, _ = build_model(pkey, num_features, output_size=output_size,
                             num_lstm_layers=num_lstm_layers,
                             num_hidden_layers=num_hidden_layers,
                             hidden_size=hidden_size)

    x = jax.random.normal(xkey, (B, 1, T, num_features), dtype=jnp.float32)

    out = forward(x)
    out = jax.block_until_ready(out)
    assert out.shape == (B, output_size), out.shape
    assert bool(jnp.all(jnp.isfinite(out)))
    print("KERNEL_OK")
</pallas_src>

<mosaic_0001>
module attributes {stable_mosaic.version = 11 : i64} {
  func.func @kernel(%arg0: memref<8x8x128xf32, #tpu.memory_space<vmem>>, %arg1: memref<128x512xbf16, #tpu.memory_space<vmem>>, %arg2: memref<128x512xbf16, #tpu.memory_space<vmem>>, %arg3: memref<1x512xf32, #tpu.memory_space<vmem>>, %arg4: memref<128x512xbf16, #tpu.memory_space<vmem>>, %arg5: memref<128x512xbf16, #tpu.memory_space<vmem>>, %arg6: memref<1x512xf32, #tpu.memory_space<vmem>>, %arg7: memref<128x512xbf16, #tpu.memory_space<vmem>>, %arg8: memref<128x512xbf16, #tpu.memory_space<vmem>>, %arg9: memref<1x512xf32, #tpu.memory_space<vmem>>, %arg10: memref<128x128xbf16, #tpu.memory_space<vmem>>, %arg11: memref<1x128xf32, #tpu.memory_space<vmem>>, %arg12: memref<128x128xbf16, #tpu.memory_space<vmem>>, %arg13: memref<1x128xf32, #tpu.memory_space<vmem>>, %arg14: memref<128x128xbf16, #tpu.memory_space<vmem>>, %arg15: memref<1x128xf32, #tpu.memory_space<vmem>>, %arg16: memref<8x128xf32, #tpu.memory_space<vmem>>, %arg17: memref<8x8x512xf32, #tpu.memory_space<vmem>>, %arg18: memref<8x8x128xf32, #tpu.memory_space<vmem>>, %arg19: memref<8x128xf32, #tpu.memory_space<vmem>>, %arg20: memref<8x128xf32, #tpu.memory_space<vmem>>) attributes {dimension_semantics = [], scalar_prefetch = 0 : i64, scratch_operands = 4 : i64, tpu.core_type = #tpu.core_type<tc>} {
    %c0 = arith.constant 0 : index
    %c0_0 = arith.constant 0 : index
    %c0_1 = arith.constant 0 : index
    %0 = vector.load %arg0[%c0, %c0_0, %c0_1] : memref<8x8x128xf32, #tpu.memory_space<vmem>>, vector<8x8x128xf32>
    %1 = vector.shape_cast %0 : vector<8x8x128xf32> to vector<64x128xf32>
    %2 = arith.truncf %1 : vector<64x128xf32> to vector<64x128xbf16>
    %c0_2 = arith.constant 0 : index
    %c0_3 = arith.constant 0 : index
    %3 = vector.load %arg1[%c0_2, %c0_3] : memref<128x512xbf16, #tpu.memory_space<vmem>>, vector<128x512xbf16>
    %cst = arith.constant dense<0.000000e+00> : vector<64x512xf32>
    %4 = tpu.matmul %2, %3, %cst {dimension_numbers = #tpu.dot_dimension_numbers<[1], [0], [0], [1], [0, 0, 1, 1], [], []>} : vector<64x128xbf16>, vector<128x512xbf16>, vector<64x512xf32> -> vector<64x512xf32>
    %c0_4 = arith.constant 0 : index
    %c0_5 = arith.constant 0 : index
    %5 = vector.load %arg3[%c0_4, %c0_5] : memref<1x512xf32, #tpu.memory_space<vmem>>, vector<1x512xf32>
    %6 = vector.broadcast %5 : vector<1x512xf32> to vector<64x512xf32>
    %7 = arith.addf %4, %6 : vector<64x512xf32>
    %8 = vector.shape_cast %7 : vector<64x512xf32> to vector<8x8x512xf32>
    %c0_6 = arith.constant 0 : index
    %c0_7 = arith.constant 0 : index
    %c0_8 = arith.constant 0 : index
    %9 = vector.load %arg17[%c0_6, %c0_7, %c0_8] : memref<8x8x512xf32, #tpu.memory_space<vmem>>, vector<8x8x512xf32>
    tpu.vector_store %arg17[%c0_6, %c0_7, %c0_8], %8 {strides = array<i32>} : memref<8x8x512xf32, #tpu.memory_space<vmem>>, vector<8x8x512xf32>,
    %cst_9 = arith.constant 0.000000e+00 : f32
    %10 = vector.broadcast %cst_9 : f32 to vector<8x128xf32>
    %c0_10 = arith.constant 0 : index
    %c0_11 = arith.constant 0 : index
    %11 = vector.load %arg19[%c0_10, %c0_11] : memref<8x128xf32, #tpu.memory_space<vmem>>, vector<8x128xf32>
    tpu.vector_store %arg19[%c0_10, %c0_11], %10 {strides = array<i32>} : memref<8x128xf32, #tpu.memory_space<vmem>>, vector<8x128xf32>,
    %cst_12 = arith.constant 0.000000e+00 : f32
    %12 = vector.broadcast %cst_12 : f32 to vector<8x128xf32>
    %c0_13 = arith.constant 0 : index
    %c0_14 = arith.constant 0 : index
    %13 = vector.load %arg20[%c0_13, %c0_14] : memref<8x128xf32, #tpu.memory_space<vmem>>, vector<8x128xf32>
    tpu.vector_store %arg20[%c0_13, %c0_14], %12 {strides = array<i32>} : memref<8x128xf32, #tpu.memory_space<vmem>>, vector<8x128xf32>,
    %c0_i32 = arith.constant 0 : i32
    %14 = arith.index_cast %c0_i32 : i32 to index
    %c0_15 = arith.constant 0 : index
    %c0_16 = arith.constant 0 : index
    %15 = vector.load %arg17[%14, %c0_15, %c0_16] : memref<8x8x512xf32, #tpu.memory_space<vmem>>, vector<1x8x512xf32>
    %16 = vector.shape_cast %15 : vector<1x8x512xf32> to vector<8x512xf32>
    %c0_17 = arith.constant 0 : index
    %c0_18 = arith.constant 0 : index
    %17 = vector.load %arg19[%c0_17, %c0_18] : memref<8x128xf32, #tpu.memory_space<vmem>>, vector<8x128xf32>
    %18 = arith.truncf %17 : vector<8x128xf32> to vector<8x128xbf16>
    %c0_19 = arith.constant 0 : index
    %c0_20 = arith.constant 0 : index
    %19 = vector.load %arg2[%c0_19, %c0_20] : memref<128x512xbf16, #tpu.memory_space<vmem>>, vector<128x512xbf16>
    %cst_21 = arith.constant dense<0.000000e+00> : vector<8x512xf32>
    %20 = tpu.matmul %18, %19, %cst_21 {dimension_numbers = #tpu.dot_dimension_numbers<[1], [0], [0], [1], [0, 0, 1, 1], [], []>} : vector<8x128xbf16>, vector<128x512xbf16>, vector<8x512xf32> -> vector<8x512xf32>
    %21 = arith.addf %16, %20 : vector<8x512xf32>
    %22 = vector.extract_strided_slice %21 {offsets = [0, 0], sizes = [8, 128], strides = [1, 1]} : vector<8x512xf32> to vector<8x128xf32>
    %23 = arith.negf %22 : vector<8x128xf32>
    %24 = math.exp %23 : vector<8x128xf32>
    %cst_22 = arith.constant 1.000000e+00 : f32
    %25 = vector.broadcast %cst_22 : f32 to vector<8x128xf32>
    %26 = arith.addf %25, %24 : vector<8x128xf32>
    %27 = arith.divf %25, %26 : vector<8x128xf32>
    %28 = vector.extract_strided_slice %21 {offsets = [0, 128], sizes = [8, 128], strides = [1, 1]} : vector<8x512xf32> to vector<8x128xf32>
    %29 = arith.negf %28 : vector<8x128xf32>
    %30 = math.exp %29 : vector<8x128xf32>
    %cst_23 = arith.constant 1.000000e+00 : f32
    %31 = vector.broadcast %cst_23 : f32 to vector<8x128xf32>
    %32 = arith.addf %31, %30 : vector<8x128xf32>
    %33 = arith.divf %31, %32 : vector<8x128xf32>
    %34 = vector.extract_strided_slice %21 {offsets = [0, 256], sizes = [8, 128], strides = [1, 1]} : vector<8x512xf32> to vector<8x128xf32>
    %35 = math.tanh %34 : vector<8x128xf32>
    %36 = vector.extract_strided_slice %21 {offsets = [0, 384], sizes = [8, 128], strides = [1, 1]} : vector<8x512xf32> to vector<8x128xf32>
    %37 = arith.negf %36 : vector<8x128xf32>
    %38 = math.exp %37 : vector<8x128xf32>
    %cst_24 = arith.constant 1.000000e+00 : f32
    %39 = vector.broadcast %cst_24 : f32 to vector<8x128xf32>
    %40 = arith.addf %39, %38 : vector<8x128xf32>
    %41 = arith.divf %39, %40 : vector<8x128xf32>
    %c0_25 = arith.constant 0 : index
    %c0_26 = arith.constant 0 : index
    %42 = vector.load %arg20[%c0_25, %c0_26] : memref<8x128xf32, #tpu.memory_space<vmem>>, vector<8x128xf32>
    %43 = arith.mulf %33, %42 : vector<8x128xf32>
    %44 = arith.mulf %27, %35 : vector<8x128xf32>
    %45 = arith.addf %43, %44 : vector<8x128xf32>
    %46 = math.tanh %45 : vector<8x128xf32>
    %47 = arith.mulf %41, %46 : vector<8x128xf32>
    %c0_27 = arith.constant 0 : index
    %c0_28 = arith.constant 0 : index
    %48 = vector.load %arg20[%c0_27, %c0_28] : memref<8x128xf32, #tpu.memory_space<vmem>>, vector<8x128xf32>
    tpu.vector_store %arg20[%c0_27, %c0_28], %45 {strides = array<i32>} : memref<8x128xf32, #tpu.memory_space<vmem>>, vector<8x128xf32>,
    %c0_29 = arith.constant 0 : index
    %c0_30 = arith.constant 0 : index
    %49 = vector.load %arg19[%c0_29, %c0_30] : memref<8x128xf32, #tpu.memory_space<vmem>>, vector<8x128xf32>
    tpu.vector_store %arg19[%c0_29, %c0_30], %47 {strides = array<i32>} : memref<8x128xf32, #tpu.memory_space<vmem>>, vector<8x128xf32>,
    %50 = arith.index_cast %c0_i32 : i32 to index
    %c0_31 = arith.constant 0 : index
    %c0_32 = arith.constant 0 : index
    %51 = vector.load %arg18[%50, %c0_31, %c0_32] : memref<8x8x128xf32, #tpu.memory_space<vmem>>, vector<1x8x128xf32>
    %52 = vector.shape_cast %51 : vector<1x8x128xf32> to vector<8x128xf32>
    %53 = vector.shape_cast %47 : vector<8x128xf32> to vector<1x8x128xf32>
    tpu.vector_store %arg18[%50, %c0_31, %c0_32], %53 {strides = array<i32>} : memref<8x8x128xf32, #tpu.memory_space<vmem>>, vector<1x8x128xf32>,
    %c1_i32 = arith.constant 1 : i32
    %54 = arith.index_cast %c1_i32 : i32 to index
    %c0_33 = arith.constant 0 : index
    %c0_34 = arith.constant 0 : index
    %55 = vector.load %arg17[%54, %c0_33, %c0_34] : memref<8x8x512xf32, #tpu.memory_space<vmem>>, vector<1x8x512xf32>
    %56 = vector.shape_cast %55 : vector<1x8x512xf32> to vector<8x512xf32>
    %c0_35 = arith.constant 0 : index
    %c0_36 = arith.constant 0 : index
    %57 = vector.load %arg19[%c0_35, %c0_36] : memref<8x128xf32, #tpu.memory_space<vmem>>, vector<8x128xf32>
    %58 = arith.truncf %57 : vector<8x128xf32> to vector<8x128xbf16>
    %c0_37 = arith.constant 0 : index
    %c0_38 = arith.constant 0 : index
    %59 = vector.load %arg2[%c0_37, %c0_38] : memref<128x512xbf16, #tpu.memory_space<vmem>>, vector<128x512xbf16>
    %cst_39 = arith.constant dense<0.000000e+00> : vector<8x512xf32>
    %60 = tpu.matmul %58, %59, %cst_39 {dimension_numbers = #tpu.dot_dimension_numbers<[1], [0], [0], [1], [0, 0, 1, 1], [], []>} : vector<8x128xbf16>, vector<128x512xbf16>, vector<8x512xf32> -> vector<8x512xf32>
    %61 = arith.addf %56, %60 : vector<8x512xf32>
    %62 = vector.extract_strided_slice %61 {offsets = [0, 0], sizes = [8, 128], strides = [1, 1]} : vector<8x512xf32> to vector<8x128xf32>
    %63 = arith.negf %62 : vector<8x128xf32>
    %64 = math.exp %63 : vector<8x128xf32>
    %cst_40 = arith.constant 1.000000e+00 : f32
    %65 = vector.broadcast %cst_40 : f32 to vector<8x128xf32>
    %66 = arith.addf %65, %64 : vector<8x128xf32>
    %67 = arith.divf %65, %66 : vector<8x128xf32>
    %68 = vector.extract_strided_slice %61 {offsets = [0, 128], sizes = [8, 128], strides = [1, 1]} : vector<8x512xf32> to vector<8x128xf32>
    %69 = arith.negf %68 : vector<8x128xf32>
    %70 = math.exp %69 : vector<8x128xf32>
    %cst_41 = arith.constant 1.000000e+00 : f32
    %71 = vector.broadcast %cst_41 : f32 to vector<8x128xf32>
    %72 = arith.addf %71, %70 : vector<8x128xf32>
    %73 = arith.divf %71, %72 : vector<8x128xf32>
    %74 = vector.extract_strided_slice %61 {offsets = [0, 256], sizes = [8, 128], strides = [1, 1]} : vector<8x512xf32> to vector<8x128xf32>
    %75 = math.tanh %74 : vector<8x128xf32>
    %76 = vector.extract_strided_slice %61 {offsets = [0, 384], sizes = [8, 128], strides = [1, 1]} : vector<8x512xf32> to vector<8x128xf32>
    %77 = arith.negf %76 : vector<8x128xf32>
    %78 = math.exp %77 : vector<8x128xf32>
    %cst_42 = arith.constant 1.000000e+00 : f32
    %79 = vector.broadcast %cst_42 : f32 to vector<8x128xf32>
    %80 = arith.addf %79, %78 : vector<8x128xf32>
    %81 = arith.divf %79, %80 : vector<8x128xf32>
    %c0_43 = arith.constant 0 : index
    %c0_44 = arith.constant 0 : index
    %82 = vector.load %arg20[%c0_43, %c0_44] : memref<8x128xf32, #tpu.memory_space<vmem>>, vector<8x128xf32>
    %83 = arith.mulf %73, %82 : vector<8x128xf32>
    %84 = arith.mulf %67, %75 : vector<8x128xf32>
    %85 = arith.addf %83, %84 : vector<8x128xf32>
    %86 = math.tanh %85 : vector<8x128xf32>
    %87 = arith.mulf %81, %86 : vector<8x128xf32>
    %c0_45 = arith.constant 0 : index
    %c0_46 = arith.constant 0 : index
    %88 = vector.load %arg20[%c0_45, %c0_46] : memref<8x128xf32, #tpu.memory_space<vmem>>, vector<8x128xf32>
    tpu.vector_store %arg20[%c0_45, %c0_46], %85 {strides = array<i32>} : memref<8x128xf32, #tpu.memory_space<vmem>>, vector<8x128xf32>,
    %c0_47 = arith.constant 0 : index
    %c0_48 = arith.constant 0 : index
    %89 = vector.load %arg19[%c0_47, %c0_48] : memref<8x128xf32, #tpu.memory_space<vmem>>, vector<8x128xf32>
    tpu.vector_store %arg19[%c0_47, %c0_48], %87 {strides = array<i32>} : memref<8x128xf32, #tpu.memory_space<vmem>>, vector<8x128xf32>,
    %90 = arith.index_cast %c1_i32 : i32 to index
    %c0_49 = arith.constant 0 : index
    %c0_50 = arith.constant 0 : index
    %91 = vector.load %arg18[%90, %c0_49, %c0_50] : memref<8x8x128xf32, #tpu.memory_space<vmem>>, vector<1x8x128xf32>
    %92 = vector.shape_cast %91 : vector<1x8x128xf32> to vector<8x128xf32>
    %93 = vector.shape_cast %87 : vector<8x128xf32> to vector<1x8x128xf32>
    tpu.vector_store %arg18[%90, %c0_49, %c0_50], %93 {strides = array<i32>} : memref<8x8x128xf32, #tpu.memory_space<vmem>>, vector<1x8x128xf32>,
    %c2_i32 = arith.constant 2 : i32
    %94 = arith.index_cast %c2_i32 : i32 to index
    %c0_51 = arith.constant 0 : index
    %c0_52 = arith.constant 0 : index
    %95 = vector.load %arg17[%94, %c0_51, %c0_52] : memref<8x8x512xf32, #tpu.memory_space<vmem>>, vector<1x8x512xf32>
    %96 = vector.shape_cast %95 : vector<1x8x512xf32> to vector<8x512xf32>
    %c0_53 = arith.constant 0 : index
    %c0_54 = arith.constant 0 : index
    %97 = vector.load %arg19[%c0_53, %c0_54] : memref<8x128xf32, #tpu.memory_space<vmem>>, vector<8x128xf32>
    %98 = arith.truncf %97 : vector<8x128xf32> to vector<8x128xbf16>
    %c0_55 = arith.constant 0 : index
    %c0_56 = arith.constant 0 : index
    %99 = vector.load %arg2[%c0_55, %c0_56] : memref<128x512xbf16, #tpu.memory_space<vmem>>, vector<128x512xbf16>
    %cst_57 = arith.constant dense<0.000000e+00> : vector<8x512xf32>
    %100 = tpu.matmul %98, %99, %cst_57 {dimension_numbers = #tpu.dot_dimension_numbers<[1], [0], [0], [1], [0, 0, 1, 1], [], []>} : vector<8x128xbf16>, vector<128x512xbf16>, vector<8x512xf32> -> vector<8x512xf32>
    %101 = arith.addf %96, %100 : vector<8x512xf32>
    %102 = vector.extract_strided_slice %101 {offsets = [0, 0], sizes = [8, 128], strides = [1, 1]} : vector<8x512xf32> to vector<8x128xf32>
    %103 = arith.negf %102 : vector<8x128xf32>
    %104 = math.exp %103 : vector<8x128xf32>
    %cst_58 = arith.constant 1.000000e+00 : f32
    %105 = vector.broadcast %cst_58 : f32 to vector<8x128xf32>
    %106 = arith.addf %105, %104 : vector<8x128xf32>
    %107 = arith.divf %105, %106 : vector<8x128xf32>
    %108 = vector.extract_strided_slice %101 {offsets = [0, 128], sizes = [8, 128], strides = [1, 1]} : vector<8x512xf32> to vector<8x128xf32>
    %109 = arith.negf %108 : vector<8x128xf32>
    %110 = math.exp %109 : vector<8x128xf32>
    %cst_59 = arith.constant 1.000000e+00 : f32
    %111 = vector.broadcast %cst_59 : f32 to vector<8x128xf32>
    %112 = arith.addf %111, %110 : vector<8x128xf32>
    %113 = arith.divf %111, %112 : vector<8x128xf32>
    %114 = vector.extract_strided_slice %101 {offsets = [0, 256], sizes = [8, 128], strides = [1, 1]} : vector<8x512xf32> to vector<8x128xf32>
    %115 = math.tanh %114 : vector<8x128xf32>
    %116 = vector.extract_strided_slice %101 {offsets = [0, 384], sizes = [8, 128], strides = [1, 1]} : vector<8x512xf32> to vector<8x128xf32>
    %117 = arith.negf %116 : vector<8x128xf32>
    %118 = math.exp %117 : vector<8x128xf32>
    %cst_60 = arith.constant 1.000000e+00 : f32
    %119 = vector.broadcast %cst_60 : f32 to vector<8x128xf32>
    %120 = arith.addf %119, %118 : vector<8x128xf32>
    %121 = arith.divf %119, %120 : vector<8x128xf32>
    %c0_61 = arith.constant 0 : index
    %c0_62 = arith.constant 0 : index
    %122 = vector.load %arg20[%c0_61, %c0_62] : memref<8x128xf32, #tpu.memory_space<vmem>>, vector<8x128xf32>
    %123 = arith.mulf %113, %122 : vector<8x128xf32>
    %124 = arith.mulf %107, %115 : vector<8x128xf32>
    %125 = arith.addf %123, %124 : vector<8x128xf32>
    %126 = math.tanh %125 : vector<8x128xf32>
    %127 = arith.mulf %121, %126 : vector<8x128xf32>
    %c0_63 = arith.constant 0 : index
    %c0_64 = arith.constant 0 : index
    %128 = vector.load %arg20[%c0_63, %c0_64] : memref<8x128xf32, #tpu.memory_space<vmem>>, vector<8x128xf32>
    tpu.vector_store %arg20[%c0_63, %c0_64], %125 {strides = array<i32>} : memref<8x128xf32, #tpu.memory_space<vmem>>, vector<8x128xf32>,
    %c0_65 = arith.constant 0 : index
    %c0_66 = arith.constant 0 : index
    %129 = vector.load %arg19[%c0_65, %c0_66] : memref<8x128xf32, #tpu.memory_space<vmem>>, vector<8x128xf32>
    tpu.vector_store %arg19[%c0_65, %c0_66], %127 {strides = array<i32>} : memref<8x128xf32, #tpu.memory_space<vmem>>, vector<8x128xf32>,
    %130 = arith.index_cast %c2_i32 : i32 to index
    %c0_67 = arith.constant 0 : index
    %c0_68 = arith.constant 0 : index
    %131 = vector.load %arg18[%130, %c0_67, %c0_68] : memref<8x8x128xf32, #tpu.memory_space<vmem>>, vector<1x8x128xf32>
    %132 = vector.shape_cast %131 : vector<1x8x128xf32> to vector<8x128xf32>
    %133 = vector.shape_cast %127 : vector<8x128xf32> to vector<1x8x128xf32>
    tpu.vector_store %arg18[%130, %c0_67, %c0_68], %133 {strides = array<i32>} : memref<8x8x128xf32, #tpu.memory_space<vmem>>, vector<1x8x128xf32>,
    %c3_i32 = arith.constant 3 : i32
    %134 = arith.index_cast %c3_i32 : i32 to index
    %c0_69 = arith.constant 0 : index
    %c0_70 = arith.constant 0 : index
    %135 = vector.load %arg17[%134, %c0_69, %c0_70] : memref<8x8x512xf32, #tpu.memory_space<vmem>>, vector<1x8x512xf32>
    %136 = vector.shape_cast %135 : vector<1x8x512xf32> to vector<8x512xf32>
    %c0_71 = arith.constant 0 : index
    %c0_72 = arith.constant 0 : index
    %137 = vector.load %arg19[%c0_71, %c0_72] : memref<8x128xf32, #tpu.memory_space<vmem>>, vector<8x128xf32>
    %138 = arith.truncf %137 : vector<8x128xf32> to vector<8x128xbf16>
    %c0_73 = arith.constant 0 : index
    %c0_74 = arith.constant 0 : index
    %139 = vector.load %arg2[%c0_73, %c0_74] : memref<128x512xbf16, #tpu.memory_space<vmem>>, vector<128x512xbf16>
    %cst_75 = arith.constant dense<0.000000e+00> : vector<8x512xf32>
    %140 = tpu.matmul %138, %139, %cst_75 {dimension_numbers = #tpu.dot_dimension_numbers<[1], [0], [0], [1], [0, 0, 1, 1], [], []>} : vector<8x128xbf16>, vector<128x512xbf16>, vector<8x512xf32> -> vector<8x512xf32>
    %141 = arith.addf %136, %140 : vector<8x512xf32>
    %142 = vector.extract_strided_slice %141 {offsets = [0, 0], sizes = [8, 128], strides = [1, 1]} : vector<8x512xf32> to vector<8x128xf32>
    %143 = arith.negf %142 : vector<8x128xf32>
    %144 = math.exp %143 : vector<8x128xf32>
    %cst_76 = arith.constant 1.000000e+00 : f32
    %145 = vector.broadcast %cst_76 : f32 to vector<8x128xf32>
    %146 = arith.addf %145, %144 : vector<8x128xf32>
    %147 = arith.divf %145, %146 : vector<8x128xf32>
    %148 = vector.extract_strided_slice %141 {offsets = [0, 128], sizes = [8, 128], strides = [1, 1]} : vector<8x512xf32> to vector<8x128xf32>
    %149 = arith.negf %148 : vector<8x128xf32>
    %150 = math.exp %149 : vector<8x128xf32>
    %cst_77 = arith.constant 1.000000e+00 : f32
    %151 = vector.broadcast %cst_77 : f32 to vector<8x128xf32>
    %152 = arith.addf %151, %150 : vector<8x128xf32>
    %153 = arith.divf %151, %152 : vector<8x128xf32>
    %154 = vector.extract_strided_slice %141 {offsets = [0, 256], sizes = [8, 128], strides = [1, 1]} : vector<8x512xf32> to vector<8x128xf32>
    %155 = math.tanh %154 : vector<8x128xf32>
    %156 = vector.extract_strided_slice %141 {offsets = [0, 384], sizes = [8, 128], strides = [1, 1]} : vector<8x512xf32> to vector<8x128xf32>
    %157 = arith.negf %156 : vector<8x128xf32>
    %158 = math.exp %157 : vector<8x128xf32>
    %cst_78 = arith.constant 1.000000e+00 : f32
    %159 = vector.broadcast %cst_78 : f32 to vector<8x128xf32>
    %160 = arith.addf %159, %158 : vector<8x128xf32>
    %161 = arith.divf %159, %160 : vector<8x128xf32>
    %c0_79 = arith.constant 0 : index
    %c0_80 = arith.constant 0 : index
    %162 = vector.load %arg20[%c0_79, %c0_80] : memref<8x128xf32, #tpu.memory_space<vmem>>, vector<8x128xf32>
    %163 = arith.mulf %153, %162 : vector<8x128xf32>
    %164 = arith.mulf %147, %155 : vector<8x128xf32>
    %165 = arith.addf %163, %164 : vector<8x128xf32>
    %166 = math.tanh %165 : vector<8x128xf32>
    %167 = arith.mulf %161, %166 : vector<8x128xf32>
    %c0_81 = arith.constant 0 : index
    %c0_82 = arith.constant 0 : index
    %168 = vector.load %arg20[%c0_81, %c0_82] : memref<8x128xf32, #tpu.memory_space<vmem>>, vector<8x128xf32>
    tpu.vector_store %arg20[%c0_81, %c0_82], %165 {strides = array<i32>} : memref<8x128xf32, #tpu.memory_space<vmem>>, vector<8x128xf32>,
    %c0_83 = arith.constant 0 : index
    %c0_84 = arith.constant 0 : index
    %169 = vector.load %arg19[%c0_83, %c0_84] : memref<8x128xf32, #tpu.memory_space<vmem>>, vector<8x128xf32>
    tpu.vector_store %arg19[%c0_83, %c0_84], %167 {strides = array<i32>} : memref<8x128xf32, #tpu.memory_space<vmem>>, vector<8x128xf32>,
    %170 = arith.index_cast %c3_i32 : i32 to index
    %c0_85 = arith.constant 0 : index
    %c0_86 = arith.constant 0 : index
    %171 = vector.load %arg18[%170, %c0_85, %c0_86] : memref<8x8x128xf32, #tpu.memory_space<vmem>>, vector<1x8x128xf32>
    %172 = vector.shape_cast %171 : vector<1x8x128xf32> to vector<8x128xf32>
    %173 = vector.shape_cast %167 : vector<8x128xf32> to vector<1x8x128xf32>
    tpu.vector_store %arg18[%170, %c0_85, %c0_86], %173 {strides = array<i32>} : memref<8x8x128xf32, #tpu.memory_space<vmem>>, vector<1x8x128xf32>,
    %c4_i32 = arith.constant 4 : i32
    %174 = arith.index_cast %c4_i32 : i32 to index
    %c0_87 = arith.constant 0 : index
    %c0_88 = arith.constant 0 : index
    %175 = vector.load %arg17[%174, %c0_87, %c0_88] : memref<8x8x512xf32, #tpu.memory_space<vmem>>, vector<1x8x512xf32>
    %176 = vector.shape_cast %175 : vector<1x8x512xf32> to vector<8x512xf32>
    %c0_89 = arith.constant 0 : index
    %c0_90 = arith.constant 0 : index
    %177 = vector.load %arg19[%c0_89, %c0_90] : memref<8x128xf32, #tpu.memory_space<vmem>>, vector<8x128xf32>
    %178 = arith.truncf %177 : vector<8x128xf32> to vector<8x128xbf16>
    %c0_91 = arith.constant 0 : index
    %c0_92 = arith.constant 0 : index
    %179 = vector.load %arg2[%c0_91, %c0_92] : memref<128x512xbf16, #tpu.memory_space<vmem>>, vector<128x512xbf16>
    %cst_93 = arith.constant dense<0.000000e+00> : vector<8x512xf32>
    %180 = tpu.matmul %178, %179, %cst_93 {dimension_numbers = #tpu.dot_dimension_numbers<[1], [0], [0], [1], [0, 0, 1, 1], [], []>} : vector<8x128xbf16>, vector<128x512xbf16>, vector<8x512xf32> -> vector<8x512xf32>
    %181 = arith.addf %176, %180 : vector<8x512xf32>
    %182 = vector.extract_strided_slice %181 {offsets = [0, 0], sizes = [8, 128], strides = [1, 1]} : vector<8x512xf32> to vector<8x128xf32>
    %183 = arith.negf %182 : vector<8x128xf32>
    %184 = math.exp %183 : vector<8x128xf32>
    %cst_94 = arith.constant 1.000000e+00 : f32
    %185 = vector.broadcast %cst_94 : f32 to vector<8x128xf32>
    %186 = arith.addf %185, %184 : vector<8x128xf32>
    %187 = arith.divf %185, %186 : vector<8x128xf32>
    %188 = vector.extract_strided_slice %181 {offsets = [0, 128], sizes = [8, 128], strides = [1, 1]} : vector<8x512xf32> to vector<8x128xf32>
    %189 = arith.negf %188 : vector<8x128xf32>
    %190 = math.exp %189 : vector<8x128xf32>
    %cst_95 = arith.constant 1.000000e+00 : f32
    %191 = vector.broadcast %cst_95 : f32 to vector<8x128xf32>
    %192 = arith.addf %191, %190 : vector<8x128xf32>
    %193 = arith.divf %191, %192 : vector<8x128xf32>
    %194 = vector.extract_strided_slice %181 {offsets = [0, 256], sizes = [8, 128], strides = [1, 1]} : vector<8x512xf32> to vector<8x128xf32>
    %195 = math.tanh %194 : vector<8x128xf32>
    %196 = vector.extract_strided_slice %181 {offsets = [0, 384], sizes = [8, 128], strides = [1, 1]} : vector<8x512xf32> to vector<8x128xf32>
    %197 = arith.negf %196 : vector<8x128xf32>
    %198 = math.exp %197 : vector<8x128xf32>
    %cst_96 = arith.constant 1.000000e+00 : f32
    %199 = vector.broadcast %cst_96 : f32 to vector<8x128xf32>
    %200 = arith.addf %199, %198 : vector<8x128xf32>
    %201 = arith.divf %199, %200 : vector<8x128xf32>
    %c0_97 = arith.constant 0 : index
    %c0_98 = arith.constant 0 : index
    %202 = vector.load %arg20[%c0_97, %c0_98] : memref<8x128xf32, #tpu.memory_space<vmem>>, vector<8x128xf32>
    %203 = arith.mulf %193, %202 : vector<8x128xf32>
    %204 = arith.mulf %187, %195 : vector<8x128xf32>
    %205 = arith.addf %203, %204 : vector<8x128xf32>
    %206 = math.tanh %205 : vector<8x128xf32>
    %207 = arith.mulf %201, %206 : vector<8x128xf32>
    %c0_99 = arith.constant 0 : index
    %c0_100 = arith.constant 0 : index
    %208 = vector.load %arg20[%c0_99, %c0_100] : memref<8x128xf32, #tpu.memory_space<vmem>>, vector<8x128xf32>
    tpu.vector_store %arg20[%c0_99, %c0_100], %205 {strides = array<i32>} : memref<8x128xf32, #tpu.memory_space<vmem>>, vector<8x128xf32>,
    %c0_101 = arith.constant 0 : index
    %c0_102 = arith.constant 0 : index
    %209 = vector.load %arg19[%c0_101, %c0_102] : memref<8x128xf32, #tpu.memory_space<vmem>>, vector<8x128xf32>
    tpu.vector_store %arg19[%c0_101, %c0_102], %207 {strides = array<i32>} : memref<8x128xf32, #tpu.memory_space<vmem>>, vector<8x128xf32>,
    %210 = arith.index_cast %c4_i32 : i32 to index
    %c0_103 = arith.constant 0 : index
    %c0_104 = arith.constant 0 : index
    %211 = vector.load %arg18[%210, %c0_103, %c0_104] : memref<8x8x128xf32, #tpu.memory_space<vmem>>, vector<1x8x128xf32>
    %212 = vector.shape_cast %211 : vector<1x8x128xf32> to vector<8x128xf32>
    %213 = vector.shape_cast %207 : vector<8x128xf32> to vector<1x8x128xf32>
    tpu.vector_store %arg18[%210, %c0_103, %c0_104], %213 {strides = array<i32>} : memref<8x8x128xf32, #tpu.memory_space<vmem>>, vector<1x8x128xf32>,
    %c5_i32 = arith.constant 5 : i32
    %214 = arith.index_cast %c5_i32 : i32 to index
    %c0_105 = arith.constant 0 : index
    %c0_106 = arith.constant 0 : index
    %215 = vector.load %arg17[%214, %c0_105, %c0_106] : memref<8x8x512xf32, #tpu.memory_space<vmem>>, vector<1x8x512xf32>
    %216 = vector.shape_cast %215 : vector<1x8x512xf32> to vector<8x512xf32>
    %c0_107 = arith.constant 0 : index
    %c0_108 = arith.constant 0 : index
    %217 = vector.load %arg19[%c0_107, %c0_108] : memref<8x128xf32, #tpu.memory_space<vmem>>, vector<8x128xf32>
    %218 = arith.truncf %217 : vector<8x128xf32> to vector<8x128xbf16>
    %c0_109 = arith.constant 0 : index
    %c0_110 = arith.constant 0 : index
    %219 = vector.load %arg2[%c0_109, %c0_110] : memref<128x512xbf16, #tpu.memory_space<vmem>>, vector<128x512xbf16>
    %cst_111 = arith.constant dense<0.000000e+00> : vector<8x512xf32>
    %220 = tpu.matmul %218, %219, %cst_111 {dimension_numbers = #tpu.dot_dimension_numbers<[1], [0], [0], [1], [0, 0, 1, 1], [], []>} : vector<8x128xbf16>, vector<128x512xbf16>, vector<8x512xf32> -> vector<8x512xf32>
    %221 = arith.addf %216, %220 : vector<8x512xf32>
    %222 = vector.extract_strided_slice %221 {offsets = [0, 0], sizes = [8, 128], strides = [1, 1]} : vector<8x512xf32> to vector<8x128xf32>
    %223 = arith.negf %222 : vector<8x128xf32>
    %224 = math.exp %223 : vector<8x128xf32>
    %cst_112 = arith.constant 1.000000e+00 : f32
    %225 = vector.broadcast %cst_112 : f32 to vector<8x128xf32>
    %226 = arith.addf %225, %224 : vector<8x128xf32>
    %227 = arith.divf %225, %226 : vector<8x128xf32>
    %228 = vector.extract_strided_slice %221 {offsets = [0, 128], sizes = [8, 128], strides = [1, 1]} : vector<8x512xf32> to vector<8x128xf32>
    %229 = arith.negf %228 : vector<8x128xf32>
    %230 = math.exp %229 : vector<8x128xf32>
    %cst_113 = arith.constant 1.000000e+00 : f32
    %231 = vector.broadcast %cst_113 : f32 to vector<8x128xf32>
    %232 = arith.addf %231, %230 : vector<8x128xf32>
    %233 = arith.divf %231, %232 : vector<8x128xf32>
    %234 = vector.extract_strided_slice %221 {offsets = [0, 256], sizes = [8, 128], strides = [1, 1]} : vector<8x512xf32> to vector<8x128xf32>
    %235 = math.tanh %234 : vector<8x128xf32>
    %236 = vector.extract_strided_slice %221 {offsets = [0, 384], sizes = [8, 128], strides = [1, 1]} : vector<8x512xf32> to vector<8x128xf32>
    %237 = arith.negf %236 : vector<8x128xf32>
    %238 = math.exp %237 : vector<8x128xf32>
    %cst_114 = arith.constant 1.000000e+00 : f32
    %239 = vector.broadcast %cst_114 : f32 to vector<8x128xf32>
    %240 = arith.addf %239, %238 : vector<8x128xf32>
    %241 = arith.divf %239, %240 : vector<8x128xf32>
    %c0_115 = arith.constant 0 : index
    %c0_116 = arith.constant 0 : index
    %242 = vector.load %arg20[%c0_115, %c0_116] : memref<8x128xf32, #tpu.memory_space<vmem>>, vector<8x128xf32>
    %243 = arith.mulf %233, %242 : vector<8x128xf32>
    %244 = arith.mulf %227, %235 : vector<8x128xf32>
    %245 = arith.addf %243, %244 : vector<8x128xf32>
    %246 = math.tanh %245 : vector<8x128xf32>
    %247 = arith.mulf %241, %246 : vector<8x128xf32>
    %c0_117 = arith.constant 0 : index
    %c0_118 = arith.constant 0 : index
    %248 = vector.load %arg20[%c0_117, %c0_118] : memref<8x128xf32, #tpu.memory_space<vmem>>, vector<8x128xf32>
    tpu.vector_store %arg20[%c0_117, %c0_118], %245 {strides = array<i32>} : memref<8x128xf32, #tpu.memory_space<vmem>>, vector<8x128xf32>,
    %c0_119 = arith.constant 0 : index
    %c0_120 = arith.constant 0 : index
    %249 = vector.load %arg19[%c0_119, %c0_120] : memref<8x128xf32, #tpu.memory_space<vmem>>, vector<8x128xf32>
    tpu.vector_store %arg19[%c0_119, %c0_120], %247 {strides = array<i32>} : memref<8x128xf32, #tpu.memory_space<vmem>>, vector<8x128xf32>,
    %250 = arith.index_cast %c5_i32 : i32 to index
    %c0_121 = arith.constant 0 : index
    %c0_122 = arith.constant 0 : index
    %251 = vector.load %arg18[%250, %c0_121, %c0_122] : memref<8x8x128xf32, #tpu.memory_space<vmem>>, vector<1x8x128xf32>
    %252 = vector.shape_cast %251 : vector<1x8x128xf32> to vector<8x128xf32>
    %253 = vector.shape_cast %247 : vector<8x128xf32> to vector<1x8x128xf32>
    tpu.vector_store %arg18[%250, %c0_121, %c0_122], %253 {strides = array<i32>} : memref<8x8x128xf32, #tpu.memory_space<vmem>>, vector<1x8x128xf32>,
    %c6_i32 = arith.constant 6 : i32
    %254 = arith.index_cast %c6_i32 : i32 to index
    %c0_123 = arith.constant 0 : index
    %c0_124 = arith.constant 0 : index
    %255 = vector.load %arg17[%254, %c0_123, %c0_124] : memref<8x8x512xf32, #tpu.memory_space<vmem>>, vector<1x8x512xf32>
    %256 = vector.shape_cast %255 : vector<1x8x512xf32> to vector<8x512xf32>
    %c0_125 = arith.constant 0 : index
    %c0_126 = arith.constant 0 : index
    %257 = vector.load %arg19[%c0_125, %c0_126] : memref<8x128xf32, #tpu.memory_space<vmem>>, vector<8x128xf32>
    %258 = arith.truncf %257 : vector<8x128xf32> to vector<8x128xbf16>
    %c0_127 = arith.constant 0 : index
    %c0_128 = arith.constant 0 : index
    %259 = vector.load %arg2[%c0_127, %c0_128] : memref<128x512xbf16, #tpu.memory_space<vmem>>, vector<128x512xbf16>
    %cst_129 = arith.constant dense<0.000000e+00> : vector<8x512xf32>
    %260 = tpu.matmul %258, %259, %cst_129 {dimension_numbers = #tpu.dot_dimension_numbers<[1], [0], [0], [1], [0, 0, 1, 1], [], []>} : vector<8x128xbf16>, vector<128x512xbf16>, vector<8x512xf32> -> vector<8x512xf32>
    %261 = arith.addf %256, %260 : vector<8x512xf32>
    %262 = vector.extract_strided_slice %261 {offsets = [0, 0], sizes = [8, 128], strides = [1, 1]} : vector<8x512xf32> to vector<8x128xf32>
    %263 = arith.negf %262 : vector<8x128xf32>
    %264 = math.exp %263 : vector<8x128xf32>
    %cst_130 = arith.constant 1.000000e+00 : f32
    %265 = vector.broadcast %cst_130 : f32 to vector<8x128xf32>
    %266 = arith.addf %265, %264 : vector<8x128xf32>
    %267 = arith.divf %265, %266 : vector<8x128xf32>
    %268 = vector.extract_strided_slice %261 {offsets = [0, 128], sizes = [8, 128], strides = [1, 1]} : vector<8x512xf32> to vector<8x128xf32>
    %269 = arith.negf %268 : vector<8x128xf32>
    %270 = math.exp %269 : vector<8x128xf32>
    %cst_131 = arith.constant 1.000000e+00 : f32
    %271 = vector.broadcast %cst_131 : f32 to vector<8x128xf32>
    %272 = arith.addf %271, %270 : vector<8x128xf32>
    %273 = arith.divf %271, %272 : vector<8x128xf32>
    %274 = vector.extract_strided_slice %261 {offsets = [0, 256], sizes = [8, 128], strides = [1, 1]} : vector<8x512xf32> to vector<8x128xf32>
    %275 = math.tanh %274 : vector<8x128xf32>
    %276 = vector.extract_strided_slice %261 {offsets = [0, 384], sizes = [8, 128], strides = [1, 1]} : vector<8x512xf32> to vector<8x128xf32>
    %277 = arith.negf %276 : vector<8x128xf32>
    %278 = math.exp %277 : vector<8x128xf32>
    %cst_132 = arith.constant 1.000000e+00 : f32
    %279 = vector.broadcast %cst_132 : f32 to vector<8x128xf32>
    %280 = arith.addf %279, %278 : vector<8x128xf32>
    %281 = arith.divf %279, %280 : vector<8x128xf32>
    %c0_133 = arith.constant 0 : index
    %c0_134 = arith.constant 0 : index
    %282 = vector.load %arg20[%c0_133, %c0_134] : memref<8x128xf32, #tpu.memory_space<vmem>>, vector<8x128xf32>
    %283 = arith.mulf %273, %282 : vector<8x128xf32>
    %284 = arith.mulf %267, %275 : vector<8x128xf32>
    %285 = arith.addf %283, %284 : vector<8x128xf32>
    %286 = math.tanh %285 : vector<8x128xf32>
    %287 = arith.mulf %281, %286 : vector<8x128xf32>
    %c0_135 = arith.constant 0 : index
    %c0_136 = arith.constant 0 : index
    %288 = vector.load %arg20[%c0_135, %c0_136] : memref<8x128xf32, #tpu.memory_space<vmem>>, vector<8x128xf32>
    tpu.vector_store %arg20[%c0_135, %c0_136], %285 {strides = array<i32>} : memref<8x128xf32, #tpu.memory_space<vmem>>, vector<8x128xf32>,
    %c0_137 = arith.constant 0 : index
    %c0_138 = arith.constant 0 : index
    %289 = vector.load %arg19[%c0_137, %c0_138] : memref<8x128xf32, #tpu.memory_space<vmem>>, vector<8x128xf32>
    tpu.vector_store %arg19[%c0_137, %c0_138], %287 {strides = array<i32>} : memref<8x128xf32, #tpu.memory_space<vmem>>, vector<8x128xf32>,
    %290 = arith.index_cast %c6_i32 : i32 to index
    %c0_139 = arith.constant 0 : index
    %c0_140 = arith.constant 0 : index
    %291 = vector.load %arg18[%290, %c0_139, %c0_140] : memref<8x8x128xf32, #tpu.memory_space<vmem>>, vector<1x8x128xf32>
    %292 = vector.shape_cast %291 : vector<1x8x128xf32> to vector<8x128xf32>
    %293 = vector.shape_cast %287 : vector<8x128xf32> to vector<1x8x128xf32>
    tpu.vector_store %arg18[%290, %c0_139, %c0_140], %293 {strides = array<i32>} : memref<8x8x128xf32, #tpu.memory_space<vmem>>, vector<1x8x128xf32>,
    %c7_i32 = arith.constant 7 : i32
    %294 = arith.index_cast %c7_i32 : i32 to index
    %c0_141 = arith.constant 0 : index
    %c0_142 = arith.constant 0 : index
    %295 = vector.load %arg17[%294, %c0_141, %c0_142] : memref<8x8x512xf32, #tpu.memory_space<vmem>>, vector<1x8x512xf32>
    %296 = vector.shape_cast %295 : vector<1x8x512xf32> to vector<8x512xf32>
    %c0_143 = arith.constant 0 : index
    %c0_144 = arith.constant 0 : index
    %297 = vector.load %arg19[%c0_143, %c0_144] : memref<8x128xf32, #tpu.memory_space<vmem>>, vector<8x128xf32>
    %298 = arith.truncf %297 : vector<8x128xf32> to vector<8x128xbf16>
    %c0_145 = arith.constant 0 : index
    %c0_146 = arith.constant 0 : index
    %299 = vector.load %arg2[%c0_145, %c0_146] : memref<128x512xbf16, #tpu.memory_space<vmem>>, vector<128x512xbf16>
    %cst_147 = arith.constant dense<0.000000e+00> : vector<8x512xf32>
    %300 = tpu.matmul %298, %299, %cst_147 {dimension_numbers = #tpu.dot_dimension_numbers<[1], [0], [0], [1], [0, 0, 1, 1], [], []>} : vector<8x128xbf16>, vector<128x512xbf16>, vector<8x512xf32> -> vector<8x512xf32>
    %301 = arith.addf %296, %300 : vector<8x512xf32>
    %302 = vector.extract_strided_slice %301 {offsets = [0, 0], sizes = [8, 128], strides = [1, 1]} : vector<8x512xf32> to vector<8x128xf32>
    %303 = arith.negf %302 : vector<8x128xf32>
    %304 = math.exp %303 : vector<8x128xf32>
    %cst_148 = arith.constant 1.000000e+00 : f32
    %305 = vector.broadcast %cst_148 : f32 to vector<8x128xf32>
    %306 = arith.addf %305, %304 : vector<8x128xf32>
    %307 = arith.divf %305, %306 : vector<8x128xf32>
    %308 = vector.extract_strided_slice %301 {offsets = [0, 128], sizes = [8, 128], strides = [1, 1]} : vector<8x512xf32> to vector<8x128xf32>
    %309 = arith.negf %308 : vector<8x128xf32>
    %310 = math.exp %309 : vector<8x128xf32>
    %cst_149 = arith.constant 1.000000e+00 : f32
    %311 = vector.broadcast %cst_149 : f32 to vector<8x128xf32>
    %312 = arith.addf %311, %310 : vector<8x128xf32>
    %313 = arith.divf %311, %312 : vector<8x128xf32>
    %314 = vector.extract_strided_slice %301 {offsets = [0, 256], sizes = [8, 128], strides = [1, 1]} : vector<8x512xf32> to vector<8x128xf32>
    %315 = math.tanh %314 : vector<8x128xf32>
    %316 = vector.extract_strided_slice %301 {offsets = [0, 384], sizes = [8, 128], strides = [1, 1]} : vector<8x512xf32> to vector<8x128xf32>
    %317 = arith.negf %316 : vector<8x128xf32>
    %318 = math.exp %317 : vector<8x128xf32>
    %cst_150 = arith.constant 1.000000e+00 : f32
    %319 = vector.broadcast %cst_150 : f32 to vector<8x128xf32>
    %320 = arith.addf %319, %318 : vector<8x128xf32>
    %321 = arith.divf %319, %320 : vector<8x128xf32>
    %c0_151 = arith.constant 0 : index
    %c0_152 = arith.constant 0 : index
    %322 = vector.load %arg20[%c0_151, %c0_152] : memref<8x128xf32, #tpu.memory_space<vmem>>, vector<8x128xf32>
    %323 = arith.mulf %313, %322 : vector<8x128xf32>
    %324 = arith.mulf %307, %315 : vector<8x128xf32>
    %325 = arith.addf %323, %324 : vector<8x128xf32>
    %326 = math.tanh %325 : vector<8x128xf32>
    %327 = arith.mulf %321, %326 : vector<8x128xf32>
    %c0_153 = arith.constant 0 : index
    %c0_154 = arith.constant 0 : index
    %328 = vector.load %arg20[%c0_153, %c0_154] : memref<8x128xf32, #tpu.memory_space<vmem>>, vector<8x128xf32>
    tpu.vector_store %arg20[%c0_153, %c0_154], %325 {strides = array<i32>} : memref<8x128xf32, #tpu.memory_space<vmem>>, vector<8x128xf32>,
    %c0_155 = arith.constant 0 : index
    %c0_156 = arith.constant 0 : index
    %329 = vector.load %arg19[%c0_155, %c0_156] : memref<8x128xf32, #tpu.memory_space<vmem>>, vector<8x128xf32>
    tpu.vector_store %arg19[%c0_155, %c0_156], %327 {strides = array<i32>} : memref<8x128xf32, #tpu.memory_space<vmem>>, vector<8x128xf32>,
    %330 = arith.index_cast %c7_i32 : i32 to index
    %c0_157 = arith.constant 0 : index
    %c0_158 = arith.constant 0 : index
    %331 = vector.load %arg18[%330, %c0_157, %c0_158] : memref<8x8x128xf32, #tpu.memory_space<vmem>>, vector<1x8x128xf32>
    %332 = vector.shape_cast %331 : vector<1x8x128xf32> to vector<8x128xf32>
    %333 = vector.shape_cast %327 : vector<8x128xf32> to vector<1x8x128xf32>
    tpu.vector_store %arg18[%330, %c0_157, %c0_158], %333 {strides = array<i32>} : memref<8x8x128xf32, #tpu.memory_space<vmem>>, vector<1x8x128xf32>,
    %c8_i32 = arith.constant 8 : i32
    %c0_159 = arith.constant 0 : index
    %c0_160 = arith.constant 0 : index
    %c0_161 = arith.constant 0 : index
    %334 = vector.load %arg18[%c0_159, %c0_160, %c0_161] : memref<8x8x128xf32, #tpu.memory_space<vmem>>, vector<8x8x128xf32>
    %335 = vector.shape_cast %334 : vector<8x8x128xf32> to vector<64x128xf32>
    %336 = arith.truncf %335 : vector<64x128xf32> to vector<64x128xbf16>
    %c0_162 = arith.constant 0 : index
    %c0_163 = arith.constant 0 : index
    %337 = vector.load %arg4[%c0_162, %c0_163] : memref<128x512xbf16, #tpu.memory_space<vmem>>, vector<128x512xbf16>
    %cst_164 = arith.constant dense<0.000000e+00> : vector<64x512xf32>
    %338 = tpu.matmul %336, %337, %cst_164 {dimension_numbers = #tpu.dot_dimension_numbers<[1], [0], [0], [1], [0, 0, 1, 1], [], []>} : vector<64x128xbf16>, vector<128x512xbf16>, vector<64x512xf32> -> vector<64x512xf32>
    %c0_165 = arith.constant 0 : index
    %c0_166 = arith.constant 0 : index
    %339 = vector.load %arg6[%c0_165, %c0_166] : memref<1x512xf32, #tpu.memory_space<vmem>>, vector<1x512xf32>
    %340 = vector.broadcast %339 : vector<1x512xf32> to vector<64x512xf32>
    %341 = arith.addf %338, %340 : vector<64x512xf32>
    %342 = vector.shape_cast %341 : vector<64x512xf32> to vector<8x8x512xf32>
    %c0_167 = arith.constant 0 : index
    %c0_168 = arith.constant 0 : index
    %c0_169 = arith.constant 0 : index
    %343 = vector.load %arg17[%c0_167, %c0_168, %c0_169] : memref<8x8x512xf32, #tpu.memory_space<vmem>>, vector<8x8x512xf32>
    tpu.vector_store %arg17[%c0_167, %c0_168, %c0_169], %342 {strides = array<i32>} : memref<8x8x512xf32, #tpu.memory_space<vmem>>, vector<8x8x512xf32>,
    %cst_170 = arith.constant 0.000000e+00 : f32
    %344 = vector.broadcast %cst_170 : f32 to vector<8x128xf32>
    %c0_171 = arith.constant 0 : index
    %c0_172 = arith.constant 0 : index
    %345 = vector.load %arg19[%c0_171, %c0_172] : memref<8x128xf32, #tpu.memory_space<vmem>>, vector<8x128xf32>
    tpu.vector_store %arg19[%c0_171, %c0_172], %344 {strides = array<i32>} : memref<8x128xf32, #tpu.memory_space<vmem>>, vector<8x128xf32>,
    %cst_173 = arith.constant 0.000000e+00 : f32
    %346 = vector.broadcast %cst_173 : f32 to vector<8x128xf32>
    %c0_174 = arith.constant 0 : index
    %c0_175 = arith.constant 0 : index
    %347 = vector.load %arg20[%c0_174, %c0_175] : memref<8x128xf32, #tpu.memory_space<vmem>>, vector<8x128xf32>
    tpu.vector_store %arg20[%c0_174, %c0_175], %346 {strides = array<i32>} : memref<8x128xf32, #tpu.memory_space<vmem>>, vector<8x128xf32>,
    %c0_i32_176 = arith.constant 0 : i32
    %348 = arith.index_cast %c0_i32_176 : i32 to index
    %c0_177 = arith.constant 0 : index
    %c0_178 = arith.constant 0 : index
    %349 = vector.load %arg17[%348, %c0_177, %c0_178] : memref<8x8x512xf32, #tpu.memory_space<vmem>>, vector<1x8x512xf32>
    %350 = vector.shape_cast %349 : vector<1x8x512xf32> to vector<8x512xf32>
    %c0_179 = arith.constant 0 : index
    %c0_180 = arith.constant 0 : index
    %351 = vector.load %arg19[%c0_179, %c0_180] : memref<8x128xf32, #tpu.memory_space<vmem>>, vector<8x128xf32>
    %352 = arith.truncf %351 : vector<8x128xf32> to vector<8x128xbf16>
    %c0_181 = arith.constant 0 : index
    %c0_182 = arith.constant 0 : index
    %353 = vector.load %arg5[%c0_181, %c0_182] : memref<128x512xbf16, #tpu.memory_space<vmem>>, vector<128x512xbf16>
    %cst_183 = arith.constant dense<0.000000e+00> : vector<8x512xf32>
    %354 = tpu.matmul %352, %353, %cst_183 {dimension_numbers = #tpu.dot_dimension_numbers<[1], [0], [0], [1], [0, 0, 1, 1], [], []>} : vector<8x128xbf16>, vector<128x512xbf16>, vector<8x512xf32> -> vector<8x512xf32>
    %355 = arith.addf %350, %354 : vector<8x512xf32>
    %356 = vector.extract_strided_slice %355 {offsets = [0, 0], sizes = [8, 128], strides = [1, 1]} : vector<8x512xf32> to vector<8x128xf32>
    %357 = arith.negf %356 : vector<8x128xf32>
    %358 = math.exp %357 : vector<8x128xf32>
    %cst_184 = arith.constant 1.000000e+00 : f32
    %359 = vector.broadcast %cst_184 : f32 to vector<8x128xf32>
    %360 = arith.addf %359, %358 : vector<8x128xf32>
    %361 = arith.divf %359, %360 : vector<8x128xf32>
    %362 = vector.extract_strided_slice %355 {offsets = [0, 128], sizes = [8, 128], strides = [1, 1]} : vector<8x512xf32> to vector<8x128xf32>
    %363 = arith.negf %362 : vector<8x128xf32>
    %364 = math.exp %363 : vector<8x128xf32>
    %cst_185 = arith.constant 1.000000e+00 : f32
    %365 = vector.broadcast %cst_185 : f32 to vector<8x128xf32>
    %366 = arith.addf %365, %364 : vector<8x128xf32>
    %367 = arith.divf %365, %366 : vector<8x128xf32>
    %368 = vector.extract_strided_slice %355 {offsets = [0, 256], sizes = [8, 128], strides = [1, 1]} : vector<8x512xf32> to vector<8x128xf32>
    %369 = math.tanh %368 : vector<8x128xf32>
    %370 = vector.extract_strided_slice %355 {offsets = [0, 384], sizes = [8, 128], strides = [1, 1]} : vector<8x512xf32> to vector<8x128xf32>
    %371 = arith.negf %370 : vector<8x128xf32>
    %372 = math.exp %371 : vector<8x128xf32>
    %cst_186 = arith.constant 1.000000e+00 : f32
    %373 = vector.broadcast %cst_186 : f32 to vector<8x128xf32>
    %374 = arith.addf %373, %372 : vector<8x128xf32>
    %375 = arith.divf %373, %374 : vector<8x128xf32>
    %c0_187 = arith.constant 0 : index
    %c0_188 = arith.constant 0 : index
    %376 = vector.load %arg20[%c0_187, %c0_188] : memref<8x128xf32, #tpu.memory_space<vmem>>, vector<8x128xf32>
    %377 = arith.mulf %367, %376 : vector<8x128xf32>
    %378 = arith.mulf %361, %369 : vector<8x128xf32>
    %379 = arith.addf %377, %378 : vector<8x128xf32>
    %380 = math.tanh %379 : vector<8x128xf32>
    %381 = arith.mulf %375, %380 : vector<8x128xf32>
    %c0_189 = arith.constant 0 : index
    %c0_190 = arith.constant 0 : index
    %382 = vector.load %arg20[%c0_189, %c0_190] : memref<8x128xf32, #tpu.memory_space<vmem>>, vector<8x128xf32>
    tpu.vector_store %arg20[%c0_189, %c0_190], %379 {strides = array<i32>} : memref<8x128xf32, #tpu.memory_space<vmem>>, vector<8x128xf32>,
    %c0_191 = arith.constant 0 : index
    %c0_192 = arith.constant 0 : index
    %383 = vector.load %arg19[%c0_191, %c0_192] : memref<8x128xf32, #tpu.memory_space<vmem>>, vector<8x128xf32>
    tpu.vector_store %arg19[%c0_191, %c0_192], %381 {strides = array<i32>} : memref<8x128xf32, #tpu.memory_space<vmem>>, vector<8x128xf32>,
    %384 = arith.index_cast %c0_i32_176 : i32 to index
    %c0_193 = arith.constant 0 : index
    %c0_194 = arith.constant 0 : index
    %385 = vector.load %arg18[%384, %c0_193, %c0_194] : memref<8x8x128xf32, #tpu.memory_space<vmem>>, vector<1x8x128xf32>
    %386 = vector.shape_cast %385 : vector<1x8x128xf32> to vector<8x128xf32>
    %387 = vector.shape_cast %381 : vector<8x128xf32> to vector<1x8x128xf32>
    tpu.vector_store %arg18[%384, %c0_193, %c0_194], %387 {strides = array<i32>} : memref<8x8x128xf32, #tpu.memory_space<vmem>>, vector<1x8x128xf32>,
    %c1_i32_195 = arith.constant 1 : i32
    %388 = arith.index_cast %c1_i32_195 : i32 to index
    %c0_196 = arith.constant 0 : index
    %c0_197 = arith.constant 0 : index
    %389 = vector.load %arg17[%388, %c0_196, %c0_197] : memref<8x8x512xf32, #tpu.memory_space<vmem>>, vector<1x8x512xf32>
    %390 = vector.shape_cast %389 : vector<1x8x512xf32> to vector<8x512xf32>
    %c0_198 = arith.constant 0 : index
    %c0_199 = arith.constant 0 : index
    %391 = vector.load %arg19[%c0_198, %c0_199] : memref<8x128xf32, #tpu.memory_space<vmem>>, vector<8x128xf32>
    %392 = arith.truncf %391 : vector<8x128xf32> to vector<8x128xbf16>
    %c0_200 = arith.constant 0 : index
    %c0_201 = arith.constant 0 : index
    %393 = vector.load %arg5[%c0_200, %c0_201] : memref<128x512xbf16, #tpu.memory_space<vmem>>, vector<128x512xbf16>
    %cst_202 = arith.constant dense<0.000000e+00> : vector<8x512xf32>
    %394 = tpu.matmul %392, %393, %cst_202 {dimension_numbers = #tpu.dot_dimension_numbers<[1], [0], [0], [1], [0, 0, 1, 1], [], []>} : vector<8x128xbf16>, vector<128x512xbf16>, vector<8x512xf32> -> vector<8x512xf32>
    %395 = arith.addf %390, %394 : vector<8x512xf32>
    %396 = vector.extract_strided_slice %395 {offsets = [0, 0], sizes = [8, 128], strides = [1, 1]} : vector<8x512xf32> to vector<8x128xf32>
    %397 = arith.negf %396 : vector<8x128xf32>
    %398 = math.exp %397 : vector<8x128xf32>
    %cst_203 = arith.constant 1.000000e+00 : f32
    %399 = vector.broadcast %cst_203 : f32 to vector<8x128xf32>
    %400 = arith.addf %399, %398 : vector<8x128xf32>
    %401 = arith.divf %399, %400 : vector<8x128xf32>
    %402 = vector.extract_strided_slice %395 {offsets = [0, 128], sizes = [8, 128], strides = [1, 1]} : vector<8x512xf32> to vector<8x128xf32>
    %403 = arith.negf %402 : vector<8x128xf32>
    %404 = math.exp %403 : vector<8x128xf32>
    %cst_204 = arith.constant 1.000000e+00 : f32
    %405 = vector.broadcast %cst_204 : f32 to vector<8x128xf32>
    %406 = arith.addf %405, %404 : vector<8x128xf32>
    %407 = arith.divf %405, %406 : vector<8x128xf32>
    %408 = vector.extract_strided_slice %395 {offsets = [0, 256], sizes = [8, 128], strides = [1, 1]} : vector<8x512xf32> to vector<8x128xf32>
    %409 = math.tanh %408 : vector<8x128xf32>
    %410 = vector.extract_strided_slice %395 {offsets = [0, 384], sizes = [8, 128], strides = [1, 1]} : vector<8x512xf32> to vector<8x128xf32>
    %411 = arith.negf %410 : vector<8x128xf32>
    %412 = math.exp %411 : vector<8x128xf32>
    %cst_205 = arith.constant 1.000000e+00 : f32
    %413 = vector.broadcast %cst_205 : f32 to vector<8x128xf32>
    %414 = arith.addf %413, %412 : vector<8x128xf32>
    %415 = arith.divf %413, %414 : vector<8x128xf32>
    %c0_206 = arith.constant 0 : index
    %c0_207 = arith.constant 0 : index
    %416 = vector.load %arg20[%c0_206, %c0_207] : memref<8x128xf32, #tpu.memory_space<vmem>>, vector<8x128xf32>
    %417 = arith.mulf %407, %416 : vector<8x128xf32>
    %418 = arith.mulf %401, %409 : vector<8x128xf32>
    %419 = arith.addf %417, %418 : vector<8x128xf32>
    %420 = math.tanh %419 : vector<8x128xf32>
    %421 = arith.mulf %415, %420 : vector<8x128xf32>
    %c0_208 = arith.constant 0 : index
    %c0_209 = arith.constant 0 : index
    %422 = vector.load %arg20[%c0_208, %c0_209] : memref<8x128xf32, #tpu.memory_space<vmem>>, vector<8x128xf32>
    tpu.vector_store %arg20[%c0_208, %c0_209], %419 {strides = array<i32>} : memref<8x128xf32, #tpu.memory_space<vmem>>, vector<8x128xf32>,
    %c0_210 = arith.constant 0 : index
    %c0_211 = arith.constant 0 : index
    %423 = vector.load %arg19[%c0_210, %c0_211] : memref<8x128xf32, #tpu.memory_space<vmem>>, vector<8x128xf32>
    tpu.vector_store %arg19[%c0_210, %c0_211], %421 {strides = array<i32>} : memref<8x128xf32, #tpu.memory_space<vmem>>, vector<8x128xf32>,
    %424 = arith.index_cast %c1_i32_195 : i32 to index
    %c0_212 = arith.constant 0 : index
    %c0_213 = arith.constant 0 : index
    %425 = vector.load %arg18[%424, %c0_212, %c0_213] : memref<8x8x128xf32, #tpu.memory_space<vmem>>, vector<1x8x128xf32>
    %426 = vector.shape_cast %425 : vector<1x8x128xf32> to vector<8x128xf32>
    %427 = vector.shape_cast %421 : vector<8x128xf32> to vector<1x8x128xf32>
    tpu.vector_store %arg18[%424, %c0_212, %c0_213], %427 {strides = array<i32>} : memref<8x8x128xf32, #tpu.memory_space<vmem>>, vector<1x8x128xf32>,
    %c2_i32_214 = arith.constant 2 : i32
    %428 = arith.index_cast %c2_i32_214 : i32 to index
    %c0_215 = arith.constant 0 : index
    %c0_216 = arith.constant 0 : index
    %429 = vector.load %arg17[%428, %c0_215, %c0_216] : memref<8x8x512xf32, #tpu.memory_space<vmem>>, vector<1x8x512xf32>
    %430 = vector.shape_cast %429 : vector<1x8x512xf32> to vector<8x512xf32>
    %c0_217 = arith.constant 0 : index
    %c0_218 = arith.constant 0 : index
    %431 = vector.load %arg19[%c0_217, %c0_218] : memref<8x128xf32, #tpu.memory_space<vmem>>, vector<8x128xf32>
    %432 = arith.truncf %431 : vector<8x128xf32> to vector<8x128xbf16>
    %c0_219 = arith.constant 0 : index
    %c0_220 = arith.constant 0 : index
    %433 = vector.load %arg5[%c0_219, %c0_220] : memref<128x512xbf16, #tpu.memory_space<vmem>>, vector<128x512xbf16>
    %cst_221 = arith.constant dense<0.000000e+00> : vector<8x512xf32>
    %434 = tpu.matmul %432, %433, %cst_221 {dimension_numbers = #tpu.dot_dimension_numbers<[1], [0], [0], [1], [0, 0, 1, 1], [], []>} : vector<8x128xbf16>, vector<128x512xbf16>, vector<8x512xf32> -> vector<8x512xf32>
    %435 = arith.addf %430, %434 : vector<8x512xf32>
    %436 = vector.extract_strided_slice %435 {offsets = [0, 0], sizes = [8, 128], strides = [1, 1]} : vector<8x512xf32> to vector<8x128xf32>
    %437 = arith.negf %436 : vector<8x128xf32>
    %438 = math.exp %437 : vector<8x128xf32>
    %cst_222 = arith.constant 1.000000e+00 : f32
    %439 = vector.broadcast %cst_222 : f32 to vector<8x128xf32>
    %440 = arith.addf %439, %438 : vector<8x128xf32>
    %441 = arith.divf %439, %440 : vector<8x128xf32>
    %442 = vector.extract_strided_slice %435 {offsets = [0, 128], sizes = [8, 128], strides = [1, 1]} : vector<8x512xf32> to vector<8x128xf32>
    %443 = arith.negf %442 : vector<8x128xf32>
    %444 = math.exp %443 : vector<8x128xf32>
    %cst_223 = arith.constant 1.000000e+00 : f32
    %445 = vector.broadcast %cst_223 : f32 to vector<8x128xf32>
    %446 = arith.addf %445, %444 : vector<8x128xf32>
    %447 = arith.divf %445, %446 : vector<8x128xf32>
    %448 = vector.extract_strided_slice %435 {offsets = [0, 256], sizes = [8, 128], strides = [1, 1]} : vector<8x512xf32> to vector<8x128xf32>
    %449 = math.tanh %448 : vector<8x128xf32>
    %450 = vector.extract_strided_slice %435 {offsets = [0, 384], sizes = [8, 128], strides = [1, 1]} : vector<8x512xf32> to vector<8x128xf32>
    %451 = arith.negf %450 : vector<8x128xf32>
    %452 = math.exp %451 : vector<8x128xf32>
    %cst_224 = arith.constant 1.000000e+00 : f32
    %453 = vector.broadcast %cst_224 : f32 to vector<8x128xf32>
    %454 = arith.addf %453, %452 : vector<8x128xf32>
    %455 = arith.divf %453, %454 : vector<8x128xf32>
    %c0_225 = arith.constant 0 : index
    %c0_226 = arith.constant 0 : index
    %456 = vector.load %arg20[%c0_225, %c0_226] : memref<8x128xf32, #tpu.memory_space<vmem>>, vector<8x128xf32>
    %457 = arith.mulf %447, %456 : vector<8x128xf32>
    %458 = arith.mulf %441, %449 : vector<8x128xf32>
    %459 = arith.addf %457, %458 : vector<8x128xf32>
    %460 = math.tanh %459 : vector<8x128xf32>
    %461 = arith.mulf %455, %460 : vector<8x128xf32>
    %c0_227 = arith.constant 0 : index
    %c0_228 = arith.constant 0 : index
    %462 = vector.load %arg20[%c0_227, %c0_228] : memref<8x128xf32, #tpu.memory_space<vmem>>, vector<8x128xf32>
    tpu.vector_store %arg20[%c0_227, %c0_228], %459 {strides = array<i32>} : memref<8x128xf32, #tpu.memory_space<vmem>>, vector<8x128xf32>,
    %c0_229 = arith.constant 0 : index
    %c0_230 = arith.constant 0 : index
    %463 = vector.load %arg19[%c0_229, %c0_230] : memref<8x128xf32, #tpu.memory_space<vmem>>, vector<8x128xf32>
    tpu.vector_store %arg19[%c0_229, %c0_230], %461 {strides = array<i32>} : memref<8x128xf32, #tpu.memory_space<vmem>>, vector<8x128xf32>,
    %464 = arith.index_cast %c2_i32_214 : i32 to index
    %c0_231 = arith.constant 0 : index
    %c0_232 = arith.constant 0 : index
    %465 = vector.load %arg18[%464, %c0_231, %c0_232] : memref<8x8x128xf32, #tpu.memory_space<vmem>>, vector<1x8x128xf32>
    %466 = vector.shape_cast %465 : vector<1x8x128xf32> to vector<8x128xf32>
    %467 = vector.shape_cast %461 : vector<8x128xf32> to vector<1x8x128xf32>
    tpu.vector_store %arg18[%464, %c0_231, %c0_232], %467 {strides = array<i32>} : memref<8x8x128xf32, #tpu.memory_space<vmem>>, vector<1x8x128xf32>,
    %c3_i32_233 = arith.constant 3 : i32
    %468 = arith.index_cast %c3_i32_233 : i32 to index
    %c0_234 = arith.constant 0 : index
    %c0_235 = arith.constant 0 : index
    %469 = vector.load %arg17[%468, %c0_234, %c0_235] : memref<8x8x512xf32, #tpu.memory_space<vmem>>, vector<1x8x512xf32>
    %470 = vector.shape_cast %469 : vector<1x8x512xf32> to vector<8x512xf32>
    %c0_236 = arith.constant 0 : index
    %c0_237 = arith.constant 0 : index
    %471 = vector.load %arg19[%c0_236, %c0_237] : memref<8x128xf32, #tpu.memory_space<vmem>>, vector<8x128xf32>
    %472 = arith.truncf %471 : vector<8x128xf32> to vector<8x128xbf16>
    %c0_238 = arith.constant 0 : index
    %c0_239 = arith.constant 0 : index
    %473 = vector.load %arg5[%c0_238, %c0_239] : memref<128x512xbf16, #tpu.memory_space<vmem>>, vector<128x512xbf16>
    %cst_240 = arith.constant dense<0.000000e+00> : vector<8x512xf32>
    %474 = tpu.matmul %472, %473, %cst_240 {dimension_numbers = #tpu.dot_dimension_numbers<[1], [0], [0], [1], [0, 0, 1, 1], [], []>} : vector<8x128xbf16>, vector<128x512xbf16>, vector<8x512xf32> -> vector<8x512xf32>
    %475 = arith.addf %470, %474 : vector<8x512xf32>
    %476 = vector.extract_strided_slice %475 {offsets = [0, 0], sizes = [8, 128], strides = [1, 1]} : vector<8x512xf32> to vector<8x128xf32>
    %477 = arith.negf %476 : vector<8x128xf32>
    %478 = math.exp %477 : vector<8x128xf32>
    %cst_241 = arith.constant 1.000000e+00 : f32
    %479 = vector.broadcast %cst_241 : f32 to vector<8x128xf32>
    %480 = arith.addf %479, %478 : vector<8x128xf32>
    %481 = arith.divf %479, %480 : vector<8x128xf32>
    %482 = vector.extract_strided_slice %475 {offsets = [0, 128], sizes = [8, 128], strides = [1, 1]} : vector<8x512xf32> to vector<8x128xf32>
    %483 = arith.negf %482 : vector<8x128xf32>
    %484 = math.exp %483 : vector<8x128xf32>
    %cst_242 = arith.constant 1.000000e+00 : f32
    %485 = vector.broadcast %cst_242 : f32 to vector<8x128xf32>
    %486 = arith.addf %485, %484 : vector<8x128xf32>
    %487 = arith.divf %485, %486 : vector<8x128xf32>
    %488 = vector.extract_strided_slice %475 {offsets = [0, 256], sizes = [8, 128], strides = [1, 1]} : vector<8x512xf32> to vector<8x128xf32>
    %489 = math.tanh %488 : vector<8x128xf32>
    %490 = vector.extract_strided_slice %475 {offsets = [0, 384], sizes = [8, 128], strides = [1, 1]} : vector<8x512xf32> to vector<8x128xf32>
    %491 = arith.negf %490 : vector<8x128xf32>
    %492 = math.exp %491 : vector<8x128xf32>
    %cst_243 = arith.constant 1.000000e+00 : f32
    %493 = vector.broadcast %cst_243 : f32 to vector<8x128xf32>
    %494 = arith.addf %493, %492 : vector<8x128xf32>
    %495 = arith.divf %493, %494 : vector<8x128xf32>
    %c0_244 = arith.constant 0 : index
    %c0_245 = arith.constant 0 : index
    %496 = vector.load %arg20[%c0_244, %c0_245] : memref<8x128xf32, #tpu.memory_space<vmem>>, vector<8x128xf32>
    %497 = arith.mulf %487, %496 : vector<8x128xf32>
    %498 = arith.mulf %481, %489 : vector<8x128xf32>
    %499 = arith.addf %497, %498 : vector<8x128xf32>
    %500 = math.tanh %499 : vector<8x128xf32>
    %501 = arith.mulf %495, %500 : vector<8x128xf32>
    %c0_246 = arith.constant 0 : index
    %c0_247 = arith.constant 0 : index
    %502 = vector.load %arg20[%c0_246, %c0_247] : memref<8x128xf32, #tpu.memory_space<vmem>>, vector<8x128xf32>
    tpu.vector_store %arg20[%c0_246, %c0_247], %499 {strides = array<i32>} : memref<8x128xf32, #tpu.memory_space<vmem>>, vector<8x128xf32>,
    %c0_248 = arith.constant 0 : index
    %c0_249 = arith.constant 0 : index
    %503 = vector.load %arg19[%c0_248, %c0_249] : memref<8x128xf32, #tpu.memory_space<vmem>>, vector<8x128xf32>
    tpu.vector_store %arg19[%c0_248, %c0_249], %501 {strides = array<i32>} : memref<8x128xf32, #tpu.memory_space<vmem>>, vector<8x128xf32>,
    %504 = arith.index_cast %c3_i32_233 : i32 to index
    %c0_250 = arith.constant 0 : index
    %c0_251 = arith.constant 0 : index
    %505 = vector.load %arg18[%504, %c0_250, %c0_251] : memref<8x8x128xf32, #tpu.memory_space<vmem>>, vector<1x8x128xf32>
    %506 = vector.shape_cast %505 : vector<1x8x128xf32> to vector<8x128xf32>
    %507 = vector.shape_cast %501 : vector<8x128xf32> to vector<1x8x128xf32>
    tpu.vector_store %arg18[%504, %c0_250, %c0_251], %507 {strides = array<i32>} : memref<8x8x128xf32, #tpu.memory_space<vmem>>, vector<1x8x128xf32>,
    %c4_i32_252 = arith.constant 4 : i32
    %508 = arith.index_cast %c4_i32_252 : i32 to index
    %c0_253 = arith.constant 0 : index
    %c0_254 = arith.constant 0 : index
    %509 = vector.load %arg17[%508, %c0_253, %c0_254] : memref<8x8x512xf32, #tpu.memory_space<vmem>>, vector<1x8x512xf32>
    %510 = vector.shape_cast %509 : vector<1x8x512xf32> to vector<8x512xf32>
    %c0_255 = arith.constant 0 : index
    %c0_256 = arith.constant 0 : index
    %511 = vector.load %arg19[%c0_255, %c0_256] : memref<8x128xf32, #tpu.memory_space<vmem>>, vector<8x128xf32>
    %512 = arith.truncf %511 : vector<8x128xf32> to vector<8x128xbf16>
    %c0_257 = arith.constant 0 : index
    %c0_258 = arith.constant 0 : index
    %513 = vector.load %arg5[%c0_257, %c0_258] : memref<128x512xbf16, #tpu.memory_space<vmem>>, vector<128x512xbf16>
    %cst_259 = arith.constant dense<0.000000e+00> : vector<8x512xf32>
    %514 = tpu.matmul %512, %513, %cst_259 {dimension_numbers = #tpu.dot_dimension_numbers<[1], [0], [0], [1], [0, 0, 1, 1], [], []>} : vector<8x128xbf16>, vector<128x512xbf16>, vector<8x512xf32> -> vector<8x512xf32>
    %515 = arith.addf %510, %514 : vector<8x512xf32>
    %516 = vector.extract_strided_slice %515 {offsets = [0, 0], sizes = [8, 128], strides = [1, 1]} : vector<8x512xf32> to vector<8x128xf32>
    %517 = arith.negf %516 : vector<8x128xf32>
    %518 = math.exp %517 : vector<8x128xf32>
    %cst_260 = arith.constant 1.000000e+00 : f32
    %519 = vector.broadcast %cst_260 : f32 to vector<8x128xf32>
    %520 = arith.addf %519, %518 : vector<8x128xf32>
    %521 = arith.divf %519, %520 : vector<8x128xf32>
    %522 = vector.extract_strided_slice %515 {offsets = [0, 128], sizes = [8, 128], strides = [1, 1]} : vector<8x512xf32> to vector<8x128xf32>
    %523 = arith.negf %522 : vector<8x128xf32>
    %524 = math.exp %523 : vector<8x128xf32>
    %cst_261 = arith.constant 1.000000e+00 : f32
    %525 = vector.broadcast %cst_261 : f32 to vector<8x128xf32>
    %526 = arith.addf %525, %524 : vector<8x128xf32>
    %527 = arith.divf %525, %526 : vector<8x128xf32>
    %528 = vector.extract_strided_slice %515 {offsets = [0, 256], sizes = [8, 128], strides = [1, 1]} : vector<8x512xf32> to vector<8x128xf32>
    %529 = math.tanh %528 : vector<8x128xf32>
    %530 = vector.extract_strided_slice %515 {offsets = [0, 384], sizes = [8, 128], strides = [1, 1]} : vector<8x512xf32> to vector<8x128xf32>
    %531 = arith.negf %530 : vector<8x128xf32>
    %532 = math.exp %531 : vector<8x128xf32>
    %cst_262 = arith.constant 1.000000e+00 : f32
    %533 = vector.broadcast %cst_262 : f32 to vector<8x128xf32>
    %534 = arith.addf %533, %532 : vector<8x128xf32>
    %535 = arith.divf %533, %534 : vector<8x128xf32>
    %c0_263 = arith.constant 0 : index
    %c0_264 = arith.constant 0 : index
    %536 = vector.load %arg20[%c0_263, %c0_264] : memref<8x128xf32, #tpu.memory_space<vmem>>, vector<8x128xf32>
    %537 = arith.mulf %527, %536 : vector<8x128xf32>
    %538 = arith.mulf %521, %529 : vector<8x128xf32>
    %539 = arith.addf %537, %538 : vector<8x128xf32>
    %540 = math.tanh %539 : vector<8x128xf32>
    %541 = arith.mulf %535, %540 : vector<8x128xf32>
    %c0_265 = arith.constant 0 : index
    %c0_266 = arith.constant 0 : index
    %542 = vector.load %arg20[%c0_265, %c0_266] : memref<8x128xf32, #tpu.memory_space<vmem>>, vector<8x128xf32>
    tpu.vector_store %arg20[%c0_265, %c0_266], %539 {strides = array<i32>} : memref<8x128xf32, #tpu.memory_space<vmem>>, vector<8x128xf32>,
    %c0_267 = arith.constant 0 : index
    %c0_268 = arith.constant 0 : index
    %543 = vector.load %arg19[%c0_267, %c0_268] : memref<8x128xf32, #tpu.memory_space<vmem>>, vector<8x128xf32>
    tpu.vector_store %arg19[%c0_267, %c0_268], %541 {strides = array<i32>} : memref<8x128xf32, #tpu.memory_space<vmem>>, vector<8x128xf32>,
    %544 = arith.index_cast %c4_i32_252 : i32 to index
    %c0_269 = arith.constant 0 : index
    %c0_270 = arith.constant 0 : index
    %545 = vector.load %arg18[%544, %c0_269, %c0_270] : memref<8x8x128xf32, #tpu.memory_space<vmem>>, vector<1x8x128xf32>
    %546 = vector.shape_cast %545 : vector<1x8x128xf32> to vector<8x128xf32>
    %547 = vector.shape_cast %541 : vector<8x128xf32> to vector<1x8x128xf32>
    tpu.vector_store %arg18[%544, %c0_269, %c0_270], %547 {strides = array<i32>} : memref<8x8x128xf32, #tpu.memory_space<vmem>>, vector<1x8x128xf32>,
    %c5_i32_271 = arith.constant 5 : i32
    %548 = arith.index_cast %c5_i32_271 : i32 to index
    %c0_272 = arith.constant 0 : index
    %c0_273 = arith.constant 0 : index
    %549 = vector.load %arg17[%548, %c0_272, %c0_273] : memref<8x8x512xf32, #tpu.memory_space<vmem>>, vector<1x8x512xf32>
    %550 = vector.shape_cast %549 : vector<1x8x512xf32> to vector<8x512xf32>
    %c0_274 = arith.constant 0 : index
    %c0_275 = arith.constant 0 : index
    %551 = vector.load %arg19[%c0_274, %c0_275] : memref<8x128xf32, #tpu.memory_space<vmem>>, vector<8x128xf32>
    %552 = arith.truncf %551 : vector<8x128xf32> to vector<8x128xbf16>
    %c0_276 = arith.constant 0 : index
    %c0_277 = arith.constant 0 : index
    %553 = vector.load %arg5[%c0_276, %c0_277] : memref<128x512xbf16, #tpu.memory_space<vmem>>, vector<128x512xbf16>
    %cst_278 = arith.constant dense<0.000000e+00> : vector<8x512xf32>
    %554 = tpu.matmul %552, %553, %cst_278 {dimension_numbers = #tpu.dot_dimension_numbers<[1], [0], [0], [1], [0, 0, 1, 1], [], []>} : vector<8x128xbf16>, vector<128x512xbf16>, vector<8x512xf32> -> vector<8x512xf32>
    %555 = arith.addf %550, %554 : vector<8x512xf32>
    %556 = vector.extract_strided_slice %555 {offsets = [0, 0], sizes = [8, 128], strides = [1, 1]} : vector<8x512xf32> to vector<8x128xf32>
    %557 = arith.negf %556 : vector<8x128xf32>
    %558 = math.exp %557 : vector<8x128xf32>
    %cst_279 = arith.constant 1.000000e+00 : f32
    %559 = vector.broadcast %cst_279 : f32 to vector<8x128xf32>
    %560 = arith.addf %559, %558 : vector<8x128xf32>
    %561 = arith.divf %559, %560 : vector<8x128xf32>
    %562 = vector.extract_strided_slice %555 {offsets = [0, 128], sizes = [8, 128], strides = [1, 1]} : vector<8x512xf32> to vector<8x128xf32>
    %563 = arith.negf %562 : vector<8x128xf32>
    %564 = math.exp %563 : vector<8x128xf32>
    %cst_280 = arith.constant 1.000000e+00 : f32
    %565 = vector.broadcast %cst_280 : f32 to vector<8x128xf32>
    %566 = arith.addf %565, %564 : vector<8x128xf32>
    %567 = arith.divf %565, %566 : vector<8x128xf32>
    %568 = vector.extract_strided_slice %555 {offsets = [0, 256], sizes = [8, 128], strides = [1, 1]} : vector<8x512xf32> to vector<8x128xf32>
    %569 = math.tanh %568 : vector<8x128xf32>
    %570 = vector.extract_strided_slice %555 {offsets = [0, 384], sizes = [8, 128], strides = [1, 1]} : vector<8x512xf32> to vector<8x128xf32>
    %571 = arith.negf %570 : vector<8x128xf32>
    %572 = math.exp %571 : vector<8x128xf32>
    %cst_281 = arith.constant 1.000000e+00 : f32
    %573 = vector.broadcast %cst_281 : f32 to vector<8x128xf32>
    %574 = arith.addf %573, %572 : vector<8x128xf32>
    %575 = arith.divf %573, %574 : vector<8x128xf32>
    %c0_282 = arith.constant 0 : index
    %c0_283 = arith.constant 0 : index
    %576 = vector.load %arg20[%c0_282, %c0_283] : memref<8x128xf32, #tpu.memory_space<vmem>>, vector<8x128xf32>
    %577 = arith.mulf %567, %576 : vector<8x128xf32>
    %578 = arith.mulf %561, %569 : vector<8x128xf32>
    %579 = arith.addf %577, %578 : vector<8x128xf32>
    %580 = math.tanh %579 : vector<8x128xf32>
    %581 = arith.mulf %575, %580 : vector<8x128xf32>
    %c0_284 = arith.constant 0 : index
    %c0_285 = arith.constant 0 : index
    %582 = vector.load %arg20[%c0_284, %c0_285] : memref<8x128xf32, #tpu.memory_space<vmem>>, vector<8x128xf32>
    tpu.vector_store %arg20[%c0_284, %c0_285], %579 {strides = array<i32>} : memref<8x128xf32, #tpu.memory_space<vmem>>, vector<8x128xf32>,
    %c0_286 = arith.constant 0 : index
    %c0_287 = arith.constant 0 : index
    %583 = vector.load %arg19[%c0_286, %c0_287] : memref<8x128xf32, #tpu.memory_space<vmem>>, vector<8x128xf32>
    tpu.vector_store %arg19[%c0_286, %c0_287], %581 {strides = array<i32>} : memref<8x128xf32, #tpu.memory_space<vmem>>, vector<8x128xf32>,
    %584 = arith.index_cast %c5_i32_271 : i32 to index
    %c0_288 = arith.constant 0 : index
    %c0_289 = arith.constant 0 : index
    %585 = vector.load %arg18[%584, %c0_288, %c0_289] : memref<8x8x128xf32, #tpu.memory_space<vmem>>, vector<1x8x128xf32>
    %586 = vector.shape_cast %585 : vector<1x8x128xf32> to vector<8x128xf32>
    %587 = vector.shape_cast %581 : vector<8x128xf32> to vector<1x8x128xf32>
    tpu.vector_store %arg18[%584, %c0_288, %c0_289], %587 {strides = array<i32>} : memref<8x8x128xf32, #tpu.memory_space<vmem>>, vector<1x8x128xf32>,
    %c6_i32_290 = arith.constant 6 : i32
    %588 = arith.index_cast %c6_i32_290 : i32 to index
    %c0_291 = arith.constant 0 : index
    %c0_292 = arith.constant 0 : index
    %589 = vector.load %arg17[%588, %c0_291, %c0_292] : memref<8x8x512xf32, #tpu.memory_space<vmem>>, vector<1x8x512xf32>
    %590 = vector.shape_cast %589 : vector<1x8x512xf32> to vector<8x512xf32>
    %c0_293 = arith.constant 0 : index
    %c0_294 = arith.constant 0 : index
    %591 = vector.load %arg19[%c0_293, %c0_294] : memref<8x128xf32, #tpu.memory_space<vmem>>, vector<8x128xf32>
    %592 = arith.truncf %591 : vector<8x128xf32> to vector<8x128xbf16>
    %c0_295 = arith.constant 0 : index
    %c0_296 = arith.constant 0 : index
    %593 = vector.load %arg5[%c0_295, %c0_296] : memref<128x512xbf16, #tpu.memory_space<vmem>>, vector<128x512xbf16>
    %cst_297 = arith.constant dense<0.000000e+00> : vector<8x512xf32>
    %594 = tpu.matmul %592, %593, %cst_297 {dimension_numbers = #tpu.dot_dimension_numbers<[1], [0], [0], [1], [0, 0, 1, 1], [], []>} : vector<8x128xbf16>, vector<128x512xbf16>, vector<8x512xf32> -> vector<8x512xf32>
    %595 = arith.addf %590, %594 : vector<8x512xf32>
    %596 = vector.extract_strided_slice %595 {offsets = [0, 0], sizes = [8, 128], strides = [1, 1]} : vector<8x512xf32> to vector<8x128xf32>
    %597 = arith.negf %596 : vector<8x128xf32>
    %598 = math.exp %597 : vector<8x128xf32>
    %cst_298 = arith.constant 1.000000e+00 : f32
    %599 = vector.broadcast %cst_298 : f32 to vector<8x128xf32>
    %600 = arith.addf %599, %598 : vector<8x128xf32>
    %601 = arith.divf %599, %600 : vector<8x128xf32>
    %602 = vector.extract_strided_slice %595 {offsets = [0, 128], sizes = [8, 128], strides = [1, 1]} : vector<8x512xf32> to vector<8x128xf32>
    %603 = arith.negf %602 : vector<8x128xf32>
    %604 = math.exp %603 : vector<8x128xf32>
    %cst_299 = arith.constant 1.000000e+00 : f32
    %605 = vector.broadcast %cst_299 : f32 to vector<8x128xf32>
    %606 = arith.addf %605, %604 : vector<8x128xf32>
    %607 = arith.divf %605, %606 : vector<8x128xf32>
    %608 = vector.extract_strided_slice %595 {offsets = [0, 256], sizes = [8, 128], strides = [1, 1]} : vector<8x512xf32> to vector<8x128xf32>
    %609 = math.tanh %608 : vector<8x128xf32>
    %610 = vector.extract_strided_slice %595 {offsets = [0, 384], sizes = [8, 128], strides = [1, 1]} : vector<8x512xf32> to vector<8x128xf32>
    %611 = arith.negf %610 : vector<8x128xf32>
    %612 = math.exp %611 : vector<8x128xf32>
    %cst_300 = arith.constant 1.000000e+00 : f32
    %613 = vector.broadcast %cst_300 : f32 to vector<8x128xf32>
    %614 = arith.addf %613, %612 : vector<8x128xf32>
    %615 = arith.divf %613, %614 : vector<8x128xf32>
    %c0_301 = arith.constant 0 : index
    %c0_302 = arith.constant 0 : index
    %616 = vector.load %arg20[%c0_301, %c0_302] : memref<8x128xf32, #tpu.memory_space<vmem>>, vector<8x128xf32>
    %617 = arith.mulf %607, %616 : vector<8x128xf32>
    %618 = arith.mulf %601, %609 : vector<8x128xf32>
    %619 = arith.addf %617, %618 : vector<8x128xf32>
    %620 = math.tanh %619 : vector<8x128xf32>
    %621 = arith.mulf %615, %620 : vector<8x128xf32>
    %c0_303 = arith.constant 0 : index
    %c0_304 = arith.constant 0 : index
    %622 = vector.load %arg20[%c0_303, %c0_304] : memref<8x128xf32, #tpu.memory_space<vmem>>, vector<8x128xf32>
    tpu.vector_store %arg20[%c0_303, %c0_304], %619 {strides = array<i32>} : memref<8x128xf32, #tpu.memory_space<vmem>>, vector<8x128xf32>,
    %c0_305 = arith.constant 0 : index
    %c0_306 = arith.constant 0 : index
    %623 = vector.load %arg19[%c0_305, %c0_306] : memref<8x128xf32, #tpu.memory_space<vmem>>, vector<8x128xf32>
    tpu.vector_store %arg19[%c0_305, %c0_306], %621 {strides = array<i32>} : memref<8x128xf32, #tpu.memory_space<vmem>>, vector<8x128xf32>,
    %624 = arith.index_cast %c6_i32_290 : i32 to index
    %c0_307 = arith.constant 0 : index
    %c0_308 = arith.constant 0 : index
    %625 = vector.load %arg18[%624, %c0_307, %c0_308] : memref<8x8x128xf32, #tpu.memory_space<vmem>>, vector<1x8x128xf32>
    %626 = vector.shape_cast %625 : vector<1x8x128xf32> to vector<8x128xf32>
    %627 = vector.shape_cast %621 : vector<8x128xf32> to vector<1x8x128xf32>
    tpu.vector_store %arg18[%624, %c0_307, %c0_308], %627 {strides = array<i32>} : memref<8x8x128xf32, #tpu.memory_space<vmem>>, vector<1x8x128xf32>,
    %c7_i32_309 = arith.constant 7 : i32
    %628 = arith.index_cast %c7_i32_309 : i32 to index
    %c0_310 = arith.constant 0 : index
    %c0_311 = arith.constant 0 : index
    %629 = vector.load %arg17[%628, %c0_310, %c0_311] : memref<8x8x512xf32, #tpu.memory_space<vmem>>, vector<1x8x512xf32>
    %630 = vector.shape_cast %629 : vector<1x8x512xf32> to vector<8x512xf32>
    %c0_312 = arith.constant 0 : index
    %c0_313 = arith.constant 0 : index
    %631 = vector.load %arg19[%c0_312, %c0_313] : memref<8x128xf32, #tpu.memory_space<vmem>>, vector<8x128xf32>
    %632 = arith.truncf %631 : vector<8x128xf32> to vector<8x128xbf16>
    %c0_314 = arith.constant 0 : index
    %c0_315 = arith.constant 0 : index
    %633 = vector.load %arg5[%c0_314, %c0_315] : memref<128x512xbf16, #tpu.memory_space<vmem>>, vector<128x512xbf16>
    %cst_316 = arith.constant dense<0.000000e+00> : vector<8x512xf32>
    %634 = tpu.matmul %632, %633, %cst_316 {dimension_numbers = #tpu.dot_dimension_numbers<[1], [0], [0], [1], [0, 0, 1, 1], [], []>} : vector<8x128xbf16>, vector<128x512xbf16>, vector<8x512xf32> -> vector<8x512xf32>
    %635 = arith.addf %630, %634 : vector<8x512xf32>
    %636 = vector.extract_strided_slice %635 {offsets = [0, 0], sizes = [8, 128], strides = [1, 1]} : vector<8x512xf32> to vector<8x128xf32>
    %637 = arith.negf %636 : vector<8x128xf32>
    %638 = math.exp %637 : vector<8x128xf32>
    %cst_317 = arith.constant 1.000000e+00 : f32
    %639 = vector.broadcast %cst_317 : f32 to vector<8x128xf32>
    %640 = arith.addf %639, %638 : vector<8x128xf32>
    %641 = arith.divf %639, %640 : vector<8x128xf32>
    %642 = vector.extract_strided_slice %635 {offsets = [0, 128], sizes = [8, 128], strides = [1, 1]} : vector<8x512xf32> to vector<8x128xf32>
    %643 = arith.negf %642 : vector<8x128xf32>
    %644 = math.exp %643 : vector<8x128xf32>
    %cst_318 = arith.constant 1.000000e+00 : f32
    %645 = vector.broadcast %cst_318 : f32 to vector<8x128xf32>
    %646 = arith.addf %645, %644 : vector<8x128xf32>
    %647 = arith.divf %645, %646 : vector<8x128xf32>
    %648 = vector.extract_strided_slice %635 {offsets = [0, 256], sizes = [8, 128], strides = [1, 1]} : vector<8x512xf32> to vector<8x128xf32>
    %649 = math.tanh %648 : vector<8x128xf32>
    %650 = vector.extract_strided_slice %635 {offsets = [0, 384], sizes = [8, 128], strides = [1, 1]} : vector<8x512xf32> to vector<8x128xf32>
    %651 = arith.negf %650 : vector<8x128xf32>
    %652 = math.exp %651 : vector<8x128xf32>
    %cst_319 = arith.constant 1.000000e+00 : f32
    %653 = vector.broadcast %cst_319 : f32 to vector<8x128xf32>
    %654 = arith.addf %653, %652 : vector<8x128xf32>
    %655 = arith.divf %653, %654 : vector<8x128xf32>
    %c0_320 = arith.constant 0 : index
    %c0_321 = arith.constant 0 : index
    %656 = vector.load %arg20[%c0_320, %c0_321] : memref<8x128xf32, #tpu.memory_space<vmem>>, vector<8x128xf32>
    %657 = arith.mulf %647, %656 : vector<8x128xf32>
    %658 = arith.mulf %641, %649 : vector<8x128xf32>
    %659 = arith.addf %657, %658 : vector<8x128xf32>
    %660 = math.tanh %659 : vector<8x128xf32>
    %661 = arith.mulf %655, %660 : vector<8x128xf32>
    %c0_322 = arith.constant 0 : index
    %c0_323 = arith.constant 0 : index
    %662 = vector.load %arg20[%c0_322, %c0_323] : memref<8x128xf32, #tpu.memory_space<vmem>>, vector<8x128xf32>
    tpu.vector_store %arg20[%c0_322, %c0_323], %659 {strides = array<i32>} : memref<8x128xf32, #tpu.memory_space<vmem>>, vector<8x128xf32>,
    %c0_324 = arith.constant 0 : index
    %c0_325 = arith.constant 0 : index
    %663 = vector.load %arg19[%c0_324, %c0_325] : memref<8x128xf32, #tpu.memory_space<vmem>>, vector<8x128xf32>
    tpu.vector_store %arg19[%c0_324, %c0_325], %661 {strides = array<i32>} : memref<8x128xf32, #tpu.memory_space<vmem>>, vector<8x128xf32>,
    %664 = arith.index_cast %c7_i32_309 : i32 to index
    %c0_326 = arith.constant 0 : index
    %c0_327 = arith.constant 0 : index
    %665 = vector.load %arg18[%664, %c0_326, %c0_327] : memref<8x8x128xf32, #tpu.memory_space<vmem>>, vector<1x8x128xf32>
    %666 = vector.shape_cast %665 : vector<1x8x128xf32> to vector<8x128xf32>
    %667 = vector.shape_cast %661 : vector<8x128xf32> to vector<1x8x128xf32>
    tpu.vector_store %arg18[%664, %c0_326, %c0_327], %667 {strides = array<i32>} : memref<8x8x128xf32, #tpu.memory_space<vmem>>, vector<1x8x128xf32>,
    %c8_i32_328 = arith.constant 8 : i32
    %c0_329 = arith.constant 0 : index
    %c0_330 = arith.constant 0 : index
    %c0_331 = arith.constant 0 : index
    %668 = vector.load %arg18[%c0_329, %c0_330, %c0_331] : memref<8x8x128xf32, #tpu.memory_space<vmem>>, vector<8x8x128xf32>
    %669 = vector.shape_cast %668 : vector<8x8x128xf32> to vector<64x128xf32>
    %670 = arith.truncf %669 : vector<64x128xf32> to vector<64x128xbf16>
    %c0_332 = arith.constant 0 : index
    %c0_333 = arith.constant 0 : index
    %671 = vector.load %arg7[%c0_332, %c0_333] : memref<128x512xbf16, #tpu.memory_space<vmem>>, vector<128x512xbf16>
    %cst_334 = arith.constant dense<0.000000e+00> : vector<64x512xf32>
    %672 = tpu.matmul %670, %671, %cst_334 {dimension_numbers = #tpu.dot_dimension_numbers<[1], [0], [0], [1], [0, 0, 1, 1], [], []>} : vector<64x128xbf16>, vector<128x512xbf16>, vector<64x512xf32> -> vector<64x512xf32>
    %c0_335 = arith.constant 0 : index
    %c0_336 = arith.constant 0 : index
    %673 = vector.load %arg9[%c0_335, %c0_336] : memref<1x512xf32, #tpu.memory_space<vmem>>, vector<1x512xf32>
    %674 = vector.broadcast %673 : vector<1x512xf32> to vector<64x512xf32>
    %675 = arith.addf %672, %674 : vector<64x512xf32>
    %676 = vector.shape_cast %675 : vector<64x512xf32> to vector<8x8x512xf32>
    %c0_337 = arith.constant 0 : index
    %c0_338 = arith.constant 0 : index
    %c0_339 = arith.constant 0 : index
    %677 = vector.load %arg17[%c0_337, %c0_338, %c0_339] : memref<8x8x512xf32, #tpu.memory_space<vmem>>, vector<8x8x512xf32>
    tpu.vector_store %arg17[%c0_337, %c0_338, %c0_339], %676 {strides = array<i32>} : memref<8x8x512xf32, #tpu.memory_space<vmem>>, vector<8x8x512xf32>,
    %cst_340 = arith.constant 0.000000e+00 : f32
    %678 = vector.broadcast %cst_340 : f32 to vector<8x128xf32>
    %c0_341 = arith.constant 0 : index
    %c0_342 = arith.constant 0 : index
    %679 = vector.load %arg19[%c0_341, %c0_342] : memref<8x128xf32, #tpu.memory_space<vmem>>, vector<8x128xf32>
    tpu.vector_store %arg19[%c0_341, %c0_342], %678 {strides = array<i32>} : memref<8x128xf32, #tpu.memory_space<vmem>>, vector<8x128xf32>,
    %cst_343 = arith.constant 0.000000e+00 : f32
    %680 = vector.broadcast %cst_343 : f32 to vector<8x128xf32>
    %c0_344 = arith.constant 0 : index
    %c0_345 = arith.constant 0 : index
    %681 = vector.load %arg20[%c0_344, %c0_345] : memref<8x128xf32, #tpu.memory_space<vmem>>, vector<8x128xf32>
    tpu.vector_store %arg20[%c0_344, %c0_345], %680 {strides = array<i32>} : memref<8x128xf32, #tpu.memory_space<vmem>>, vector<8x128xf32>,
    %c0_i32_346 = arith.constant 0 : i32
    %682 = arith.index_cast %c0_i32_346 : i32 to index
    %c0_347 = arith.constant 0 : index
    %c0_348 = arith.constant 0 : index
    %683 = vector.load %arg17[%682, %c0_347, %c0_348] : memref<8x8x512xf32, #tpu.memory_space<vmem>>, vector<1x8x512xf32>
    %684 = vector.shape_cast %683 : vector<1x8x512xf32> to vector<8x512xf32>
    %c0_349 = arith.constant 0 : index
    %c0_350 = arith.constant 0 : index
    %685 = vector.load %arg19[%c0_349, %c0_350] : memref<8x128xf32, #tpu.memory_space<vmem>>, vector<8x128xf32>
    %686 = arith.truncf %685 : vector<8x128xf32> to vector<8x128xbf16>
    %c0_351 = arith.constant 0 : index
    %c0_352 = arith.constant 0 : index
    %687 = vector.load %arg8[%c0_351, %c0_352] : memref<128x512xbf16, #tpu.memory_space<vmem>>, vector<128x512xbf16>
    %cst_353 = arith.constant dense<0.000000e+00> : vector<8x512xf32>
    %688 = tpu.matmul %686, %687, %cst_353 {dimension_numbers = #tpu.dot_dimension_numbers<[1], [0], [0], [1], [0, 0, 1, 1], [], []>} : vector<8x128xbf16>, vector<128x512xbf16>, vector<8x512xf32> -> vector<8x512xf32>
    %689 = arith.addf %684, %688 : vector<8x512xf32>
    %690 = vector.extract_strided_slice %689 {offsets = [0, 0], sizes = [8, 128], strides = [1, 1]} : vector<8x512xf32> to vector<8x128xf32>
    %691 = arith.negf %690 : vector<8x128xf32>
    %692 = math.exp %691 : vector<8x128xf32>
    %cst_354 = arith.constant 1.000000e+00 : f32
    %693 = vector.broadcast %cst_354 : f32 to vector<8x128xf32>
    %694 = arith.addf %693, %692 : vector<8x128xf32>
    %695 = arith.divf %693, %694 : vector<8x128xf32>
    %696 = vector.extract_strided_slice %689 {offsets = [0, 128], sizes = [8, 128], strides = [1, 1]} : vector<8x512xf32> to vector<8x128xf32>
    %697 = arith.negf %696 : vector<8x128xf32>
    %698 = math.exp %697 : vector<8x128xf32>
    %cst_355 = arith.constant 1.000000e+00 : f32
    %699 = vector.broadcast %cst_355 : f32 to vector<8x128xf32>
    %700 = arith.addf %699, %698 : vector<8x128xf32>
    %701 = arith.divf %699, %700 : vector<8x128xf32>
    %702 = vector.extract_strided_slice %689 {offsets = [0, 256], sizes = [8, 128], strides = [1, 1]} : vector<8x512xf32> to vector<8x128xf32>
    %703 = math.tanh %702 : vector<8x128xf32>
    %704 = vector.extract_strided_slice %689 {offsets = [0, 384], sizes = [8, 128], strides = [1, 1]} : vector<8x512xf32> to vector<8x128xf32>
    %705 = arith.negf %704 : vector<8x128xf32>
    %706 = math.exp %705 : vector<8x128xf32>
    %cst_356 = arith.constant 1.000000e+00 : f32
    %707 = vector.broadcast %cst_356 : f32 to vector<8x128xf32>
    %708 = arith.addf %707, %706 : vector<8x128xf32>
    %709 = arith.divf %707, %708 : vector<8x128xf32>
    %c0_357 = arith.constant 0 : index
    %c0_358 = arith.constant 0 : index
    %710 = vector.load %arg20[%c0_357, %c0_358] : memref<8x128xf32, #tpu.memory_space<vmem>>, vector<8x128xf32>
    %711 = arith.mulf %701, %710 : vector<8x128xf32>
    %712 = arith.mulf %695, %703 : vector<8x128xf32>
    %713 = arith.addf %711, %712 : vector<8x128xf32>
    %714 = math.tanh %713 : vector<8x128xf32>
    %715 = arith.mulf %709, %714 : vector<8x128xf32>
    %c0_359 = arith.constant 0 : index
    %c0_360 = arith.constant 0 : index
    %716 = vector.load %arg20[%c0_359, %c0_360] : memref<8x128xf32, #tpu.memory_space<vmem>>, vector<8x128xf32>
    tpu.vector_store %arg20[%c0_359, %c0_360], %713 {strides = array<i32>} : memref<8x128xf32, #tpu.memory_space<vmem>>, vector<8x128xf32>,
    %c0_361 = arith.constant 0 : index
    %c0_362 = arith.constant 0 : index
    %717 = vector.load %arg19[%c0_361, %c0_362] : memref<8x128xf32, #tpu.memory_space<vmem>>, vector<8x128xf32>
    tpu.vector_store %arg19[%c0_361, %c0_362], %715 {strides = array<i32>} : memref<8x128xf32, #tpu.memory_space<vmem>>, vector<8x128xf32>,
    %c1_i32_363 = arith.constant 1 : i32
    %718 = arith.index_cast %c1_i32_363 : i32 to index
    %c0_364 = arith.constant 0 : index
    %c0_365 = arith.constant 0 : index
    %719 = vector.load %arg17[%718, %c0_364, %c0_365] : memref<8x8x512xf32, #tpu.memory_space<vmem>>, vector<1x8x512xf32>
    %720 = vector.shape_cast %719 : vector<1x8x512xf32> to vector<8x512xf32>
    %c0_366 = arith.constant 0 : index
    %c0_367 = arith.constant 0 : index
    %721 = vector.load %arg19[%c0_366, %c0_367] : memref<8x128xf32, #tpu.memory_space<vmem>>, vector<8x128xf32>
    %722 = arith.truncf %721 : vector<8x128xf32> to vector<8x128xbf16>
    %c0_368 = arith.constant 0 : index
    %c0_369 = arith.constant 0 : index
    %723 = vector.load %arg8[%c0_368, %c0_369] : memref<128x512xbf16, #tpu.memory_space<vmem>>, vector<128x512xbf16>
    %cst_370 = arith.constant dense<0.000000e+00> : vector<8x512xf32>
    %724 = tpu.matmul %722, %723, %cst_370 {dimension_numbers = #tpu.dot_dimension_numbers<[1], [0], [0], [1], [0, 0, 1, 1], [], []>} : vector<8x128xbf16>, vector<128x512xbf16>, vector<8x512xf32> -> vector<8x512xf32>
    %725 = arith.addf %720, %724 : vector<8x512xf32>
    %726 = vector.extract_strided_slice %725 {offsets = [0, 0], sizes = [8, 128], strides = [1, 1]} : vector<8x512xf32> to vector<8x128xf32>
    %727 = arith.negf %726 : vector<8x128xf32>
    %728 = math.exp %727 : vector<8x128xf32>
    %cst_371 = arith.constant 1.000000e+00 : f32
    %729 = vector.broadcast %cst_371 : f32 to vector<8x128xf32>
    %730 = arith.addf %729, %728 : vector<8x128xf32>
    %731 = arith.divf %729, %730 : vector<8x128xf32>
    %732 = vector.extract_strided_slice %725 {offsets = [0, 128], sizes = [8, 128], strides = [1, 1]} : vector<8x512xf32> to vector<8x128xf32>
    %733 = arith.negf %732 : vector<8x128xf32>
    %734 = math.exp %733 : vector<8x128xf32>
    %cst_372 = arith.constant 1.000000e+00 : f32
    %735 = vector.broadcast %cst_372 : f32 to vector<8x128xf32>
    %736 = arith.addf %735, %734 : vector<8x128xf32>
    %737 = arith.divf %735, %736 : vector<8x128xf32>
    %738 = vector.extract_strided_slice %725 {offsets = [0, 256], sizes = [8, 128], strides = [1, 1]} : vector<8x512xf32> to vector<8x128xf32>
    %739 = math.tanh %738 : vector<8x128xf32>
    %740 = vector.extract_strided_slice %725 {offsets = [0, 384], sizes = [8, 128], strides = [1, 1]} : vector<8x512xf32> to vector<8x128xf32>
    %741 = arith.negf %740 : vector<8x128xf32>
    %742 = math.exp %741 : vector<8x128xf32>
    %cst_373 = arith.constant 1.000000e+00 : f32
    %743 = vector.broadcast %cst_373 : f32 to vector<8x128xf32>
    %744 = arith.addf %743, %742 : vector<8x128xf32>
    %745 = arith.divf %743, %744 : vector<8x128xf32>
    %c0_374 = arith.constant 0 : index
    %c0_375 = arith.constant 0 : index
    %746 = vector.load %arg20[%c0_374, %c0_375] : memref<8x128xf32, #tpu.memory_space<vmem>>, vector<8x128xf32>
    %747 = arith.mulf %737, %746 : vector<8x128xf32>
    %748 = arith.mulf %731, %739 : vector<8x128xf32>
    %749 = arith.addf %747, %748 : vector<8x128xf32>
    %750 = math.tanh %749 : vector<8x128xf32>
    %751 = arith.mulf %745, %750 : vector<8x128xf32>
    %c0_376 = arith.constant 0 : index
    %c0_377 = arith.constant 0 : index
    %752 = vector.load %arg20[%c0_376, %c0_377] : memref<8x128xf32, #tpu.memory_space<vmem>>, vector<8x128xf32>
    tpu.vector_store %arg20[%c0_376, %c0_377], %749 {strides = array<i32>} : memref<8x128xf32, #tpu.memory_space<vmem>>, vector<8x128xf32>,
    %c0_378 = arith.constant 0 : index
    %c0_379 = arith.constant 0 : index
    %753 = vector.load %arg19[%c0_378, %c0_379] : memref<8x128xf32, #tpu.memory_space<vmem>>, vector<8x128xf32>
    tpu.vector_store %arg19[%c0_378, %c0_379], %751 {strides = array<i32>} : memref<8x128xf32, #tpu.memory_space<vmem>>, vector<8x128xf32>,
    %c2_i32_380 = arith.constant 2 : i32
    %754 = arith.index_cast %c2_i32_380 : i32 to index
    %c0_381 = arith.constant 0 : index
    %c0_382 = arith.constant 0 : index
    %755 = vector.load %arg17[%754, %c0_381, %c0_382] : memref<8x8x512xf32, #tpu.memory_space<vmem>>, vector<1x8x512xf32>
    %756 = vector.shape_cast %755 : vector<1x8x512xf32> to vector<8x512xf32>
    %c0_383 = arith.constant 0 : index
    %c0_384 = arith.constant 0 : index
    %757 = vector.load %arg19[%c0_383, %c0_384] : memref<8x128xf32, #tpu.memory_space<vmem>>, vector<8x128xf32>
    %758 = arith.truncf %757 : vector<8x128xf32> to vector<8x128xbf16>
    %c0_385 = arith.constant 0 : index
    %c0_386 = arith.constant 0 : index
    %759 = vector.load %arg8[%c0_385, %c0_386] : memref<128x512xbf16, #tpu.memory_space<vmem>>, vector<128x512xbf16>
    %cst_387 = arith.constant dense<0.000000e+00> : vector<8x512xf32>
    %760 = tpu.matmul %758, %759, %cst_387 {dimension_numbers = #tpu.dot_dimension_numbers<[1], [0], [0], [1], [0, 0, 1, 1], [], []>} : vector<8x128xbf16>, vector<128x512xbf16>, vector<8x512xf32> -> vector<8x512xf32>
    %761 = arith.addf %756, %760 : vector<8x512xf32>
    %762 = vector.extract_strided_slice %761 {offsets = [0, 0], sizes = [8, 128], strides = [1, 1]} : vector<8x512xf32> to vector<8x128xf32>
    %763 = arith.negf %762 : vector<8x128xf32>
    %764 = math.exp %763 : vector<8x128xf32>
    %cst_388 = arith.constant 1.000000e+00 : f32
    %765 = vector.broadcast %cst_388 : f32 to vector<8x128xf32>
    %766 = arith.addf %765, %764 : vector<8x128xf32>
    %767 = arith.divf %765, %766 : vector<8x128xf32>
    %768 = vector.extract_strided_slice %761 {offsets = [0, 128], sizes = [8, 128], strides = [1, 1]} : vector<8x512xf32> to vector<8x128xf32>
    %769 = arith.negf %768 : vector<8x128xf32>
    %770 = math.exp %769 : vector<8x128xf32>
    %cst_389 = arith.constant 1.000000e+00 : f32
    %771 = vector.broadcast %cst_389 : f32 to vector<8x128xf32>
    %772 = arith.addf %771, %770 : vector<8x128xf32>
    %773 = arith.divf %771, %772 : vector<8x128xf32>
    %774 = vector.extract_strided_slice %761 {offsets = [0, 256], sizes = [8, 128], strides = [1, 1]} : vector<8x512xf32> to vector<8x128xf32>
    %775 = math.tanh %774 : vector<8x128xf32>
    %776 = vector.extract_strided_slice %761 {offsets = [0, 384], sizes = [8, 128], strides = [1, 1]} : vector<8x512xf32> to vector<8x128xf32>
    %777 = arith.negf %776 : vector<8x128xf32>
    %778 = math.exp %777 : vector<8x128xf32>
    %cst_390 = arith.constant 1.000000e+00 : f32
    %779 = vector.broadcast %cst_390 : f32 to vector<8x128xf32>
    %780 = arith.addf %779, %778 : vector<8x128xf32>
    %781 = arith.divf %779, %780 : vector<8x128xf32>
    %c0_391 = arith.constant 0 : index
    %c0_392 = arith.constant 0 : index
    %782 = vector.load %arg20[%c0_391, %c0_392] : memref<8x128xf32, #tpu.memory_space<vmem>>, vector<8x128xf32>
    %783 = arith.mulf %773, %782 : vector<8x128xf32>
    %784 = arith.mulf %767, %775 : vector<8x128xf32>
    %785 = arith.addf %783, %784 : vector<8x128xf32>
    %786 = math.tanh %785 : vector<8x128xf32>
    %787 = arith.mulf %781, %786 : vector<8x128xf32>
    %c0_393 = arith.constant 0 : index
    %c0_394 = arith.constant 0 : index
    %788 = vector.load %arg20[%c0_393, %c0_394] : memref<8x128xf32, #tpu.memory_space<vmem>>, vector<8x128xf32>
    tpu.vector_store %arg20[%c0_393, %c0_394], %785 {strides = array<i32>} : memref<8x128xf32, #tpu.memory_space<vmem>>, vector<8x128xf32>,
    %c0_395 = arith.constant 0 : index
    %c0_396 = arith.constant 0 : index
    %789 = vector.load %arg19[%c0_395, %c0_396] : memref<8x128xf32, #tpu.memory_space<vmem>>, vector<8x128xf32>
    tpu.vector_store %arg19[%c0_395, %c0_396], %787 {strides = array<i32>} : memref<8x128xf32, #tpu.memory_space<vmem>>, vector<8x128xf32>,
    %c3_i32_397 = arith.constant 3 : i32
    %790 = arith.index_cast %c3_i32_397 : i32 to index
    %c0_398 = arith.constant 0 : index
    %c0_399 = arith.constant 0 : index
    %791 = vector.load %arg17[%790, %c0_398, %c0_399] : memref<8x8x512xf32, #tpu.memory_space<vmem>>, vector<1x8x512xf32>
    %792 = vector.shape_cast %791 : vector<1x8x512xf32> to vector<8x512xf32>
    %c0_400 = arith.constant 0 : index
    %c0_401 = arith.constant 0 : index
    %793 = vector.load %arg19[%c0_400, %c0_401] : memref<8x128xf32, #tpu.memory_space<vmem>>, vector<8x128xf32>
    %794 = arith.truncf %793 : vector<8x128xf32> to vector<8x128xbf16>
    %c0_402 = arith.constant 0 : index
    %c0_403 = arith.constant 0 : index
    %795 = vector.load %arg8[%c0_402, %c0_403] : memref<128x512xbf16, #tpu.memory_space<vmem>>, vector<128x512xbf16>
    %cst_404 = arith.constant dense<0.000000e+00> : vector<8x512xf32>
    %796 = tpu.matmul %794, %795, %cst_404 {dimension_numbers = #tpu.dot_dimension_numbers<[1], [0], [0], [1], [0, 0, 1, 1], [], []>} : vector<8x128xbf16>, vector<128x512xbf16>, vector<8x512xf32> -> vector<8x512xf32>
    %797 = arith.addf %792, %796 : vector<8x512xf32>
    %798 = vector.extract_strided_slice %797 {offsets = [0, 0], sizes = [8, 128], strides = [1, 1]} : vector<8x512xf32> to vector<8x128xf32>
    %799 = arith.negf %798 : vector<8x128xf32>
    %800 = math.exp %799 : vector<8x128xf32>
    %cst_405 = arith.constant 1.000000e+00 : f32
    %801 = vector.broadcast %cst_405 : f32 to vector<8x128xf32>
    %802 = arith.addf %801, %800 : vector<8x128xf32>
    %803 = arith.divf %801, %802 : vector<8x128xf32>
    %804 = vector.extract_strided_slice %797 {offsets = [0, 128], sizes = [8, 128], strides = [1, 1]} : vector<8x512xf32> to vector<8x128xf32>
    %805 = arith.negf %804 : vector<8x128xf32>
    %806 = math.exp %805 : vector<8x128xf32>
    %cst_406 = arith.constant 1.000000e+00 : f32
    %807 = vector.broadcast %cst_406 : f32 to vector<8x128xf32>
    %808 = arith.addf %807, %806 : vector<8x128xf32>
    %809 = arith.divf %807, %808 : vector<8x128xf32>
    %810 = vector.extract_strided_slice %797 {offsets = [0, 256], sizes = [8, 128], strides = [1, 1]} : vector<8x512xf32> to vector<8x128xf32>
    %811 = math.tanh %810 : vector<8x128xf32>
    %812 = vector.extract_strided_slice %797 {offsets = [0, 384], sizes = [8, 128], strides = [1, 1]} : vector<8x512xf32> to vector<8x128xf32>
    %813 = arith.negf %812 : vector<8x128xf32>
    %814 = math.exp %813 : vector<8x128xf32>
    %cst_407 = arith.constant 1.000000e+00 : f32
    %815 = vector.broadcast %cst_407 : f32 to vector<8x128xf32>
    %816 = arith.addf %815, %814 : vector<8x128xf32>
    %817 = arith.divf %815, %816 : vector<8x128xf32>
    %c0_408 = arith.constant 0 : index
    %c0_409 = arith.constant 0 : index
    %818 = vector.load %arg20[%c0_408, %c0_409] : memref<8x128xf32, #tpu.memory_space<vmem>>, vector<8x128xf32>
    %819 = arith.mulf %809, %818 : vector<8x128xf32>
    %820 = arith.mulf %803, %811 : vector<8x128xf32>
    %821 = arith.addf %819, %820 : vector<8x128xf32>
    %822 = math.tanh %821 : vector<8x128xf32>
    %823 = arith.mulf %817, %822 : vector<8x128xf32>
    %c0_410 = arith.constant 0 : index
    %c0_411 = arith.constant 0 : index
    %824 = vector.load %arg20[%c0_410, %c0_411] : memref<8x128xf32, #tpu.memory_space<vmem>>, vector<8x128xf32>
    tpu.vector_store %arg20[%c0_410, %c0_411], %821 {strides = array<i32>} : memref<8x128xf32, #tpu.memory_space<vmem>>, vector<8x128xf32>,
    %c0_412 = arith.constant 0 : index
    %c0_413 = arith.constant 0 : index
    %825 = vector.load %arg19[%c0_412, %c0_413] : memref<8x128xf32, #tpu.memory_space<vmem>>, vector<8x128xf32>
    tpu.vector_store %arg19[%c0_412, %c0_413], %823 {strides = array<i32>} : memref<8x128xf32, #tpu.memory_space<vmem>>, vector<8x128xf32>,
    %c4_i32_414 = arith.constant 4 : i32
    %826 = arith.index_cast %c4_i32_414 : i32 to index
    %c0_415 = arith.constant 0 : index
    %c0_416 = arith.constant 0 : index
    %827 = vector.load %arg17[%826, %c0_415, %c0_416] : memref<8x8x512xf32, #tpu.memory_space<vmem>>, vector<1x8x512xf32>
    %828 = vector.shape_cast %827 : vector<1x8x512xf32> to vector<8x512xf32>
    %c0_417 = arith.constant 0 : index
    %c0_418 = arith.constant 0 : index
    %829 = vector.load %arg19[%c0_417, %c0_418] : memref<8x128xf32, #tpu.memory_space<vmem>>, vector<8x128xf32>
    %830 = arith.truncf %829 : vector<8x128xf32> to vector<8x128xbf16>
    %c0_419 = arith.constant 0 : index
    %c0_420 = arith.constant 0 : index
    %831 = vector.load %arg8[%c0_419, %c0_420] : memref<128x512xbf16, #tpu.memory_space<vmem>>, vector<128x512xbf16>
    %cst_421 = arith.constant dense<0.000000e+00> : vector<8x512xf32>
    %832 = tpu.matmul %830, %831, %cst_421 {dimension_numbers = #tpu.dot_dimension_numbers<[1], [0], [0], [1], [0, 0, 1, 1], [], []>} : vector<8x128xbf16>, vector<128x512xbf16>, vector<8x512xf32> -> vector<8x512xf32>
    %833 = arith.addf %828, %832 : vector<8x512xf32>
    %834 = vector.extract_strided_slice %833 {offsets = [0, 0], sizes = [8, 128], strides = [1, 1]} : vector<8x512xf32> to vector<8x128xf32>
    %835 = arith.negf %834 : vector<8x128xf32>
    %836 = math.exp %835 : vector<8x128xf32>
    %cst_422 = arith.constant 1.000000e+00 : f32
    %837 = vector.broadcast %cst_422 : f32 to vector<8x128xf32>
    %838 = arith.addf %837, %836 : vector<8x128xf32>
    %839 = arith.divf %837, %838 : vector<8x128xf32>
    %840 = vector.extract_strided_slice %833 {offsets = [0, 128], sizes = [8, 128], strides = [1, 1]} : vector<8x512xf32> to vector<8x128xf32>
    %841 = arith.negf %840 : vector<8x128xf32>
    %842 = math.exp %841 : vector<8x128xf32>
    %cst_423 = arith.constant 1.000000e+00 : f32
    %843 = vector.broadcast %cst_423 : f32 to vector<8x128xf32>
    %844 = arith.addf %843, %842 : vector<8x128xf32>
    %845 = arith.divf %843, %844 : vector<8x128xf32>
    %846 = vector.extract_strided_slice %833 {offsets = [0, 256], sizes = [8, 128], strides = [1, 1]} : vector<8x512xf32> to vector<8x128xf32>
    %847 = math.tanh %846 : vector<8x128xf32>
    %848 = vector.extract_strided_slice %833 {offsets = [0, 384], sizes = [8, 128], strides = [1, 1]} : vector<8x512xf32> to vector<8x128xf32>
    %849 = arith.negf %848 : vector<8x128xf32>
    %850 = math.exp %849 : vector<8x128xf32>
    %cst_424 = arith.constant 1.000000e+00 : f32
    %851 = vector.broadcast %cst_424 : f32 to vector<8x128xf32>
    %852 = arith.addf %851, %850 : vector<8x128xf32>
    %853 = arith.divf %851, %852 : vector<8x128xf32>
    %c0_425 = arith.constant 0 : index
    %c0_426 = arith.constant 0 : index
    %854 = vector.load %arg20[%c0_425, %c0_426] : memref<8x128xf32, #tpu.memory_space<vmem>>, vector<8x128xf32>
    %855 = arith.mulf %845, %854 : vector<8x128xf32>
    %856 = arith.mulf %839, %847 : vector<8x128xf32>
    %857 = arith.addf %855, %856 : vector<8x128xf32>
    %858 = math.tanh %857 : vector<8x128xf32>
    %859 = arith.mulf %853, %858 : vector<8x128xf32>
    %c0_427 = arith.constant 0 : index
    %c0_428 = arith.constant 0 : index
    %860 = vector.load %arg20[%c0_427, %c0_428] : memref<8x128xf32, #tpu.memory_space<vmem>>, vector<8x128xf32>
    tpu.vector_store %arg20[%c0_427, %c0_428], %857 {strides = array<i32>} : memref<8x128xf32, #tpu.memory_space<vmem>>, vector<8x128xf32>,
    %c0_429 = arith.constant 0 : index
    %c0_430 = arith.constant 0 : index
    %861 = vector.load %arg19[%c0_429, %c0_430] : memref<8x128xf32, #tpu.memory_space<vmem>>, vector<8x128xf32>
    tpu.vector_store %arg19[%c0_429, %c0_430], %859 {strides = array<i32>} : memref<8x128xf32, #tpu.memory_space<vmem>>, vector<8x128xf32>,
    %c5_i32_431 = arith.constant 5 : i32
    %862 = arith.index_cast %c5_i32_431 : i32 to index
    %c0_432 = arith.constant 0 : index
    %c0_433 = arith.constant 0 : index
    %863 = vector.load %arg17[%862, %c0_432, %c0_433] : memref<8x8x512xf32, #tpu.memory_space<vmem>>, vector<1x8x512xf32>
    %864 = vector.shape_cast %863 : vector<1x8x512xf32> to vector<8x512xf32>
    %c0_434 = arith.constant 0 : index
    %c0_435 = arith.constant 0 : index
    %865 = vector.load %arg19[%c0_434, %c0_435] : memref<8x128xf32, #tpu.memory_space<vmem>>, vector<8x128xf32>
    %866 = arith.truncf %865 : vector<8x128xf32> to vector<8x128xbf16>
    %c0_436 = arith.constant 0 : index
    %c0_437 = arith.constant 0 : index
    %867 = vector.load %arg8[%c0_436, %c0_437] : memref<128x512xbf16, #tpu.memory_space<vmem>>, vector<128x512xbf16>
    %cst_438 = arith.constant dense<0.000000e+00> : vector<8x512xf32>
    %868 = tpu.matmul %866, %867, %cst_438 {dimension_numbers = #tpu.dot_dimension_numbers<[1], [0], [0], [1], [0, 0, 1, 1], [], []>} : vector<8x128xbf16>, vector<128x512xbf16>, vector<8x512xf32> -> vector<8x512xf32>
    %869 = arith.addf %864, %868 : vector<8x512xf32>
    %870 = vector.extract_strided_slice %869 {offsets = [0, 0], sizes = [8, 128], strides = [1, 1]} : vector<8x512xf32> to vector<8x128xf32>
    %871 = arith.negf %870 : vector<8x128xf32>
    %872 = math.exp %871 : vector<8x128xf32>
    %cst_439 = arith.constant 1.000000e+00 : f32
    %873 = vector.broadcast %cst_439 : f32 to vector<8x128xf32>
    %874 = arith.addf %873, %872 : vector<8x128xf32>
    %875 = arith.divf %873, %874 : vector<8x128xf32>
    %876 = vector.extract_strided_slice %869 {offsets = [0, 128], sizes = [8, 128], strides = [1, 1]} : vector<8x512xf32> to vector<8x128xf32>
    %877 = arith.negf %876 : vector<8x128xf32>
    %878 = math.exp %877 : vector<8x128xf32>
    %cst_440 = arith.constant 1.000000e+00 : f32
    %879 = vector.broadcast %cst_440 : f32 to vector<8x128xf32>
    %880 = arith.addf %879, %878 : vector<8x128xf32>
    %881 = arith.divf %879, %880 : vector<8x128xf32>
    %882 = vector.extract_strided_slice %869 {offsets = [0, 256], sizes = [8, 128], strides = [1, 1]} : vector<8x512xf32> to vector<8x128xf32>
    %883 = math.tanh %882 : vector<8x128xf32>
    %884 = vector.extract_strided_slice %869 {offsets = [0, 384], sizes = [8, 128], strides = [1, 1]} : vector<8x512xf32> to vector<8x128xf32>
    %885 = arith.negf %884 : vector<8x128xf32>
    %886 = math.exp %885 : vector<8x128xf32>
    %cst_441 = arith.constant 1.000000e+00 : f32
    %887 = vector.broadcast %cst_441 : f32 to vector<8x128xf32>
    %888 = arith.addf %887, %886 : vector<8x128xf32>
    %889 = arith.divf %887, %888 : vector<8x128xf32>
    %c0_442 = arith.constant 0 : index
    %c0_443 = arith.constant 0 : index
    %890 = vector.load %arg20[%c0_442, %c0_443] : memref<8x128xf32, #tpu.memory_space<vmem>>, vector<8x128xf32>
    %891 = arith.mulf %881, %890 : vector<8x128xf32>
    %892 = arith.mulf %875, %883 : vector<8x128xf32>
    %893 = arith.addf %891, %892 : vector<8x128xf32>
    %894 = math.tanh %893 : vector<8x128xf32>
    %895 = arith.mulf %889, %894 : vector<8x128xf32>
    %c0_444 = arith.constant 0 : index
    %c0_445 = arith.constant 0 : index
    %896 = vector.load %arg20[%c0_444, %c0_445] : memref<8x128xf32, #tpu.memory_space<vmem>>, vector<8x128xf32>
    tpu.vector_store %arg20[%c0_444, %c0_445], %893 {strides = array<i32>} : memref<8x128xf32, #tpu.memory_space<vmem>>, vector<8x128xf32>,
    %c0_446 = arith.constant 0 : index
    %c0_447 = arith.constant 0 : index
    %897 = vector.load %arg19[%c0_446, %c0_447] : memref<8x128xf32, #tpu.memory_space<vmem>>, vector<8x128xf32>
    tpu.vector_store %arg19[%c0_446, %c0_447], %895 {strides = array<i32>} : memref<8x128xf32, #tpu.memory_space<vmem>>, vector<8x128xf32>,
    %c6_i32_448 = arith.constant 6 : i32
    %898 = arith.index_cast %c6_i32_448 : i32 to index
    %c0_449 = arith.constant 0 : index
    %c0_450 = arith.constant 0 : index
    %899 = vector.load %arg17[%898, %c0_449, %c0_450] : memref<8x8x512xf32, #tpu.memory_space<vmem>>, vector<1x8x512xf32>
    %900 = vector.shape_cast %899 : vector<1x8x512xf32> to vector<8x512xf32>
    %c0_451 = arith.constant 0 : index
    %c0_452 = arith.constant 0 : index
    %901 = vector.load %arg19[%c0_451, %c0_452] : memref<8x128xf32, #tpu.memory_space<vmem>>, vector<8x128xf32>
    %902 = arith.truncf %901 : vector<8x128xf32> to vector<8x128xbf16>
    %c0_453 = arith.constant 0 : index
    %c0_454 = arith.constant 0 : index
    %903 = vector.load %arg8[%c0_453, %c0_454] : memref<128x512xbf16, #tpu.memory_space<vmem>>, vector<128x512xbf16>
    %cst_455 = arith.constant dense<0.000000e+00> : vector<8x512xf32>
    %904 = tpu.matmul %902, %903, %cst_455 {dimension_numbers = #tpu.dot_dimension_numbers<[1], [0], [0], [1], [0, 0, 1, 1], [], []>} : vector<8x128xbf16>, vector<128x512xbf16>, vector<8x512xf32> -> vector<8x512xf32>
    %905 = arith.addf %900, %904 : vector<8x512xf32>
    %906 = vector.extract_strided_slice %905 {offsets = [0, 0], sizes = [8, 128], strides = [1, 1]} : vector<8x512xf32> to vector<8x128xf32>
    %907 = arith.negf %906 : vector<8x128xf32>
    %908 = math.exp %907 : vector<8x128xf32>
    %cst_456 = arith.constant 1.000000e+00 : f32
    %909 = vector.broadcast %cst_456 : f32 to vector<8x128xf32>
    %910 = arith.addf %909, %908 : vector<8x128xf32>
    %911 = arith.divf %909, %910 : vector<8x128xf32>
    %912 = vector.extract_strided_slice %905 {offsets = [0, 128], sizes = [8, 128], strides = [1, 1]} : vector<8x512xf32> to vector<8x128xf32>
    %913 = arith.negf %912 : vector<8x128xf32>
    %914 = math.exp %913 : vector<8x128xf32>
    %cst_457 = arith.constant 1.000000e+00 : f32
    %915 = vector.broadcast %cst_457 : f32 to vector<8x128xf32>
    %916 = arith.addf %915, %914 : vector<8x128xf32>
    %917 = arith.divf %915, %916 : vector<8x128xf32>
    %918 = vector.extract_strided_slice %905 {offsets = [0, 256], sizes = [8, 128], strides = [1, 1]} : vector<8x512xf32> to vector<8x128xf32>
    %919 = math.tanh %918 : vector<8x128xf32>
    %920 = vector.extract_strided_slice %905 {offsets = [0, 384], sizes = [8, 128], strides = [1, 1]} : vector<8x512xf32> to vector<8x128xf32>
    %921 = arith.negf %920 : vector<8x128xf32>
    %922 = math.exp %921 : vector<8x128xf32>
    %cst_458 = arith.constant 1.000000e+00 : f32
    %923 = vector.broadcast %cst_458 : f32 to vector<8x128xf32>
    %924 = arith.addf %923, %922 : vector<8x128xf32>
    %925 = arith.divf %923, %924 : vector<8x128xf32>
    %c0_459 = arith.constant 0 : index
    %c0_460 = arith.constant 0 : index
    %926 = vector.load %arg20[%c0_459, %c0_460] : memref<8x128xf32, #tpu.memory_space<vmem>>, vector<8x128xf32>
    %927 = arith.mulf %917, %926 : vector<8x128xf32>
    %928 = arith.mulf %911, %919 : vector<8x128xf32>
    %929 = arith.addf %927, %928 : vector<8x128xf32>
    %930 = math.tanh %929 : vector<8x128xf32>
    %931 = arith.mulf %925, %930 : vector<8x128xf32>
    %c0_461 = arith.constant 0 : index
    %c0_462 = arith.constant 0 : index
    %932 = vector.load %arg20[%c0_461, %c0_462] : memref<8x128xf32, #tpu.memory_space<vmem>>, vector<8x128xf32>
    tpu.vector_store %arg20[%c0_461, %c0_462], %929 {strides = array<i32>} : memref<8x128xf32, #tpu.memory_space<vmem>>, vector<8x128xf32>,
    %c0_463 = arith.constant 0 : index
    %c0_464 = arith.constant 0 : index
    %933 = vector.load %arg19[%c0_463, %c0_464] : memref<8x128xf32, #tpu.memory_space<vmem>>, vector<8x128xf32>
    tpu.vector_store %arg19[%c0_463, %c0_464], %931 {strides = array<i32>} : memref<8x128xf32, #tpu.memory_space<vmem>>, vector<8x128xf32>,
    %c7_i32_465 = arith.constant 7 : i32
    %934 = arith.index_cast %c7_i32_465 : i32 to index
    %c0_466 = arith.constant 0 : index
    %c0_467 = arith.constant 0 : index
    %935 = vector.load %arg17[%934, %c0_466, %c0_467] : memref<8x8x512xf32, #tpu.memory_space<vmem>>, vector<1x8x512xf32>
    %936 = vector.shape_cast %935 : vector<1x8x512xf32> to vector<8x512xf32>
    %c0_468 = arith.constant 0 : index
    %c0_469 = arith.constant 0 : index
    %937 = vector.load %arg19[%c0_468, %c0_469] : memref<8x128xf32, #tpu.memory_space<vmem>>, vector<8x128xf32>
    %938 = arith.truncf %937 : vector<8x128xf32> to vector<8x128xbf16>
    %c0_470 = arith.constant 0 : index
    %c0_471 = arith.constant 0 : index
    %939 = vector.load %arg8[%c0_470, %c0_471] : memref<128x512xbf16, #tpu.memory_space<vmem>>, vector<128x512xbf16>
    %cst_472 = arith.constant dense<0.000000e+00> : vector<8x512xf32>
    %940 = tpu.matmul %938, %939, %cst_472 {dimension_numbers = #tpu.dot_dimension_numbers<[1], [0], [0], [1], [0, 0, 1, 1], [], []>} : vector<8x128xbf16>, vector<128x512xbf16>, vector<8x512xf32> -> vector<8x512xf32>
    %941 = arith.addf %936, %940 : vector<8x512xf32>
    %942 = vector.extract_strided_slice %941 {offsets = [0, 0], sizes = [8, 128], strides = [1, 1]} : vector<8x512xf32> to vector<8x128xf32>
    %943 = arith.negf %942 : vector<8x128xf32>
    %944 = math.exp %943 : vector<8x128xf32>
    %cst_473 = arith.constant 1.000000e+00 : f32
    %945 = vector.broadcast %cst_473 : f32 to vector<8x128xf32>
    %946 = arith.addf %945, %944 : vector<8x128xf32>
    %947 = arith.divf %945, %946 : vector<8x128xf32>
    %948 = vector.extract_strided_slice %941 {offsets = [0, 128], sizes = [8, 128], strides = [1, 1]} : vector<8x512xf32> to vector<8x128xf32>
    %949 = arith.negf %948 : vector<8x128xf32>
    %950 = math.exp %949 : vector<8x128xf32>
    %cst_474 = arith.constant 1.000000e+00 : f32
    %951 = vector.broadcast %cst_474 : f32 to vector<8x128xf32>
    %952 = arith.addf %951, %950 : vector<8x128xf32>
    %953 = arith.divf %951, %952 : vector<8x128xf32>
    %954 = vector.extract_strided_slice %941 {offsets = [0, 256], sizes = [8, 128], strides = [1, 1]} : vector<8x512xf32> to vector<8x128xf32>
    %955 = math.tanh %954 : vector<8x128xf32>
    %956 = vector.extract_strided_slice %941 {offsets = [0, 384], sizes = [8, 128], strides = [1, 1]} : vector<8x512xf32> to vector<8x128xf32>
    %957 = arith.negf %956 : vector<8x128xf32>
    %958 = math.exp %957 : vector<8x128xf32>
    %cst_475 = arith.constant 1.000000e+00 : f32
    %959 = vector.broadcast %cst_475 : f32 to vector<8x128xf32>
    %960 = arith.addf %959, %958 : vector<8x128xf32>
    %961 = arith.divf %959, %960 : vector<8x128xf32>
    %c0_476 = arith.constant 0 : index
    %c0_477 = arith.constant 0 : index
    %962 = vector.load %arg20[%c0_476, %c0_477] : memref<8x128xf32, #tpu.memory_space<vmem>>, vector<8x128xf32>
    %963 = arith.mulf %953, %962 : vector<8x128xf32>
    %964 = arith.mulf %947, %955 : vector<8x128xf32>
    %965 = arith.addf %963, %964 : vector<8x128xf32>
    %966 = math.tanh %965 : vector<8x128xf32>
    %967 = arith.mulf %961, %966 : vector<8x128xf32>
    %c0_478 = arith.constant 0 : index
    %c0_479 = arith.constant 0 : index
    %968 = vector.load %arg20[%c0_478, %c0_479] : memref<8x128xf32, #tpu.memory_space<vmem>>, vector<8x128xf32>
    tpu.vector_store %arg20[%c0_478, %c0_479], %965 {strides = array<i32>} : memref<8x128xf32, #tpu.memory_space<vmem>>, vector<8x128xf32>,
    %c0_480 = arith.constant 0 : index
    %c0_481 = arith.constant 0 : index
    %969 = vector.load %arg19[%c0_480, %c0_481] : memref<8x128xf32, #tpu.memory_space<vmem>>, vector<8x128xf32>
    tpu.vector_store %arg19[%c0_480, %c0_481], %967 {strides = array<i32>} : memref<8x128xf32, #tpu.memory_space<vmem>>, vector<8x128xf32>,
    %c8_i32_482 = arith.constant 8 : i32
    %c0_483 = arith.constant 0 : index
    %c0_484 = arith.constant 0 : index
    %970 = vector.load %arg19[%c0_483, %c0_484] : memref<8x128xf32, #tpu.memory_space<vmem>>, vector<8x128xf32>
    %971 = arith.truncf %970 : vector<8x128xf32> to vector<8x128xbf16>
    %c0_485 = arith.constant 0 : index
    %c0_486 = arith.constant 0 : index
    %972 = vector.load %arg10[%c0_485, %c0_486] : memref<128x128xbf16, #tpu.memory_space<vmem>>, vector<128x128xbf16>
    %cst_487 = arith.constant dense<0.000000e+00> : vector<8x128xf32>
    %973 = tpu.matmul %971, %972, %cst_487 {dimension_numbers = #tpu.dot_dimension_numbers<[1], [0], [0], [1], [0, 0, 1, 1], [], []>} : vector<8x128xbf16>, vector<128x128xbf16>, vector<8x128xf32> -> vector<8x128xf32>
    %c0_488 = arith.constant 0 : index
    %c0_489 = arith.constant 0 : index
    %974 = vector.load %arg11[%c0_488, %c0_489] : memref<1x128xf32, #tpu.memory_space<vmem>>, vector<1x128xf32>
    %975 = vector.broadcast %974 : vector<1x128xf32> to vector<8x128xf32>
    %976 = arith.addf %973, %975 : vector<8x128xf32>
    %cst_490 = arith.constant 0.000000e+00 : f32
    %977 = vector.broadcast %cst_490 : f32 to vector<8x128xf32>
    %978 = arith.maximumf %976, %977 : vector<8x128xf32>
    %979 = arith.truncf %978 : vector<8x128xf32> to vector<8x128xbf16>
    %c0_491 = arith.constant 0 : index
    %c0_492 = arith.constant 0 : index
    %980 = vector.load %arg12[%c0_491, %c0_492] : memref<128x128xbf16, #tpu.memory_space<vmem>>, vector<128x128xbf16>
    %cst_493 = arith.constant dense<0.000000e+00> : vector<8x128xf32>
    %981 = tpu.matmul %979, %980, %cst_493 {dimension_numbers = #tpu.dot_dimension_numbers<[1], [0], [0], [1], [0, 0, 1, 1], [], []>} : vector<8x128xbf16>, vector<128x128xbf16>, vector<8x128xf32> -> vector<8x128xf32>
    %c0_494 = arith.constant 0 : index
    %c0_495 = arith.constant 0 : index
    %982 = vector.load %arg13[%c0_494, %c0_495] : memref<1x128xf32, #tpu.memory_space<vmem>>, vector<1x128xf32>
    %983 = vector.broadcast %982 : vector<1x128xf32> to vector<8x128xf32>
    %984 = arith.addf %981, %983 : vector<8x128xf32>
    %cst_496 = arith.constant 0.000000e+00 : f32
    %985 = vector.broadcast %cst_496 : f32 to vector<8x128xf32>
    %986 = arith.maximumf %984, %985 : vector<8x128xf32>
    %987 = arith.truncf %986 : vector<8x128xf32> to vector<8x128xbf16>
    %c0_497 = arith.constant 0 : index
    %c0_498 = arith.constant 0 : index
    %988 = vector.load %arg14[%c0_497, %c0_498] : memref<128x128xbf16, #tpu.memory_space<vmem>>, vector<128x128xbf16>
    %cst_499 = arith.constant dense<0.000000e+00> : vector<8x128xf32>
    %989 = tpu.matmul %987, %988, %cst_499 {dimension_numbers = #tpu.dot_dimension_numbers<[1], [0], [0], [1], [0, 0, 1, 1], [], []>} : vector<8x128xbf16>, vector<128x128xbf16>, vector<8x128xf32> -> vector<8x128xf32>
    %c0_500 = arith.constant 0 : index
    %c0_501 = arith.constant 0 : index
    %990 = vector.load %arg15[%c0_500, %c0_501] : memref<1x128xf32, #tpu.memory_space<vmem>>, vector<1x128xf32>
    %991 = vector.broadcast %990 : vector<1x128xf32> to vector<8x128xf32>
    %992 = arith.addf %989, %991 : vector<8x128xf32>
    %c0_502 = arith.constant 0 : index
    %c0_503 = arith.constant 0 : index
    %993 = vector.load %arg16[%c0_502, %c0_503] : memref<8x128xf32, #tpu.memory_space<vmem>>, vector<8x128xf32>
    tpu.vector_store %arg16[%c0_502, %c0_503], %992 {strides = array<i32>} : memref<8x128xf32, #tpu.memory_space<vmem>>, vector<8x128xf32>,
    return
  }
}

</mosaic_0001>

<llo_original>
// kernel: forward.1
$region0: #{forward.1}
  #allocation0 [shape = 'u32[]', space=smem, size = 0x4, offset = 0x4, fixed_abs, tag = 'smem constant byte address 0x4 - core index']
  #allocation1 [shape = 'u32[144,128]{1,0:T(1,128)}', space=vmem, size = 0x12000, scoped, tag = 'internal scratch']
  #allocation2 [shape = 'f32[8,8,512]{2,1,0:T(8,128)}', space=vmem, size = 0x20000, scoped, tag = 'scratch operand']
  #allocation3 [shape = 'f32[8,8,128]{2,1,0:T(8,128)}', space=vmem, size = 0x8000, scoped, tag = 'scratch operand']
  #allocation4 [shape = 'f32[8,128]{1,0:T(8,128)}', space=vmem, size = 0x1000, scoped, tag = 'scratch operand']
  #allocation5 [shape = 'f32[8,128]{1,0:T(8,128)}', space=vmem, size = 0x1000, scoped, tag = 'scratch operand']
  %s0 = inlined_call_operand.vmem [shape: f32[8,8,128], index: 0, kind: input, shape index: {}]
  %s1 = inlined_call_operand.vmem [shape: bf16[128,512], index: 1, kind: input, shape index: {}]
  %s2 = inlined_call_operand.vmem [shape: bf16[128,512], index: 2, kind: input, shape index: {}]
  %s3 = inlined_call_operand.vmem [shape: f32[1,512], index: 3, kind: input, shape index: {}]
  %s4 = inlined_call_operand.vmem [shape: bf16[128,512], index: 4, kind: input, shape index: {}]
  %s5 = inlined_call_operand.vmem [shape: bf16[128,512], index: 5, kind: input, shape index: {}]
  %s6 = inlined_call_operand.vmem [shape: f32[1,512], index: 6, kind: input, shape index: {}]
  %s7 = inlined_call_operand.vmem [shape: bf16[128,512], index: 7, kind: input, shape index: {}]
  %s8 = inlined_call_operand.vmem [shape: bf16[128,512], index: 8, kind: input, shape index: {}]
  %s9 = inlined_call_operand.vmem [shape: f32[1,512], index: 9, kind: input, shape index: {}]
  %s10 = inlined_call_operand.vmem [shape: bf16[128,128], index: 10, kind: input, shape index: {}]
  %s11 = inlined_call_operand.vmem [shape: f32[1,128], index: 11, kind: input, shape index: {}]
  %s12 = inlined_call_operand.vmem [shape: bf16[128,128], index: 12, kind: input, shape index: {}]
  %s13 = inlined_call_operand.vmem [shape: f32[1,128], index: 13, kind: input, shape index: {}]
  %s14 = inlined_call_operand.vmem [shape: bf16[128,128], index: 14, kind: input, shape index: {}]
  %s15 = inlined_call_operand.vmem [shape: f32[1,128], index: 15, kind: input, shape index: {}]
  %s16 = inlined_call_operand.vmem [shape: f32[8,128], index: 16, kind: output, shape index: {}]
  %s17 = sld [smem:[#allocation0]]
  $region74: #{forward.1} parent=0
    _
  %s19 = ssub.s32 1, %s17
  %s20 = scalar_select 0, %s19, %s17
  // Predicated region
  $region2: #{forward.1} parent=0 // pred_check
    _
  $region3: #{forward.1} parent=0 // pred_check_branch
    %22 = sbr.rel (0) target = $region5
  $region4: #{forward.1} parent=0 // pred_region
    _
  $region5: #{forward.1} parent=0 // pred_fallthru
    _
  // Predicated region
  $region6: #{forward.1} parent=0 // pred_check
    _
  $region7: #{forward.1} parent=0 // pred_check_branch
    %24 = sbr.rel (0) target = $region9
  $region8: #{forward.1} parent=0 // pred_region
    _
  $region9: #{forward.1} parent=0 // pred_fallthru
    _
  // Predicated region
  $region10: #{forward.1} parent=0 // pred_check
    _
  $region11: #{forward.1} parent=0 // pred_check_branch
    %26 = sbr.rel (0) target = $region13
  $region12: #{forward.1} parent=0 // pred_region
    _
  $region13: #{forward.1} parent=0 // pred_fallthru
    _
  // Predicated region
  $region14: #{forward.1} parent=0 // pred_check
    _
  $region15: #{forward.1} parent=0 // pred_check_branch
    %28 = sbr.rel (0) target = $region17
  $region16: #{forward.1} parent=0 // pred_region
    _
  $region17: #{forward.1} parent=0 // pred_fallthru
    _
  // Predicated region
  $region18: #{forward.1} parent=0 // pred_check
    _
  $region19: #{forward.1} parent=0 // pred_check_branch
    %30 = sbr.rel (0) target = $region21
  $region20: #{forward.1} parent=0 // pred_region
    _
  $region21: #{forward.1} parent=0 // pred_fallthru
    _
  // Predicated region
  $region22: #{forward.1} parent=0 // pred_check
    _
  $region23: #{forward.1} parent=0 // pred_check_branch
    %32 = sbr.rel (0) target = $region25
  $region24: #{forward.1} parent=0 // pred_region
    _
  $region25: #{forward.1} parent=0 // pred_fallthru
    _
  // Predicated region
  $region26: #{forward.1} parent=0 // pred_check
    _
  $region27: #{forward.1} parent=0 // pred_check_branch
    %34 = sbr.rel (0) target = $region29
  $region28: #{forward.1} parent=0 // pred_region
    _
  $region29: #{forward.1} parent=0 // pred_fallthru
    _
  // Predicated region
  $region30: #{forward.1} parent=0 // pred_check
    _
  $region31: #{forward.1} parent=0 // pred_check_branch
    %36 = sbr.rel (0) target = $region33
  $region32: #{forward.1} parent=0 // pred_region
    _
  $region33: #{forward.1} parent=0 // pred_fallthru
    _
  // Predicated region
  $region34: #{forward.1} parent=0 // pred_check
    _
  $region35: #{forward.1} parent=0 // pred_check_branch
    %38 = sbr.rel (0) target = $region37
  $region36: #{forward.1} parent=0 // pred_region
    _
  $region37: #{forward.1} parent=0 // pred_fallthru
    _
  // Predicated region
  $region38: #{forward.1} parent=0 // pred_check
    _
  $region39: #{forward.1} parent=0 // pred_check_branch
    %40 = sbr.rel (0) target = $region41
  $region40: #{forward.1} parent=0 // pred_region
    _
  $region41: #{forward.1} parent=0 // pred_fallthru
    _
  // Predicated region
  $region42: #{forward.1} parent=0 // pred_check
    _
  $region43: #{forward.1} parent=0 // pred_check_branch
    %42 = sbr.rel (0) target = $region45
  $region44: #{forward.1} parent=0 // pred_region
    _
  $region45: #{forward.1} parent=0 // pred_fallthru
    _
  // Predicated region
  $region46: #{forward.1} parent=0 // pred_check
    _
  $region47: #{forward.1} parent=0 // pred_check_branch
    %44 = sbr.rel (0) target = $region49
  $region48: #{forward.1} parent=0 // pred_region
    _
  $region49: #{forward.1} parent=0 // pred_fallthru
    _
  // Predicated region
  $region50: #{forward.1} parent=0 // pred_check
    _
  $region51: #{forward.1} parent=0 // pred_check_branch
    %46 = sbr.rel (0) target = $region53
  $region52: #{forward.1} parent=0 // pred_region
    _
  $region53: #{forward.1} parent=0 // pred_fallthru
    _
  // Predicated region
  $region54: #{forward.1} parent=0 // pred_check
    _
  $region55: #{forward.1} parent=0 // pred_check_branch
    %48 = sbr.rel (0) target = $region57
  $region56: #{forward.1} parent=0 // pred_region
    _
  $region57: #{forward.1} parent=0 // pred_fallthru
    _
  // Predicated region
  $region58: #{forward.1} parent=0 // pred_check
    _
  $region59: #{forward.1} parent=0 // pred_check_branch
    %50 = sbr.rel (0) target = $region61
  $region60: #{forward.1} parent=0 // pred_region
    _
  $region61: #{forward.1} parent=0 // pred_fallthru
    _
  // Predicated region
  $region62: #{forward.1} parent=0 // pred_check
    _
  $region63: #{forward.1} parent=0 // pred_check_branch
    %52 = sbr.rel (0) target = $region65
  $region64: #{forward.1} parent=0 // pred_region
    _
  $region65: #{forward.1} parent=0 // pred_fallthru
    _
  %v54 = vld [vmem:[%s0] sm:$0xff]
  %v55 = vld [vmem:[%s0 + $0x8] sm:$0xff]
  %v56 = vld [vmem:[%s0 + $0x10] sm:$0xff]
  %v57 = vld [vmem:[%s0 + $0x18] sm:$0xff]
  %v58 = vld [vmem:[%s0 + $0x20] sm:$0xff]
  %v59 = vld [vmem:[%s0 + $0x28] sm:$0xff]
  %v60 = vld [vmem:[%s0 + $0x30] sm:$0xff]
  %v61 = vld [vmem:[%s0 + $0x38] sm:$0xff]
  %v62 = vpack.c.bf16 %v55, %v54
  %v63 = vpack.c.bf16 %v57, %v56
  %v64 = vpack.c.bf16 %v59, %v58
  %v65 = vpack.c.bf16 %v61, %v60
  %v66 = vld [vmem:[%s1] sm:$0xff]
  %v67 = vld [vmem:[%s1 + $0x8] sm:$0xff]
  %v68 = vld [vmem:[%s1 + $0x10] sm:$0xff]
  %v69 = vld [vmem:[%s1 + $0x18] sm:$0xff]
  %v70 = vld [vmem:[%s1 + $0x20] sm:$0xff]
  %v71 = vld [vmem:[%s1 + $0x28] sm:$0xff]
  %v72 = vld [vmem:[%s1 + $0x30] sm:$0xff]
  %v73 = vld [vmem:[%s1 + $0x38] sm:$0xff]
  %v74 = vld [vmem:[%s1 + $0x40] sm:$0xff]
  %v75 = vld [vmem:[%s1 + $0x48] sm:$0xff]
  %v76 = vld [vmem:[%s1 + $0x50] sm:$0xff]
  %v77 = vld [vmem:[%s1 + $0x58] sm:$0xff]
  %v78 = vld [vmem:[%s1 + $0x60] sm:$0xff]
  %v79 = vld [vmem:[%s1 + $0x68] sm:$0xff]
  %v80 = vld [vmem:[%s1 + $0x70] sm:$0xff]
  %v81 = vld [vmem:[%s1 + $0x78] sm:$0xff]
  %v82 = vld [vmem:[%s1 + $0x80] sm:$0xff]
  %v83 = vld [vmem:[%s1 + $0x88] sm:$0xff]
  %v84 = vld [vmem:[%s1 + $0x90] sm:$0xff]
  %v85 = vld [vmem:[%s1 + $0x98] sm:$0xff]
  %v86 = vld [vmem:[%s1 + $0xa0] sm:$0xff]
  %v87 = vld [vmem:[%s1 + $0xa8] sm:$0xff]
  %v88 = vld [vmem:[%s1 + $0xb0] sm:$0xff]
  %v89 = vld [vmem:[%s1 + $0xb8] sm:$0xff]
  %v90 = vld [vmem:[%s1 + $0xc0] sm:$0xff]
  %v91 = vld [vmem:[%s1 + $0xc8] sm:$0xff]
  %v92 = vld [vmem:[%s1 + $0xd0] sm:$0xff]
  %v93 = vld [vmem:[%s1 + $0xd8] sm:$0xff]
  %v94 = vld [vmem:[%s1 + $0xe0] sm:$0xff]
  %v95 = vld [vmem:[%s1 + $0xe8] sm:$0xff]
  %v96 = vld [vmem:[%s1 + $0xf0] sm:$0xff]
  %v97 = vld [vmem:[%s1 + $0xf8] sm:$0xff]
  %v98 = vld [vmem:[%s3] sm:$0xf]
  %v100 = vlaneseq
  %v101 = vshrl.u32 %v100, 7
  %v102 = vsub.s32 0, %v101
  %v103 = vrot.slane %v98, %v102
  %v104 = vlaneseq
  %v105 = vshrl.u32 %v104, 7
  %v106 = vsub.s32 1, %v105
  %v107 = vrot.slane %v98, %v106
  %v108 = vlaneseq
  %v109 = vshrl.u32 %v108, 7
  %v110 = vsub.s32 2, %v109
  %v111 = vrot.slane %v98, %v110
  %v112 = vlaneseq
  %v113 = vshrl.u32 %v112, 7
  %v114 = vsub.s32 3, %v113
  %v115 = vrot.slane %v98, %v114
  %v152 = vunpack.c.l.b16 %v66
  %v153 = vunpack.c.h.b16 %v66
  %v154 = vunpack.c.l.b16 %v67
  %v155 = vunpack.c.h.b16 %v67
  %v156 = vunpack.c.l.b16 %v68
  %v157 = vunpack.c.h.b16 %v68
  %v158 = vunpack.c.l.b16 %v69
  %v159 = vunpack.c.h.b16 %v69
  %v160 = vunpack.c.l.b16 %v70
  %v161 = vunpack.c.h.b16 %v70
  %v162 = vunpack.c.l.b16 %v71
  %v163 = vunpack.c.h.b16 %v71
  %v164 = vunpack.c.l.b16 %v72
  %v165 = vunpack.c.h.b16 %v72
  %v166 = vunpack.c.l.b16 %v73
  %v167 = vunpack.c.h.b16 %v73
  %v168 = vunpack.c.l.b16 %v74
  %v169 = vunpack.c.h.b16 %v74
  %v170 = vunpack.c.l.b16 %v75
  %v171 = vunpack.c.h.b16 %v75
  %v172 = vunpack.c.l.b16 %v76
  %v173 = vunpack.c.h.b16 %v76
  %v174 = vunpack.c.l.b16 %v77
  %v175 = vunpack.c.h.b16 %v77
  %v176 = vunpack.c.l.b16 %v78
  %v177 = vunpack.c.h.b16 %v78
  %v178 = vunpack.c.l.b16 %v79
  %v179 = vunpack.c.h.b16 %v79
  %v180 = vunpack.c.l.b16 %v80
  %v181 = vunpack.c.h.b16 %v80
  %v182 = vunpack.c.l.b16 %v81
  %v183 = vunpack.c.h.b16 %v81
  %v184 = vunpack.c.l.b16 %v82
  %v185 = vunpack.c.h.b16 %v82
  %v186 = vunpack.c.l.b16 %v83
  %v187 = vunpack.c.h.b16 %v83
  %v188 = vunpack.c.l.b16 %v84
  %v189 = vunpack.c.h.b16 %v84
  %v190 = vunpack.c.l.b16 %v85
  %v191 = vunpack.c.h.b16 %v85
  %v192 = vunpack.c.l.b16 %v86
  %v193 = vunpack.c.h.b16 %v86
  %v194 = vunpack.c.l.b16 %v87
  %v195 = vunpack.c.h.b16 %v87
  %v196 = vunpack.c.l.b16 %v88
  %v197 = vunpack.c.h.b16 %v88
  %v198 = vunpack.c.l.b16 %v89
  %v199 = vunpack.c.h.b16 %v89
  %v200 = vunpack.c.l.b16 %v90
  %v201 = vunpack.c.h.b16 %v90
  %v202 = vunpack.c.l.b16 %v91
  %v203 = vunpack.c.h.b16 %v91
  %v204 = vunpack.c.l.b16 %v92
  %v205 = vunpack.c.h.b16 %v92
  %v206 = vunpack.c.l.b16 %v93
  %v207 = vunpack.c.h.b16 %v93
  %v208 = vunpack.c.l.b16 %v94
  %v209 = vunpack.c.h.b16 %v94
  %v210 = vunpack.c.l.b16 %v95
  %v211 = vunpack.c.h.b16 %v95
  %v212 = vunpack.c.l.b16 %v96
  %v213 = vunpack.c.h.b16 %v96
  %v214 = vunpack.c.l.b16 %v97
  %v215 = vunpack.c.h.b16 %v97
  %v216 = vpack.c.b16 %v156, %v152
  %v217 = vpack.c.b16 %v157, %v153
  %v218 = vpack.c.b16 %v158, %v154
  %v219 = vpack.c.b16 %v159, %v155
  %v220 = vpack.c.b16 %v164, %v160
  %v221 = vpack.c.b16 %v165, %v161
  %v222 = vpack.c.b16 %v166, %v162
  %v223 = vpack.c.b16 %v167, %v163
  %v224 = vpack.c.b16 %v172, %v168
  %v225 = vpack.c.b16 %v173, %v169
  %v226 = vpack.c.b16 %v174, %v170
  %v227 = vpack.c.b16 %v175, %v171
  %v228 = vpack.c.b16 %v180, %v176
  %v229 = vpack.c.b16 %v181, %v177
  %v230 = vpack.c.b16 %v182, %v178
  %v231 = vpack.c.b16 %v183, %v179
  %v232 = vpack.c.b16 %v188, %v184
  %v233 = vpack.c.b16 %v189, %v185
  %v234 = vpack.c.b16 %v190, %v186
  %v235 = vpack.c.b16 %v191, %v187
  %v236 = vpack.c.b16 %v196, %v192
  %v237 = vpack.c.b16 %v197, %v193
  %v238 = vpack.c.b16 %v198, %v194
  %v239 = vpack.c.b16 %v199, %v195
  %v240 = vpack.c.b16 %v204, %v200
  %v241 = vpack.c.b16 %v205, %v201
  %v242 = vpack.c.b16 %v206, %v202
  %v243 = vpack.c.b16 %v207, %v203
  %v244 = vpack.c.b16 %v212, %v208
  %v245 = vpack.c.b16 %v213, %v209
  %v246 = vpack.c.b16 %v214, %v210
  %v247 = vpack.c.b16 %v215, %v211
  %280 = vmatprep.subr.bf16.mxu0 %v217
  %281 = vmatpush1.bf16.msra.mxu0 %v216
  %282 = vmatprep.subr.bf16.mxu0 %v221
  %283 = vmatpush1.bf16.msra.mxu0 %v220
  %284 = vmatprep.subr.bf16.mxu0 %v225
  %285 = vmatpush1.bf16.msra.mxu0 %v224
  %286 = vmatprep.subr.bf16.mxu0 %v229
  %287 = vmatpush1.bf16.msra.mxu0 %v228
  %288 = vmatprep.subr.bf16.mxu0 %v233
  %289 = vmatpush1.bf16.msra.mxu0 %v232
  %290 = vmatprep.subr.bf16.mxu0 %v237
  %291 = vmatpush1.bf16.msra.mxu0 %v236
  %292 = vmatprep.subr.bf16.mxu0 %v241
  %293 = vmatpush1.bf16.msra.mxu0 %v240
  %294 = vmatprep.subr.bf16.mxu0 %v245
  %295 = vmatpush1.bf16.msra.mxu0 %v244
  %296 = vmatprep.subr.bf16.mxu0 0
  %297 = vmatpush1.bf16.msra.mxu0 0
  %298 = vmatprep.subr.bf16.mxu0 0
  %299 = vmatpush1.bf16.msra.mxu0 0
  %300 = vmatprep.subr.bf16.mxu0 0
  %301 = vmatpush1.bf16.msra.mxu0 0
  %302 = vmatprep.subr.bf16.mxu0 0
  %303 = vmatpush1.bf16.msra.mxu0 0
  %304 = vmatprep.subr.bf16.mxu0 0
  %305 = vmatpush1.bf16.msra.mxu0 0
  %306 = vmatprep.subr.bf16.mxu0 0
  %307 = vmatpush1.bf16.msra.mxu0 0
  %308 = vmatprep.subr.bf16.mxu0 0
  %309 = vmatpush1.bf16.msra.mxu0 0
  %310 = vmatprep.subr.bf16.mxu0 0
  %311 = vmatpush1.bf16.msra.mxu0 0
  %312 = vmatprep.mubr.bf16.mxu0 0
  %313 = vmatmul.mubr.bf16.gmra.mrb[0].mxu0 %v62
  %v314 = vpop.f32.mrb[0].mxu0
  %v315 = vadd.f32 %v103, %v314
  %v316 = vpop.f32.mrb[0].mxu0
  %v317 = vadd.f32 %v107, %v316
  %v318 = vpop.f32.mrb[0].mxu0
  %v319 = vadd.f32 %v103, %v318
  %v320 = vpop.f32.mrb[0].mxu0
  %v321 = vadd.f32 %v107, %v320
  %322 = vmatprep.mubr.bf16.mxu0 0
  %323 = vmatmul.mubr.bf16.gmra.mrb[0].mxu0 %v63
  %v324 = vpop.f32.mrb[0].mxu0
  %v325 = vadd.f32 %v103, %v324
  %v326 = vpop.f32.mrb[0].mxu0
  %v327 = vadd.f32 %v107, %v326
  %v328 = vpop.f32.mrb[0].mxu0
  %v329 = vadd.f32 %v103, %v328
  %v330 = vpop.f32.mrb[0].mxu0
  %v331 = vadd.f32 %v107, %v330
  %332 = vmatprep.mubr.bf16.mxu0 0
  %333 = vmatmul.mubr.bf16.gmra.mrb[0].mxu0 %v64
  %v334 = vpop.f32.mrb[0].mxu0
  %v335 = vadd.f32 %v103, %v334
  %v336 = vpop.f32.mrb[0].mxu0
  %v337 = vadd.f32 %v107, %v336
  %v338 = vpop.f32.mrb[0].mxu0
  %v339 = vadd.f32 %v103, %v338
  %v340 = vpop.f32.mrb[0].mxu0
  %v341 = vadd.f32 %v107, %v340
  %342 = vmatprep.mubr.bf16.mxu0 0
  %343 = vmatmul.mubr.bf16.gmra.mrb[0].mxu0 %v65
  %v344 = vpop.f32.mrb[0].mxu0
  %v345 = vadd.f32 %v103, %v344
  %v346 = vpop.f32.mrb[0].mxu0
  %v347 = vadd.f32 %v107, %v346
  %v348 = vpop.f32.mrb[0].mxu0
  %v349 = vadd.f32 %v103, %v348
  %v350 = vpop.f32.mrb[0].mxu0
  %v351 = vadd.f32 %v107, %v350
  %352 = vdwg.mxu0
  %353 = vmatprep.subr.bf16.mxu0 %v219
  %354 = vmatpush1.bf16.msra.mxu0 %v218
  %355 = vmatprep.subr.bf16.mxu0 %v223
  %356 = vmatpush1.bf16.msra.mxu0 %v222
  %357 = vmatprep.subr.bf16.mxu0 %v227
  %358 = vmatpush1.bf16.msra.mxu0 %v226
  %359 = vmatprep.subr.bf16.mxu0 %v231
  %360 = vmatpush1.bf16.msra.mxu0 %v230
  %361 = vmatprep.subr.bf16.mxu0 %v235
  %362 = vmatpush1.bf16.msra.mxu0 %v234
  %363 = vmatprep.subr.bf16.mxu0 %v239
  %364 = vmatpush1.bf16.msra.mxu0 %v238
  %365 = vmatprep.subr.bf16.mxu0 %v243
  %366 = vmatpush1.bf16.msra.mxu0 %v242
  %367 = vmatprep.subr.bf16.mxu0 %v247
  %368 = vmatpush1.bf16.msra.mxu0 %v246
  %369 = vmatprep.subr.bf16.mxu0 0
  %370 = vmatpush1.bf16.msra.mxu0 0
  %371 = vmatprep.subr.bf16.mxu0 0
  %372 = vmatpush1.bf16.msra.mxu0 0
  %373 = vmatprep.subr.bf16.mxu0 0
  %374 = vmatpush1.bf16.msra.mxu0 0
  %375 = vmatprep.subr.bf16.mxu0 0
  %376 = vmatpush1.bf16.msra.mxu0 0
  %377 = vmatprep.subr.bf16.mxu0 0
  %378 = vmatpush1.bf16.msra.mxu0 0
  %379 = vmatprep.subr.bf16.mxu0 0
  %380 = vmatpush1.bf16.msra.mxu0 0
  %381 = vmatprep.subr.bf16.mxu0 0
  %382 = vmatpush1.bf16.msra.mxu0 0
  %383 = vmatprep.subr.bf16.mxu0 0
  %384 = vmatpush1.bf16.msra.mxu0 0
  %385 = vmatprep.mubr.bf16.mxu0 0
  %386 = vmatmul.mubr.bf16.gmra.mrb[0].mxu0 %v62
  %v387 = vpop.f32.mrb[0].mxu0
  %v388 = vadd.f32 %v111, %v387
  %v389 = vpop.f32.mrb[0].mxu0
  %v390 = vadd.f32 %v115, %v389
  %v391 = vpop.f32.mrb[0].mxu0
  %v392 = vadd.f32 %v111, %v391
  %v393 = vpop.f32.mrb[0].mxu0
  %v394 = vadd.f32 %v115, %v393
  %395 = vmatprep.mubr.bf16.mxu0 0
  %396 = vmatmul.mubr.bf16.gmra.mrb[0].mxu0 %v63
  %v397 = vpop.f32.mrb[0].mxu0
  %v398 = vadd.f32 %v111, %v397
  %v399 = vpop.f32.mrb[0].mxu0
  %v400 = vadd.f32 %v115, %v399
  %v401 = vpop.f32.mrb[0].mxu0
  %v402 = vadd.f32 %v111, %v401
  %v403 = vpop.f32.mrb[0].mxu0
  %v404 = vadd.f32 %v115, %v403
  %405 = vmatprep.mubr.bf16.mxu0 0
  %406 = vmatmul.mubr.bf16.gmra.mrb[0].mxu0 %v64
  %v407 = vpop.f32.mrb[0].mxu0
  %v408 = vadd.f32 %v111, %v407
  %v409 = vpop.f32.mrb[0].mxu0
  %v410 = vadd.f32 %v115, %v409
  %v411 = vpop.f32.mrb[0].mxu0
  %v412 = vadd.f32 %v111, %v411
  %v413 = vpop.f32.mrb[0].mxu0
  %v414 = vadd.f32 %v115, %v413
  %415 = vmatprep.mubr.bf16.mxu0 0
  %416 = vmatmul.mubr.bf16.gmra.mrb[0].mxu0 %v65
  %v417 = vpop.f32.mrb[0].mxu0
  %v418 = vadd.f32 %v111, %v417
  %v419 = vpop.f32.mrb[0].mxu0
  %v420 = vadd.f32 %v115, %v419
  %v421 = vpop.f32.mrb[0].mxu0
  %v422 = vadd.f32 %v111, %v421
  %v423 = vpop.f32.mrb[0].mxu0
  %v424 = vadd.f32 %v115, %v423
  %425 = vdwg.mxu0
  %426 = vst [vmem:[#allocation2] sm:$0xff] %v315
  %427 = vst [vmem:[#allocation2 + $0x8] sm:$0xff] %v317
  %428 = vst [vmem:[#allocation2 + $0x10] sm:$0xff] %v388
  %429 = vst [vmem:[#allocation2 + $0x18] sm:$0xff] %v390
  %430 = vst [vmem:[#allocation2 + $0x20] sm:$0xff] %v319
  %431 = vst [vmem:[#allocation2 + $0x28] sm:$0xff] %v321
  %432 = vst [vmem:[#allocation2 + $0x30] sm:$0xff] %v392
  %433 = vst [vmem:[#allocation2 + $0x38] sm:$0xff] %v394
  %434 = vst [vmem:[#allocation2 + $0x40] sm:$0xff] %v325
  %435 = vst [vmem:[#allocation2 + $0x48] sm:$0xff] %v327
  %436 = vst [vmem:[#allocation2 + $0x50] sm:$0xff] %v398
  %437 = vst [vmem:[#allocation2 + $0x58] sm:$0xff] %v400
  %438 = vst [vmem:[#allocation2 + $0x60] sm:$0xff] %v329
  %439 = vst [vmem:[#allocation2 + $0x68] sm:$0xff] %v331
  %440 = vst [vmem:[#allocation2 + $0x70] sm:$0xff] %v402
  %441 = vst [vmem:[#allocation2 + $0x78] sm:$0xff] %v404
  %442 = vst [vmem:[#allocation2 + $0x80] sm:$0xff] %v335
  %443 = vst [vmem:[#allocation2 + $0x88] sm:$0xff] %v337
  %444 = vst [vmem:[#allocation2 + $0x90] sm:$0xff] %v408
  %445 = vst [vmem:[#allocation2 + $0x98] sm:$0xff] %v410
  %446 = vst [vmem:[#allocation2 + $0xa0] sm:$0xff] %v339
  %447 = vst [vmem:[#allocation2 + $0xa8] sm:$0xff] %v341
  %448 = vst [vmem:[#allocation2 + $0xb0] sm:$0xff] %v412
  %449 = vst [vmem:[#allocation2 + $0xb8] sm:$0xff] %v414
  %450 = vst [vmem:[#allocation2 + $0xc0] sm:$0xff] %v345
  %451 = vst [vmem:[#allocation2 + $0xc8] sm:$0xff] %v347
  %452 = vst [vmem:[#allocation2 + $0xd0] sm:$0xff] %v418
  %453 = vst [vmem:[#allocation2 + $0xd8] sm:$0xff] %v420
  %454 = vst [vmem:[#allocation2 + $0xe0] sm:$0xff] %v349
  %455 = vst [vmem:[#allocation2 + $0xe8] sm:$0xff] %v351
  %456 = vst [vmem:[#allocation2 + $0xf0] sm:$0xff] %v422
  %457 = vst [vmem:[#allocation2 + $0xf8] sm:$0xff] %v424
  %458 = vst [vmem:[#allocation4] sm:$0xff] 0.0
  %459 = vst [vmem:[#allocation5] sm:$0xff] 0.0
  %v460 = vld [vmem:[#allocation2] sm:$0xff]
  %v461 = vld [vmem:[#allocation2 + $0x8] sm:$0xff]
  %v462 = vld [vmem:[#allocation2 + $0x10] sm:$0xff]
  %v463 = vld [vmem:[#allocation2 + $0x18] sm:$0xff]
  %v464 = vld [vmem:[#allocation4] sm:$0xff]
  %v465 = vpack.c.bf16 %v464, %v464
  %v466 = vld [vmem:[%s2] sm:$0xff]
  %v467 = vld [vmem:[%s2 + $0x8] sm:$0xff]
  %v468 = vld [vmem:[%s2 + $0x10] sm:$0xff]
  %v469 = vld [vmem:[%s2 + $0x18] sm:$0xff]
  %v470 = vld [vmem:[%s2 + $0x20] sm:$0xff]
  %v471 = vld [vmem:[%s2 + $0x28] sm:$0xff]
  %v472 = vld [vmem:[%s2 + $0x30] sm:$0xff]
  %v473 = vld [vmem:[%s2 + $0x38] sm:$0xff]
  %v474 = vld [vmem:[%s2 + $0x40] sm:$0xff]
  %v475 = vld [vmem:[%s2 + $0x48] sm:$0xff]
  %v476 = vld [vmem:[%s2 + $0x50] sm:$0xff]
  %v477 = vld [vmem:[%s2 + $0x58] sm:$0xff]
  %v478 = vld [vmem:[%s2 + $0x60] sm:$0xff]
  %v479 = vld [vmem:[%s2 + $0x68] sm:$0xff]
  %v480 = vld [vmem:[%s2 + $0x70] sm:$0xff]
  %v481 = vld [vmem:[%s2 + $0x78] sm:$0xff]
  %v482 = vld [vmem:[%s2 + $0x80] sm:$0xff]
  %v483 = vld [vmem:[%s2 + $0x88] sm:$0xff]
  %v484 = vld [vmem:[%s2 + $0x90] sm:$0xff]
  %v485 = vld [vmem:[%s2 + $0x98] sm:$0xff]
  %v486 = vld [vmem:[%s2 + $0xa0] sm:$0xff]
  %v487 = vld [vmem:[%s2 + $0xa8] sm:$0xff]
  %v488 = vld [vmem:[%s2 + $0xb0] sm:$0xff]
  %v489 = vld [vmem:[%s2 + $0xb8] sm:$0xff]
  %v490 = vld [vmem:[%s2 + $0xc0] sm:$0xff]
  %v491 = vld [vmem:[%s2 + $0xc8] sm:$0xff]
  %v492 = vld [vmem:[%s2 + $0xd0] sm:$0xff]
  %v493 = vld [vmem:[%s2 + $0xd8] sm:$0xff]
  %v494 = vld [vmem:[%s2 + $0xe0] sm:$0xff]
  %v495 = vld [vmem:[%s2 + $0xe8] sm:$0xff]
  %v496 = vld [vmem:[%s2 + $0xf0] sm:$0xff]
  %v497 = vld [vmem:[%s2 + $0xf8] sm:$0xff]
  %v530 = vunpack.c.l.b16 %v466
  %v531 = vunpack.c.h.b16 %v466
  %v532 = vunpack.c.l.b16 %v467
  %v533 = vunpack.c.h.b16 %v467
  %v534 = vunpack.c.l.b16 %v468
  %v535 = vunpack.c.h.b16 %v468
  %v536 = vunpack.c.l.b16 %v469
  %v537 = vunpack.c.h.b16 %v469
  %v538 = vunpack.c.l.b16 %v470
  %v539 = vunpack.c.h.b16 %v470
  %v540 = vunpack.c.l.b16 %v471
  %v541 = vunpack.c.h.b16 %v471
  %v542 = vunpack.c.l.b16 %v472
  %v543 = vunpack.c.h.b16 %v472
  %v544 = vunpack.c.l.b16 %v473
  %v545 = vunpack.c.h.b16 %v473
  %v546 = vunpack.c.l.b16 %v474
  %v547 = vunpack.c.h.b16 %v474
  %v548 = vunpack.c.l.b16 %v475
  %v549 = vunpack.c.h.b16 %v475
  %v550 = vunpack.c.l.b16 %v476
  %v551 = vunpack.c.h.b16 %v476
  %v552 = vunpack.c.l.b16 %v477
  %v553 = vunpack.c.h.b16 %v477
  %v554 = vunpack.c.l.b16 %v478
  %v555 = vunpack.c.h.b16 %v478
  %v556 = vunpack.c.l.b16 %v479
  %v557 = vunpack.c.h.b16 %v479
  %v558 = vunpack.c.l.b16 %v480
  %v559 = vunpack.c.h.b16 %v480
  %v560 = vunpack.c.l.b16 %v481
  %v561 = vunpack.c.h.b16 %v481
  %v562 = vunpack.c.l.b16 %v482
  %v563 = vunpack.c.h.b16 %v482
  %v564 = vunpack.c.l.b16 %v483
  %v565 = vunpack.c.h.b16 %v483
  %v566 = vunpack.c.l.b16 %v484
  %v567 = vunpack.c.h.b16 %v484
  %v568 = vunpack.c.l.b16 %v485
  %v569 = vunpack.c.h.b16 %v485
  %v570 = vunpack.c.l.b16 %v486
  %v571 = vunpack.c.h.b16 %v486
  %v572 = vunpack.c.l.b16 %v487
  %v573 = vunpack.c.h.b16 %v487
  %v574 = vunpack.c.l.b16 %v488
  %v575 = vunpack.c.h.b16 %v488
  %v576 = vunpack.c.l.b16 %v489
  %v577 = vunpack.c.h.b16 %v489
  %v578 = vunpack.c.l.b16 %v490
  %v579 = vunpack.c.h.b16 %v490
  %v580 = vunpack.c.l.b16 %v491
  %v581 = vunpack.c.h.b16 %v491
  %v582 = vunpack.c.l.b16 %v492
  %v583 = vunpack.c.h.b16 %v492
  %v584 = vunpack.c.l.b16 %v493
  %v585 = vunpack.c.h.b16 %v493
  %v586 = vunpack.c.l.b16 %v494
  %v587 = vunpack.c.h.b16 %v494
  %v588 = vunpack.c.l.b16 %v495
  %v589 = vunpack.c.h.b16 %v495
  %v590 = vunpack.c.l.b16 %v496
  %v591 = vunpack.c.h.b16 %v496
  %v592 = vunpack.c.l.b16 %v497
  %v593 = vunpack.c.h.b16 %v497
  %v594 = vpack.c.b16 %v534, %v530
  %v595 = vpack.c.b16 %v535, %v531
  %v596 = vpack.c.b16 %v536, %v532
  %v597 = vpack.c.b16 %v537, %v533
  %v598 = vpack.c.b16 %v542, %v538
  %v599 = vpack.c.b16 %v543, %v539
  %v600 = vpack.c.b16 %v544, %v540
  %v601 = vpack.c.b16 %v545, %v541
  %v602 = vpack.c.b16 %v550, %v546
  %v603 = vpack.c.b16 %v551, %v547
  %v604 = vpack.c.b16 %v552, %v548
  %v605 = vpack.c.b16 %v553, %v549
  %v606 = vpack.c.b16 %v558, %v554
  %v607 = vpack.c.b16 %v559, %v555
  %v608 = vpack.c.b16 %v560, %v556
  %v609 = vpack.c.b16 %v561, %v557
  %v610 = vpack.c.b16 %v566, %v562
  %v611 = vpack.c.b16 %v567, %v563
  %v612 = vpack.c.b16 %v568, %v564
  %v613 = vpack.c.b16 %v569, %v565
  %v614 = vpack.c.b16 %v574, %v570
  %v615 = vpack.c.b16 %v575, %v571
  %v616 = vpack.c.b16 %v576, %v572
  %v617 = vpack.c.b16 %v577, %v573
  %v618 = vpack.c.b16 %v582, %v578
  %v619 = vpack.c.b16 %v583, %v579
  %v620 = vpack.c.b16 %v584, %v580
  %v621 = vpack.c.b16 %v585, %v581
  %v622 = vpack.c.b16 %v590, %v586
  %v623 = vpack.c.b16 %v591, %v587
  %v624 = vpack.c.b16 %v592, %v588
  %v625 = vpack.c.b16 %v593, %v589
  %658 = vmatprep.subr.bf16.mxu0 %v595
  %659 = vmatpush1.bf16.msra.mxu0 %v594
  %660 = vmatprep.subr.bf16.mxu0 %v599
  %661 = vmatpush1.bf16.msra.mxu0 %v598
  %662 = vmatprep.subr.bf16.mxu0 %v603
  %663 = vmatpush1.bf16.msra.mxu0 %v602
  %664 = vmatprep.subr.bf16.mxu0 %v607
  %665 = vmatpush1.bf16.msra.mxu0 %v606
  %666 = vmatprep.subr.bf16.mxu0 %v611
  %667 = vmatpush1.bf16.msra.mxu0 %v610
  %668 = vmatprep.subr.bf16.mxu0 %v615
  %669 = vmatpush1.bf16.msra.mxu0 %v614
  %670 = vmatprep.subr.bf16.mxu0 %v619
  %671 = vmatpush1.bf16.msra.mxu0 %v618
  %672 = vmatprep.subr.bf16.mxu0 %v623
  %673 = vmatpush1.bf16.msra.mxu0 %v622
  %674 = vmatprep.subr.bf16.mxu0 0
  %675 = vmatpush1.bf16.msra.mxu0 0
  %676 = vmatprep.subr.bf16.mxu0 0
  %677 = vmatpush1.bf16.msra.mxu0 0
  %678 = vmatprep.subr.bf16.mxu0 0
  %679 = vmatpush1.bf16.msra.mxu0 0
  %680 = vmatprep.subr.bf16.mxu0 0
  %681 = vmatpush1.bf16.msra.mxu0 0
  %682 = vmatprep.subr.bf16.mxu0 0
  %683 = vmatpush1.bf16.msra.mxu0 0
  %684 = vmatprep.subr.bf16.mxu0 0
  %685 = vmatpush1.bf16.msra.mxu0 0
  %686 = vmatprep.subr.bf16.mxu0 0
  %687 = vmatpush1.bf16.msra.mxu0 0
  %688 = vmatprep.subr.bf16.mxu0 0
  %689 = vmatpush1.bf16.msra.mxu0 0
  %690 = vmatprep.mubr.bf16.mxu0 0
  %691 = vmatmul.mubr.bf16.gmra.mrb[0].mxu0 %v465
  %v692 = vpop.f32.mrb[0].mxu0
  %v693 = vadd.f32 0.0, %v692
  %v694 = vpop.f32.mrb[0].mxu0
  %v695 = vadd.f32 0.0, %v694
  %v696 = vpop.f32.mrb[0].mxu0
  %v697 = vpop.f32.mrb[0].mxu0
  %698 = vdwg.mxu0
  %699 = vmatprep.subr.bf16.mxu0 %v597
  %700 = vmatpush1.bf16.msra.mxu0 %v596
  %701 = vmatprep.subr.bf16.mxu0 %v601
  %702 = vmatpush1.bf16.msra.mxu0 %v600
  %703 = vmatprep.subr.bf16.mxu0 %v605
  %704 = vmatpush1.bf16.msra.mxu0 %v604
  %705 = vmatprep.subr.bf16.mxu0 %v609
  %706 = vmatpush1.bf16.msra.mxu0 %v608
  %707 = vmatprep.subr.bf16.mxu0 %v613
  %708 = vmatpush1.bf16.msra.mxu0 %v612
  %709 = vmatprep.subr.bf16.mxu0 %v617
  %710 = vmatpush1.bf16.msra.mxu0 %v616
  %711 = vmatprep.subr.bf16.mxu0 %v621
  %712 = vmatpush1.bf16.msra.mxu0 %v620
  %713 = vmatprep.subr.bf16.mxu0 %v625
  %714 = vmatpush1.bf16.msra.mxu0 %v624
  %715 = vmatprep.subr.bf16.mxu0 0
  %716 = vmatpush1.bf16.msra.mxu0 0
  %717 = vmatprep.subr.bf16.mxu0 0
  %718 = vmatpush1.bf16.msra.mxu0 0
  %719 = vmatprep.subr.bf16.mxu0 0
  %720 = vmatpush1.bf16.msra.mxu0 0
  %721 = vmatprep.subr.bf16.mxu0 0
  %722 = vmatpush1.bf16.msra.mxu0 0
  %723 = vmatprep.subr.bf16.mxu0 0
  %724 = vmatpush1.bf16.msra.mxu0 0
  %725 = vmatprep.subr.bf16.mxu0 0
  %726 = vmatpush1.bf16.msra.mxu0 0
  %727 = vmatprep.subr.bf16.mxu0 0
  %728 = vmatpush1.bf16.msra.mxu0 0
  %729 = vmatprep.subr.bf16.mxu0 0
  %730 = vmatpush1.bf16.msra.mxu0 0
  %731 = vmatprep.mubr.bf16.mxu0 0
  %732 = vmatmul.mubr.bf16.gmra.mrb[0].mxu0 %v465
  %v733 = vpop.f32.mrb[0].mxu0
  %v734 = vadd.f32 0.0, %v733
  %v735 = vpop.f32.mrb[0].mxu0
  %v736 = vadd.f32 0.0, %v735
  %v737 = vpop.f32.mrb[0].mxu0
  %v738 = vpop.f32.mrb[0].mxu0
  %739 = vdwg.mxu0
  %v740 = vadd.f32 %v460, %v693
  %v741 = vadd.f32 %v461, %v695
  %v742 = vadd.f32 %v462, %v734
  %v743 = vadd.f32 %v463, %v736
  %v744 = vxor.u32 %v740, 2147483648
  %v745 = vmul.f32 %v744, 1.442695
  %v746 = vpow.pop %v745
  %v747 = vadd.f32 %v746, 1.0
  %v748 = vrcp.pop %v747
  %v749 = vmul.f32 1.0, %v748
  %v750 = vxor.u32 %v741, 2147483648
  %v751 = vmul.f32 %v750, 1.442695
  %v752 = vpow.pop %v751
  %v753 = vadd.f32 %v752, 1.0
  %v754 = vrcp.pop %v753
  %v755 = vmul.f32 1.0, %v754
  %v756 = vtanh.pop %v742
  %v757 = vxor.u32 %v743, 2147483648
  %v758 = vmul.f32 %v757, 1.442695
  %v759 = vpow.pop %v758
  %v760 = vadd.f32 %v759, 1.0
  %v761 = vrcp.pop %v760
  %v762 = vmul.f32 1.0, %v761
  %v763 = vld [vmem:[#allocation5] sm:$0xff]
  %v764 = vmul.f32 %v755, %v763
  %v765 = vmul.f32 %v749, %v756
  %v766 = vadd.f32 %v764, %v765
  %v767 = vtanh.pop %v766
  %v768 = vmul.f32 %v762, %v767
  %769 = vst [vmem:[#allocation5] sm:$0xff] %v766
  %770 = vst [vmem:[#allocation4] sm:$0xff] %v768
  %771 = vst [vmem:[#allocation3] sm:$0xff] %v768
  %s772 = scalar_lea.vmem [#allocation2], 32
  %v773 = vld [vmem:[%s772] sm:$0xff]
  %v774 = vld [vmem:[%s772 + $0x8] sm:$0xff]
  %v775 = vld [vmem:[%s772 + $0x10] sm:$0xff]
  %v776 = vld [vmem:[%s772 + $0x18] sm:$0xff]
  %v777 = vld [vmem:[#allocation4] sm:$0xff]
  %v778 = vpack.c.bf16 %v777, %v777
  %v779 = vld [vmem:[%s2] sm:$0xff]
  %v780 = vld [vmem:[%s2 + $0x8] sm:$0xff]
  %v781 = vld [vmem:[%s2 + $0x10] sm:$0xff]
  %v782 = vld [vmem:[%s2 + $0x18] sm:$0xff]
  %v783 = vld [vmem:[%s2 + $0x20] sm:$0xff]
  %v784 = vld [vmem:[%s2 + $0x28] sm:$0xff]
  %v785 = vld [vmem:[%s2 + $0x30] sm:$0xff]
  %v786 = vld [vmem:[%s2 + $0x38] sm:$0xff]
  %v787 = vld [vmem:[%s2 + $0x40] sm:$0xff]
  %v788 = vld [vmem:[%s2 + $0x48] sm:$0xff]
  %v789 = vld [vmem:[%s2 + $0x50] sm:$0xff]
  %v790 = vld [vmem:[%s2 + $0x58] sm:$0xff]
  %v791 = vld [vmem:[%s2 + $0x60] sm:$0xff]
  %v792 = vld [vmem:[%s2 + $0x68] sm:$0xff]
  %v793 = vld [vmem:[%s2 + $0x70] sm:$0xff]
  %v794 = vld [vmem:[%s2 + $0x78] sm:$0xff]
  %v795 = vld [vmem:[%s2 + $0x80] sm:$0xff]
  %v796 = vld [vmem:[%s2 + $0x88] sm:$0xff]
  %v797 = vld [vmem:[%s2 + $0x90] sm:$0xff]
  %v798 = vld [vmem:[%s2 + $0x98] sm:$0xff]
  %v799 = vld [vmem:[%s2 + $0xa0] sm:$0xff]
  %v800 = vld [vmem:[%s2 + $0xa8] sm:$0xff]
  %v801 = vld [vmem:[%s2 + $0xb0] sm:$0xff]
  %v802 = vld [vmem:[%s2 + $0xb8] sm:$0xff]
  %v803 = vld [vmem:[%s2 + $0xc0] sm:$0xff]
  %v804 = vld [vmem:[%s2 + $0xc8] sm:$0xff]
  %v805 = vld [vmem:[%s2 + $0xd0] sm:$0xff]
  %v806 = vld [vmem:[%s2 + $0xd8] sm:$0xff]
  %v807 = vld [vmem:[%s2 + $0xe0] sm:$0xff]
  %v808 = vld [vmem:[%s2 + $0xe8] sm:$0xff]
  %v809 = vld [vmem:[%s2 + $0xf0] sm:$0xff]
  %v810 = vld [vmem:[%s2 + $0xf8] sm:$0xff]
  %v843 = vunpack.c.l.b16 %v779
  %v844 = vunpack.c.h.b16 %v779
  %v845 = vunpack.c.l.b16 %v780
  %v846 = vunpack.c.h.b16 %v780
  %v847 = vunpack.c.l.b16 %v781
  %v848 = vunpack.c.h.b16 %v781
  %v849 = vunpack.c.l.b16 %v782
  %v850 = vunpack.c.h.b16 %v782
  %v851 = vunpack.c.l.b16 %v783
  %v852 = vunpack.c.h.b16 %v783
  %v853 = vunpack.c.l.b16 %v784
  %v854 = vunpack.c.h.b16 %v784
  %v855 = vunpack.c.l.b16 %v785
  %v856 = vunpack.c.h.b16 %v785
  %v857 = vunpack.c.l.b16 %v786
  %v858 = vunpack.c.h.b16 %v786
  %v859 = vunpack.c.l.b16 %v787
  %v860 = vunpack.c.h.b16 %v787
  %v861 = vunpack.c.l.b16 %v788
  %v862 = vunpack.c.h.b16 %v788
  %v863 = vunpack.c.l.b16 %v789
  %v864 = vunpack.c.h.b16 %v789
  %v865 = vunpack.c.l.b16 %v790
  %v866 = vunpack.c.h.b16 %v790
  %v867 = vunpack.c.l.b16 %v791
  %v868 = vunpack.c.h.b16 %v791
  %v869 = vunpack.c.l.b16 %v792
  %v870 = vunpack.c.h.b16 %v792
  %v871 = vunpack.c.l.b16 %v793
  %v872 = vunpack.c.h.b16 %v793
  %v873 = vunpack.c.l.b16 %v794
  %v874 = vunpack.c.h.b16 %v794
  %v875 = vunpack.c.l.b16 %v795
  %v876 = vunpack.c.h.b16 %v795
  %v877 = vunpack.c.l.b16 %v796
  %v878 = vunpack.c.h.b16 %v796
  %v879 = vunpack.c.l.b16 %v797
  %v880 = vunpack.c.h.b16 %v797
  %v881 = vunpack.c.l.b16 %v798
  %v882 = vunpack.c.h.b16 %v798
  %v883 = vunpack.c.l.b16 %v799
  %v884 = vunpack.c.h.b16 %v799
  %v885 = vunpack.c.l.b16 %v800
  %v886 = vunpack.c.h.b16 %v800
  %v887 = vunpack.c.l.b16 %v801
  %v888 = vunpack.c.h.b16 %v801
  %v889 = vunpack.c.l.b16 %v802
  %v890 = vunpack.c.h.b16 %v802
  %v891 = vunpack.c.l.b16 %v803
  %v892 = vunpack.c.h.b16 %v803
  %v893 = vunpack.c.l.b16 %v804
  %v894 = vunpack.c.h.b16 %v804
  %v895 = vunpack.c.l.b16 %v805
  %v896 = vunpack.c.h.b16 %v805
  %v897 = vunpack.c.l.b16 %v806
  %v898 = vunpack.c.h.b16 %v806
  %v899 = vunpack.c.l.b16 %v807
  %v900 = vunpack.c.h.b16 %v807
  %v901 = vunpack.c.l.b16 %v808
  %v902 = vunpack.c.h.b16 %v808
  %v903 = vunpack.c.l.b16 %v809
  %v904 = vunpack.c.h.b16 %v809
  %v905 = vunpack.c.l.b16 %v810
  %v906 = vunpack.c.h.b16 %v810
  %v907 = vpack.c.b16 %v847, %v843
  %v908 = vpack.c.b16 %v848, %v844
  %v909 = vpack.c.b16 %v849, %v845
  %v910 = vpack.c.b16 %v850, %v846
  %v911 = vpack.c.b16 %v855, %v851
  %v912 = vpack.c.b16 %v856, %v852
  %v913 = vpack.c.b16 %v857, %v853
  %v914 = vpack.c.b16 %v858, %v854
  %v915 = vpack.c.b16 %v863, %v859
  %v916 = vpack.c.b16 %v864, %v860
  %v917 = vpack.c.b16 %v865, %v861
  %v918 = vpack.c.b16 %v866, %v862
  %v919 = vpack.c.b16 %v871, %v867
  %v920 = vpack.c.b16 %v872, %v868
  %v921 = vpack.c.b16 %v873, %v869
  %v922 = vpack.c.b16 %v874, %v870
  %v923 = vpack.c.b16 %v879, %v875
  %v924 = vpack.c.b16 %v880, %v876
  %v925 = vpack.c.b16 %v881, %v877
  %v926 = vpack.c.b16 %v882, %v878
  %v927 = vpack.c.b16 %v887, %v883
  %v928 = vpack.c.b16 %v888, %v884
  %v929 = vpack.c.b16 %v889, %v885
  %v930 = vpack.c.b16 %v890, %v886
  %v931 = vpack.c.b16 %v895, %v891
  %v932 = vpack.c.b16 %v896, %v892
  %v933 = vpack.c.b16 %v897, %v893
  %v934 = vpack.c.b16 %v898, %v894
  %v935 = vpack.c.b16 %v903, %v899
  %v936 = vpack.c.b16 %v904, %v900
  %v937 = vpack.c.b16 %v905, %v901
  %v938 = vpack.c.b16 %v906, %v902
  %971 = vmatprep.subr.bf16.mxu0 %v908
  %972 = vmatpush1.bf16.msra.mxu0 %v907
  %973 = vmatprep.subr.bf16.mxu0 %v912
  %974 = vmatpush1.bf16.msra.mxu0 %v911
  %975 = vmatprep.subr.bf16.mxu0 %v916
  %976 = vmatpush1.bf16.msra.mxu0 %v915
  %977 = vmatprep.subr.bf16.mxu0 %v920
  %978 = vmatpush1.bf16.msra.mxu0 %v919
  %979 = vmatprep.subr.bf16.mxu0 %v924
  %980 = vmatpush1.bf16.msra.mxu0 %v923
  %981 = vmatprep.subr.bf16.mxu0 %v928
  %982 = vmatpush1.bf16.msra.mxu0 %v927
  %983 = vmatprep.subr.bf16.mxu0 %v932
  %984 = vmatpush1.bf16.msra.mxu0 %v931
  %985 = vmatprep.subr.bf16.mxu0 %v936
  %986 = vmatpush1.bf16.msra.mxu0 %v935
  %987 = vmatprep.subr.bf16.mxu0 0
  %988 = vmatpush1.bf16.msra.mxu0 0
  %989 = vmatprep.subr.bf16.mxu0 0
  %990 = vmatpush1.bf16.msra.mxu0 0
  %991 = vmatprep.subr.bf16.mxu0 0
  %992 = vmatpush1.bf16.msra.mxu0 0
  %993 = vmatprep.subr.bf16.mxu0 0
  %994 = vmatpush1.bf16.msra.mxu0 0
  %995 = vmatprep.subr.bf16.mxu0 0
  %996 = vmatpush1.bf16.msra.mxu0 0
  %997 = vmatprep.subr.bf16.mxu0 0
  %998 = vmatpush1.bf16.msra.mxu0 0
  %999 = vmatprep.subr.bf16.mxu0 0
  %1000 = vmatpush1.bf16.msra.mxu0 0
  %1001 = vmatprep.subr.bf16.mxu0 0
  %1002 = vmatpush1.bf16.msra.mxu0 0
  %1003 = vmatprep.mubr.bf16.mxu0 0
  %1004 = vmatmul.mubr.bf16.gmra.mrb[0].mxu0 %v778
  %v1005 = vpop.f32.mrb[0].mxu0
  %v1006 = vadd.f32 0.0, %v1005
  %v1007 = vpop.f32.mrb[0].mxu0
  %v1008 = vadd.f32 0.0, %v1007
  %v1009 = vpop.f32.mrb[0].mxu0
  %v1010 = vpop.f32.mrb[0].mxu0
  %1011 = vdwg.mxu0
  %1012 = vmatprep.subr.bf16.mxu0 %v910
  %1013 = vmatpush1.bf16.msra.mxu0 %v909
  %1014 = vmatprep.subr.bf16.mxu0 %v914
  %1015 = vmatpush1.bf16.msra.mxu0 %v913
  %1016 = vmatprep.subr.bf16.mxu0 %v918
  %1017 = vmatpush1.bf16.msra.mxu0 %v917
  %1018 = vmatprep.subr.bf16.mxu0 %v922
  %1019 = vmatpush1.bf16.msra.mxu0 %v921
  %1020 = vmatprep.subr.bf16.mxu0 %v926
  %1021 = vmatpush1.bf16.msra.mxu0 %v925
  %1022 = vmatprep.subr.bf16.mxu0 %v930
  %1023 = vmatpush1.bf16.msra.mxu0 %v929
  %1024 = vmatprep.subr.bf16.mxu0 %v934
  %1025 = vmatpush1.bf16.msra.mxu0 %v933
  %1026 = vmatprep.subr.bf16.mxu0 %v938
  %1027 = vmatpush1.bf16.msra.mxu0 %v937
  %1028 = vmatprep.subr.bf16.mxu0 0
  %1029 = vmatpush1.bf16.msra.mxu0 0
  %1030 = vmatprep.subr.bf16.mxu0 0
  %1031 = vmatpush1.bf16.msra.mxu0 0
  %1032 = vmatprep.subr.bf16.mxu0 0
  %1033 = vmatpush1.bf16.msra.mxu0 0
  %1034 = vmatprep.subr.bf16.mxu0 0
  %1035 = vmatpush1.bf16.msra.mxu0 0
  %1036 = vmatprep.subr.bf16.mxu0 0
  %1037 = vmatpush1.bf16.msra.mxu0 0
  %1038 = vmatprep.subr.bf16.mxu0 0
  %1039 = vmatpush1.bf16.msra.mxu0 0
  %1040 = vmatprep.subr.bf16.mxu0 0
  %1041 = vmatpush1.bf16.msra.mxu0 0
  %1042 = vmatprep.subr.bf16.mxu0 0
  %1043 = vmatpush1.bf16.msra.mxu0 0
  %1044 = vmatprep.mubr.bf16.mxu0 0
  %1045 = vmatmul.mubr.bf16.gmra.mrb[0].mxu0 %v778
  %v1046 = vpop.f32.mrb[0].mxu0
  %v1047 = vadd.f32 0.0, %v1046
  %v1048 = vpop.f32.mrb[0].mxu0
  %v1049 = vadd.f32 0.0, %v1048
  %v1050 = vpop.f32.mrb[0].mxu0
  %v1051 = vpop.f32.mrb[0].mxu0
  %1052 = vdwg.mxu0
  %v1053 = vadd.f32 %v773, %v1006
  %v1054 = vadd.f32 %v774, %v1008
  %v1055 = vadd.f32 %v775, %v1047
  %v1056 = vadd.f32 %v776, %v1049
  %v1057 = vxor.u32 %v1053, 2147483648
  %v1058 = vmul.f32 %v1057, 1.442695
  %v1059 = vpow.pop %v1058
  %v1060 = vadd.f32 %v1059, 1.0
  %v1061 = vrcp.pop %v1060
  %v1062 = vmul.f32 1.0, %v1061
  %v1063 = vxor.u32 %v1054, 2147483648
  %v1064 = vmul.f32 %v1063, 1.442695
  %v1065 = vpow.pop %v1064
  %v1066 = vadd.f32 %v1065, 1.0
  %v1067 = vrcp.pop %v1066
  %v1068 = vmul.f32 1.0, %v1067
  %v1069 = vtanh.pop %v1055
  %v1070 = vxor.u32 %v1056, 2147483648
  %v1071 = vmul.f32 %v1070, 1.442695
  %v1072 = vpow.pop %v1071
  %v1073 = vadd.f32 %v1072, 1.0
  %v1074 = vrcp.pop %v1073
  %v1075 = vmul.f32 1.0, %v1074
  %v1076 = vld [vmem:[#allocation5] sm:$0xff]
  %v1077 = vmul.f32 %v1068, %v1076
  %v1078 = vmul.f32 %v1062, %v1069
  %v1079 = vadd.f32 %v1077, %v1078
  %v1080 = vtanh.pop %v1079
  %v1081 = vmul.f32 %v1075, %v1080
  %1082 = vst [vmem:[#allocation5] sm:$0xff] %v1079
  %1083 = vst [vmem:[#allocation4] sm:$0xff] %v1081
  %s1084 = scalar_lea.vmem [#allocation3], 8
  %1085 = vst [vmem:[%s1084] sm:$0xff] %v1081
  %s1086 = scalar_lea.vmem [#allocation2], 64
  %v1087 = vld [vmem:[%s1086] sm:$0xff]
  %v1088 = vld [vmem:[%s1086 + $0x8] sm:$0xff]
  %v1089 = vld [vmem:[%s1086 + $0x10] sm:$0xff]
  %v1090 = vld [vmem:[%s1086 + $0x18] sm:$0xff]
  %v1091 = vld [vmem:[#allocation4] sm:$0xff]
  %v1092 = vpack.c.bf16 %v1091, %v1091
  %v1093 = vld [vmem:[%s2] sm:$0xff]
  %v1094 = vld [vmem:[%s2 + $0x8] sm:$0xff]
  %v1095 = vld [vmem:[%s2 + $0x10] sm:$0xff]
  %v1096 = vld [vmem:[%s2 + $0x18] sm:$0xff]
  %v1097 = vld [vmem:[%s2 + $0x20] sm:$0xff]
  %v1098 = vld [vmem:[%s2 + $0x28] sm:$0xff]
  %v1099 = vld [vmem:[%s2 + $0x30] sm:$0xff]
  %v1100 = vld [vmem:[%s2 + $0x38] sm:$0xff]
  %v1101 = vld [vmem:[%s2 + $0x40] sm:$0xff]
  %v1102 = vld [vmem:[%s2 + $0x48] sm:$0xff]
  %v1103 = vld [vmem:[%s2 + $0x50] sm:$0xff]
  %v1104 = vld [vmem:[%s2 + $0x58] sm:$0xff]
  %v1105 = vld [vmem:[%s2 + $0x60] sm:$0xff]
  %v1106 = vld [vmem:[%s2 + $0x68] sm:$0xff]
  %v1107 = vld [vmem:[%s2 + $0x70] sm:$0xff]
  %v1108 = vld [vmem:[%s2 + $0x78] sm:$0xff]
  %v1109 = vld [vmem:[%s2 + $0x80] sm:$0xff]
  %v1110 = vld [vmem:[%s2 + $0x88] sm:$0xff]
  %v1111 = vld [vmem:[%s2 + $0x90] sm:$0xff]
  %v1112 = vld [vmem:[%s2 + $0x98] sm:$0xff]
  %v1113 = vld [vmem:[%s2 + $0xa0] sm:$0xff]
  %v1114 = vld [vmem:[%s2 + $0xa8] sm:$0xff]
  %v1115 = vld [vmem:[%s2 + $0xb0] sm:$0xff]
  %v1116 = vld [vmem:[%s2 + $0xb8] sm:$0xff]
  %v1117 = vld [vmem:[%s2 + $0xc0] sm:$0xff]
  %v1118 = vld [vmem:[%s2 + $0xc8] sm:$0xff]
  %v1119 = vld [vmem:[%s2 + $0xd0] sm:$0xff]
  %v1120 = vld [vmem:[%s2 + $0xd8] sm:$0xff]
  %v1121 = vld [vmem:[%s2 + $0xe0] sm:$0xff]
  %v1122 = vld [vmem:[%s2 + $0xe8] sm:$0xff]
  %v1123 = vld [vmem:[%s2 + $0xf0] sm:$0xff]
  %v1124 = vld [vmem:[%s2 + $0xf8] sm:$0xff]
  %v1157 = vunpack.c.l.b16 %v1093
  %v1158 = vunpack.c.h.b16 %v1093
  %v1159 = vunpack.c.l.b16 %v1094
  %v1160 = vunpack.c.h.b16 %v1094
  %v1161 = vunpack.c.l.b16 %v1095
  %v1162 = vunpack.c.h.b16 %v1095
  %v1163 = vunpack.c.l.b16 %v1096
  %v1164 = vunpack.c.h.b16 %v1096
  %v1165 = vunpack.c.l.b16 %v1097
  %v1166 = vunpack.c.h.b16 %v1097
  %v1167 = vunpack.c.l.b16 %v1098
  %v1168 = vunpack.c.h.b16 %v1098
  %v1169 = vunpack.c.l.b16 %v1099
  %v1170 = vunpack.c.h.b16 %v1099
  %v1171 = vunpack.c.l.b16 %v1100
  %v1172 = vunpack.c.h.b16 %v1100
  %v1173 = vunpack.c.l.b16 %v1101
  %v1174 = vunpack.c.h.b16 %v1101
  %v1175 = vunpack.c.l.b16 %v1102
  %v1176 = vunpack.c.h.b16 %v1102
  %v1177 = vunpack.c.l.b16 %v1103
  %v1178 = vunpack.c.h.b16 %v1103
  %v1179 = vunpack.c.l.b16 %v1104
  %v1180 = vunpack.c.h.b16 %v1104
  %v1181 = vunpack.c.l.b16 %v1105
  %v1182 = vunpack.c.h.b16 %v1105
  %v1183 = vunpack.c.l.b16 %v1106
  %v1184 = vunpack.c.h.b16 %v1106
  %v1185 = vunpack.c.l.b16 %v1107
  %v1186 = vunpack.c.h.b16 %v1107
  %v1187 = vunpack.c.l.b16 %v1108
  %v1188 = vunpack.c.h.b16 %v1108
  %v1189 = vunpack.c.l.b16 %v1109
  %v1190 = vunpack.c.h.b16 %v1109
  %v1191 = vunpack.c.l.b16 %v1110
  %v1192 = vunpack.c.h.b16 %v1110
  %v1193 = vunpack.c.l.b16 %v1111
  %v1194 = vunpack.c.h.b16 %v1111
  %v1195 = vunpack.c.l.b16 %v1112
  %v1196 = vunpack.c.h.b16 %v1112
  %v1197 = vunpack.c.l.b16 %v1113
  %v1198 = vunpack.c.h.b16 %v1113
  %v1199 = vunpack.c.l.b16 %v1114
  %v1200 = vunpack.c.h.b16 %v1114
  %v1201 = vunpack.c.l.b16 %v1115
  %v1202 = vunpack.c.h.b16 %v1115
  %v1203 = vunpack.c.l.b16 %v1116
  %v1204 = vunpack.c.h.b16 %v1116
  %v1205 = vunpack.c.l.b16 %v1117
  %v1206 = vunpack.c.h.b16 %v1117
  %v1207 = vunpack.c.l.b16 %v1118
  %v1208 = vunpack.c.h.b16 %v1118
  %v1209 = vunpack.c.l.b16 %v1119
  %v1210 = vunpack.c.h.b16 %v1119
  %v1211 = vunpack.c.l.b16 %v1120
  %v1212 = vunpack.c.h.b16 %v1120
  %v1213 = vunpack.c.l.b16 %v1121
  %v1214 = vunpack.c.h.b16 %v1121
  %v1215 = vunpack.c.l.b16 %v1122
  %v1216 = vunpack.c.h.b16 %v1122
  %v1217 = vunpack.c.l.b16 %v1123
  %v1218 = vunpack.c.h.b16 %v1123
  %v1219 = vunpack.c.l.b16 %v1124
  %v1220 = vunpack.c.h.b16 %v1124
  %v1221 = vpack.c.b16 %v1161, %v1157
  %v1222 = vpack.c.b16 %v1162, %v1158
  %v1223 = vpack.c.b16 %v1163, %v1159
  %v1224 = vpack.c.b16 %v1164, %v1160
  %v1225 = vpack.c.b16 %v1169, %v1165
  %v1226 = vpack.c.b16 %v1170, %v1166
  %v1227 = vpack.c.b16 %v1171, %v1167
  %v1228 = vpack.c.b16 %v1172, %v1168
  %v1229 = vpack.c.b16 %v1177, %v1173
  %v1230 = vpack.c.b16 %v1178, %v1174
  %v1231 = vpack.c.b16 %v1179, %v1175
  %v1232 = vpack.c.b16 %v1180, %v1176
  %v1233 = vpack.c.b16 %v1185, %v1181
  %v1234 = vpack.c.b16 %v1186, %v1182
  %v1235 = vpack.c.b16 %v1187, %v1183
  %v1236 = vpack.c.b16 %v1188, %v1184
  %v1237 = vpack.c.b16 %v1193, %v1189
  %v1238 = vpack.c.b16 %v1194, %v1190
  %v1239 = vpack.c.b16 %v1195, %v1191
  %v1240 = vpack.c.b16 %v1196, %v1192
  %v1241 = vpack.c.b16 %v1201, %v1197
  %v1242 = vpack.c.b16 %v1202, %v1198
  %v1243 = vpack.c.b16 %v1203, %v1199
  %v1244 = vpack.c.b16 %v1204, %v1200
  %v1245 = vpack.c.b16 %v1209, %v1205
  %v1246 = vpack.c.b16 %v1210, %v1206
  %v1247 = vpack.c.b16 %v1211, %v1207
  %v1248 = vpack.c.b16 %v1212, %v1208
  %v1249 = vpack.c.b16 %v1217, %v1213
  %v1250 = vpack.c.b16 %v1218, %v1214
  %v1251 = vpack.c.b16 %v1219, %v1215
  %v1252 = vpack.c.b16 %v1220, %v1216
  %1285 = vmatprep.subr.bf16.mxu0 %v1222
  %1286 = vmatpush1.bf16.msra.mxu0 %v1221
  %1287 = vmatprep.subr.bf16.mxu0 %v1226
  %1288 = vmatpush1.bf16.msra.mxu0 %v1225
  %1289 = vmatprep.subr.bf16.mxu0 %v1230
  %1290 = vmatpush1.bf16.msra.mxu0 %v1229
  %1291 = vmatprep.subr.bf16.mxu0 %v1234
  %1292 = vmatpush1.bf16.msra.mxu0 %v1233
  %1293 = vmatprep.subr.bf16.mxu0 %v1238
  %1294 = vmatpush1.bf16.msra.mxu0 %v1237
  %1295 = vmatprep.subr.bf16.mxu0 %v1242
  %1296 = vmatpush1.bf16.msra.mxu0 %v1241
  %1297 = vmatprep.subr.bf16.mxu0 %v1246
  %1298 = vmatpush1.bf16.msra.mxu0 %v1245
  %1299 = vmatprep.subr.bf16.mxu0 %v1250
  %1300 = vmatpush1.bf16.msra.mxu0 %v1249
  %1301 = vmatprep.subr.bf16.mxu0 0
  %1302 = vmatpush1.bf16.msra.mxu0 0
  %1303 = vmatprep.subr.bf16.mxu0 0
  %1304 = vmatpush1.bf16.msra.mxu0 0
  %1305 = vmatprep.subr.bf16.mxu0 0
  %1306 = vmatpush1.bf16.msra.mxu0 0
  %1307 = vmatprep.subr.bf16.mxu0 0
  %1308 = vmatpush1.bf16.msra.mxu0 0
  %1309 = vmatprep.subr.bf16.mxu0 0
  %1310 = vmatpush1.bf16.msra.mxu0 0
  %1311 = vmatprep.subr.bf16.mxu0 0
  %1312 = vmatpush1.bf16.msra.mxu0 0
  %1313 = vmatprep.subr.bf16.mxu0 0
  %1314 = vmatpush1.bf16.msra.mxu0 0
  %1315 = vmatprep.subr.bf16.mxu0 0
  %1316 = vmatpush1.bf16.msra.mxu0 0
  %1317 = vmatprep.mubr.bf16.mxu0 0
  %1318 = vmatmul.mubr.bf16.gmra.mrb[0].mxu0 %v1092
  %v1319 = vpop.f32.mrb[0].mxu0
  %v1320 = vadd.f32 0.0, %v1319
  %v1321 = vpop.f32.mrb[0].mxu0
  %v1322 = vadd.f32 0.0, %v1321
  %v1323 = vpop.f32.mrb[0].mxu0
  %v1324 = vpop.f32.mrb[0].mxu0
  %1325 = vdwg.mxu0
  %1326 = vmatprep.subr.bf16.mxu0 %v1224
  %1327 = vmatpush1.bf16.msra.mxu0 %v1223
  %1328 = vmatprep.subr.bf16.mxu0 %v1228
  %1329 = vmatpush1.bf16.msra.mxu0 %v1227
  %1330 = vmatprep.subr.bf16.mxu0 %v1232
  %1331 = vmatpush1.bf16.msra.mxu0 %v1231
  %1332 = vmatprep.subr.bf16.mxu0 %v1236
  %1333 = vmatpush1.bf16.msra.mxu0 %v1235
  %1334 = vmatprep.subr.bf16.mxu0 %v1240
  %1335 = vmatpush1.bf16.msra.mxu0 %v1239
  %1336 = vmatprep.subr.bf16.mxu0 %v1244
  %1337 = vmatpush1.bf16.msra.mxu0 %v1243
  %1338 = vmatprep.subr.bf16.mxu0 %v1248
  %1339 = vmatpush1.bf16.msra.mxu0 %v1247
  %1340 = vmatprep.subr.bf16.mxu0 %v1252
  %1341 = vmatpush1.bf16.msra.mxu0 %v1251
  %1342 = vmatprep.subr.bf16.mxu0 0
  %1343 = vmatpush1.bf16.msra.mxu0 0
  %1344 = vmatprep.subr.bf16.mxu0 0
  %1345 = vmatpush1.bf16.msra.mxu0 0
  %1346 = vmatprep.subr.bf16.mxu0 0
  %1347 = vmatpush1.bf16.msra.mxu0 0
  %1348 = vmatprep.subr.bf16.mxu0 0
  %1349 = vmatpush1.bf16.msra.mxu0 0
  %1350 = vmatprep.subr.bf16.mxu0 0
  %1351 = vmatpush1.bf16.msra.mxu0 0
  %1352 = vmatprep.subr.bf16.mxu0 0
  %1353 = vmatpush1.bf16.msra.mxu0 0
  %1354 = vmatprep.subr.bf16.mxu0 0
  %1355 = vmatpush1.bf16.msra.mxu0 0
  %1356 = vmatprep.subr.bf16.mxu0 0
  %1357 = vmatpush1.bf16.msra.mxu0 0
  %1358 = vmatprep.mubr.bf16.mxu0 0
  %1359 = vmatmul.mubr.bf16.gmra.mrb[0].mxu0 %v1092
  %v1360 = vpop.f32.mrb[0].mxu0
  %v1361 = vadd.f32 0.0, %v1360
  %v1362 = vpop.f32.mrb[0].mxu0
  %v1363 = vadd.f32 0.0, %v1362
  %v1364 = vpop.f32.mrb[0].mxu0
  %v1365 = vpop.f32.mrb[0].mxu0
  %1366 = vdwg.mxu0
  %v1367 = vadd.f32 %v1087, %v1320
  %v1368 = vadd.f32 %v1088, %v1322
  %v1369 = vadd.f32 %v1089, %v1361
  %v1370 = vadd.f32 %v1090, %v1363
  %v1371 = vxor.u32 %v1367, 2147483648
  %v1372 = vmul.f32 %v1371, 1.442695
  %v1373 = vpow.pop %v1372
  %v1374 = vadd.f32 %v1373, 1.0
  %v1375 = vrcp.pop %v1374
  %v1376 = vmul.f32 1.0, %v1375
  %v1377 = vxor.u32 %v1368, 2147483648
  %v1378 = vmul.f32 %v1377, 1.442695
  %v1379 = vpow.pop %v1378
  %v1380 = vadd.f32 %v1379, 1.0
  %v1381 = vrcp.pop %v1380
  %v1382 = vmul.f32 1.0, %v1381
  %v1383 = vtanh.pop %v1369
  %v1384 = vxor.u32 %v1370, 2147483648
  %v1385 = vmul.f32 %v1384, 1.442695
  %v1386 = vpow.pop %v1385
  %v1387 = vadd.f32 %v1386, 1.0
  %v1388 = vrcp.pop %v1387
  %v1389 = vmul.f32 1.0, %v1388
  %v1390 = vld [vmem:[#allocation5] sm:$0xff]
  %v1391 = vmul.f32 %v1382, %v1390
  %v1392 = vmul.f32 %v1376, %v1383
  %v1393 = vadd.f32 %v1391, %v1392
  %v1394 = vtanh.pop %v1393
  %v1395 = vmul.f32 %v1389, %v1394
  %1396 = vst [vmem:[#allocation5] sm:$0xff] %v1393
  %1397 = vst [vmem:[#allocation4] sm:$0xff] %v1395
  %s1398 = scalar_lea.vmem [#allocation3], 16
  %1399 = vst [vmem:[%s1398] sm:$0xff] %v1395
  %s1400 = scalar_lea.vmem [#allocation2], 96
  %v1401 = vld [vmem:[%s1400] sm:$0xff]
  %v1402 = vld [vmem:[%s1400 + $0x8] sm:$0xff]
  %v1403 = vld [vmem:[%s1400 + $0x10] sm:$0xff]
  %v1404 = vld [vmem:[%s1400 + $0x18] sm:$0xff]
  %v1405 = vld [vmem:[#allocation4] sm:$0xff]
  %v1406 = vpack.c.bf16 %v1405, %v1405
  %v1407 = vld [vmem:[%s2] sm:$0xff]
  %v1408 = vld [vmem:[%s2 + $0x8] sm:$0xff]
  %v1409 = vld [vmem:[%s2 + $0x10] sm:$0xff]
  %v1410 = vld [vmem:[%s2 + $0x18] sm:$0xff]
  %v1411 = vld [vmem:[%s2 + $0x20] sm:$0xff]
  %v1412 = vld [vmem:[%s2 + $0x28] sm:$0xff]
  %v1413 = vld [vmem:[%s2 + $0x30] sm:$0xff]
  %v1414 = vld [vmem:[%s2 + $0x38] sm:$0xff]
  %v1415 = vld [vmem:[%s2 + $0x40] sm:$0xff]
  %v1416 = vld [vmem:[%s2 + $0x48] sm:$0xff]
  %v1417 = vld [vmem:[%s2 + $0x50] sm:$0xff]
  %v1418 = vld [vmem:[%s2 + $0x58] sm:$0xff]
  %v1419 = vld [vmem:[%s2 + $0x60] sm:$0xff]
  %v1420 = vld [vmem:[%s2 + $0x68] sm:$0xff]
  %v1421 = vld [vmem:[%s2 + $0x70] sm:$0xff]
  %v1422 = vld [vmem:[%s2 + $0x78] sm:$0xff]
  %v1423 = vld [vmem:[%s2 + $0x80] sm:$0xff]
  %v1424 = vld [vmem:[%s2 + $0x88] sm:$0xff]
  %v1425 = vld [vmem:[%s2 + $0x90] sm:$0xff]
  %v1426 = vld [vmem:[%s2 + $0x98] sm:$0xff]
  %v1427 = vld [vmem:[%s2 + $0xa0] sm:$0xff]
  %v1428 = vld [vmem:[%s2 + $0xa8] sm:$0xff]
  %v1429 = vld [vmem:[%s2 + $0xb0] sm:$0xff]
  %v1430 = vld [vmem:[%s2 + $0xb8] sm:$0xff]
  %v1431 = vld [vmem:[%s2 + $0xc0] sm:$0xff]
  %v1432 = vld [vmem:[%s2 + $0xc8] sm:$0xff]
  %v1433 = vld [vmem:[%s2 + $0xd0] sm:$0xff]
  %v1434 = vld [vmem:[%s2 + $0xd8] sm:$0xff]
  %v1435 = vld [vmem:[%s2 + $0xe0] sm:$0xff]
  %v1436 = vld [vmem:[%s2 + $0xe8] sm:$0xff]
  %v1437 = vld [vmem:[%s2 + $0xf0] sm:$0xff]
  %v1438 = vld [vmem:[%s2 + $0xf8] sm:$0xff]
  %v1471 = vunpack.c.l.b16 %v1407
  %v1472 = vunpack.c.h.b16 %v1407
  %v1473 = vunpack.c.l.b16 %v1408
  %v1474 = vunpack.c.h.b16 %v1408
  %v1475 = vunpack.c.l.b16 %v1409
  %v1476 = vunpack.c.h.b16 %v1409
  %v1477 = vunpack.c.l.b16 %v1410
  %v1478 = vunpack.c.h.b16 %v1410
  %v1479 = vunpack.c.l.b16 %v1411
  %v1480 = vunpack.c.h.b16 %v1411
  %v1481 = vunpack.c.l.b16 %v1412
  %v1482 = vunpack.c.h.b16 %v1412
  %v1483 = vunpack.c.l.b16 %v1413
  %v1484 = vunpack.c.h.b16 %v1413
  %v1485 = vunpack.c.l.b16 %v1414
  %v1486 = vunpack.c.h.b16 %v1414
  %v1487 = vunpack.c.l.b16 %v1415
  %v1488 = vunpack.c.h.b16 %v1415
  %v1489 = vunpack.c.l.b16 %v1416
  %v1490 = vunpack.c.h.b16 %v1416
  %v1491 = vunpack.c.l.b16 %v1417
  %v1492 = vunpack.c.h.b16 %v1417
  %v1493 = vunpack.c.l.b16 %v1418
  %v1494 = vunpack.c.h.b16 %v1418
  %v1495 = vunpack.c.l.b16 %v1419
  %v1496 = vunpack.c.h.b16 %v1419
  %v1497 = vunpack.c.l.b16 %v1420
  %v1498 = vunpack.c.h.b16 %v1420
  %v1499 = vunpack.c.l.b16 %v1421
  %v1500 = vunpack.c.h.b16 %v1421
  %v1501 = vunpack.c.l.b16 %v1422
  %v1502 = vunpack.c.h.b16 %v1422
  %v1503 = vunpack.c.l.b16 %v1423
  %v1504 = vunpack.c.h.b16 %v1423
  %v1505 = vunpack.c.l.b16 %v1424
  %v1506 = vunpack.c.h.b16 %v1424
  %v1507 = vunpack.c.l.b16 %v1425
  %v1508 = vunpack.c.h.b16 %v1425
  %v1509 = vunpack.c.l.b16 %v1426
  %v1510 = vunpack.c.h.b16 %v1426
  %v1511 = vunpack.c.l.b16 %v1427
  %v1512 = vunpack.c.h.b16 %v1427
  %v1513 = vunpack.c.l.b16 %v1428
  %v1514 = vunpack.c.h.b16 %v1428
  %v1515 = vunpack.c.l.b16 %v1429
  %v1516 = vunpack.c.h.b16 %v1429
  %v1517 = vunpack.c.l.b16 %v1430
  %v1518 = vunpack.c.h.b16 %v1430
  %v1519 = vunpack.c.l.b16 %v1431
  %v1520 = vunpack.c.h.b16 %v1431
  %v1521 = vunpack.c.l.b16 %v1432
  %v1522 = vunpack.c.h.b16 %v1432
  %v1523 = vunpack.c.l.b16 %v1433
  %v1524 = vunpack.c.h.b16 %v1433
  %v1525 = vunpack.c.l.b16 %v1434
  %v1526 = vunpack.c.h.b16 %v1434
  %v1527 = vunpack.c.l.b16 %v1435
  %v1528 = vunpack.c.h.b16 %v1435
  %v1529 = vunpack.c.l.b16 %v1436
  %v1530 = vunpack.c.h.b16 %v1436
  %v1531 = vunpack.c.l.b16 %v1437
  %v1532 = vunpack.c.h.b16 %v1437
  %v1533 = vunpack.c.l.b16 %v1438
  %v1534 = vunpack.c.h.b16 %v1438
  %v1535 = vpack.c.b16 %v1475, %v1471
  %v1536 = vpack.c.b16 %v1476, %v1472
  %v1537 = vpack.c.b16 %v1477, %v1473
  %v1538 = vpack.c.b16 %v1478, %v1474
  %v1539 = vpack.c.b16 %v1483, %v1479
  %v1540 = vpack.c.b16 %v1484, %v1480
  %v1541 = vpack.c.b16 %v1485, %v1481
  %v1542 = vpack.c.b16 %v1486, %v1482
  %v1543 = vpack.c.b16 %v1491, %v1487
  %v1544 = vpack.c.b16 %v1492, %v1488
  %v1545 = vpack.c.b16 %v1493, %v1489
  %v1546 = vpack.c.b16 %v1494, %v1490
  %v1547 = vpack.c.b16 %v1499, %v1495
  %v1548 = vpack.c.b16 %v1500, %v1496
  %v1549 = vpack.c.b16 %v1501, %v1497
  %v1550 = vpack.c.b16 %v1502, %v1498
  %v1551 = vpack.c.b16 %v1507, %v1503
  %v1552 = vpack.c.b16 %v1508, %v1504
  %v1553 = vpack.c.b16 %v1509, %v1505
  %v1554 = vpack.c.b16 %v1510, %v1506
  %v1555 = vpack.c.b16 %v1515, %v1511
  %v1556 = vpack.c.b16 %v1516, %v1512
  %v1557 = vpack.c.b16 %v1517, %v1513
  %v1558 = vpack.c.b16 %v1518, %v1514
  %v1559 = vpack.c.b16 %v1523, %v1519
  %v1560 = vpack.c.b16 %v1524, %v1520
  %v1561 = vpack.c.b16 %v1525, %v1521
  %v1562 = vpack.c.b16 %v1526, %v1522
  %v1563 = vpack.c.b16 %v1531, %v1527
  %v1564 = vpack.c.b16 %v1532, %v1528
  %v1565 = vpack.c.b16 %v1533, %v1529
  %v1566 = vpack.c.b16 %v1534, %v1530
  %1599 = vmatprep.subr.bf16.mxu0 %v1536
  %1600 = vmatpush1.bf16.msra.mxu0 %v1535
  %1601 = vmatprep.subr.bf16.mxu0 %v1540
  %1602 = vmatpush1.bf16.msra.mxu0 %v1539
  %1603 = vmatprep.subr.bf16.mxu0 %v1544
  %1604 = vmatpush1.bf16.msra.mxu0 %v1543
  %1605 = vmatprep.subr.bf16.mxu0 %v1548
  %1606 = vmatpush1.bf16.msra.mxu0 %v1547
  %1607 = vmatprep.subr.bf16.mxu0 %v1552
  %1608 = vmatpush1.bf16.msra.mxu0 %v1551
  %1609 = vmatprep.subr.bf16.mxu0 %v1556
  %1610 = vmatpush1.bf16.msra.mxu0 %v1555
  %1611 = vmatprep.subr.bf16.mxu0 %v1560
  %1612 = vmatpush1.bf16.msra.mxu0 %v1559
  %1613 = vmatprep.subr.bf16.mxu0 %v1564
  %1614 = vmatpush1.bf16.msra.mxu0 %v1563
  %1615 = vmatprep.subr.bf16.mxu0 0
  %1616 = vmatpush1.bf16.msra.mxu0 0
  %1617 = vmatprep.subr.bf16.mxu0 0
  %1618 = vmatpush1.bf16.msra.mxu0 0
  %1619 = vmatprep.subr.bf16.mxu0 0
  %1620 = vmatpush1.bf16.msra.mxu0 0
  %1621 = vmatprep.subr.bf16.mxu0 0
  %1622 = vmatpush1.bf16.msra.mxu0 0
  %1623 = vmatprep.subr.bf16.mxu0 0
  %1624 = vmatpush1.bf16.msra.mxu0 0
  %1625 = vmatprep.subr.bf16.mxu0 0
  %1626 = vmatpush1.bf16.msra.mxu0 0
  %1627 = vmatprep.subr.bf16.mxu0 0
  %1628 = vmatpush1.bf16.msra.mxu0 0
  %1629 = vmatprep.subr.bf16.mxu0 0
  %1630 = vmatpush1.bf16.msra.mxu0 0
  %1631 = vmatprep.mubr.bf16.mxu0 0
  %1632 = vmatmul.mubr.bf16.gmra.mrb[0].mxu0 %v1406
  %v1633 = vpop.f32.mrb[0].mxu0
  %v1634 = vadd.f32 0.0, %v1633
  %v1635 = vpop.f32.mrb[0].mxu0
  %v1636 = vadd.f32 0.0, %v1635
  %v1637 = vpop.f32.mrb[0].mxu0
  %v1638 = vpop.f32.mrb[0].mxu0
  %1639 = vdwg.mxu0
  %1640 = vmatprep.subr.bf16.mxu0 %v1538
  %1641 = vmatpush1.bf16.msra.mxu0 %v1537
  %1642 = vmatprep.subr.bf16.mxu0 %v1542
  %1643 = vmatpush1.bf16.msra.mxu0 %v1541
  %1644 = vmatprep.subr.bf16.mxu0 %v1546
  %1645 = vmatpush1.bf16.msra.mxu0 %v1545
  %1646 = vmatprep.subr.bf16.mxu0 %v1550
  %1647 = vmatpush1.bf16.msra.mxu0 %v1549
  %1648 = vmatprep.subr.bf16.mxu0 %v1554
  %1649 = vmatpush1.bf16.msra.mxu0 %v1553
  %1650 = vmatprep.subr.bf16.mxu0 %v1558
  %1651 = vmatpush1.bf16.msra.mxu0 %v1557
  %1652 = vmatprep.subr.bf16.mxu0 %v1562
  %1653 = vmatpush1.bf16.msra.mxu0 %v1561
  %1654 = vmatprep.subr.bf16.mxu0 %v1566
  %1655 = vmatpush1.bf16.msra.mxu0 %v1565
  %1656 = vmatprep.subr.bf16.mxu0 0
  %1657 = vmatpush1.bf16.msra.mxu0 0
  %1658 = vmatprep.subr.bf16.mxu0 0
  %1659 = vmatpush1.bf16.msra.mxu0 0
  %1660 = vmatprep.subr.bf16.mxu0 0
  %1661 = vmatpush1.bf16.msra.mxu0 0
  %1662 = vmatprep.subr.bf16.mxu0 0
  %1663 = vmatpush1.bf16.msra.mxu0 0
  %1664 = vmatprep.subr.bf16.mxu0 0
  %1665 = vmatpush1.bf16.msra.mxu0 0
  %1666 = vmatprep.subr.bf16.mxu0 0
  %1667 = vmatpush1.bf16.msra.mxu0 0
  %1668 = vmatprep.subr.bf16.mxu0 0
  %1669 = vmatpush1.bf16.msra.mxu0 0
  %1670 = vmatprep.subr.bf16.mxu0 0
  %1671 = vmatpush1.bf16.msra.mxu0 0
  %1672 = vmatprep.mubr.bf16.mxu0 0
  %1673 = vmatmul.mubr.bf16.gmra.mrb[0].mxu0 %v1406
  %v1674 = vpop.f32.mrb[0].mxu0
  %v1675 = vadd.f32 0.0, %v1674
  %v1676 = vpop.f32.mrb[0].mxu0
  %v1677 = vadd.f32 0.0, %v1676
  %v1678 = vpop.f32.mrb[0].mxu0
  %v1679 = vpop.f32.mrb[0].mxu0
  %1680 = vdwg.mxu0
  %v1681 = vadd.f32 %v1401, %v1634
  %v1682 = vadd.f32 %v1402, %v1636
  %v1683 = vadd.f32 %v1403, %v1675
  %v1684 = vadd.f32 %v1404, %v1677
  %v1685 = vxor.u32 %v1681, 2147483648
  %v1686 = vmul.f32 %v1685, 1.442695
  %v1687 = vpow.pop %v1686
  %v1688 = vadd.f32 %v1687, 1.0
  %v1689 = vrcp.pop %v1688
  %v1690 = vmul.f32 1.0, %v1689
  %v1691 = vxor.u32 %v1682, 2147483648
  %v1692 = vmul.f32 %v1691, 1.442695
  %v1693 = vpow.pop %v1692
  %v1694 = vadd.f32 %v1693, 1.0
  %v1695 = vrcp.pop %v1694
  %v1696 = vmul.f32 1.0, %v1695
  %v1697 = vtanh.pop %v1683
  %v1698 = vxor.u32 %v1684, 2147483648
  %v1699 = vmul.f32 %v1698, 1.442695
  %v1700 = vpow.pop %v1699
  %v1701 = vadd.f32 %v1700, 1.0
  %v1702 = vrcp.pop %v1701
  %v1703 = vmul.f32 1.0, %v1702
  %v1704 = vld [vmem:[#allocation5] sm:$0xff]
  %v1705 = vmul.f32 %v1696, %v1704
  %v1706 = vmul.f32 %v1690, %v1697
  %v1707 = vadd.f32 %v1705, %v1706
  %v1708 = vtanh.pop %v1707
  %v1709 = vmul.f32 %v1703, %v1708
  %1710 = vst [vmem:[#allocation5] sm:$0xff] %v1707
  %1711 = vst [vmem:[#allocation4] sm:$0xff] %v1709
  %s1712 = scalar_lea.vmem [#allocation3], 24
  %1713 = vst [vmem:[%s1712] sm:$0xff] %v1709
  %s1714 = scalar_lea.vmem [#allocation2], 128
  %v1715 = vld [vmem:[%s1714] sm:$0xff]
  %v1716 = vld [vmem:[%s1714 + $0x8] sm:$0xff]
  %v1717 = vld [vmem:[%s1714 + $0x10] sm:$0xff]
  %v1718 = vld [vmem:[%s1714 + $0x18] sm:$0xff]
  %v1719 = vld [vmem:[#allocation4] sm:$0xff]
  %v1720 = vpack.c.bf16 %v1719, %v1719
  %v1721 = vld [vmem:[%s2] sm:$0xff]
  %v1722 = vld [vmem:[%s2 + $0x8] sm:$0xff]
  %v1723 = vld [vmem:[%s2 + $0x10] sm:$0xff]
  %v1724 = vld [vmem:[%s2 + $0x18] sm:$0xff]
  %v1725 = vld [vmem:[%s2 + $0x20] sm:$0xff]
  %v1726 = vld [vmem:[%s2 + $0x28] sm:$0xff]
  %v1727 = vld [vmem:[%s2 + $0x30] sm:$0xff]
  %v1728 = vld [vmem:[%s2 + $0x38] sm:$0xff]
  %v1729 = vld [vmem:[%s2 + $0x40] sm:$0xff]
  %v1730 = vld [vmem:[%s2 + $0x48] sm:$0xff]
  %v1731 = vld [vmem:[%s2 + $0x50] sm:$0xff]
  %v1732 = vld [vmem:[%s2 + $0x58] sm:$0xff]
  %v1733 = vld [vmem:[%s2 + $0x60] sm:$0xff]
  %v1734 = vld [vmem:[%s2 + $0x68] sm:$0xff]
  %v1735 = vld [vmem:[%s2 + $0x70] sm:$0xff]
  %v1736 = vld [vmem:[%s2 + $0x78] sm:$0xff]
  %v1737 = vld [vmem:[%s2 + $0x80] sm:$0xff]
  %v1738 = vld [vmem:[%s2 + $0x88] sm:$0xff]
  %v1739 = vld [vmem:[%s2 + $0x90] sm:$0xff]
  %v1740 = vld [vmem:[%s2 + $0x98] sm:$0xff]
  %v1741 = vld [vmem:[%s2 + $0xa0] sm:$0xff]
  %v1742 = vld [vmem:[%s2 + $0xa8] sm:$0xff]
  %v1743 = vld [vmem:[%s2 + $0xb0] sm:$0xff]
  %v1744 = vld [vmem:[%s2 + $0xb8] sm:$0xff]
  %v1745 = vld [vmem:[%s2 + $0xc0] sm:$0xff]
  %v1746 = vld [vmem:[%s2 + $0xc8] sm:$0xff]
  %v1747 = vld [vmem:[%s2 + $0xd0] sm:$0xff]
  %v1748 = vld [vmem:[%s2 + $0xd8] sm:$0xff]
  %v1749 = vld [vmem:[%s2 + $0xe0] sm:$0xff]
  %v1750 = vld [vmem:[%s2 + $0xe8] sm:$0xff]
  %v1751 = vld [vmem:[%s2 + $0xf0] sm:$0xff]
  %v1752 = vld [vmem:[%s2 + $0xf8] sm:$0xff]
  %v1785 = vunpack.c.l.b16 %v1721
  %v1786 = vunpack.c.h.b16 %v1721
  %v1787 = vunpack.c.l.b16 %v1722
  %v1788 = vunpack.c.h.b16 %v1722
  %v1789 = vunpack.c.l.b16 %v1723
  %v1790 = vunpack.c.h.b16 %v1723
  %v1791 = vunpack.c.l.b16 %v1724
  %v1792 = vunpack.c.h.b16 %v1724
  %v1793 = vunpack.c.l.b16 %v1725
  %v1794 = vunpack.c.h.b16 %v1725
  %v1795 = vunpack.c.l.b16 %v1726
  %v1796 = vunpack.c.h.b16 %v1726
  %v1797 = vunpack.c.l.b16 %v1727
  %v1798 = vunpack.c.h.b16 %v1727
  %v1799 = vunpack.c.l.b16 %v1728
  %v1800 = vunpack.c.h.b16 %v1728
  %v1801 = vunpack.c.l.b16 %v1729
  %v1802 = vunpack.c.h.b16 %v1729
  %v1803 = vunpack.c.l.b16 %v1730
  %v1804 = vunpack.c.h.b16 %v1730
  %v1805 = vunpack.c.l.b16 %v1731
  %v1806 = vunpack.c.h.b16 %v1731
  %v1807 = vunpack.c.l.b16 %v1732
  %v1808 = vunpack.c.h.b16 %v1732
  %v1809 = vunpack.c.l.b16 %v1733
  %v1810 = vunpack.c.h.b16 %v1733
  %v1811 = vunpack.c.l.b16 %v1734
  %v1812 = vunpack.c.h.b16 %v1734
  %v1813 = vunpack.c.l.b16 %v1735
  %v1814 = vunpack.c.h.b16 %v1735
  %v1815 = vunpack.c.l.b16 %v1736
  %v1816 = vunpack.c.h.b16 %v1736
  %v1817 = vunpack.c.l.b16 %v1737
  %v1818 = vunpack.c.h.b16 %v1737
  %v1819 = vunpack.c.l.b16 %v1738
  %v1820 = vunpack.c.h.b16 %v1738
  %v1821 = vunpack.c.l.b16 %v1739
  %v1822 = vunpack.c.h.b16 %v1739
  %v1823 = vunpack.c.l.b16 %v1740
  %v1824 = vunpack.c.h.b16 %v1740
  %v1825 = vunpack.c.l.b16 %v1741
  %v1826 = vunpack.c.h.b16 %v1741
  %v1827 = vunpack.c.l.b16 %v1742
  %v1828 = vunpack.c.h.b16 %v1742
  %v1829 = vunpack.c.l.b16 %v1743
  %v1830 = vunpack.c.h.b16 %v1743
  %v1831 = vunpack.c.l.b16 %v1744
  %v1832 = vunpack.c.h.b16 %v1744
  %v1833 = vunpack.c.l.b16 %v1745
  %v1834 = vunpack.c.h.b16 %v1745
  %v1835 = vunpack.c.l.b16 %v1746
  %v1836 = vunpack.c.h.b16 %v1746
  %v1837 = vunpack.c.l.b16 %v1747
  %v1838 = vunpack.c.h.b16 %v1747
  %v1839 = vunpack.c.l.b16 %v1748
  %v1840 = vunpack.c.h.b16 %v1748
  %v1841 = vunpack.c.l.b16 %v1749
  %v1842 = vunpack.c.h.b16 %v1749
  %v1843 = vunpack.c.l.b16 %v1750
  %v1844 = vunpack.c.h.b16 %v1750
  %v1845 = vunpack.c.l.b16 %v1751
  %v1846 = vunpack.c.h.b16 %v1751
  %v1847 = vunpack.c.l.b16 %v1752
  %v1848 = vunpack.c.h.b16 %v1752
  %v1849 = vpack.c.b16 %v1789, %v1785
  %v1850 = vpack.c.b16 %v1790, %v1786
  %v1851 = vpack.c.b16 %v1791, %v1787
  %v1852 = vpack.c.b16 %v1792, %v1788
  %v1853 = vpack.c.b16 %v1797, %v1793
  %v1854 = vpack.c.b16 %v1798, %v1794
  %v1855 = vpack.c.b16 %v1799, %v1795
  %v1856 = vpack.c.b16 %v1800, %v1796
  %v1857 = vpack.c.b16 %v1805, %v1801
  %v1858 = vpack.c.b16 %v1806, %v1802
  %v1859 = vpack.c.b16 %v1807, %v1803
  %v1860 = vpack.c.b16 %v1808, %v1804
  %v1861 = vpack.c.b16 %v1813, %v1809
  %v1862 = vpack.c.b16 %v1814, %v1810
  %v1863 = vpack.c.b16 %v1815, %v1811
  %v1864 = vpack.c.b16 %v1816, %v1812
  %v1865 = vpack.c.b16 %v1821, %v1817
  %v1866 = vpack.c.b16 %v1822, %v1818
  %v1867 = vpack.c.b16 %v1823, %v1819
  %v1868 = vpack.c.b16 %v1824, %v1820
  %v1869 = vpack.c.b16 %v1829, %v1825
  %v1870 = vpack.c.b16 %v1830, %v1826
  %v1871 = vpack.c.b16 %v1831, %v1827
  %v1872 = vpack.c.b16 %v1832, %v1828
  %v1873 = vpack.c.b16 %v1837, %v1833
  %v1874 = vpack.c.b16 %v1838, %v1834
  %v1875 = vpack.c.b16 %v1839, %v1835
  %v1876 = vpack.c.b16 %v1840, %v1836
  %v1877 = vpack.c.b16 %v1845, %v1841
  %v1878 = vpack.c.b16 %v1846, %v1842
  %v1879 = vpack.c.b16 %v1847, %v1843
  %v1880 = vpack.c.b16 %v1848, %v1844
  %1913 = vmatprep.subr.bf16.mxu0 %v1850
  %1914 = vmatpush1.bf16.msra.mxu0 %v1849
  %1915 = vmatprep.subr.bf16.mxu0 %v1854
  %1916 = vmatpush1.bf16.msra.mxu0 %v1853
  %1917 = vmatprep.subr.bf16.mxu0 %v1858
  %1918 = vmatpush1.bf16.msra.mxu0 %v1857
  %1919 = vmatprep.subr.bf16.mxu0 %v1862
  %1920 = vmatpush1.bf16.msra.mxu0 %v1861
  %1921 = vmatprep.subr.bf16.mxu0 %v1866
  %1922 = vmatpush1.bf16.msra.mxu0 %v1865
  %1923 = vmatprep.subr.bf16.mxu0 %v1870
  %1924 = vmatpush1.bf16.msra.mxu0 %v1869
  %1925 = vmatprep.subr.bf16.mxu0 %v1874
  %1926 = vmatpush1.bf16.msra.mxu0 %v1873
  %1927 = vmatprep.subr.bf16.mxu0 %v1878
  %1928 = vmatpush1.bf16.msra.mxu0 %v1877
  %1929 = vmatprep.subr.bf16.mxu0 0
  %1930 = vmatpush1.bf16.msra.mxu0 0
  %1931 = vmatprep.subr.bf16.mxu0 0
  %1932 = vmatpush1.bf16.msra.mxu0 0
  %1933 = vmatprep.subr.bf16.mxu0 0
  %1934 = vmatpush1.bf16.msra.mxu0 0
  %1935 = vmatprep.subr.bf16.mxu0 0
  %1936 = vmatpush1.bf16.msra.mxu0 0
  %1937 = vmatprep.subr.bf16.mxu0 0
  %1938 = vmatpush1.bf16.msra.mxu0 0
  %1939 = vmatprep.subr.bf16.mxu0 0
  %1940 = vmatpush1.bf16.msra.mxu0 0
  %1941 = vmatprep.subr.bf16.mxu0 0
  %1942 = vmatpush1.bf16.msra.mxu0 0
  %1943 = vmatprep.subr.bf16.mxu0 0
  %1944 = vmatpush1.bf16.msra.mxu0 0
  %1945 = vmatprep.mubr.bf16.mxu0 0
  %1946 = vmatmul.mubr.bf16.gmra.mrb[0].mxu0 %v1720
  %v1947 = vpop.f32.mrb[0].mxu0
  %v1948 = vadd.f32 0.0, %v1947
  %v1949 = vpop.f32.mrb[0].mxu0
  %v1950 = vadd.f32 0.0, %v1949
  %v1951 = vpop.f32.mrb[0].mxu0
  %v1952 = vpop.f32.mrb[0].mxu0
  %1953 = vdwg.mxu0
  %1954 = vmatprep.subr.bf16.mxu0 %v1852
  %1955 = vmatpush1.bf16.msra.mxu0 %v1851
  %1956 = vmatprep.subr.bf16.mxu0 %v1856
  %1957 = vmatpush1.bf16.msra.mxu0 %v1855
  %1958 = vmatprep.subr.bf16.mxu0 %v1860
  %1959 = vmatpush1.bf16.msra.mxu0 %v1859
  %1960 = vmatprep.subr.bf16.mxu0 %v1864
  %1961 = vmatpush1.bf16.msra.mxu0 %v1863
  %1962 = vmatprep.subr.bf16.mxu0 %v1868
  %1963 = vmatpush1.bf16.msra.mxu0 %v1867
  %1964 = vmatprep.subr.bf16.mxu0 %v1872
  %1965 = vmatpush1.bf16.msra.mxu0 %v1871
  %1966 = vmatprep.subr.bf16.mxu0 %v1876
  %1967 = vmatpush1.bf16.msra.mxu0 %v1875
  %1968 = vmatprep.subr.bf16.mxu0 %v1880
  %1969 = vmatpush1.bf16.msra.mxu0 %v1879
  %1970 = vmatprep.subr.bf16.mxu0 0
  %1971 = vmatpush1.bf16.msra.mxu0 0
  %1972 = vmatprep.subr.bf16.mxu0 0
  %1973 = vmatpush1.bf16.msra.mxu0 0
  %1974 = vmatprep.subr.bf16.mxu0 0
  %1975 = vmatpush1.bf16.msra.mxu0 0
  %1976 = vmatprep.subr.bf16.mxu0 0
  %1977 = vmatpush1.bf16.msra.mxu0 0
  %1978 = vmatprep.subr.bf16.mxu0 0
  %1979 = vmatpush1.bf16.msra.mxu0 0
  %1980 = vmatprep.subr.bf16.mxu0 0
  %1981 = vmatpush1.bf16.msra.mxu0 0
  %1982 = vmatprep.subr.bf16.mxu0 0
  %1983 = vmatpush1.bf16.msra.mxu0 0
  %1984 = vmatprep.subr.bf16.mxu0 0
  %1985 = vmatpush1.bf16.msra.mxu0 0
  %1986 = vmatprep.mubr.bf16.mxu0 0
  %1987 = vmatmul.mubr.bf16.gmra.mrb[0].mxu0 %v1720
  %v1988 = vpop.f32.mrb[0].mxu0
  %v1989 = vadd.f32 0.0, %v1988
  %v1990 = vpop.f32.mrb[0].mxu0
  %v1991 = vadd.f32 0.0, %v1990
  %v1992 = vpop.f32.mrb[0].mxu0
  %v1993 = vpop.f32.mrb[0].mxu0
  %1994 = vdwg.mxu0
  %v1995 = vadd.f32 %v1715, %v1948
  %v1996 = vadd.f32 %v1716, %v1950
  %v1997 = vadd.f32 %v1717, %v1989
  %v1998 = vadd.f32 %v1718, %v1991
  %v1999 = vxor.u32 %v1995, 2147483648
  %v2000 = vmul.f32 %v1999, 1.442695
  %v2001 = vpow.pop %v2000
  %v2002 = vadd.f32 %v2001, 1.0
  %v2003 = vrcp.pop %v2002
  %v2004 = vmul.f32 1.0, %v2003
  %v2005 = vxor.u32 %v1996, 2147483648
  %v2006 = vmul.f32 %v2005, 1.442695
  %v2007 = vpow.pop %v2006
  %v2008 = vadd.f32 %v2007, 1.0
  %v2009 = vrcp.pop %v2008
  %v2010 = vmul.f32 1.0, %v2009
  %v2011 = vtanh.pop %v1997
  %v2012 = vxor.u32 %v1998, 2147483648
  %v2013 = vmul.f32 %v2012, 1.442695
  %v2014 = vpow.pop %v2013
  %v2015 = vadd.f32 %v2014, 1.0
  %v2016 = vrcp.pop %v2015
  %v2017 = vmul.f32 1.0, %v2016
  %v2018 = vld [vmem:[#allocation5] sm:$0xff]
  %v2019 = vmul.f32 %v2010, %v2018
  %v2020 = vmul.f32 %v2004, %v2011
  %v2021 = vadd.f32 %v2019, %v2020
  %v2022 = vtanh.pop %v2021
  %v2023 = vmul.f32 %v2017, %v2022
  %2024 = vst [vmem:[#allocation5] sm:$0xff] %v2021
  %2025 = vst [vmem:[#allocation4] sm:$0xff] %v2023
  %s2026 = scalar_lea.vmem [#allocation3], 32
  %2027 = vst [vmem:[%s2026] sm:$0xff] %v2023
  %s2028 = scalar_lea.vmem [#allocation2], 160
  %v2029 = vld [vmem:[%s2028] sm:$0xff]
  %v2030 = vld [vmem:[%s2028 + $0x8] sm:$0xff]
  %v2031 = vld [vmem:[%s2028 + $0x10] sm:$0xff]
  %v2032 = vld [vmem:[%s2028 + $0x18] sm:$0xff]
  %v2033 = vld [vmem:[#allocation4] sm:$0xff]
  %v2034 = vpack.c.bf16 %v2033, %v2033
  %v2035 = vld [vmem:[%s2] sm:$0xff]
  %v2036 = vld [vmem:[%s2 + $0x8] sm:$0xff]
  %v2037 = vld [vmem:[%s2 + $0x10] sm:$0xff]
  %v2038 = vld [vmem:[%s2 + $0x18] sm:$0xff]
  %v2039 = vld [vmem:[%s2 + $0x20] sm:$0xff]
  %v2040 = vld [vmem:[%s2 + $0x28] sm:$0xff]
  %v2041 = vld [vmem:[%s2 + $0x30] sm:$0xff]
  %v2042 = vld [vmem:[%s2 + $0x38] sm:$0xff]
  %v2043 = vld [vmem:[%s2 + $0x40] sm:$0xff]
  %v2044 = vld [vmem:[%s2 + $0x48] sm:$0xff]
  %v2045 = vld [vmem:[%s2 + $0x50] sm:$0xff]
  %v2046 = vld [vmem:[%s2 + $0x58] sm:$0xff]
  %v2047 = vld [vmem:[%s2 + $0x60] sm:$0xff]
  %v2048 = vld [vmem:[%s2 + $0x68] sm:$0xff]
  %v2049 = vld [vmem:[%s2 + $0x70] sm:$0xff]
  %v2050 = vld [vmem:[%s2 + $0x78] sm:$0xff]
  %v2051 = vld [vmem:[%s2 + $0x80] sm:$0xff]
  %v2052 = vld [vmem:[%s2 + $0x88] sm:$0xff]
  %v2053 = vld [vmem:[%s2 + $0x90] sm:$0xff]
  %v2054 = vld [vmem:[%s2 + $0x98] sm:$0xff]
  %v2055 = vld [vmem:[%s2 + $0xa0] sm:$0xff]
  %v2056 = vld [vmem:[%s2 + $0xa8] sm:$0xff]
  %v2057 = vld [vmem:[%s2 + $0xb0] sm:$0xff]
  %v2058 = vld [vmem:[%s2 + $0xb8] sm:$0xff]
  %v2059 = vld [vmem:[%s2 + $0xc0] sm:$0xff]
  %v2060 = vld [vmem:[%s2 + $0xc8] sm:$0xff]
  %v2061 = vld [vmem:[%s2 + $0xd0] sm:$0xff]
  %v2062 = vld [vmem:[%s2 + $0xd8] sm:$0xff]
  %v2063 = vld [vmem:[%s2 + $0xe0] sm:$0xff]
  %v2064 = vld [vmem:[%s2 + $0xe8] sm:$0xff]
  %v2065 = vld [vmem:[%s2 + $0xf0] sm:$0xff]
  %v2066 = vld [vmem:[%s2 + $0xf8] sm:$0xff]
  %v2099 = vunpack.c.l.b16 %v2035
  %v2100 = vunpack.c.h.b16 %v2035
  %v2101 = vunpack.c.l.b16 %v2036
  %v2102 = vunpack.c.h.b16 %v2036
  %v2103 = vunpack.c.l.b16 %v2037
  %v2104 = vunpack.c.h.b16 %v2037
  %v2105 = vunpack.c.l.b16 %v2038
  %v2106 = vunpack.c.h.b16 %v2038
  %v2107 = vunpack.c.l.b16 %v2039
  %v2108 = vunpack.c.h.b16 %v2039
  %v2109 = vunpack.c.l.b16 %v2040
  %v2110 = vunpack.c.h.b16 %v2040
  %v2111 = vunpack.c.l.b16 %v2041
  %v2112 = vunpack.c.h.b16 %v2041
  %v2113 = vunpack.c.l.b16 %v2042
  %v2114 = vunpack.c.h.b16 %v2042
  %v2115 = vunpack.c.l.b16 %v2043
  %v2116 = vunpack.c.h.b16 %v2043
  %v2117 = vunpack.c.l.b16 %v2044
  %v2118 = vunpack.c.h.b16 %v2044
  %v2119 = vunpack.c.l.b16 %v2045
  %v2120 = vunpack.c.h.b16 %v2045
  %v2121 = vunpack.c.l.b16 %v2046
  %v2122 = vunpack.c.h.b16 %v2046
  %v2123 = vunpack.c.l.b16 %v2047
  %v2124 = vunpack.c.h.b16 %v2047
  %v2125 = vunpack.c.l.b16 %v2048
  %v2126 = vunpack.c.h.b16 %v2048
  %v2127 = vunpack.c.l.b16 %v2049
  %v2128 = vunpack.c.h.b16 %v2049
  %v2129 = vunpack.c.l.b16 %v2050
  %v2130 = vunpack.c.h.b16 %v2050
  %v2131 = vunpack.c.l.b16 %v2051
  %v2132 = vunpack.c.h.b16 %v2051
  %v2133 = vunpack.c.l.b16 %v2052
  %v2134 = vunpack.c.h.b16 %v2052
  %v2135 = vunpack.c.l.b16 %v2053
  %v2136 = vunpack.c.h.b16 %v2053
  %v2137 = vunpack.c.l.b16 %v2054
  %v2138 = vunpack.c.h.b16 %v2054
  %v2139 = vunpack.c.l.b16 %v2055
  %v2140 = vunpack.c.h.b16 %v2055
  %v2141 = vunpack.c.l.b16 %v2056
  %v2142 = vunpack.c.h.b16 %v2056
  %v2143 = vunpack.c.l.b16 %v2057
  %v2144 = vunpack.c.h.b16 %v2057
  %v2145 = vunpack.c.l.b16 %v2058
  %v2146 = vunpack.c.h.b16 %v2058
  %v2147 = vunpack.c.l.b16 %v2059
  %v2148 = vunpack.c.h.b16 %v2059
  %v2149 = vunpack.c.l.b16 %v2060
  %v2150 = vunpack.c.h.b16 %v2060
  %v2151 = vunpack.c.l.b16 %v2061
  %v2152 = vunpack.c.h.b16 %v2061
  %v2153 = vunpack.c.l.b16 %v2062
  %v2154 = vunpack.c.h.b16 %v2062
  %v2155 = vunpack.c.l.b16 %v2063
  %v2156 = vunpack.c.h.b16 %v2063
  %v2157 = vunpack.c.l.b16 %v2064
  %v2158 = vunpack.c.h.b16 %v2064
  %v2159 = vunpack.c.l.b16 %v2065
  %v2160 = vunpack.c.h.b16 %v2065
  %v2161 = vunpack.c.l.b16 %v2066
  %v2162 = vunpack.c.h.b16 %v2066
  %v2163 = vpack.c.b16 %v2103, %v2099
  %v2164 = vpack.c.b16 %v2104, %v2100
  %v2165 = vpack.c.b16 %v2105, %v2101
  %v2166 = vpack.c.b16 %v2106, %v2102
  %v2167 = vpack.c.b16 %v2111, %v2107
  %v2168 = vpack.c.b16 %v2112, %v2108
  %v2169 = vpack.c.b16 %v2113, %v2109
  %v2170 = vpack.c.b16 %v2114, %v2110
  %v2171 = vpack.c.b16 %v2119, %v2115
  %v2172 = vpack.c.b16 %v2120, %v2116
  %v2173 = vpack.c.b16 %v2121, %v2117
  %v2174 = vpack.c.b16 %v2122, %v2118
  %v2175 = vpack.c.b16 %v2127, %v2123
  %v2176 = vpack.c.b16 %v2128, %v2124
  %v2177 = vpack.c.b16 %v2129, %v2125
  %v2178 = vpack.c.b16 %v2130, %v2126
  %v2179 = vpack.c.b16 %v2135, %v2131
  %v2180 = vpack.c.b16 %v2136, %v2132
  %v2181 = vpack.c.b16 %v2137, %v2133
  %v2182 = vpack.c.b16 %v2138, %v2134
  %v2183 = vpack.c.b16 %v2143, %v2139
  %v2184 = vpack.c.b16 %v2144, %v2140
  %v2185 = vpack.c.b16 %v2145, %v2141
  %v2186 = vpack.c.b16 %v2146, %v2142
  %v2187 = vpack.c.b16 %v2151, %v2147
  %v2188 = vpack.c.b16 %v2152, %v2148
  %v2189 = vpack.c.b16 %v2153, %v2149
  %v2190 = vpack.c.b16 %v2154, %v2150
  %v2191 = vpack.c.b16 %v2159, %v2155
  %v2192 = vpack.c.b16 %v2160, %v2156
  %v2193 = vpack.c.b16 %v2161, %v2157
  %v2194 = vpack.c.b16 %v2162, %v2158
  %2227 = vmatprep.subr.bf16.mxu0 %v2164
  %2228 = vmatpush1.bf16.msra.mxu0 %v2163
  %2229 = vmatprep.subr.bf16.mxu0 %v2168
  %2230 = vmatpush1.bf16.msra.mxu0 %v2167
  %2231 = vmatprep.subr.bf16.mxu0 %v2172
  %2232 = vmatpush1.bf16.msra.mxu0 %v2171
  %2233 = vmatprep.subr.bf16.mxu0 %v2176
  %2234 = vmatpush1.bf16.msra.mxu0 %v2175
  %2235 = vmatprep.subr.bf16.mxu0 %v2180
  %2236 = vmatpush1.bf16.msra.mxu0 %v2179
  %2237 = vmatprep.subr.bf16.mxu0 %v2184
  %2238 = vmatpush1.bf16.msra.mxu0 %v2183
  %2239 = vmatprep.subr.bf16.mxu0 %v2188
  %2240 = vmatpush1.bf16.msra.mxu0 %v2187
  %2241 = vmatprep.subr.bf16.mxu0 %v2192
  %2242 = vmatpush1.bf16.msra.mxu0 %v2191
  %2243 = vmatprep.subr.bf16.mxu0 0
  %2244 = vmatpush1.bf16.msra.mxu0 0
  %2245 = vmatprep.subr.bf16.mxu0 0
  %2246 = vmatpush1.bf16.msra.mxu0 0
  %2247 = vmatprep.subr.bf16.mxu0 0
  %2248 = vmatpush1.bf16.msra.mxu0 0
  %2249 = vmatprep.subr.bf16.mxu0 0
  %2250 = vmatpush1.bf16.msra.mxu0 0
  %2251 = vmatprep.subr.bf16.mxu0 0
  %2252 = vmatpush1.bf16.msra.mxu0 0
  %2253 = vmatprep.subr.bf16.mxu0 0
  %2254 = vmatpush1.bf16.msra.mxu0 0
  %2255 = vmatprep.subr.bf16.mxu0 0
  %2256 = vmatpush1.bf16.msra.mxu0 0
  %2257 = vmatprep.subr.bf16.mxu0 0
  %2258 = vmatpush1.bf16.msra.mxu0 0
  %2259 = vmatprep.mubr.bf16.mxu0 0
  %2260 = vmatmul.mubr.bf16.gmra.mrb[0].mxu0 %v2034
  %v2261 = vpop.f32.mrb[0].mxu0
  %v2262 = vadd.f32 0.0, %v2261
  %v2263 = vpop.f32.mrb[0].mxu0
  %v2264 = vadd.f32 0.0, %v2263
  %v2265 = vpop.f32.mrb[0].mxu0
  %v2266 = vpop.f32.mrb[0].mxu0
  %2267 = vdwg.mxu0
  %2268 = vmatprep.subr.bf16.mxu0 %v2166
  %2269 = vmatpush1.bf16.msra.mxu0 %v2165
  %2270 = vmatprep.subr.bf16.mxu0 %v2170
  %2271 = vmatpush1.bf16.msra.mxu0 %v2169
  %2272 = vmatprep.subr.bf16.mxu0 %v2174
  %2273 = vmatpush1.bf16.msra.mxu0 %v2173
  %2274 = vmatprep.subr.bf16.mxu0 %v2178
  %2275 = vmatpush1.bf16.msra.mxu0 %v2177
  %2276 = vmatprep.subr.bf16.mxu0 %v2182
  %2277 = vmatpush1.bf16.msra.mxu0 %v2181
  %2278 = vmatprep.subr.bf16.mxu0 %v2186
  %2279 = vmatpush1.bf16.msra.mxu0 %v2185
  %2280 = vmatprep.subr.bf16.mxu0 %v2190
  %2281 = vmatpush1.bf16.msra.mxu0 %v2189
  %2282 = vmatprep.subr.bf16.mxu0 %v2194
  %2283 = vmatpush1.bf16.msra.mxu0 %v2193
  %2284 = vmatprep.subr.bf16.mxu0 0
  %2285 = vmatpush1.bf16.msra.mxu0 0
  %2286 = vmatprep.subr.bf16.mxu0 0
  %2287 = vmatpush1.bf16.msra.mxu0 0
  %2288 = vmatprep.subr.bf16.mxu0 0
  %2289 = vmatpush1.bf16.msra.mxu0 0
  %2290 = vmatprep.subr.bf16.mxu0 0
  %2291 = vmatpush1.bf16.msra.mxu0 0
  %2292 = vmatprep.subr.bf16.mxu0 0
  %2293 = vmatpush1.bf16.msra.mxu0 0
  %2294 = vmatprep.subr.bf16.mxu0 0
  %2295 = vmatpush1.bf16.msra.mxu0 0
  %2296 = vmatprep.subr.bf16.mxu0 0
  %2297 = vmatpush1.bf16.msra.mxu0 0
  %2298 = vmatprep.subr.bf16.mxu0 0
  %2299 = vmatpush1.bf16.msra.mxu0 0
  %2300 = vmatprep.mubr.bf16.mxu0 0
  %2301 = vmatmul.mubr.bf16.gmra.mrb[0].mxu0 %v2034
  %v2302 = vpop.f32.mrb[0].mxu0
  %v2303 = vadd.f32 0.0, %v2302
  %v2304 = vpop.f32.mrb[0].mxu0
  %v2305 = vadd.f32 0.0, %v2304
  %v2306 = vpop.f32.mrb[0].mxu0
  %v2307 = vpop.f32.mrb[0].mxu0
  %2308 = vdwg.mxu0
  %v2309 = vadd.f32 %v2029, %v2262
  %v2310 = vadd.f32 %v2030, %v2264
  %v2311 = vadd.f32 %v2031, %v2303
  %v2312 = vadd.f32 %v2032, %v2305
  %v2313 = vxor.u32 %v2309, 2147483648
  %v2314 = vmul.f32 %v2313, 1.442695
  %v2315 = vpow.pop %v2314
  %v2316 = vadd.f32 %v2315, 1.0
  %v2317 = vrcp.pop %v2316
  %v2318 = vmul.f32 1.0, %v2317
  %v2319 = vxor.u32 %v2310, 2147483648
  %v2320 = vmul.f32 %v2319, 1.442695
  %v2321 = vpow.pop %v2320
  %v2322 = vadd.f32 %v2321, 1.0
  %v2323 = vrcp.pop %v2322
  %v2324 = vmul.f32 1.0, %v2323
  %v2325 = vtanh.pop %v2311
  %v2326 = vxor.u32 %v2312, 2147483648
  %v2327 = vmul.f32 %v2326, 1.442695
  %v2328 = vpow.pop %v2327
  %v2329 = vadd.f32 %v2328, 1.0
  %v2330 = vrcp.pop %v2329
  %v2331 = vmul.f32 1.0, %v2330
  %v2332 = vld [vmem:[#allocation5] sm:$0xff]
  %v2333 = vmul.f32 %v2324, %v2332
  %v2334 = vmul.f32 %v2318, %v2325
  %v2335 = vadd.f32 %v2333, %v2334
  %v2336 = vtanh.pop %v2335
  %v2337 = vmul.f32 %v2331, %v2336
  %2338 = vst [vmem:[#allocation5] sm:$0xff] %v2335
  %2339 = vst [vmem:[#allocation4] sm:$0xff] %v2337
  %s2340 = scalar_lea.vmem [#allocation3], 40
  %2341 = vst [vmem:[%s2340] sm:$0xff] %v2337
  %s2342 = scalar_lea.vmem [#allocation2], 192
  %v2343 = vld [vmem:[%s2342] sm:$0xff]
  %v2344 = vld [vmem:[%s2342 + $0x8] sm:$0xff]
  %v2345 = vld [vmem:[%s2342 + $0x10] sm:$0xff]
  %v2346 = vld [vmem:[%s2342 + $0x18] sm:$0xff]
  %v2347 = vld [vmem:[#allocation4] sm:$0xff]
  %v2348 = vpack.c.bf16 %v2347, %v2347
  %v2349 = vld [vmem:[%s2] sm:$0xff]
  %v2350 = vld [vmem:[%s2 + $0x8] sm:$0xff]
  %v2351 = vld [vmem:[%s2 + $0x10] sm:$0xff]
  %v2352 = vld [vmem:[%s2 + $0x18] sm:$0xff]
  %v2353 = vld [vmem:[%s2 + $0x20] sm:$0xff]
  %v2354 = vld [vmem:[%s2 + $0x28] sm:$0xff]
  %v2355 = vld [vmem:[%s2 + $0x30] sm:$0xff]
  %v2356 = vld [vmem:[%s2 + $0x38] sm:$0xff]
  %v2357 = vld [vmem:[%s2 + $0x40] sm:$0xff]
  %v2358 = vld [vmem:[%s2 + $0x48] sm:$0xff]
  %v2359 = vld [vmem:[%s2 + $0x50] sm:$0xff]
  %v2360 = vld [vmem:[%s2 + $0x58] sm:$0xff]
  %v2361 = vld [vmem:[%s2 + $0x60] sm:$0xff]
  %v2362 = vld [vmem:[%s2 + $0x68] sm:$0xff]
  %v2363 = vld [vmem:[%s2 + $0x70] sm:$0xff]
  %v2364 = vld [vmem:[%s2 + $0x78] sm:$0xff]
  %v2365 = vld [vmem:[%s2 + $0x80] sm:$0xff]
  %v2366 = vld [vmem:[%s2 + $0x88] sm:$0xff]
  %v2367 = vld [vmem:[%s2 + $0x90] sm:$0xff]
  %v2368 = vld [vmem:[%s2 + $0x98] sm:$0xff]
  %v2369 = vld [vmem:[%s2 + $0xa0] sm:$0xff]
  %v2370 = vld [vmem:[%s2 + $0xa8] sm:$0xff]
  %v2371 = vld [vmem:[%s2 + $0xb0] sm:$0xff]
  %v2372 = vld [vmem:[%s2 + $0xb8] sm:$0xff]
  %v2373 = vld [vmem:[%s2 + $0xc0] sm:$0xff]
  %v2374 = vld [vmem:[%s2 + $0xc8] sm:$0xff]
  %v2375 = vld [vmem:[%s2 + $0xd0] sm:$0xff]
  %v2376 = vld [vmem:[%s2 + $0xd8] sm:$0xff]
  %v2377 = vld [vmem:[%s2 + $0xe0] sm:$0xff]
  %v2378 = vld [vmem:[%s2 + $0xe8] sm:$0xff]
  %v2379 = vld [vmem:[%s2 + $0xf0] sm:$0xff]
  %v2380 = vld [vmem:[%s2 + $0xf8] sm:$0xff]
  %v2413 = vunpack.c.l.b16 %v2349
  %v2414 = vunpack.c.h.b16 %v2349
  %v2415 = vunpack.c.l.b16 %v2350
  %v2416 = vunpack.c.h.b16 %v2350
  %v2417 = vunpack.c.l.b16 %v2351
  %v2418 = vunpack.c.h.b16 %v2351
  %v2419 = vunpack.c.l.b16 %v2352
  %v2420 = vunpack.c.h.b16 %v2352
  %v2421 = vunpack.c.l.b16 %v2353
  %v2422 = vunpack.c.h.b16 %v2353
  %v2423 = vunpack.c.l.b16 %v2354
  %v2424 = vunpack.c.h.b16 %v2354
  %v2425 = vunpack.c.l.b16 %v2355
  %v2426 = vunpack.c.h.b16 %v2355
  %v2427 = vunpack.c.l.b16 %v2356
  %v2428 = vunpack.c.h.b16 %v2356
  %v2429 = vunpack.c.l.b16 %v2357
  %v2430 = vunpack.c.h.b16 %v2357
  %v2431 = vunpack.c.l.b16 %v2358
  %v2432 = vunpack.c.h.b16 %v2358
  %v2433 = vunpack.c.l.b16 %v2359
  %v2434 = vunpack.c.h.b16 %v2359
  %v2435 = vunpack.c.l.b16 %v2360
  %v2436 = vunpack.c.h.b16 %v2360
  %v2437 = vunpack.c.l.b16 %v2361
  %v2438 = vunpack.c.h.b16 %v2361
  %v2439 = vunpack.c.l.b16 %v2362
  %v2440 = vunpack.c.h.b16 %v2362
  %v2441 = vunpack.c.l.b16 %v2363
  %v2442 = vunpack.c.h.b16 %v2363
  %v2443 = vunpack.c.l.b16 %v2364
  %v2444 = vunpack.c.h.b16 %v2364
  %v2445 = vunpack.c.l.b16 %v2365
  %v2446 = vunpack.c.h.b16 %v2365
  %v2447 = vunpack.c.l.b16 %v2366
  %v2448 = vunpack.c.h.b16 %v2366
  %v2449 = vunpack.c.l.b16 %v2367
  %v2450 = vunpack.c.h.b16 %v2367
  %v2451 = vunpack.c.l.b16 %v2368
  %v2452 = vunpack.c.h.b16 %v2368
  %v2453 = vunpack.c.l.b16 %v2369
  %v2454 = vunpack.c.h.b16 %v2369
  %v2455 = vunpack.c.l.b16 %v2370
  %v2456 = vunpack.c.h.b16 %v2370
  %v2457 = vunpack.c.l.b16 %v2371
  %v2458 = vunpack.c.h.b16 %v2371
  %v2459 = vunpack.c.l.b16 %v2372
  %v2460 = vunpack.c.h.b16 %v2372
  %v2461 = vunpack.c.l.b16 %v2373
  %v2462 = vunpack.c.h.b16 %v2373
  %v2463 = vunpack.c.l.b16 %v2374
  %v2464 = vunpack.c.h.b16 %v2374
  %v2465 = vunpack.c.l.b16 %v2375
  %v2466 = vunpack.c.h.b16 %v2375
  %v2467 = vunpack.c.l.b16 %v2376
  %v2468 = vunpack.c.h.b16 %v2376
  %v2469 = vunpack.c.l.b16 %v2377
  %v2470 = vunpack.c.h.b16 %v2377
  %v2471 = vunpack.c.l.b16 %v2378
  %v2472 = vunpack.c.h.b16 %v2378
  %v2473 = vunpack.c.l.b16 %v2379
  %v2474 = vunpack.c.h.b16 %v2379
  %v2475 = vunpack.c.l.b16 %v2380
  %v2476 = vunpack.c.h.b16 %v2380
  %v2477 = vpack.c.b16 %v2417, %v2413
  %v2478 = vpack.c.b16 %v2418, %v2414
  %v2479 = vpack.c.b16 %v2419, %v2415
  %v2480 = vpack.c.b16 %v2420, %v2416
  %v2481 = vpack.c.b16 %v2425, %v2421
  %v2482 = vpack.c.b16 %v2426, %v2422
  %v2483 = vpack.c.b16 %v2427, %v2423
  %v2484 = vpack.c.b16 %v2428, %v2424
  %v2485 = vpack.c.b16 %v2433, %v2429
  %v2486 = vpack.c.b16 %v2434, %v2430
  %v2487 = vpack.c.b16 %v2435, %v2431
  %v2488 = vpack.c.b16 %v2436, %v2432
  %v2489 = vpack.c.b16 %v2441, %v2437
  %v2490 = vpack.c.b16 %v2442, %v2438
  %v2491 = vpack.c.b16 %v2443, %v2439
  %v2492 = vpack.c.b16 %v2444, %v2440
  %v2493 = vpack.c.b16 %v2449, %v2445
  %v2494 = vpack.c.b16 %v2450, %v2446
  %v2495 = vpack.c.b16 %v2451, %v2447
  %v2496 = vpack.c.b16 %v2452, %v2448
  %v2497 = vpack.c.b16 %v2457, %v2453
  %v2498 = vpack.c.b16 %v2458, %v2454
  %v2499 = vpack.c.b16 %v2459, %v2455
  %v2500 = vpack.c.b16 %v2460, %v2456
  %v2501 = vpack.c.b16 %v2465, %v2461
  %v2502 = vpack.c.b16 %v2466, %v2462
  %v2503 = vpack.c.b16 %v2467, %v2463
  %v2504 = vpack.c.b16 %v2468, %v2464
  %v2505 = vpack.c.b16 %v2473, %v2469
  %v2506 = vpack.c.b16 %v2474, %v2470
  %v2507 = vpack.c.b16 %v2475, %v2471
  %v2508 = vpack.c.b16 %v2476, %v2472
  %2541 = vmatprep.subr.bf16.mxu0 %v2478
  %2542 = vmatpush1.bf16.msra.mxu0 %v2477
  %2543 = vmatprep.subr.bf16.mxu0 %v2482
  %2544 = vmatpush1.bf16.msra.mxu0 %v2481
  %2545 = vmatprep.subr.bf16.mxu0 %v2486
  %2546 = vmatpush1.bf16.msra.mxu0 %v2485
  %2547 = vmatprep.subr.bf16.mxu0 %v2490
  %2548 = vmatpush1.bf16.msra.mxu0 %v2489
  %2549 = vmatprep.subr.bf16.mxu0 %v2494
  %2550 = vmatpush1.bf16.msra.mxu0 %v2493
  %2551 = vmatprep.subr.bf16.mxu0 %v2498
  %2552 = vmatpush1.bf16.msra.mxu0 %v2497
  %2553 = vmatprep.subr.bf16.mxu0 %v2502
  %2554 = vmatpush1.bf16.msra.mxu0 %v2501
  %2555 = vmatprep.subr.bf16.mxu0 %v2506
  %2556 = vmatpush1.bf16.msra.mxu0 %v2505
  %2557 = vmatprep.subr.bf16.mxu0 0
  %2558 = vmatpush1.bf16.msra.mxu0 0
  %2559 = vmatprep.subr.bf16.mxu0 0
  %2560 = vmatpush1.bf16.msra.mxu0 0
  %2561 = vmatprep.subr.bf16.mxu0 0
  %2562 = vmatpush1.bf16.msra.mxu0 0
  %2563 = vmatprep.subr.bf16.mxu0 0
  %2564 = vmatpush1.bf16.msra.mxu0 0
  %2565 = vmatprep.subr.bf16.mxu0 0
  %2566 = vmatpush1.bf16.msra.mxu0 0
  %2567 = vmatprep.subr.bf16.mxu0 0
  %2568 = vmatpush1.bf16.msra.mxu0 0
  %2569 = vmatprep.subr.bf16.mxu0 0
  %2570 = vmatpush1.bf16.msra.mxu0 0
  %2571 = vmatprep.subr.bf16.mxu0 0
  %2572 = vmatpush1.bf16.msra.mxu0 0
  %2573 = vmatprep.mubr.bf16.mxu0 0
  %2574 = vmatmul.mubr.bf16.gmra.mrb[0].mxu0 %v2348
  %v2575 = vpop.f32.mrb[0].mxu0
  %v2576 = vadd.f32 0.0, %v2575
  %v2577 = vpop.f32.mrb[0].mxu0
  %v2578 = vadd.f32 0.0, %v2577
  %v2579 = vpop.f32.mrb[0].mxu0
  %v2580 = vpop.f32.mrb[0].mxu0
  %2581 = vdwg.mxu0
  %2582 = vmatprep.subr.bf16.mxu0 %v2480
  %2583 = vmatpush1.bf16.msra.mxu0 %v2479
  %2584 = vmatprep.subr.bf16.mxu0 %v2484
  %2585 = vmatpush1.bf16.msra.mxu0 %v2483
  %2586 = vmatprep.subr.bf16.mxu0 %v2488
  %2587 = vmatpush1.bf16.msra.mxu0 %v2487
  %2588 = vmatprep.subr.bf16.mxu0 %v2492
  %2589 = vmatpush1.bf16.msra.mxu0 %v2491
  %2590 = vmatprep.subr.bf16.mxu0 %v2496
  %2591 = vmatpush1.bf16.msra.mxu0 %v2495
  %2592 = vmatprep.subr.bf16.mxu0 %v2500
  %2593 = vmatpush1.bf16.msra.mxu0 %v2499
  %2594 = vmatprep.subr.bf16.mxu0 %v2504
  %2595 = vmatpush1.bf16.msra.mxu0 %v2503
  %2596 = vmatprep.subr.bf16.mxu0 %v2508
  %2597 = vmatpush1.bf16.msra.mxu0 %v2507
  %2598 = vmatprep.subr.bf16.mxu0 0
  %2599 = vmatpush1.bf16.msra.mxu0 0
  %2600 = vmatprep.subr.bf16.mxu0 0
  %2601 = vmatpush1.bf16.msra.mxu0 0
  %2602 = vmatprep.subr.bf16.mxu0 0
  %2603 = vmatpush1.bf16.msra.mxu0 0
  %2604 = vmatprep.subr.bf16.mxu0 0
  %2605 = vmatpush1.bf16.msra.mxu0 0
  %2606 = vmatprep.subr.bf16.mxu0 0
  %2607 = vmatpush1.bf16.msra.mxu0 0
  %2608 = vmatprep.subr.bf16.mxu0 0
  %2609 = vmatpush1.bf16.msra.mxu0 0
  %2610 = vmatprep.subr.bf16.mxu0 0
  %2611 = vmatpush1.bf16.msra.mxu0 0
  %2612 = vmatprep.subr.bf16.mxu0 0
  %2613 = vmatpush1.bf16.msra.mxu0 0
  %2614 = vmatprep.mubr.bf16.mxu0 0
  %2615 = vmatmul.mubr.bf16.gmra.mrb[0].mxu0 %v2348
  %v2616 = vpop.f32.mrb[0].mxu0
  %v2617 = vadd.f32 0.0, %v2616
  %v2618 = vpop.f32.mrb[0].mxu0
  %v2619 = vadd.f32 0.0, %v2618
  %v2620 = vpop.f32.mrb[0].mxu0
  %v2621 = vpop.f32.mrb[0].mxu0
  %2622 = vdwg.mxu0
  %v2623 = vadd.f32 %v2343, %v2576
  %v2624 = vadd.f32 %v2344, %v2578
  %v2625 = vadd.f32 %v2345, %v2617
  %v2626 = vadd.f32 %v2346, %v2619
  %v2627 = vxor.u32 %v2623, 2147483648
  %v2628 = vmul.f32 %v2627, 1.442695
  %v2629 = vpow.pop %v2628
  %v2630 = vadd.f32 %v2629, 1.0
  %v2631 = vrcp.pop %v2630
  %v2632 = vmul.f32 1.0, %v2631
  %v2633 = vxor.u32 %v2624, 2147483648
  %v2634 = vmul.f32 %v2633, 1.442695
  %v2635 = vpow.pop %v2634
  %v2636 = vadd.f32 %v2635, 1.0
  %v2637 = vrcp.pop %v2636
  %v2638 = vmul.f32 1.0, %v2637
  %v2639 = vtanh.pop %v2625
  %v2640 = vxor.u32 %v2626, 2147483648
  %v2641 = vmul.f32 %v2640, 1.442695
  %v2642 = vpow.pop %v2641
  %v2643 = vadd.f32 %v2642, 1.0
  %v2644 = vrcp.pop %v2643
  %v2645 = vmul.f32 1.0, %v2644
  %v2646 = vld [vmem:[#allocation5] sm:$0xff]
  %v2647 = vmul.f32 %v2638, %v2646
  %v2648 = vmul.f32 %v2632, %v2639
  %v2649 = vadd.f32 %v2647, %v2648
  %v2650 = vtanh.pop %v2649
  %v2651 = vmul.f32 %v2645, %v2650
  %2652 = vst [vmem:[#allocation5] sm:$0xff] %v2649
  %2653 = vst [vmem:[#allocation4] sm:$0xff] %v2651
  %s2654 = scalar_lea.vmem [#allocation3], 48
  %2655 = vst [vmem:[%s2654] sm:$0xff] %v2651
  %s2656 = scalar_lea.vmem [#allocation2], 224
  %v2657 = vld [vmem:[%s2656] sm:$0xff]
  %v2658 = vld [vmem:[%s2656 + $0x8] sm:$0xff]
  %v2659 = vld [vmem:[%s2656 + $0x10] sm:$0xff]
  %v2660 = vld [vmem:[%s2656 + $0x18] sm:$0xff]
  %v2661 = vld [vmem:[#allocation4] sm:$0xff]
  %v2662 = vpack.c.bf16 %v2661, %v2661
  %v2663 = vld [vmem:[%s2] sm:$0xff]
  %v2664 = vld [vmem:[%s2 + $0x8] sm:$0xff]
  %v2665 = vld [vmem:[%s2 + $0x10] sm:$0xff]
  %v2666 = vld [vmem:[%s2 + $0x18] sm:$0xff]
  %v2667 = vld [vmem:[%s2 + $0x20] sm:$0xff]
  %v2668 = vld [vmem:[%s2 + $0x28] sm:$0xff]
  %v2669 = vld [vmem:[%s2 + $0x30] sm:$0xff]
  %v2670 = vld [vmem:[%s2 + $0x38] sm:$0xff]
  %v2671 = vld [vmem:[%s2 + $0x40] sm:$0xff]
  %v2672 = vld [vmem:[%s2 + $0x48] sm:$0xff]
  %v2673 = vld [vmem:[%s2 + $0x50] sm:$0xff]
  %v2674 = vld [vmem:[%s2 + $0x58] sm:$0xff]
  %v2675 = vld [vmem:[%s2 + $0x60] sm:$0xff]
  %v2676 = vld [vmem:[%s2 + $0x68] sm:$0xff]
  %v2677 = vld [vmem:[%s2 + $0x70] sm:$0xff]
  %v2678 = vld [vmem:[%s2 + $0x78] sm:$0xff]
  %v2679 = vld [vmem:[%s2 + $0x80] sm:$0xff]
  %v2680 = vld [vmem:[%s2 + $0x88] sm:$0xff]
  %v2681 = vld [vmem:[%s2 + $0x90] sm:$0xff]
  %v2682 = vld [vmem:[%s2 + $0x98] sm:$0xff]
  %v2683 = vld [vmem:[%s2 + $0xa0] sm:$0xff]
  %v2684 = vld [vmem:[%s2 + $0xa8] sm:$0xff]
  %v2685 = vld [vmem:[%s2 + $0xb0] sm:$0xff]
  %v2686 = vld [vmem:[%s2 + $0xb8] sm:$0xff]
  %v2687 = vld [vmem:[%s2 + $0xc0] sm:$0xff]
  %v2688 = vld [vmem:[%s2 + $0xc8] sm:$0xff]
  %v2689 = vld [vmem:[%s2 + $0xd0] sm:$0xff]
  %v2690 = vld [vmem:[%s2 + $0xd8] sm:$0xff]
  %v2691 = vld [vmem:[%s2 + $0xe0] sm:$0xff]
  %v2692 = vld [vmem:[%s2 + $0xe8] sm:$0xff]
  %v2693 = vld [vmem:[%s2 + $0xf0] sm:$0xff]
  %v2694 = vld [vmem:[%s2 + $0xf8] sm:$0xff]
  %v2727 = vunpack.c.l.b16 %v2663
  %v2728 = vunpack.c.h.b16 %v2663
  %v2729 = vunpack.c.l.b16 %v2664
  %v2730 = vunpack.c.h.b16 %v2664
  %v2731 = vunpack.c.l.b16 %v2665
  %v2732 = vunpack.c.h.b16 %v2665
  %v2733 = vunpack.c.l.b16 %v2666
  %v2734 = vunpack.c.h.b16 %v2666
  %v2735 = vunpack.c.l.b16 %v2667
  %v2736 = vunpack.c.h.b16 %v2667
  %v2737 = vunpack.c.l.b16 %v2668
  %v2738 = vunpack.c.h.b16 %v2668
  %v2739 = vunpack.c.l.b16 %v2669
  %v2740 = vunpack.c.h.b16 %v2669
  %v2741 = vunpack.c.l.b16 %v2670
  %v2742 = vunpack.c.h.b16 %v2670
  %v2743 = vunpack.c.l.b16 %v2671
  %v2744 = vunpack.c.h.b16 %v2671
  %v2745 = vunpack.c.l.b16 %v2672
  %v2746 = vunpack.c.h.b16 %v2672
  %v2747 = vunpack.c.l.b16 %v2673
  %v2748 = vunpack.c.h.b16 %v2673
  %v2749 = vunpack.c.l.b16 %v2674
  %v2750 = vunpack.c.h.b16 %v2674
  %v2751 = vunpack.c.l.b16 %v2675
  %v2752 = vunpack.c.h.b16 %v2675
  %v2753 = vunpack.c.l.b16 %v2676
  %v2754 = vunpack.c.h.b16 %v2676
  %v2755 = vunpack.c.l.b16 %v2677
  %v2756 = vunpack.c.h.b16 %v2677
  %v2757 = vunpack.c.l.b16 %v2678
  %v2758 = vunpack.c.h.b16 %v2678
  %v2759 = vunpack.c.l.b16 %v2679
  %v2760 = vunpack.c.h.b16 %v2679
  %v2761 = vunpack.c.l.b16 %v2680
  %v2762 = vunpack.c.h.b16 %v2680
  %v2763 = vunpack.c.l.b16 %v2681
  %v2764 = vunpack.c.h.b16 %v2681
  %v2765 = vunpack.c.l.b16 %v2682
  %v2766 = vunpack.c.h.b16 %v2682
  %v2767 = vunpack.c.l.b16 %v2683
  %v2768 = vunpack.c.h.b16 %v2683
  %v2769 = vunpack.c.l.b16 %v2684
  %v2770 = vunpack.c.h.b16 %v2684
  %v2771 = vunpack.c.l.b16 %v2685
  %v2772 = vunpack.c.h.b16 %v2685
  %v2773 = vunpack.c.l.b16 %v2686
  %v2774 = vunpack.c.h.b16 %v2686
  %v2775 = vunpack.c.l.b16 %v2687
  %v2776 = vunpack.c.h.b16 %v2687
  %v2777 = vunpack.c.l.b16 %v2688
  %v2778 = vunpack.c.h.b16 %v2688
  %v2779 = vunpack.c.l.b16 %v2689
  %v2780 = vunpack.c.h.b16 %v2689
  %v2781 = vunpack.c.l.b16 %v2690
  %v2782 = vunpack.c.h.b16 %v2690
  %v2783 = vunpack.c.l.b16 %v2691
  %v2784 = vunpack.c.h.b16 %v2691
  %v2785 = vunpack.c.l.b16 %v2692
  %v2786 = vunpack.c.h.b16 %v2692
  %v2787 = vunpack.c.l.b16 %v2693
  %v2788 = vunpack.c.h.b16 %v2693
  %v2789 = vunpack.c.l.b16 %v2694
  %v2790 = vunpack.c.h.b16 %v2694
  %v2791 = vpack.c.b16 %v2731, %v2727
  %v2792 = vpack.c.b16 %v2732, %v2728
  %v2793 = vpack.c.b16 %v2733, %v2729
  %v2794 = vpack.c.b16 %v2734, %v2730
  %v2795 = vpack.c.b16 %v2739, %v2735
  %v2796 = vpack.c.b16 %v2740, %v2736
  %v2797 = vpack.c.b16 %v2741, %v2737
  %v2798 = vpack.c.b16 %v2742, %v2738
  %v2799 = vpack.c.b16 %v2747, %v2743
  %v2800 = vpack.c.b16 %v2748, %v2744
  %v2801 = vpack.c.b16 %v2749, %v2745
  %v2802 = vpack.c.b16 %v2750, %v2746
  %v2803 = vpack.c.b16 %v2755, %v2751
  %v2804 = vpack.c.b16 %v2756, %v2752
  %v2805 = vpack.c.b16 %v2757, %v2753
  %v2806 = vpack.c.b16 %v2758, %v2754
  %v2807 = vpack.c.b16 %v2763, %v2759
  %v2808 = vpack.c.b16 %v2764, %v2760
  %v2809 = vpack.c.b16 %v2765, %v2761
  %v2810 = vpack.c.b16 %v2766, %v2762
  %v2811 = vpack.c.b16 %v2771, %v2767
  %v2812 = vpack.c.b16 %v2772, %v2768
  %v2813 = vpack.c.b16 %v2773, %v2769
  %v2814 = vpack.c.b16 %v2774, %v2770
  %v2815 = vpack.c.b16 %v2779, %v2775
  %v2816 = vpack.c.b16 %v2780, %v2776
  %v2817 = vpack.c.b16 %v2781, %v2777
  %v2818 = vpack.c.b16 %v2782, %v2778
  %v2819 = vpack.c.b16 %v2787, %v2783
  %v2820 = vpack.c.b16 %v2788, %v2784
  %v2821 = vpack.c.b16 %v2789, %v2785
  %v2822 = vpack.c.b16 %v2790, %v2786
  %2855 = vmatprep.subr.bf16.mxu0 %v2792
  %2856 = vmatpush1.bf16.msra.mxu0 %v2791
  %2857 = vmatprep.subr.bf16.mxu0 %v2796
  %2858 = vmatpush1.bf16.msra.mxu0 %v2795
  %2859 = vmatprep.subr.bf16.mxu0 %v2800
  %2860 = vmatpush1.bf16.msra.mxu0 %v2799
  %2861 = vmatprep.subr.bf16.mxu0 %v2804
  %2862 = vmatpush1.bf16.msra.mxu0 %v2803
  %2863 = vmatprep.subr.bf16.mxu0 %v2808
  %2864 = vmatpush1.bf16.msra.mxu0 %v2807
  %2865 = vmatprep.subr.bf16.mxu0 %v2812
  %2866 = vmatpush1.bf16.msra.mxu0 %v2811
  %2867 = vmatprep.subr.bf16.mxu0 %v2816
  %2868 = vmatpush1.bf16.msra.mxu0 %v2815
  %2869 = vmatprep.subr.bf16.mxu0 %v2820
  %2870 = vmatpush1.bf16.msra.mxu0 %v2819
  %2871 = vmatprep.subr.bf16.mxu0 0
  %2872 = vmatpush1.bf16.msra.mxu0 0
  %2873 = vmatprep.subr.bf16.mxu0 0
  %2874 = vmatpush1.bf16.msra.mxu0 0
  %2875 = vmatprep.subr.bf16.mxu0 0
  %2876 = vmatpush1.bf16.msra.mxu0 0
  %2877 = vmatprep.subr.bf16.mxu0 0
  %2878 = vmatpush1.bf16.msra.mxu0 0
  %2879 = vmatprep.subr.bf16.mxu0 0
  %2880 = vmatpush1.bf16.msra.mxu0 0
  %2881 = vmatprep.subr.bf16.mxu0 0
  %2882 = vmatpush1.bf16.msra.mxu0 0
  %2883 = vmatprep.subr.bf16.mxu0 0
  %2884 = vmatpush1.bf16.msra.mxu0 0
  %2885 = vmatprep.subr.bf16.mxu0 0
  %2886 = vmatpush1.bf16.msra.mxu0 0
  %2887 = vmatprep.mubr.bf16.mxu0 0
  %2888 = vmatmul.mubr.bf16.gmra.mrb[0].mxu0 %v2662
  %v2889 = vpop.f32.mrb[0].mxu0
  %v2890 = vadd.f32 0.0, %v2889
  %v2891 = vpop.f32.mrb[0].mxu0
  %v2892 = vadd.f32 0.0, %v2891
  %v2893 = vpop.f32.mrb[0].mxu0
  %v2894 = vpop.f32.mrb[0].mxu0
  %2895 = vdwg.mxu0
  %2896 = vmatprep.subr.bf16.mxu0 %v2794
  %2897 = vmatpush1.bf16.msra.mxu0 %v2793
  %2898 = vmatprep.subr.bf16.mxu0 %v2798
  %2899 = vmatpush1.bf16.msra.mxu0 %v2797
  %2900 = vmatprep.subr.bf16.mxu0 %v2802
  %2901 = vmatpush1.bf16.msra.mxu0 %v2801
  %2902 = vmatprep.subr.bf16.mxu0 %v2806
  %2903 = vmatpush1.bf16.msra.mxu0 %v2805
  %2904 = vmatprep.subr.bf16.mxu0 %v2810
  %2905 = vmatpush1.bf16.msra.mxu0 %v2809
  %2906 = vmatprep.subr.bf16.mxu0 %v2814
  %2907 = vmatpush1.bf16.msra.mxu0 %v2813
  %2908 = vmatprep.subr.bf16.mxu0 %v2818
  %2909 = vmatpush1.bf16.msra.mxu0 %v2817
  %2910 = vmatprep.subr.bf16.mxu0 %v2822
  %2911 = vmatpush1.bf16.msra.mxu0 %v2821
  %2912 = vmatprep.subr.bf16.mxu0 0
  %2913 = vmatpush1.bf16.msra.mxu0 0
  %2914 = vmatprep.subr.bf16.mxu0 0
  %2915 = vmatpush1.bf16.msra.mxu0 0
  %2916 = vmatprep.subr.bf16.mxu0 0
  %2917 = vmatpush1.bf16.msra.mxu0 0
  %2918 = vmatprep.subr.bf16.mxu0 0
  %2919 = vmatpush1.bf16.msra.mxu0 0
  %2920 = vmatprep.subr.bf16.mxu0 0
  %2921 = vmatpush1.bf16.msra.mxu0 0
  %2922 = vmatprep.subr.bf16.mxu0 0
  %2923 = vmatpush1.bf16.msra.mxu0 0
  %2924 = vmatprep.subr.bf16.mxu0 0
  %2925 = vmatpush1.bf16.msra.mxu0 0
  %2926 = vmatprep.subr.bf16.mxu0 0
  %2927 = vmatpush1.bf16.msra.mxu0 0
  %2928 = vmatprep.mubr.bf16.mxu0 0
  %2929 = vmatmul.mubr.bf16.gmra.mrb[0].mxu0 %v2662
  %v2930 = vpop.f32.mrb[0].mxu0
  %v2931 = vadd.f32 0.0, %v2930
  %v2932 = vpop.f32.mrb[0].mxu0
  %v2933 = vadd.f32 0.0, %v2932
  %v2934 = vpop.f32.mrb[0].mxu0
  %v2935 = vpop.f32.mrb[0].mxu0
  %2936 = vdwg.mxu0
  %v2937 = vadd.f32 %v2657, %v2890
  %v2938 = vadd.f32 %v2658, %v2892
  %v2939 = vadd.f32 %v2659, %v2931
  %v2940 = vadd.f32 %v2660, %v2933
  %v2941 = vxor.u32 %v2937, 2147483648
  %v2942 = vmul.f32 %v2941, 1.442695
  %v2943 = vpow.pop %v2942
  %v2944 = vadd.f32 %v2943, 1.0
  %v2945 = vrcp.pop %v2944
  %v2946 = vmul.f32 1.0, %v2945
  %v2947 = vxor.u32 %v2938, 2147483648
  %v2948 = vmul.f32 %v2947, 1.442695
  %v2949 = vpow.pop %v2948
  %v2950 = vadd.f32 %v2949, 1.0
  %v2951 = vrcp.pop %v2950
  %v2952 = vmul.f32 1.0, %v2951
  %v2953 = vtanh.pop %v2939
  %v2954 = vxor.u32 %v2940, 2147483648
  %v2955 = vmul.f32 %v2954, 1.442695
  %v2956 = vpow.pop %v2955
  %v2957 = vadd.f32 %v2956, 1.0
  %v2958 = vrcp.pop %v2957
  %v2959 = vmul.f32 1.0, %v2958
  %v2960 = vld [vmem:[#allocation5] sm:$0xff]
  %v2961 = vmul.f32 %v2952, %v2960
  %v2962 = vmul.f32 %v2946, %v2953
  %v2963 = vadd.f32 %v2961, %v2962
  %v2964 = vtanh.pop %v2963
  %v2965 = vmul.f32 %v2959, %v2964
  %2966 = vst [vmem:[#allocation5] sm:$0xff] %v2963
  %2967 = vst [vmem:[#allocation4] sm:$0xff] %v2965
  %s2968 = scalar_lea.vmem [#allocation3], 56
  %2969 = vst [vmem:[%s2968] sm:$0xff] %v2965
  %v2970 = vld [vmem:[#allocation3] sm:$0xff]
  %v2971 = vld [vmem:[#allocation3 + $0x8] sm:$0xff]
  %v2972 = vld [vmem:[#allocation3 + $0x10] sm:$0xff]
  %v2973 = vld [vmem:[#allocation3 + $0x18] sm:$0xff]
  %v2974 = vld [vmem:[#allocation3 + $0x20] sm:$0xff]
  %v2975 = vld [vmem:[#allocation3 + $0x28] sm:$0xff]
  %v2976 = vld [vmem:[#allocation3 + $0x30] sm:$0xff]
  %v2977 = vld [vmem:[#allocation3 + $0x38] sm:$0xff]
  %v2978 = vpack.c.bf16 %v2971, %v2970
  %v2979 = vpack.c.bf16 %v2973, %v2972
  %v2980 = vpack.c.bf16 %v2975, %v2974
  %v2981 = vpack.c.bf16 %v2977, %v2976
  %v2982 = vld [vmem:[%s4] sm:$0xff]
  %v2983 = vld [vmem:[%s4 + $0x8] sm:$0xff]
  %v2984 = vld [vmem:[%s4 + $0x10] sm:$0xff]
  %v2985 = vld [vmem:[%s4 + $0x18] sm:$0xff]
  %v2986 = vld [vmem:[%s4 + $0x20] sm:$0xff]
  %v2987 = vld [vmem:[%s4 + $0x28] sm:$0xff]
  %v2988 = vld [vmem:[%s4 + $0x30] sm:$0xff]
  %v2989 = vld [vmem:[%s4 + $0x38] sm:$0xff]
  %v2990 = vld [vmem:[%s4 + $0x40] sm:$0xff]
  %v2991 = vld [vmem:[%s4 + $0x48] sm:$0xff]
  %v2992 = vld [vmem:[%s4 + $0x50] sm:$0xff]
  %v2993 = vld [vmem:[%s4 + $0x58] sm:$0xff]
  %v2994 = vld [vmem:[%s4 + $0x60] sm:$0xff]
  %v2995 = vld [vmem:[%s4 + $0x68] sm:$0xff]
  %v2996 = vld [vmem:[%s4 + $0x70] sm:$0xff]
  %v2997 = vld [vmem:[%s4 + $0x78] sm:$0xff]
  %v2998 = vld [vmem:[%s4 + $0x80] sm:$0xff]
  %v2999 = vld [vmem:[%s4 + $0x88] sm:$0xff]
  %v3000 = vld [vmem:[%s4 + $0x90] sm:$0xff]
  %v3001 = vld [vmem:[%s4 + $0x98] sm:$0xff]
  %v3002 = vld [vmem:[%s4 + $0xa0] sm:$0xff]
  %v3003 = vld [vmem:[%s4 + $0xa8] sm:$0xff]
  %v3004 = vld [vmem:[%s4 + $0xb0] sm:$0xff]
  %v3005 = vld [vmem:[%s4 + $0xb8] sm:$0xff]
  %v3006 = vld [vmem:[%s4 + $0xc0] sm:$0xff]
  %v3007 = vld [vmem:[%s4 + $0xc8] sm:$0xff]
  %v3008 = vld [vmem:[%s4 + $0xd0] sm:$0xff]
  %v3009 = vld [vmem:[%s4 + $0xd8] sm:$0xff]
  %v3010 = vld [vmem:[%s4 + $0xe0] sm:$0xff]
  %v3011 = vld [vmem:[%s4 + $0xe8] sm:$0xff]
  %v3012 = vld [vmem:[%s4 + $0xf0] sm:$0xff]
  %v3013 = vld [vmem:[%s4 + $0xf8] sm:$0xff]
  %v3014 = vld [vmem:[%s6] sm:$0xf]
  %v3016 = vlaneseq
  %v3017 = vshrl.u32 %v3016, 7
  %v3018 = vsub.s32 0, %v3017
  %v3019 = vrot.slane %v3014, %v3018
  %v3020 = vlaneseq
  %v3021 = vshrl.u32 %v3020, 7
  %v3022 = vsub.s32 1, %v3021
  %v3023 = vrot.slane %v3014, %v3022
  %v3024 = vlaneseq
  %v3025 = vshrl.u32 %v3024, 7
  %v3026 = vsub.s32 2, %v3025
  %v3027 = vrot.slane %v3014, %v3026
  %v3028 = vlaneseq
  %v3029 = vshrl.u32 %v3028, 7
  %v3030 = vsub.s32 3, %v3029
  %v3031 = vrot.slane %v3014, %v3030
  %v3068 = vunpack.c.l.b16 %v2982
  %v3069 = vunpack.c.h.b16 %v2982
  %v3070 = vunpack.c.l.b16 %v2983
  %v3071 = vunpack.c.h.b16 %v2983
  %v3072 = vunpack.c.l.b16 %v2984
  %v3073 = vunpack.c.h.b16 %v2984
  %v3074 = vunpack.c.l.b16 %v2985
  %v3075 = vunpack.c.h.b16 %v2985
  %v3076 = vunpack.c.l.b16 %v2986
  %v3077 = vunpack.c.h.b16 %v2986
  %v3078 = vunpack.c.l.b16 %v2987
  %v3079 = vunpack.c.h.b16 %v2987
  %v3080 = vunpack.c.l.b16 %v2988
  %v3081 = vunpack.c.h.b16 %v2988
  %v3082 = vunpack.c.l.b16 %v2989
  %v3083 = vunpack.c.h.b16 %v2989
  %v3084 = vunpack.c.l.b16 %v2990
  %v3085 = vunpack.c.h.b16 %v2990
  %v3086 = vunpack.c.l.b16 %v2991
  %v3087 = vunpack.c.h.b16 %v2991
  %v3088 = vunpack.c.l.b16 %v2992
  %v3089 = vunpack.c.h.b16 %v2992
  %v3090 = vunpack.c.l.b16 %v2993
  %v3091 = vunpack.c.h.b16 %v2993
  %v3092 = vunpack.c.l.b16 %v2994
  %v3093 = vunpack.c.h.b16 %v2994
  %v3094 = vunpack.c.l.b16 %v2995
  %v3095 = vunpack.c.h.b16 %v2995
  %v3096 = vunpack.c.l.b16 %v2996
  %v3097 = vunpack.c.h.b16 %v2996
  %v3098 = vunpack.c.l.b16 %v2997
  %v3099 = vunpack.c.h.b16 %v2997
  %v3100 = vunpack.c.l.b16 %v2998
  %v3101 = vunpack.c.h.b16 %v2998
  %v3102 = vunpack.c.l.b16 %v2999
  %v3103 = vunpack.c.h.b16 %v2999
  %v3104 = vunpack.c.l.b16 %v3000
  %v3105 = vunpack.c.h.b16 %v3000
  %v3106 = vunpack.c.l.b16 %v3001
  %v3107 = vunpack.c.h.b16 %v3001
  %v3108 = vunpack.c.l.b16 %v3002
  %v3109 = vunpack.c.h.b16 %v3002
  %v3110 = vunpack.c.l.b16 %v3003
  %v3111 = vunpack.c.h.b16 %v3003
  %v3112 = vunpack.c.l.b16 %v3004
  %v3113 = vunpack.c.h.b16 %v3004
  %v3114 = vunpack.c.l.b16 %v3005
  %v3115 = vunpack.c.h.b16 %v3005
  %v3116 = vunpack.c.l.b16 %v3006
  %v3117 = vunpack.c.h.b16 %v3006
  %v3118 = vunpack.c.l.b16 %v3007
  %v3119 = vunpack.c.h.b16 %v3007
  %v3120 = vunpack.c.l.b16 %v3008
  %v3121 = vunpack.c.h.b16 %v3008
  %v3122 = vunpack.c.l.b16 %v3009
  %v3123 = vunpack.c.h.b16 %v3009
  %v3124 = vunpack.c.l.b16 %v3010
  %v3125 = vunpack.c.h.b16 %v3010
  %v3126 = vunpack.c.l.b16 %v3011
  %v3127 = vunpack.c.h.b16 %v3011
  %v3128 = vunpack.c.l.b16 %v3012
  %v3129 = vunpack.c.h.b16 %v3012
  %v3130 = vunpack.c.l.b16 %v3013
  %v3131 = vunpack.c.h.b16 %v3013
  %v3132 = vpack.c.b16 %v3072, %v3068
  %v3133 = vpack.c.b16 %v3073, %v3069
  %v3134 = vpack.c.b16 %v3074, %v3070
  %v3135 = vpack.c.b16 %v3075, %v3071
  %v3136 = vpack.c.b16 %v3080, %v3076
  %v3137 = vpack.c.b16 %v3081, %v3077
  %v3138 = vpack.c.b16 %v3082, %v3078
  %v3139 = vpack.c.b16 %v3083, %v3079
  %v3140 = vpack.c.b16 %v3088, %v3084
  %v3141 = vpack.c.b16 %v3089, %v3085
  %v3142 = vpack.c.b16 %v3090, %v3086
  %v3143 = vpack.c.b16 %v3091, %v3087
  %v3144 = vpack.c.b16 %v3096, %v3092
  %v3145 = vpack.c.b16 %v3097, %v3093
  %v3146 = vpack.c.b16 %v3098, %v3094
  %v3147 = vpack.c.b16 %v3099, %v3095
  %v3148 = vpack.c.b16 %v3104, %v3100
  %v3149 = vpack.c.b16 %v3105, %v3101
  %v3150 = vpack.c.b16 %v3106, %v3102
  %v3151 = vpack.c.b16 %v3107, %v3103
  %v3152 = vpack.c.b16 %v3112, %v3108
  %v3153 = vpack.c.b16 %v3113, %v3109
  %v3154 = vpack.c.b16 %v3114, %v3110
  %v3155 = vpack.c.b16 %v3115, %v3111
  %v3156 = vpack.c.b16 %v3120, %v3116
  %v3157 = vpack.c.b16 %v3121, %v3117
  %v3158 = vpack.c.b16 %v3122, %v3118
  %v3159 = vpack.c.b16 %v3123, %v3119
  %v3160 = vpack.c.b16 %v3128, %v3124
  %v3161 = vpack.c.b16 %v3129, %v3125
  %v3162 = vpack.c.b16 %v3130, %v3126
  %v3163 = vpack.c.b16 %v3131, %v3127
  %3196 = vmatprep.subr.bf16.mxu0 %v3133
  %3197 = vmatpush1.bf16.msra.mxu0 %v3132
  %3198 = vmatprep.subr.bf16.mxu0 %v3137
  %3199 = vmatpush1.bf16.msra.mxu0 %v3136
  %3200 = vmatprep.subr.bf16.mxu0 %v3141
  %3201 = vmatpush1.bf16.msra.mxu0 %v3140
  %3202 = vmatprep.subr.bf16.mxu0 %v3145
  %3203 = vmatpush1.bf16.msra.mxu0 %v3144
  %3204 = vmatprep.subr.bf16.mxu0 %v3149
  %3205 = vmatpush1.bf16.msra.mxu0 %v3148
  %3206 = vmatprep.subr.bf16.mxu0 %v3153
  %3207 = vmatpush1.bf16.msra.mxu0 %v3152
  %3208 = vmatprep.subr.bf16.mxu0 %v3157
  %3209 = vmatpush1.bf16.msra.mxu0 %v3156
  %3210 = vmatprep.subr.bf16.mxu0 %v3161
  %3211 = vmatpush1.bf16.msra.mxu0 %v3160
  %3212 = vmatprep.subr.bf16.mxu0 0
  %3213 = vmatpush1.bf16.msra.mxu0 0
  %3214 = vmatprep.subr.bf16.mxu0 0
  %3215 = vmatpush1.bf16.msra.mxu0 0
  %3216 = vmatprep.subr.bf16.mxu0 0
  %3217 = vmatpush1.bf16.msra.mxu0 0
  %3218 = vmatprep.subr.bf16.mxu0 0
  %3219 = vmatpush1.bf16.msra.mxu0 0
  %3220 = vmatprep.subr.bf16.mxu0 0
  %3221 = vmatpush1.bf16.msra.mxu0 0
  %3222 = vmatprep.subr.bf16.mxu0 0
  %3223 = vmatpush1.bf16.msra.mxu0 0
  %3224 = vmatprep.subr.bf16.mxu0 0
  %3225 = vmatpush1.bf16.msra.mxu0 0
  %3226 = vmatprep.subr.bf16.mxu0 0
  %3227 = vmatpush1.bf16.msra.mxu0 0
  %3228 = vmatprep.mubr.bf16.mxu0 0
  %3229 = vmatmul.mubr.bf16.gmra.mrb[0].mxu0 %v2978
  %v3230 = vpop.f32.mrb[0].mxu0
  %v3231 = vadd.f32 %v3019, %v3230
  %v3232 = vpop.f32.mrb[0].mxu0
  %v3233 = vadd.f32 %v3023, %v3232
  %v3234 = vpop.f32.mrb[0].mxu0
  %v3235 = vadd.f32 %v3019, %v3234
  %v3236 = vpop.f32.mrb[0].mxu0
  %v3237 = vadd.f32 %v3023, %v3236
  %3238 = vmatprep.mubr.bf16.mxu0 0
  %3239 = vmatmul.mubr.bf16.gmra.mrb[0].mxu0 %v2979
  %v3240 = vpop.f32.mrb[0].mxu0
  %v3241 = vadd.f32 %v3019, %v3240
  %v3242 = vpop.f32.mrb[0].mxu0
  %v3243 = vadd.f32 %v3023, %v3242
  %v3244 = vpop.f32.mrb[0].mxu0
  %v3245 = vadd.f32 %v3019, %v3244
  %v3246 = vpop.f32.mrb[0].mxu0
  %v3247 = vadd.f32 %v3023, %v3246
  %3248 = vmatprep.mubr.bf16.mxu0 0
  %3249 = vmatmul.mubr.bf16.gmra.mrb[0].mxu0 %v2980
  %v3250 = vpop.f32.mrb[0].mxu0
  %v3251 = vadd.f32 %v3019, %v3250
  %v3252 = vpop.f32.mrb[0].mxu0
  %v3253 = vadd.f32 %v3023, %v3252
  %v3254 = vpop.f32.mrb[0].mxu0
  %v3255 = vadd.f32 %v3019, %v3254
  %v3256 = vpop.f32.mrb[0].mxu0
  %v3257 = vadd.f32 %v3023, %v3256
  %3258 = vmatprep.mubr.bf16.mxu0 0
  %3259 = vmatmul.mubr.bf16.gmra.mrb[0].mxu0 %v2981
  %v3260 = vpop.f32.mrb[0].mxu0
  %v3261 = vadd.f32 %v3019, %v3260
  %v3262 = vpop.f32.mrb[0].mxu0
  %v3263 = vadd.f32 %v3023, %v3262
  %v3264 = vpop.f32.mrb[0].mxu0
  %v3265 = vadd.f32 %v3019, %v3264
  %v3266 = vpop.f32.mrb[0].mxu0
  %v3267 = vadd.f32 %v3023, %v3266
  %3268 = vdwg.mxu0
  %3269 = vmatprep.subr.bf16.mxu0 %v3135
  %3270 = vmatpush1.bf16.msra.mxu0 %v3134
  %3271 = vmatprep.subr.bf16.mxu0 %v3139
  %3272 = vmatpush1.bf16.msra.mxu0 %v3138
  %3273 = vmatprep.subr.bf16.mxu0 %v3143
  %3274 = vmatpush1.bf16.msra.mxu0 %v3142
  %3275 = vmatprep.subr.bf16.mxu0 %v3147
  %3276 = vmatpush1.bf16.msra.mxu0 %v3146
  %3277 = vmatprep.subr.bf16.mxu0 %v3151
  %3278 = vmatpush1.bf16.msra.mxu0 %v3150
  %3279 = vmatprep.subr.bf16.mxu0 %v3155
  %3280 = vmatpush1.bf16.msra.mxu0 %v3154
  %3281 = vmatprep.subr.bf16.mxu0 %v3159
  %3282 = vmatpush1.bf16.msra.mxu0 %v3158
  %3283 = vmatprep.subr.bf16.mxu0 %v3163
  %3284 = vmatpush1.bf16.msra.mxu0 %v3162
  %3285 = vmatprep.subr.bf16.mxu0 0
  %3286 = vmatpush1.bf16.msra.mxu0 0
  %3287 = vmatprep.subr.bf16.mxu0 0
  %3288 = vmatpush1.bf16.msra.mxu0 0
  %3289 = vmatprep.subr.bf16.mxu0 0
  %3290 = vmatpush1.bf16.msra.mxu0 0
  %3291 = vmatprep.subr.bf16.mxu0 0
  %3292 = vmatpush1.bf16.msra.mxu0 0
  %3293 = vmatprep.subr.bf16.mxu0 0
  %3294 = vmatpush1.bf16.msra.mxu0 0
  %3295 = vmatprep.subr.bf16.mxu0 0
  %3296 = vmatpush1.bf16.msra.mxu0 0
  %3297 = vmatprep.subr.bf16.mxu0 0
  %3298 = vmatpush1.bf16.msra.mxu0 0
  %3299 = vmatprep.subr.bf16.mxu0 0
  %3300 = vmatpush1.bf16.msra.mxu0 0
  %3301 = vmatprep.mubr.bf16.mxu0 0
  %3302 = vmatmul.mubr.bf16.gmra.mrb[0].mxu0 %v2978
  %v3303 = vpop.f32.mrb[0].mxu0
  %v3304 = vadd.f32 %v3027, %v3303
  %v3305 = vpop.f32.mrb[0].mxu0
  %v3306 = vadd.f32 %v3031, %v3305
  %v3307 = vpop.f32.mrb[0].mxu0
  %v3308 = vadd.f32 %v3027, %v3307
  %v3309 = vpop.f32.mrb[0].mxu0
  %v3310 = vadd.f32 %v3031, %v3309
  %3311 = vmatprep.mubr.bf16.mxu0 0
  %3312 = vmatmul.mubr.bf16.gmra.mrb[0].mxu0 %v2979
  %v3313 = vpop.f32.mrb[0].mxu0
  %v3314 = vadd.f32 %v3027, %v3313
  %v3315 = vpop.f32.mrb[0].mxu0
  %v3316 = vadd.f32 %v3031, %v3315
  %v3317 = vpop.f32.mrb[0].mxu0
  %v3318 = vadd.f32 %v3027, %v3317
  %v3319 = vpop.f32.mrb[0].mxu0
  %v3320 = vadd.f32 %v3031, %v3319
  %3321 = vmatprep.mubr.bf16.mxu0 0
  %3322 = vmatmul.mubr.bf16.gmra.mrb[0].mxu0 %v2980
  %v3323 = vpop.f32.mrb[0].mxu0
  %v3324 = vadd.f32 %v3027, %v3323
  %v3325 = vpop.f32.mrb[0].mxu0
  %v3326 = vadd.f32 %v3031, %v3325
  %v3327 = vpop.f32.mrb[0].mxu0
  %v3328 = vadd.f32 %v3027, %v3327
  %v3329 = vpop.f32.mrb[0].mxu0
  %v3330 = vadd.f32 %v3031, %v3329
  %3331 = vmatprep.mubr.bf16.mxu0 0
  %3332 = vmatmul.mubr.bf16.gmra.mrb[0].mxu0 %v2981
  %v3333 = vpop.f32.mrb[0].mxu0
  %v3334 = vadd.f32 %v3027, %v3333
  %v3335 = vpop.f32.mrb[0].mxu0
  %v3336 = vadd.f32 %v3031, %v3335
  %v3337 = vpop.f32.mrb[0].mxu0
  %v3338 = vadd.f32 %v3027, %v3337
  %v3339 = vpop.f32.mrb[0].mxu0
  %v3340 = vadd.f32 %v3031, %v3339
  %3341 = vdwg.mxu0
  %3342 = vst [vmem:[#allocation2] sm:$0xff] %v3231
  %3343 = vst [vmem:[#allocation2 + $0x8] sm:$0xff] %v3233
  %3344 = vst [vmem:[#allocation2 + $0x10] sm:$0xff] %v3304
  %3345 = vst [vmem:[#allocation2 + $0x18] sm:$0xff] %v3306
  %3346 = vst [vmem:[#allocation2 + $0x20] sm:$0xff] %v3235
  %3347 = vst [vmem:[#allocation2 + $0x28] sm:$0xff] %v3237
  %3348 = vst [vmem:[#allocation2 + $0x30] sm:$0xff] %v3308
  %3349 = vst [vmem:[#allocation2 + $0x38] sm:$0xff] %v3310
  %3350 = vst [vmem:[#allocation2 + $0x40] sm:$0xff] %v3241
  %3351 = vst [vmem:[#allocation2 + $0x48] sm:$0xff] %v3243
  %3352 = vst [vmem:[#allocation2 + $0x50] sm:$0xff] %v3314
  %3353 = vst [vmem:[#allocation2 + $0x58] sm:$0xff] %v3316
  %3354 = vst [vmem:[#allocation2 + $0x60] sm:$0xff] %v3245
  %3355 = vst [vmem:[#allocation2 + $0x68] sm:$0xff] %v3247
  %3356 = vst [vmem:[#allocation2 + $0x70] sm:$0xff] %v3318
  %3357 = vst [vmem:[#allocation2 + $0x78] sm:$0xff] %v3320
  %3358 = vst [vmem:[#allocation2 + $0x80] sm:$0xff] %v3251
  %3359 = vst [vmem:[#allocation2 + $0x88] sm:$0xff] %v3253
  %3360 = vst [vmem:[#allocation2 + $0x90] sm:$0xff] %v3324
  %3361 = vst [vmem:[#allocation2 + $0x98] sm:$0xff] %v3326
  %3362 = vst [vmem:[#allocation2 + $0xa0] sm:$0xff] %v3255
  %3363 = vst [vmem:[#allocation2 + $0xa8] sm:$0xff] %v3257
  %3364 = vst [vmem:[#allocation2 + $0xb0] sm:$0xff] %v3328
  %3365 = vst [vmem:[#allocation2 + $0xb8] sm:$0xff] %v3330
  %3366 = vst [vmem:[#allocation2 + $0xc0] sm:$0xff] %v3261
  %3367 = vst [vmem:[#allocation2 + $0xc8] sm:$0xff] %v3263
  %3368 = vst [vmem:[#allocation2 + $0xd0] sm:$0xff] %v3334
  %3369 = vst [vmem:[#allocation2 + $0xd8] sm:$0xff] %v3336
  %3370 = vst [vmem:[#allocation2 + $0xe0] sm:$0xff] %v3265
  %3371 = vst [vmem:[#allocation2 + $0xe8] sm:$0xff] %v3267
  %3372 = vst [vmem:[#allocation2 + $0xf0] sm:$0xff] %v3338
  %3373 = vst [vmem:[#allocation2 + $0xf8] sm:$0xff] %v3340
  %3374 = vst [vmem:[#allocation4] sm:$0xff] 0.0
  %3375 = vst [vmem:[#allocation5] sm:$0xff] 0.0
  %v3376 = vld [vmem:[#allocation2] sm:$0xff]
  %v3377 = vld [vmem:[#allocation2 + $0x8] sm:$0xff]
  %v3378 = vld [vmem:[#allocation2 + $0x10] sm:$0xff]
  %v3379 = vld [vmem:[#allocation2 + $0x18] sm:$0xff]
  %v3380 = vld [vmem:[#allocation4] sm:$0xff]
  %v3381 = vpack.c.bf16 %v3380, %v3380
  %v3382 = vld [vmem:[%s5] sm:$0xff]
  %v3383 = vld [vmem:[%s5 + $0x8] sm:$0xff]
  %v3384 = vld [vmem:[%s5 + $0x10] sm:$0xff]
  %v3385 = vld [vmem:[%s5 + $0x18] sm:$0xff]
  %v3386 = vld [vmem:[%s5 + $0x20] sm:$0xff]
  %v3387 = vld [vmem:[%s5 + $0x28] sm:$0xff]
  %v3388 = vld [vmem:[%s5 + $0x30] sm:$0xff]
  %v3389 = vld [vmem:[%s5 + $0x38] sm:$0xff]
  %v3390 = vld [vmem:[%s5 + $0x40] sm:$0xff]
  %v3391 = vld [vmem:[%s5 + $0x48] sm:$0xff]
  %v3392 = vld [vmem:[%s5 + $0x50] sm:$0xff]
  %v3393 = vld [vmem:[%s5 + $0x58] sm:$0xff]
  %v3394 = vld [vmem:[%s5 + $0x60] sm:$0xff]
  %v3395 = vld [vmem:[%s5 + $0x68] sm:$0xff]
  %v3396 = vld [vmem:[%s5 + $0x70] sm:$0xff]
  %v3397 = vld [vmem:[%s5 + $0x78] sm:$0xff]
  %v3398 = vld [vmem:[%s5 + $0x80] sm:$0xff]
  %v3399 = vld [vmem:[%s5 + $0x88] sm:$0xff]
  %v3400 = vld [vmem:[%s5 + $0x90] sm:$0xff]
  %v3401 = vld [vmem:[%s5 + $0x98] sm:$0xff]
  %v3402 = vld [vmem:[%s5 + $0xa0] sm:$0xff]
  %v3403 = vld [vmem:[%s5 + $0xa8] sm:$0xff]
  %v3404 = vld [vmem:[%s5 + $0xb0] sm:$0xff]
  %v3405 = vld [vmem:[%s5 + $0xb8] sm:$0xff]
  %v3406 = vld [vmem:[%s5 + $0xc0] sm:$0xff]
  %v3407 = vld [vmem:[%s5 + $0xc8] sm:$0xff]
  %v3408 = vld [vmem:[%s5 + $0xd0] sm:$0xff]
  %v3409 = vld [vmem:[%s5 + $0xd8] sm:$0xff]
  %v3410 = vld [vmem:[%s5 + $0xe0] sm:$0xff]
  %v3411 = vld [vmem:[%s5 + $0xe8] sm:$0xff]
  %v3412 = vld [vmem:[%s5 + $0xf0] sm:$0xff]
  %v3413 = vld [vmem:[%s5 + $0xf8] sm:$0xff]
  %v3446 = vunpack.c.l.b16 %v3382
  %v3447 = vunpack.c.h.b16 %v3382
  %v3448 = vunpack.c.l.b16 %v3383
  %v3449 = vunpack.c.h.b16 %v3383
  %v3450 = vunpack.c.l.b16 %v3384
  %v3451 = vunpack.c.h.b16 %v3384
  %v3452 = vunpack.c.l.b16 %v3385
  %v3453 = vunpack.c.h.b16 %v3385
  %v3454 = vunpack.c.l.b16 %v3386
  %v3455 = vunpack.c.h.b16 %v3386
  %v3456 = vunpack.c.l.b16 %v3387
  %v3457 = vunpack.c.h.b16 %v3387
  %v3458 = vunpack.c.l.b16 %v3388
  %v3459 = vunpack.c.h.b16 %v3388
  %v3460 = vunpack.c.l.b16 %v3389
  %v3461 = vunpack.c.h.b16 %v3389
  %v3462 = vunpack.c.l.b16 %v3390
  %v3463 = vunpack.c.h.b16 %v3390
  %v3464 = vunpack.c.l.b16 %v3391
  %v3465 = vunpack.c.h.b16 %v3391
  %v3466 = vunpack.c.l.b16 %v3392
  %v3467 = vunpack.c.h.b16 %v3392
  %v3468 = vunpack.c.l.b16 %v3393
  %v3469 = vunpack.c.h.b16 %v3393
  %v3470 = vunpack.c.l.b16 %v3394
  %v3471 = vunpack.c.h.b16 %v3394
  %v3472 = vunpack.c.l.b16 %v3395
  %v3473 = vunpack.c.h.b16 %v3395
  %v3474 = vunpack.c.l.b16 %v3396
  %v3475 = vunpack.c.h.b16 %v3396
  %v3476 = vunpack.c.l.b16 %v3397
  %v3477 = vunpack.c.h.b16 %v3397
  %v3478 = vunpack.c.l.b16 %v3398
  %v3479 = vunpack.c.h.b16 %v3398
  %v3480 = vunpack.c.l.b16 %v3399
  %v3481 = vunpack.c.h.b16 %v3399
  %v3482 = vunpack.c.l.b16 %v3400
  %v3483 = vunpack.c.h.b16 %v3400
  %v3484 = vunpack.c.l.b16 %v3401
  %v3485 = vunpack.c.h.b16 %v3401
  %v3486 = vunpack.c.l.b16 %v3402
  %v3487 = vunpack.c.h.b16 %v3402
  %v3488 = vunpack.c.l.b16 %v3403
  %v3489 = vunpack.c.h.b16 %v3403
  %v3490 = vunpack.c.l.b16 %v3404
  %v3491 = vunpack.c.h.b16 %v3404
  %v3492 = vunpack.c.l.b16 %v3405
  %v3493 = vunpack.c.h.b16 %v3405
  %v3494 = vunpack.c.l.b16 %v3406
  %v3495 = vunpack.c.h.b16 %v3406
  %v3496 = vunpack.c.l.b16 %v3407
  %v3497 = vunpack.c.h.b16 %v3407
  %v3498 = vunpack.c.l.b16 %v3408
  %v3499 = vunpack.c.h.b16 %v3408
  %v3500 = vunpack.c.l.b16 %v3409
  %v3501 = vunpack.c.h.b16 %v3409
  %v3502 = vunpack.c.l.b16 %v3410
  %v3503 = vunpack.c.h.b16 %v3410
  %v3504 = vunpack.c.l.b16 %v3411
  %v3505 = vunpack.c.h.b16 %v3411
  %v3506 = vunpack.c.l.b16 %v3412
  %v3507 = vunpack.c.h.b16 %v3412
  %v3508 = vunpack.c.l.b16 %v3413
  %v3509 = vunpack.c.h.b16 %v3413
  %v3510 = vpack.c.b16 %v3450, %v3446
  %v3511 = vpack.c.b16 %v3451, %v3447
  %v3512 = vpack.c.b16 %v3452, %v3448
  %v3513 = vpack.c.b16 %v3453, %v3449
  %v3514 = vpack.c.b16 %v3458, %v3454
  %v3515 = vpack.c.b16 %v3459, %v3455
  %v3516 = vpack.c.b16 %v3460, %v3456
  %v3517 = vpack.c.b16 %v3461, %v3457
  %v3518 = vpack.c.b16 %v3466, %v3462
  %v3519 = vpack.c.b16 %v3467, %v3463
  %v3520 = vpack.c.b16 %v3468, %v3464
  %v3521 = vpack.c.b16 %v3469, %v3465
  %v3522 = vpack.c.b16 %v3474, %v3470
  %v3523 = vpack.c.b16 %v3475, %v3471
  %v3524 = vpack.c.b16 %v3476, %v3472
  %v3525 = vpack.c.b16 %v3477, %v3473
  %v3526 = vpack.c.b16 %v3482, %v3478
  %v3527 = vpack.c.b16 %v3483, %v3479
  %v3528 = vpack.c.b16 %v3484, %v3480
  %v3529 = vpack.c.b16 %v3485, %v3481
  %v3530 = vpack.c.b16 %v3490, %v3486
  %v3531 = vpack.c.b16 %v3491, %v3487
  %v3532 = vpack.c.b16 %v3492, %v3488
  %v3533 = vpack.c.b16 %v3493, %v3489
  %v3534 = vpack.c.b16 %v3498, %v3494
  %v3535 = vpack.c.b16 %v3499, %v3495
  %v3536 = vpack.c.b16 %v3500, %v3496
  %v3537 = vpack.c.b16 %v3501, %v3497
  %v3538 = vpack.c.b16 %v3506, %v3502
  %v3539 = vpack.c.b16 %v3507, %v3503
  %v3540 = vpack.c.b16 %v3508, %v3504
  %v3541 = vpack.c.b16 %v3509, %v3505
  %3574 = vmatprep.subr.bf16.mxu0 %v3511
  %3575 = vmatpush1.bf16.msra.mxu0 %v3510
  %3576 = vmatprep.subr.bf16.mxu0 %v3515
  %3577 = vmatpush1.bf16.msra.mxu0 %v3514
  %3578 = vmatprep.subr.bf16.mxu0 %v3519
  %3579 = vmatpush1.bf16.msra.mxu0 %v3518
  %3580 = vmatprep.subr.bf16.mxu0 %v3523
  %3581 = vmatpush1.bf16.msra.mxu0 %v3522
  %3582 = vmatprep.subr.bf16.mxu0 %v3527
  %3583 = vmatpush1.bf16.msra.mxu0 %v3526
  %3584 = vmatprep.subr.bf16.mxu0 %v3531
  %3585 = vmatpush1.bf16.msra.mxu0 %v3530
  %3586 = vmatprep.subr.bf16.mxu0 %v3535
  %3587 = vmatpush1.bf16.msra.mxu0 %v3534
  %3588 = vmatprep.subr.bf16.mxu0 %v3539
  %3589 = vmatpush1.bf16.msra.mxu0 %v3538
  %3590 = vmatprep.subr.bf16.mxu0 0
  %3591 = vmatpush1.bf16.msra.mxu0 0
  %3592 = vmatprep.subr.bf16.mxu0 0
  %3593 = vmatpush1.bf16.msra.mxu0 0
  %3594 = vmatprep.subr.bf16.mxu0 0
  %3595 = vmatpush1.bf16.msra.mxu0 0
  %3596 = vmatprep.subr.bf16.mxu0 0
  %3597 = vmatpush1.bf16.msra.mxu0 0
  %3598 = vmatprep.subr.bf16.mxu0 0
  %3599 = vmatpush1.bf16.msra.mxu0 0
  %3600 = vmatprep.subr.bf16.mxu0 0
  %3601 = vmatpush1.bf16.msra.mxu0 0
  %3602 = vmatprep.subr.bf16.mxu0 0
  %3603 = vmatpush1.bf16.msra.mxu0 0
  %3604 = vmatprep.subr.bf16.mxu0 0
  %3605 = vmatpush1.bf16.msra.mxu0 0
  %3606 = vmatprep.mubr.bf16.mxu0 0
  %3607 = vmatmul.mubr.bf16.gmra.mrb[0].mxu0 %v3381
  %v3608 = vpop.f32.mrb[0].mxu0
  %v3609 = vadd.f32 0.0, %v3608
  %v3610 = vpop.f32.mrb[0].mxu0
  %v3611 = vadd.f32 0.0, %v3610
  %v3612 = vpop.f32.mrb[0].mxu0
  %v3613 = vpop.f32.mrb[0].mxu0
  %3614 = vdwg.mxu0
  %3615 = vmatprep.subr.bf16.mxu0 %v3513
  %3616 = vmatpush1.bf16.msra.mxu0 %v3512
  %3617 = vmatprep.subr.bf16.mxu0 %v3517
  %3618 = vmatpush1.bf16.msra.mxu0 %v3516
  %3619 = vmatprep.subr.bf16.mxu0 %v3521
  %3620 = vmatpush1.bf16.msra.mxu0 %v3520
  %3621 = vmatprep.subr.bf16.mxu0 %v3525
  %3622 = vmatpush1.bf16.msra.mxu0 %v3524
  %3623 = vmatprep.subr.bf16.mxu0 %v3529
  %3624 = vmatpush1.bf16.msra.mxu0 %v3528
  %3625 = vmatprep.subr.bf16.mxu0 %v3533
  %3626 = vmatpush1.bf16.msra.mxu0 %v3532
  %3627 = vmatprep.subr.bf16.mxu0 %v3537
  %3628 = vmatpush1.bf16.msra.mxu0 %v3536
  %3629 = vmatprep.subr.bf16.mxu0 %v3541
  %3630 = vmatpush1.bf16.msra.mxu0 %v3540
  %3631 = vmatprep.subr.bf16.mxu0 0
  %3632 = vmatpush1.bf16.msra.mxu0 0
  %3633 = vmatprep.subr.bf16.mxu0 0
  %3634 = vmatpush1.bf16.msra.mxu0 0
  %3635 = vmatprep.subr.bf16.mxu0 0
  %3636 = vmatpush1.bf16.msra.mxu0 0
  %3637 = vmatprep.subr.bf16.mxu0 0
  %3638 = vmatpush1.bf16.msra.mxu0 0
  %3639 = vmatprep.subr.bf16.mxu0 0
  %3640 = vmatpush1.bf16.msra.mxu0 0
  %3641 = vmatprep.subr.bf16.mxu0 0
  %3642 = vmatpush1.bf16.msra.mxu0 0
  %3643 = vmatprep.subr.bf16.mxu0 0
  %3644 = vmatpush1.bf16.msra.mxu0 0
  %3645 = vmatprep.subr.bf16.mxu0 0
  %3646 = vmatpush1.bf16.msra.mxu0 0
  %3647 = vmatprep.mubr.bf16.mxu0 0
  %3648 = vmatmul.mubr.bf16.gmra.mrb[0].mxu0 %v3381
  %v3649 = vpop.f32.mrb[0].mxu0
  %v3650 = vadd.f32 0.0, %v3649
  %v3651 = vpop.f32.mrb[0].mxu0
  %v3652 = vadd.f32 0.0, %v3651
  %v3653 = vpop.f32.mrb[0].mxu0
  %v3654 = vpop.f32.mrb[0].mxu0
  %3655 = vdwg.mxu0
  %v3656 = vadd.f32 %v3376, %v3609
  %v3657 = vadd.f32 %v3377, %v3611
  %v3658 = vadd.f32 %v3378, %v3650
  %v3659 = vadd.f32 %v3379, %v3652
  %v3660 = vxor.u32 %v3656, 2147483648
  %v3661 = vmul.f32 %v3660, 1.442695
  %v3662 = vpow.pop %v3661
  %v3663 = vadd.f32 %v3662, 1.0
  %v3664 = vrcp.pop %v3663
  %v3665 = vmul.f32 1.0, %v3664
  %v3666 = vxor.u32 %v3657, 2147483648
  %v3667 = vmul.f32 %v3666, 1.442695
  %v3668 = vpow.pop %v3667
  %v3669 = vadd.f32 %v3668, 1.0
  %v3670 = vrcp.pop %v3669
  %v3671 = vmul.f32 1.0, %v3670
  %v3672 = vtanh.pop %v3658
  %v3673 = vxor.u32 %v3659, 2147483648
  %v3674 = vmul.f32 %v3673, 1.442695
  %v3675 = vpow.pop %v3674
  %v3676 = vadd.f32 %v3675, 1.0
  %v3677 = vrcp.pop %v3676
  %v3678 = vmul.f32 1.0, %v3677
  %v3679 = vld [vmem:[#allocation5] sm:$0xff]
  %v3680 = vmul.f32 %v3671, %v3679
  %v3681 = vmul.f32 %v3665, %v3672
  %v3682 = vadd.f32 %v3680, %v3681
  %v3683 = vtanh.pop %v3682
  %v3684 = vmul.f32 %v3678, %v3683
  %3685 = vst [vmem:[#allocation5] sm:$0xff] %v3682
  %3686 = vst [vmem:[#allocation4] sm:$0xff] %v3684
  %3687 = vst [vmem:[#allocation3] sm:$0xff] %v3684
  %v3688 = vld [vmem:[%s772] sm:$0xff]
  %v3689 = vld [vmem:[%s772 + $0x8] sm:$0xff]
  %v3690 = vld [vmem:[%s772 + $0x10] sm:$0xff]
  %v3691 = vld [vmem:[%s772 + $0x18] sm:$0xff]
  %v3692 = vld [vmem:[#allocation4] sm:$0xff]
  %v3693 = vpack.c.bf16 %v3692, %v3692
  %v3694 = vld [vmem:[%s5] sm:$0xff]
  %v3695 = vld [vmem:[%s5 + $0x8] sm:$0xff]
  %v3696 = vld [vmem:[%s5 + $0x10] sm:$0xff]
  %v3697 = vld [vmem:[%s5 + $0x18] sm:$0xff]
  %v3698 = vld [vmem:[%s5 + $0x20] sm:$0xff]
  %v3699 = vld [vmem:[%s5 + $0x28] sm:$0xff]
  %v3700 = vld [vmem:[%s5 + $0x30] sm:$0xff]
  %v3701 = vld [vmem:[%s5 + $0x38] sm:$0xff]
  %v3702 = vld [vmem:[%s5 + $0x40] sm:$0xff]
  %v3703 = vld [vmem:[%s5 + $0x48] sm:$0xff]
  %v3704 = vld [vmem:[%s5 + $0x50] sm:$0xff]
  %v3705 = vld [vmem:[%s5 + $0x58] sm:$0xff]
  %v3706 = vld [vmem:[%s5 + $0x60] sm:$0xff]
  %v3707 = vld [vmem:[%s5 + $0x68] sm:$0xff]
  %v3708 = vld [vmem:[%s5 + $0x70] sm:$0xff]
  %v3709 = vld [vmem:[%s5 + $0x78] sm:$0xff]
  %v3710 = vld [vmem:[%s5 + $0x80] sm:$0xff]
  %v3711 = vld [vmem:[%s5 + $0x88] sm:$0xff]
  %v3712 = vld [vmem:[%s5 + $0x90] sm:$0xff]
  %v3713 = vld [vmem:[%s5 + $0x98] sm:$0xff]
  %v3714 = vld [vmem:[%s5 + $0xa0] sm:$0xff]
  %v3715 = vld [vmem:[%s5 + $0xa8] sm:$0xff]
  %v3716 = vld [vmem:[%s5 + $0xb0] sm:$0xff]
  %v3717 = vld [vmem:[%s5 + $0xb8] sm:$0xff]
  %v3718 = vld [vmem:[%s5 + $0xc0] sm:$0xff]
  %v3719 = vld [vmem:[%s5 + $0xc8] sm:$0xff]
  %v3720 = vld [vmem:[%s5 + $0xd0] sm:$0xff]
  %v3721 = vld [vmem:[%s5 + $0xd8] sm:$0xff]
  %v3722 = vld [vmem:[%s5 + $0xe0] sm:$0xff]
  %v3723 = vld [vmem:[%s5 + $0xe8] sm:$0xff]
  %v3724 = vld [vmem:[%s5 + $0xf0] sm:$0xff]
  %v3725 = vld [vmem:[%s5 + $0xf8] sm:$0xff]
  %v3758 = vunpack.c.l.b16 %v3694
  %v3759 = vunpack.c.h.b16 %v3694
  %v3760 = vunpack.c.l.b16 %v3695
  %v3761 = vunpack.c.h.b16 %v3695
  %v3762 = vunpack.c.l.b16 %v3696
  %v3763 = vunpack.c.h.b16 %v3696
  %v3764 = vunpack.c.l.b16 %v3697
  %v3765 = vunpack.c.h.b16 %v3697
  %v3766 = vunpack.c.l.b16 %v3698
  %v3767 = vunpack.c.h.b16 %v3698
  %v3768 = vunpack.c.l.b16 %v3699
  %v3769 = vunpack.c.h.b16 %v3699
  %v3770 = vunpack.c.l.b16 %v3700
  %v3771 = vunpack.c.h.b16 %v3700
  %v3772 = vunpack.c.l.b16 %v3701
  %v3773 = vunpack.c.h.b16 %v3701
  %v3774 = vunpack.c.l.b16 %v3702
  %v3775 = vunpack.c.h.b16 %v3702
  %v3776 = vunpack.c.l.b16 %v3703
  %v3777 = vunpack.c.h.b16 %v3703
  %v3778 = vunpack.c.l.b16 %v3704
  %v3779 = vunpack.c.h.b16 %v3704
  %v3780 = vunpack.c.l.b16 %v3705
  %v3781 = vunpack.c.h.b16 %v3705
  %v3782 = vunpack.c.l.b16 %v3706
  %v3783 = vunpack.c.h.b16 %v3706
  %v3784 = vunpack.c.l.b16 %v3707
  %v3785 = vunpack.c.h.b16 %v3707
  %v3786 = vunpack.c.l.b16 %v3708
  %v3787 = vunpack.c.h.b16 %v3708
  %v3788 = vunpack.c.l.b16 %v3709
  %v3789 = vunpack.c.h.b16 %v3709
  %v3790 = vunpack.c.l.b16 %v3710
  %v3791 = vunpack.c.h.b16 %v3710
  %v3792 = vunpack.c.l.b16 %v3711
  %v3793 = vunpack.c.h.b16 %v3711
  %v3794 = vunpack.c.l.b16 %v3712
  %v3795 = vunpack.c.h.b16 %v3712
  %v3796 = vunpack.c.l.b16 %v3713
  %v3797 = vunpack.c.h.b16 %v3713
  %v3798 = vunpack.c.l.b16 %v3714
  %v3799 = vunpack.c.h.b16 %v3714
  %v3800 = vunpack.c.l.b16 %v3715
  %v3801 = vunpack.c.h.b16 %v3715
  %v3802 = vunpack.c.l.b16 %v3716
  %v3803 = vunpack.c.h.b16 %v3716
  %v3804 = vunpack.c.l.b16 %v3717
  %v3805 = vunpack.c.h.b16 %v3717
  %v3806 = vunpack.c.l.b16 %v3718
  %v3807 = vunpack.c.h.b16 %v3718
  %v3808 = vunpack.c.l.b16 %v3719
  %v3809 = vunpack.c.h.b16 %v3719
  %v3810 = vunpack.c.l.b16 %v3720
  %v3811 = vunpack.c.h.b16 %v3720
  %v3812 = vunpack.c.l.b16 %v3721
  %v3813 = vunpack.c.h.b16 %v3721
  %v3814 = vunpack.c.l.b16 %v3722
  %v3815 = vunpack.c.h.b16 %v3722
  %v3816 = vunpack.c.l.b16 %v3723
  %v3817 = vunpack.c.h.b16 %v3723
  %v3818 = vunpack.c.l.b16 %v3724
  %v3819 = vunpack.c.h.b16 %v3724
  %v3820 = vunpack.c.l.b16 %v3725
  %v3821 = vunpack.c.h.b16 %v3725
  %v3822 = vpack.c.b16 %v3762, %v3758
  %v3823 = vpack.c.b16 %v3763, %v3759
  %v3824 = vpack.c.b16 %v3764, %v3760
  %v3825 = vpack.c.b16 %v3765, %v3761
  %v3826 = vpack.c.b16 %v3770, %v3766
  %v3827 = vpack.c.b16 %v3771, %v3767
  %v3828 = vpack.c.b16 %v3772, %v3768
  %v3829 = vpack.c.b16 %v3773, %v3769
  %v3830 = vpack.c.b16 %v3778, %v3774
  %v3831 = vpack.c.b16 %v3779, %v3775
  %v3832 = vpack.c.b16 %v3780, %v3776
  %v3833 = vpack.c.b16 %v3781, %v3777
  %v3834 = vpack.c.b16 %v3786, %v3782
  %v3835 = vpack.c.b16 %v3787, %v3783
  %v3836 = vpack.c.b16 %v3788, %v3784
  %v3837 = vpack.c.b16 %v3789, %v3785
  %v3838 = vpack.c.b16 %v3794, %v3790
  %v3839 = vpack.c.b16 %v3795, %v3791
  %v3840 = vpack.c.b16 %v3796, %v3792
  %v3841 = vpack.c.b16 %v3797, %v3793
  %v3842 = vpack.c.b16 %v3802, %v3798
  %v3843 = vpack.c.b16 %v3803, %v3799
  %v3844 = vpack.c.b16 %v3804, %v3800
  %v3845 = vpack.c.b16 %v3805, %v3801
  %v3846 = vpack.c.b16 %v3810, %v3806
  %v3847 = vpack.c.b16 %v3811, %v3807
  %v3848 = vpack.c.b16 %v3812, %v3808
  %v3849 = vpack.c.b16 %v3813, %v3809
  %v3850 = vpack.c.b16 %v3818, %v3814
  %v3851 = vpack.c.b16 %v3819, %v3815
  %v3852 = vpack.c.b16 %v3820, %v3816
  %v3853 = vpack.c.b16 %v3821, %v3817
  %3886 = vmatprep.subr.bf16.mxu0 %v3823
  %3887 = vmatpush1.bf16.msra.mxu0 %v3822
  %3888 = vmatprep.subr.bf16.mxu0 %v3827
  %3889 = vmatpush1.bf16.msra.mxu0 %v3826
  %3890 = vmatprep.subr.bf16.mxu0 %v3831
  %3891 = vmatpush1.bf16.msra.mxu0 %v3830
  %3892 = vmatprep.subr.bf16.mxu0 %v3835
  %3893 = vmatpush1.bf16.msra.mxu0 %v3834
  %3894 = vmatprep.subr.bf16.mxu0 %v3839
  %3895 = vmatpush1.bf16.msra.mxu0 %v3838
  %3896 = vmatprep.subr.bf16.mxu0 %v3843
  %3897 = vmatpush1.bf16.msra.mxu0 %v3842
  %3898 = vmatprep.subr.bf16.mxu0 %v3847
  %3899 = vmatpush1.bf16.msra.mxu0 %v3846
  %3900 = vmatprep.subr.bf16.mxu0 %v3851
  %3901 = vmatpush1.bf16.msra.mxu0 %v3850
  %3902 = vmatprep.subr.bf16.mxu0 0
  %3903 = vmatpush1.bf16.msra.mxu0 0
  %3904 = vmatprep.subr.bf16.mxu0 0
  %3905 = vmatpush1.bf16.msra.mxu0 0
  %3906 = vmatprep.subr.bf16.mxu0 0
  %3907 = vmatpush1.bf16.msra.mxu0 0
  %3908 = vmatprep.subr.bf16.mxu0 0
  %3909 = vmatpush1.bf16.msra.mxu0 0
  %3910 = vmatprep.subr.bf16.mxu0 0
  %3911 = vmatpush1.bf16.msra.mxu0 0
  %3912 = vmatprep.subr.bf16.mxu0 0
  %3913 = vmatpush1.bf16.msra.mxu0 0
  %3914 = vmatprep.subr.bf16.mxu0 0
  %3915 = vmatpush1.bf16.msra.mxu0 0
  %3916 = vmatprep.subr.bf16.mxu0 0
  %3917 = vmatpush1.bf16.msra.mxu0 0
  %3918 = vmatprep.mubr.bf16.mxu0 0
  %3919 = vmatmul.mubr.bf16.gmra.mrb[0].mxu0 %v3693
  %v3920 = vpop.f32.mrb[0].mxu0
  %v3921 = vadd.f32 0.0, %v3920
  %v3922 = vpop.f32.mrb[0].mxu0
  %v3923 = vadd.f32 0.0, %v3922
  %v3924 = vpop.f32.mrb[0].mxu0
  %v3925 = vpop.f32.mrb[0].mxu0
  %3926 = vdwg.mxu0
  %3927 = vmatprep.subr.bf16.mxu0 %v3825
  %3928 = vmatpush1.bf16.msra.mxu0 %v3824
  %3929 = vmatprep.subr.bf16.mxu0 %v3829
  %3930 = vmatpush1.bf16.msra.mxu0 %v3828
  %3931 = vmatprep.subr.bf16.mxu0 %v3833
  %3932 = vmatpush1.bf16.msra.mxu0 %v3832
  %3933 = vmatprep.subr.bf16.mxu0 %v3837
  %3934 = vmatpush1.bf16.msra.mxu0 %v3836
  %3935 = vmatprep.subr.bf16.mxu0 %v3841
  %3936 = vmatpush1.bf16.msra.mxu0 %v3840
  %3937 = vmatprep.subr.bf16.mxu0 %v3845
  %3938 = vmatpush1.bf16.msra.mxu0 %v3844
  %3939 = vmatprep.subr.bf16.mxu0 %v3849
  %3940 = vmatpush1.bf16.msra.mxu0 %v3848
  %3941 = vmatprep.subr.bf16.mxu0 %v3853
  %3942 = vmatpush1.bf16.msra.mxu0 %v3852
  %3943 = vmatprep.subr.bf16.mxu0 0
  %3944 = vmatpush1.bf16.msra.mxu0 0
  %3945 = vmatprep.subr.bf16.mxu0 0
  %3946 = vmatpush1.bf16.msra.mxu0 0
  %3947 = vmatprep.subr.bf16.mxu0 0
  %3948 = vmatpush1.bf16.msra.mxu0 0
  %3949 = vmatprep.subr.bf16.mxu0 0
  %3950 = vmatpush1.bf16.msra.mxu0 0
  %3951 = vmatprep.subr.bf16.mxu0 0
  %3952 = vmatpush1.bf16.msra.mxu0 0
  %3953 = vmatprep.subr.bf16.mxu0 0
  %3954 = vmatpush1.bf16.msra.mxu0 0
  %3955 = vmatprep.subr.bf16.mxu0 0
  %3956 = vmatpush1.bf16.msra.mxu0 0
  %3957 = vmatprep.subr.bf16.mxu0 0
  %3958 = vmatpush1.bf16.msra.mxu0 0
  %3959 = vmatprep.mubr.bf16.mxu0 0
  %3960 = vmatmul.mubr.bf16.gmra.mrb[0].mxu0 %v3693
  %v3961 = vpop.f32.mrb[0].mxu0
  %v3962 = vadd.f32 0.0, %v3961
  %v3963 = vpop.f32.mrb[0].mxu0
  %v3964 = vadd.f32 0.0, %v3963
  %v3965 = vpop.f32.mrb[0].mxu0
  %v3966 = vpop.f32.mrb[0].mxu0
  %3967 = vdwg.mxu0
  %v3968 = vadd.f32 %v3688, %v3921
  %v3969 = vadd.f32 %v3689, %v3923
  %v3970 = vadd.f32 %v3690, %v3962
  %v3971 = vadd.f32 %v3691, %v3964
  %v3972 = vxor.u32 %v3968, 2147483648
  %v3973 = vmul.f32 %v3972, 1.442695
  %v3974 = vpow.pop %v3973
  %v3975 = vadd.f32 %v3974, 1.0
  %v3976 = vrcp.pop %v3975
  %v3977 = vmul.f32 1.0, %v3976
  %v3978 = vxor.u32 %v3969, 2147483648
  %v3979 = vmul.f32 %v3978, 1.442695
  %v3980 = vpow.pop %v3979
  %v3981 = vadd.f32 %v3980, 1.0
  %v3982 = vrcp.pop %v3981
  %v3983 = vmul.f32 1.0, %v3982
  %v3984 = vtanh.pop %v3970
  %v3985 = vxor.u32 %v3971, 2147483648
  %v3986 = vmul.f32 %v3985, 1.442695
  %v3987 = vpow.pop %v3986
  %v3988 = vadd.f32 %v3987, 1.0
  %v3989 = vrcp.pop %v3988
  %v3990 = vmul.f32 1.0, %v3989
  %v3991 = vld [vmem:[#allocation5] sm:$0xff]
  %v3992 = vmul.f32 %v3983, %v3991
  %v3993 = vmul.f32 %v3977, %v3984
  %v3994 = vadd.f32 %v3992, %v3993
  %v3995 = vtanh.pop %v3994
  %v3996 = vmul.f32 %v3990, %v3995
  %3997 = vst [vmem:[#allocation5] sm:$0xff] %v3994
  %3998 = vst [vmem:[#allocation4] sm:$0xff] %v3996
  %3999 = vst [vmem:[%s1084] sm:$0xff] %v3996
  %v4000 = vld [vmem:[%s1086] sm:$0xff]
  %v4001 = vld [vmem:[%s1086 + $0x8] sm:$0xff]
  %v4002 = vld [vmem:[%s1086 + $0x10] sm:$0xff]
  %v4003 = vld [vmem:[%s1086 + $0x18] sm:$0xff]
  %v4004 = vld [vmem:[#allocation4] sm:$0xff]
  %v4005 = vpack.c.bf16 %v4004, %v4004
  %v4006 = vld [vmem:[%s5] sm:$0xff]
  %v4007 = vld [vmem:[%s5 + $0x8] sm:$0xff]
  %v4008 = vld [vmem:[%s5 + $0x10] sm:$0xff]
  %v4009 = vld [vmem:[%s5 + $0x18] sm:$0xff]
  %v4010 = vld [vmem:[%s5 + $0x20] sm:$0xff]
  %v4011 = vld [vmem:[%s5 + $0x28] sm:$0xff]
  %v4012 = vld [vmem:[%s5 + $0x30] sm:$0xff]
  %v4013 = vld [vmem:[%s5 + $0x38] sm:$0xff]
  %v4014 = vld [vmem:[%s5 + $0x40] sm:$0xff]
  %v4015 = vld [vmem:[%s5 + $0x48] sm:$0xff]
  %v4016 = vld [vmem:[%s5 + $0x50] sm:$0xff]
  %v4017 = vld [vmem:[%s5 + $0x58] sm:$0xff]
  %v4018 = vld [vmem:[%s5 + $0x60] sm:$0xff]
  %v4019 = vld [vmem:[%s5 + $0x68] sm:$0xff]
  %v4020 = vld [vmem:[%s5 + $0x70] sm:$0xff]
  %v4021 = vld [vmem:[%s5 + $0x78] sm:$0xff]
  %v4022 = vld [vmem:[%s5 + $0x80] sm:$0xff]
  %v4023 = vld [vmem:[%s5 + $0x88] sm:$0xff]
  %v4024 = vld [vmem:[%s5 + $0x90] sm:$0xff]
  %v4025 = vld [vmem:[%s5 + $0x98] sm:$0xff]
  %v4026 = vld [vmem:[%s5 + $0xa0] sm:$0xff]
  %v4027 = vld [vmem:[%s5 + $0xa8] sm:$0xff]
  %v4028 = vld [vmem:[%s5 + $0xb0] sm:$0xff]
  %v4029 = vld [vmem:[%s5 + $0xb8] sm:$0xff]
  %v4030 = vld [vmem:[%s5 + $0xc0] sm:$0xff]
  %v4031 = vld [vmem:[%s5 + $0xc8] sm:$0xff]
  %v4032 = vld [vmem:[%s5 + $0xd0] sm:$0xff]
  %v4033 = vld [vmem:[%s5 + $0xd8] sm:$0xff]
  %v4034 = vld [vmem:[%s5 + $0xe0] sm:$0xff]
  %v4035 = vld [vmem:[%s5 + $0xe8] sm:$0xff]
  %v4036 = vld [vmem:[%s5 + $0xf0] sm:$0xff]
  %v4037 = vld [vmem:[%s5 + $0xf8] sm:$0xff]
  %v4070 = vunpack.c.l.b16 %v4006
  %v4071 = vunpack.c.h.b16 %v4006
  %v4072 = vunpack.c.l.b16 %v4007
  %v4073 = vunpack.c.h.b16 %v4007
  %v4074 = vunpack.c.l.b16 %v4008
  %v4075 = vunpack.c.h.b16 %v4008
  %v4076 = vunpack.c.l.b16 %v4009
  %v4077 = vunpack.c.h.b16 %v4009
  %v4078 = vunpack.c.l.b16 %v4010
  %v4079 = vunpack.c.h.b16 %v4010
  %v4080 = vunpack.c.l.b16 %v4011
  %v4081 = vunpack.c.h.b16 %v4011
  %v4082 = vunpack.c.l.b16 %v4012
  %v4083 = vunpack.c.h.b16 %v4012
  %v4084 = vunpack.c.l.b16 %v4013
  %v4085 = vunpack.c.h.b16 %v4013
  %v4086 = vunpack.c.l.b16 %v4014
  %v4087 = vunpack.c.h.b16 %v4014
  %v4088 = vunpack.c.l.b16 %v4015
  %v4089 = vunpack.c.h.b16 %v4015
  %v4090 = vunpack.c.l.b16 %v4016
  %v4091 = vunpack.c.h.b16 %v4016
  %v4092 = vunpack.c.l.b16 %v4017
  %v4093 = vunpack.c.h.b16 %v4017
  %v4094 = vunpack.c.l.b16 %v4018
  %v4095 = vunpack.c.h.b16 %v4018
  %v4096 = vunpack.c.l.b16 %v4019
  %v4097 = vunpack.c.h.b16 %v4019
  %v4098 = vunpack.c.l.b16 %v4020
  %v4099 = vunpack.c.h.b16 %v4020
  %v4100 = vunpack.c.l.b16 %v4021
  %v4101 = vunpack.c.h.b16 %v4021
  %v4102 = vunpack.c.l.b16 %v4022
  %v4103 = vunpack.c.h.b16 %v4022
  %v4104 = vunpack.c.l.b16 %v4023
  %v4105 = vunpack.c.h.b16 %v4023
  %v4106 = vunpack.c.l.b16 %v4024
  %v4107 = vunpack.c.h.b16 %v4024
  %v4108 = vunpack.c.l.b16 %v4025
  %v4109 = vunpack.c.h.b16 %v4025
  %v4110 = vunpack.c.l.b16 %v4026
  %v4111 = vunpack.c.h.b16 %v4026
  %v4112 = vunpack.c.l.b16 %v4027
  %v4113 = vunpack.c.h.b16 %v4027
  %v4114 = vunpack.c.l.b16 %v4028
  %v4115 = vunpack.c.h.b16 %v4028
  %v4116 = vunpack.c.l.b16 %v4029
  %v4117 = vunpack.c.h.b16 %v4029
  %v4118 = vunpack.c.l.b16 %v4030
  %v4119 = vunpack.c.h.b16 %v4030
  %v4120 = vunpack.c.l.b16 %v4031
  %v4121 = vunpack.c.h.b16 %v4031
  %v4122 = vunpack.c.l.b16 %v4032
  %v4123 = vunpack.c.h.b16 %v4032
  %v4124 = vunpack.c.l.b16 %v4033
  %v4125 = vunpack.c.h.b16 %v4033
  %v4126 = vunpack.c.l.b16 %v4034
  %v4127 = vunpack.c.h.b16 %v4034
  %v4128 = vunpack.c.l.b16 %v4035
  %v4129 = vunpack.c.h.b16 %v4035
  %v4130 = vunpack.c.l.b16 %v4036
  %v4131 = vunpack.c.h.b16 %v4036
  %v4132 = vunpack.c.l.b16 %v4037
  %v4133 = vunpack.c.h.b16 %v4037
  %v4134 = vpack.c.b16 %v4074, %v4070
  %v4135 = vpack.c.b16 %v4075, %v4071
  %v4136 = vpack.c.b16 %v4076, %v4072
  %v4137 = vpack.c.b16 %v4077, %v4073
  %v4138 = vpack.c.b16 %v4082, %v4078
  %v4139 = vpack.c.b16 %v4083, %v4079
  %v4140 = vpack.c.b16 %v4084, %v4080
  %v4141 = vpack.c.b16 %v4085, %v4081
  %v4142 = vpack.c.b16 %v4090, %v4086
  %v4143 = vpack.c.b16 %v4091, %v4087
  %v4144 = vpack.c.b16 %v4092, %v4088
  %v4145 = vpack.c.b16 %v4093, %v4089
  %v4146 = vpack.c.b16 %v4098, %v4094
  %v4147 = vpack.c.b16 %v4099, %v4095
  %v4148 = vpack.c.b16 %v4100, %v4096
  %v4149 = vpack.c.b16 %v4101, %v4097
  %v4150 = vpack.c.b16 %v4106, %v4102
  %v4151 = vpack.c.b16 %v4107, %v4103
  %v4152 = vpack.c.b16 %v4108, %v4104
  %v4153 = vpack.c.b16 %v4109, %v4105
  %v4154 = vpack.c.b16 %v4114, %v4110
  %v4155 = vpack.c.b16 %v4115, %v4111
  %v4156 = vpack.c.b16 %v4116, %v4112
  %v4157 = vpack.c.b16 %v4117, %v4113
  %v4158 = vpack.c.b16 %v4122, %v4118
  %v4159 = vpack.c.b16 %v4123, %v4119
  %v4160 = vpack.c.b16 %v4124, %v4120
  %v4161 = vpack.c.b16 %v4125, %v4121
  %v4162 = vpack.c.b16 %v4130, %v4126
  %v4163 = vpack.c.b16 %v4131, %v4127
  %v4164 = vpack.c.b16 %v4132, %v4128
  %v4165 = vpack.c.b16 %v4133, %v4129
  %4198 = vmatprep.subr.bf16.mxu0 %v4135
  %4199 = vmatpush1.bf16.msra.mxu0 %v4134
  %4200 = vmatprep.subr.bf16.mxu0 %v4139
  %4201 = vmatpush1.bf16.msra.mxu0 %v4138
  %4202 = vmatprep.subr.bf16.mxu0 %v4143
  %4203 = vmatpush1.bf16.msra.mxu0 %v4142
  %4204 = vmatprep.subr.bf16.mxu0 %v4147
  %4205 = vmatpush1.bf16.msra.mxu0 %v4146
  %4206 = vmatprep.subr.bf16.mxu0 %v4151
  %4207 = vmatpush1.bf16.msra.mxu0 %v4150
  %4208 = vmatprep.subr.bf16.mxu0 %v4155
  %4209 = vmatpush1.bf16.msra.mxu0 %v4154
  %4210 = vmatprep.subr.bf16.mxu0 %v4159
  %4211 = vmatpush1.bf16.msra.mxu0 %v4158
  %4212 = vmatprep.subr.bf16.mxu0 %v4163
  %4213 = vmatpush1.bf16.msra.mxu0 %v4162
  %4214 = vmatprep.subr.bf16.mxu0 0
  %4215 = vmatpush1.bf16.msra.mxu0 0
  %4216 = vmatprep.subr.bf16.mxu0 0
  %4217 = vmatpush1.bf16.msra.mxu0 0
  %4218 = vmatprep.subr.bf16.mxu0 0
  %4219 = vmatpush1.bf16.msra.mxu0 0
  %4220 = vmatprep.subr.bf16.mxu0 0
  %4221 = vmatpush1.bf16.msra.mxu0 0
  %4222 = vmatprep.subr.bf16.mxu0 0
  %4223 = vmatpush1.bf16.msra.mxu0 0
  %4224 = vmatprep.subr.bf16.mxu0 0
  %4225 = vmatpush1.bf16.msra.mxu0 0
  %4226 = vmatprep.subr.bf16.mxu0 0
  %4227 = vmatpush1.bf16.msra.mxu0 0
  %4228 = vmatprep.subr.bf16.mxu0 0
  %4229 = vmatpush1.bf16.msra.mxu0 0
  %4230 = vmatprep.mubr.bf16.mxu0 0
  %4231 = vmatmul.mubr.bf16.gmra.mrb[0].mxu0 %v4005
  %v4232 = vpop.f32.mrb[0].mxu0
  %v4233 = vadd.f32 0.0, %v4232
  %v4234 = vpop.f32.mrb[0].mxu0
  %v4235 = vadd.f32 0.0, %v4234
  %v4236 = vpop.f32.mrb[0].mxu0
  %v4237 = vpop.f32.mrb[0].mxu0
  %4238 = vdwg.mxu0
  %4239 = vmatprep.subr.bf16.mxu0 %v4137
  %4240 = vmatpush1.bf16.msra.mxu0 %v4136
  %4241 = vmatprep.subr.bf16.mxu0 %v4141
  %4242 = vmatpush1.bf16.msra.mxu0 %v4140
  %4243 = vmatprep.subr.bf16.mxu0 %v4145
  %4244 = vmatpush1.bf16.msra.mxu0 %v4144
  %4245 = vmatprep.subr.bf16.mxu0 %v4149
  %4246 = vmatpush1.bf16.msra.mxu0 %v4148
  %4247 = vmatprep.subr.bf16.mxu0 %v4153
  %4248 = vmatpush1.bf16.msra.mxu0 %v4152
  %4249 = vmatprep.subr.bf16.mxu0 %v4157
  %4250 = vmatpush1.bf16.msra.mxu0 %v4156
  %4251 = vmatprep.subr.bf16.mxu0 %v4161
  %4252 = vmatpush1.bf16.msra.mxu0 %v4160
  %4253 = vmatprep.subr.bf16.mxu0 %v4165
  %4254 = vmatpush1.bf16.msra.mxu0 %v4164
  %4255 = vmatprep.subr.bf16.mxu0 0
  %4256 = vmatpush1.bf16.msra.mxu0 0
  %4257 = vmatprep.subr.bf16.mxu0 0
  %4258 = vmatpush1.bf16.msra.mxu0 0
  %4259 = vmatprep.subr.bf16.mxu0 0
  %4260 = vmatpush1.bf16.msra.mxu0 0
  %4261 = vmatprep.subr.bf16.mxu0 0
  %4262 = vmatpush1.bf16.msra.mxu0 0
  %4263 = vmatprep.subr.bf16.mxu0 0
  %4264 = vmatpush1.bf16.msra.mxu0 0
  %4265 = vmatprep.subr.bf16.mxu0 0
  %4266 = vmatpush1.bf16.msra.mxu0 0
  %4267 = vmatprep.subr.bf16.mxu0 0
  %4268 = vmatpush1.bf16.msra.mxu0 0
  %4269 = vmatprep.subr.bf16.mxu0 0
  %4270 = vmatpush1.bf16.msra.mxu0 0
  %4271 = vmatprep.mubr.bf16.mxu0 0
  %4272 = vmatmul.mubr.bf16.gmra.mrb[0].mxu0 %v4005
  %v4273 = vpop.f32.mrb[0].mxu0
  %v4274 = vadd.f32 0.0, %v4273
  %v4275 = vpop.f32.mrb[0].mxu0
  %v4276 = vadd.f32 0.0, %v4275
  %v4277 = vpop.f32.mrb[0].mxu0
  %v4278 = vpop.f32.mrb[0].mxu0
  %4279 = vdwg.mxu0
  %v4280 = vadd.f32 %v4000, %v4233
  %v4281 = vadd.f32 %v4001, %v4235
  %v4282 = vadd.f32 %v4002, %v4274
  %v4283 = vadd.f32 %v4003, %v4276
  %v4284 = vxor.u32 %v4280, 2147483648
  %v4285 = vmul.f32 %v4284, 1.442695
  %v4286 = vpow.pop %v4285
  %v4287 = vadd.f32 %v4286, 1.0
  %v4288 = vrcp.pop %v4287
  %v4289 = vmul.f32 1.0, %v4288
  %v4290 = vxor.u32 %v4281, 2147483648
  %v4291 = vmul.f32 %v4290, 1.442695
  %v4292 = vpow.pop %v4291
  %v4293 = vadd.f32 %v4292, 1.0
  %v4294 = vrcp.pop %v4293
  %v4295 = vmul.f32 1.0, %v4294
  %v4296 = vtanh.pop %v4282
  %v4297 = vxor.u32 %v4283, 2147483648
  %v4298 = vmul.f32 %v4297, 1.442695
  %v4299 = vpow.pop %v4298
  %v4300 = vadd.f32 %v4299, 1.0
  %v4301 = vrcp.pop %v4300
  %v4302 = vmul.f32 1.0, %v4301
  %v4303 = vld [vmem:[#allocation5] sm:$0xff]
  %v4304 = vmul.f32 %v4295, %v4303
  %v4305 = vmul.f32 %v4289, %v4296
  %v4306 = vadd.f32 %v4304, %v4305
  %v4307 = vtanh.pop %v4306
  %v4308 = vmul.f32 %v4302, %v4307
  %4309 = vst [vmem:[#allocation5] sm:$0xff] %v4306
  %4310 = vst [vmem:[#allocation4] sm:$0xff] %v4308
  %4311 = vst [vmem:[%s1398] sm:$0xff] %v4308
  %v4312 = vld [vmem:[%s1400] sm:$0xff]
  %v4313 = vld [vmem:[%s1400 + $0x8] sm:$0xff]
  %v4314 = vld [vmem:[%s1400 + $0x10] sm:$0xff]
  %v4315 = vld [vmem:[%s1400 + $0x18] sm:$0xff]
  %v4316 = vld [vmem:[#allocation4] sm:$0xff]
  %v4317 = vpack.c.bf16 %v4316, %v4316
  %v4318 = vld [vmem:[%s5] sm:$0xff]
  %v4319 = vld [vmem:[%s5 + $0x8] sm:$0xff]
  %v4320 = vld [vmem:[%s5 + $0x10] sm:$0xff]
  %v4321 = vld [vmem:[%s5 + $0x18] sm:$0xff]
  %v4322 = vld [vmem:[%s5 + $0x20] sm:$0xff]
  %v4323 = vld [vmem:[%s5 + $0x28] sm:$0xff]
  %v4324 = vld [vmem:[%s5 + $0x30] sm:$0xff]
  %v4325 = vld [vmem:[%s5 + $0x38] sm:$0xff]
  %v4326 = vld [vmem:[%s5 + $0x40] sm:$0xff]
  %v4327 = vld [vmem:[%s5 + $0x48] sm:$0xff]
  %v4328 = vld [vmem:[%s5 + $0x50] sm:$0xff]
  %v4329 = vld [vmem:[%s5 + $0x58] sm:$0xff]
  %v4330 = vld [vmem:[%s5 + $0x60] sm:$0xff]
  %v4331 = vld [vmem:[%s5 + $0x68] sm:$0xff]
  %v4332 = vld [vmem:[%s5 + $0x70] sm:$0xff]
  %v4333 = vld [vmem:[%s5 + $0x78] sm:$0xff]
  %v4334 = vld [vmem:[%s5 + $0x80] sm:$0xff]
  %v4335 = vld [vmem:[%s5 + $0x88] sm:$0xff]
  %v4336 = vld [vmem:[%s5 + $0x90] sm:$0xff]
  %v4337 = vld [vmem:[%s5 + $0x98] sm:$0xff]
  %v4338 = vld [vmem:[%s5 + $0xa0] sm:$0xff]
  %v4339 = vld [vmem:[%s5 + $0xa8] sm:$0xff]
  %v4340 = vld [vmem:[%s5 + $0xb0] sm:$0xff]
  %v4341 = vld [vmem:[%s5 + $0xb8] sm:$0xff]
  %v4342 = vld [vmem:[%s5 + $0xc0] sm:$0xff]
  %v4343 = vld [vmem:[%s5 + $0xc8] sm:$0xff]
  %v4344 = vld [vmem:[%s5 + $0xd0] sm:$0xff]
  %v4345 = vld [vmem:[%s5 + $0xd8] sm:$0xff]
  %v4346 = vld [vmem:[%s5 + $0xe0] sm:$0xff]
  %v4347 = vld [vmem:[%s5 + $0xe8] sm:$0xff]
  %v4348 = vld [vmem:[%s5 + $0xf0] sm:$0xff]
  %v4349 = vld [vmem:[%s5 + $0xf8] sm:$0xff]
  %v4382 = vunpack.c.l.b16 %v4318
  %v4383 = vunpack.c.h.b16 %v4318
  %v4384 = vunpack.c.l.b16 %v4319
  %v4385 = vunpack.c.h.b16 %v4319
  %v4386 = vunpack.c.l.b16 %v4320
  %v4387 = vunpack.c.h.b16 %v4320
  %v4388 = vunpack.c.l.b16 %v4321
  %v4389 = vunpack.c.h.b16 %v4321
  %v4390 = vunpack.c.l.b16 %v4322
  %v4391 = vunpack.c.h.b16 %v4322
  %v4392 = vunpack.c.l.b16 %v4323
  %v4393 = vunpack.c.h.b16 %v4323
  %v4394 = vunpack.c.l.b16 %v4324
  %v4395 = vunpack.c.h.b16 %v4324
  %v4396 = vunpack.c.l.b16 %v4325
  %v4397 = vunpack.c.h.b16 %v4325
  %v4398 = vunpack.c.l.b16 %v4326
  %v4399 = vunpack.c.h.b16 %v4326
  %v4400 = vunpack.c.l.b16 %v4327
  %v4401 = vunpack.c.h.b16 %v4327
  %v4402 = vunpack.c.l.b16 %v4328
  %v4403 = vunpack.c.h.b16 %v4328
  %v4404 = vunpack.c.l.b16 %v4329
  %v4405 = vunpack.c.h.b16 %v4329
  %v4406 = vunpack.c.l.b16 %v4330
  %v4407 = vunpack.c.h.b16 %v4330
  %v4408 = vunpack.c.l.b16 %v4331
  %v4409 = vunpack.c.h.b16 %v4331
  %v4410 = vunpack.c.l.b16 %v4332
  %v4411 = vunpack.c.h.b16 %v4332
  %v4412 = vunpack.c.l.b16 %v4333
  %v4413 = vunpack.c.h.b16 %v4333
  %v4414 = vunpack.c.l.b16 %v4334
  %v4415 = vunpack.c.h.b16 %v4334
  %v4416 = vunpack.c.l.b16 %v4335
  %v4417 = vunpack.c.h.b16 %v4335
  %v4418 = vunpack.c.l.b16 %v4336
  %v4419 = vunpack.c.h.b16 %v4336
  %v4420 = vunpack.c.l.b16 %v4337
  %v4421 = vunpack.c.h.b16 %v4337
  %v4422 = vunpack.c.l.b16 %v4338
  %v4423 = vunpack.c.h.b16 %v4338
  %v4424 = vunpack.c.l.b16 %v4339
  %v4425 = vunpack.c.h.b16 %v4339
  %v4426 = vunpack.c.l.b16 %v4340
  %v4427 = vunpack.c.h.b16 %v4340
  %v4428 = vunpack.c.l.b16 %v4341
  %v4429 = vunpack.c.h.b16 %v4341
  %v4430 = vunpack.c.l.b16 %v4342
  %v4431 = vunpack.c.h.b16 %v4342
  %v4432 = vunpack.c.l.b16 %v4343
  %v4433 = vunpack.c.h.b16 %v4343
  %v4434 = vunpack.c.l.b16 %v4344
  %v4435 = vunpack.c.h.b16 %v4344
  %v4436 = vunpack.c.l.b16 %v4345
  %v4437 = vunpack.c.h.b16 %v4345
  %v4438 = vunpack.c.l.b16 %v4346
  %v4439 = vunpack.c.h.b16 %v4346
  %v4440 = vunpack.c.l.b16 %v4347
  %v4441 = vunpack.c.h.b16 %v4347
  %v4442 = vunpack.c.l.b16 %v4348
  %v4443 = vunpack.c.h.b16 %v4348
  %v4444 = vunpack.c.l.b16 %v4349
  %v4445 = vunpack.c.h.b16 %v4349
  %v4446 = vpack.c.b16 %v4386, %v4382
  %v4447 = vpack.c.b16 %v4387, %v4383
  %v4448 = vpack.c.b16 %v4388, %v4384
  %v4449 = vpack.c.b16 %v4389, %v4385
  %v4450 = vpack.c.b16 %v4394, %v4390
  %v4451 = vpack.c.b16 %v4395, %v4391
  %v4452 = vpack.c.b16 %v4396, %v4392
  %v4453 = vpack.c.b16 %v4397, %v4393
  %v4454 = vpack.c.b16 %v4402, %v4398
  %v4455 = vpack.c.b16 %v4403, %v4399
  %v4456 = vpack.c.b16 %v4404, %v4400
  %v4457 = vpack.c.b16 %v4405, %v4401
  %v4458 = vpack.c.b16 %v4410, %v4406
  %v4459 = vpack.c.b16 %v4411, %v4407
  %v4460 = vpack.c.b16 %v4412, %v4408
  %v4461 = vpack.c.b16 %v4413, %v4409
  %v4462 = vpack.c.b16 %v4418, %v4414
  %v4463 = vpack.c.b16 %v4419, %v4415
  %v4464 = vpack.c.b16 %v4420, %v4416
  %v4465 = vpack.c.b16 %v4421, %v4417
  %v4466 = vpack.c.b16 %v4426, %v4422
  %v4467 = vpack.c.b16 %v4427, %v4423
  %v4468 = vpack.c.b16 %v4428, %v4424
  %v4469 = vpack.c.b16 %v4429, %v4425
  %v4470 = vpack.c.b16 %v4434, %v4430
  %v4471 = vpack.c.b16 %v4435, %v4431
  %v4472 = vpack.c.b16 %v4436, %v4432
  %v4473 = vpack.c.b16 %v4437, %v4433
  %v4474 = vpack.c.b16 %v4442, %v4438
  %v4475 = vpack.c.b16 %v4443, %v4439
  %v4476 = vpack.c.b16 %v4444, %v4440
  %v4477 = vpack.c.b16 %v4445, %v4441
  %4510 = vmatprep.subr.bf16.mxu0 %v4447
  %4511 = vmatpush1.bf16.msra.mxu0 %v4446
  %4512 = vmatprep.subr.bf16.mxu0 %v4451
  %4513 = vmatpush1.bf16.msra.mxu0 %v4450
  %4514 = vmatprep.subr.bf16.mxu0 %v4455
  %4515 = vmatpush1.bf16.msra.mxu0 %v4454
  %4516 = vmatprep.subr.bf16.mxu0 %v4459
  %4517 = vmatpush1.bf16.msra.mxu0 %v4458
  %4518 = vmatprep.subr.bf16.mxu0 %v4463
  %4519 = vmatpush1.bf16.msra.mxu0 %v4462
  %4520 = vmatprep.subr.bf16.mxu0 %v4467
  %4521 = vmatpush1.bf16.msra.mxu0 %v4466
  %4522 = vmatprep.subr.bf16.mxu0 %v4471
  %4523 = vmatpush1.bf16.msra.mxu0 %v4470
  %4524 = vmatprep.subr.bf16.mxu0 %v4475
  %4525 = vmatpush1.bf16.msra.mxu0 %v4474
  %4526 = vmatprep.subr.bf16.mxu0 0
  %4527 = vmatpush1.bf16.msra.mxu0 0
  %4528 = vmatprep.subr.bf16.mxu0 0
  %4529 = vmatpush1.bf16.msra.mxu0 0
  %4530 = vmatprep.subr.bf16.mxu0 0
  %4531 = vmatpush1.bf16.msra.mxu0 0
  %4532 = vmatprep.subr.bf16.mxu0 0
  %4533 = vmatpush1.bf16.msra.mxu0 0
  %4534 = vmatprep.subr.bf16.mxu0 0
  %4535 = vmatpush1.bf16.msra.mxu0 0
  %4536 = vmatprep.subr.bf16.mxu0 0
  %4537 = vmatpush1.bf16.msra.mxu0 0
  %4538 = vmatprep.subr.bf16.mxu0 0
  %4539 = vmatpush1.bf16.msra.mxu0 0
  %4540 = vmatprep.subr.bf16.mxu0 0
  %4541 = vmatpush1.bf16.msra.mxu0 0
  %4542 = vmatprep.mubr.bf16.mxu0 0
  %4543 = vmatmul.mubr.bf16.gmra.mrb[0].mxu0 %v4317
  %v4544 = vpop.f32.mrb[0].mxu0
  %v4545 = vadd.f32 0.0, %v4544
  %v4546 = vpop.f32.mrb[0].mxu0
  %v4547 = vadd.f32 0.0, %v4546
  %v4548 = vpop.f32.mrb[0].mxu0
  %v4549 = vpop.f32.mrb[0].mxu0
  %4550 = vdwg.mxu0
  %4551 = vmatprep.subr.bf16.mxu0 %v4449
  %4552 = vmatpush1.bf16.msra.mxu0 %v4448
  %4553 = vmatprep.subr.bf16.mxu0 %v4453
  %4554 = vmatpush1.bf16.msra.mxu0 %v4452
  %4555 = vmatprep.subr.bf16.mxu0 %v4457
  %4556 = vmatpush1.bf16.msra.mxu0 %v4456
  %4557 = vmatprep.subr.bf16.mxu0 %v4461
  %4558 = vmatpush1.bf16.msra.mxu0 %v4460
  %4559 = vmatprep.subr.bf16.mxu0 %v4465
  %4560 = vmatpush1.bf16.msra.mxu0 %v4464
  %4561 = vmatprep.subr.bf16.mxu0 %v4469
  %4562 = vmatpush1.bf16.msra.mxu0 %v4468
  %4563 = vmatprep.subr.bf16.mxu0 %v4473
  %4564 = vmatpush1.bf16.msra.mxu0 %v4472
  %4565 = vmatprep.subr.bf16.mxu0 %v4477
  %4566 = vmatpush1.bf16.msra.mxu0 %v4476
  %4567 = vmatprep.subr.bf16.mxu0 0
  %4568 = vmatpush1.bf16.msra.mxu0 0
  %4569 = vmatprep.subr.bf16.mxu0 0
  %4570 = vmatpush1.bf16.msra.mxu0 0
  %4571 = vmatprep.subr.bf16.mxu0 0
  %4572 = vmatpush1.bf16.msra.mxu0 0
  %4573 = vmatprep.subr.bf16.mxu0 0
  %4574 = vmatpush1.bf16.msra.mxu0 0
  %4575 = vmatprep.subr.bf16.mxu0 0
  %4576 = vmatpush1.bf16.msra.mxu0 0
  %4577 = vmatprep.subr.bf16.mxu0 0
  %4578 = vmatpush1.bf16.msra.mxu0 0
  %4579 = vmatprep.subr.bf16.mxu0 0
  %4580 = vmatpush1.bf16.msra.mxu0 0
  %4581 = vmatprep.subr.bf16.mxu0 0
  %4582 = vmatpush1.bf16.msra.mxu0 0
  %4583 = vmatprep.mubr.bf16.mxu0 0
  %4584 = vmatmul.mubr.bf16.gmra.mrb[0].mxu0 %v4317
  %v4585 = vpop.f32.mrb[0].mxu0
  %v4586 = vadd.f32 0.0, %v4585
  %v4587 = vpop.f32.mrb[0].mxu0
  %v4588 = vadd.f32 0.0, %v4587
  %v4589 = vpop.f32.mrb[0].mxu0
  %v4590 = vpop.f32.mrb[0].mxu0
  %4591 = vdwg.mxu0
  %v4592 = vadd.f32 %v4312, %v4545
  %v4593 = vadd.f32 %v4313, %v4547
  %v4594 = vadd.f32 %v4314, %v4586
  %v4595 = vadd.f32 %v4315, %v4588
  %v4596 = vxor.u32 %v4592, 2147483648
  %v4597 = vmul.f32 %v4596, 1.442695
  %v4598 = vpow.pop %v4597
  %v4599 = vadd.f32 %v4598, 1.0
  %v4600 = vrcp.pop %v4599
  %v4601 = vmul.f32 1.0, %v4600
  %v4602 = vxor.u32 %v4593, 2147483648
  %v4603 = vmul.f32 %v4602, 1.442695
  %v4604 = vpow.pop %v4603
  %v4605 = vadd.f32 %v4604, 1.0
  %v4606 = vrcp.pop %v4605
  %v4607 = vmul.f32 1.0, %v4606
  %v4608 = vtanh.pop %v4594
  %v4609 = vxor.u32 %v4595, 2147483648
  %v4610 = vmul.f32 %v4609, 1.442695
  %v4611 = vpow.pop %v4610
  %v4612 = vadd.f32 %v4611, 1.0
  %v4613 = vrcp.pop %v4612
  %v4614 = vmul.f32 1.0, %v4613
  %v4615 = vld [vmem:[#allocation5] sm:$0xff]
  %v4616 = vmul.f32 %v4607, %v4615
  %v4617 = vmul.f32 %v4601, %v4608
  %v4618 = vadd.f32 %v4616, %v4617
  %v4619 = vtanh.pop %v4618
  %v4620 = vmul.f32 %v4614, %v4619
  %4621 = vst [vmem:[#allocation5] sm:$0xff] %v4618
  %4622 = vst [vmem:[#allocation4] sm:$0xff] %v4620
  %4623 = vst [vmem:[%s1712] sm:$0xff] %v4620
  %v4624 = vld [vmem:[%s1714] sm:$0xff]
  %v4625 = vld [vmem:[%s1714 + $0x8] sm:$0xff]
  %v4626 = vld [vmem:[%s1714 + $0x10] sm:$0xff]
  %v4627 = vld [vmem:[%s1714 + $0x18] sm:$0xff]
  %v4628 = vld [vmem:[#allocation4] sm:$0xff]
  %v4629 = vpack.c.bf16 %v4628, %v4628
  %v4630 = vld [vmem:[%s5] sm:$0xff]
  %v4631 = vld [vmem:[%s5 + $0x8] sm:$0xff]
  %v4632 = vld [vmem:[%s5 + $0x10] sm:$0xff]
  %v4633 = vld [vmem:[%s5 + $0x18] sm:$0xff]
  %v4634 = vld [vmem:[%s5 + $0x20] sm:$0xff]
  %v4635 = vld [vmem:[%s5 + $0x28] sm:$0xff]
  %v4636 = vld [vmem:[%s5 + $0x30] sm:$0xff]
  %v4637 = vld [vmem:[%s5 + $0x38] sm:$0xff]
  %v4638 = vld [vmem:[%s5 + $0x40] sm:$0xff]
  %v4639 = vld [vmem:[%s5 + $0x48] sm:$0xff]
  %v4640 = vld [vmem:[%s5 + $0x50] sm:$0xff]
  %v4641 = vld [vmem:[%s5 + $0x58] sm:$0xff]
  %v4642 = vld [vmem:[%s5 + $0x60] sm:$0xff]
  %v4643 = vld [vmem:[%s5 + $0x68] sm:$0xff]
  %v4644 = vld [vmem:[%s5 + $0x70] sm:$0xff]
  %v4645 = vld [vmem:[%s5 + $0x78] sm:$0xff]
  %v4646 = vld [vmem:[%s5 + $0x80] sm:$0xff]
  %v4647 = vld [vmem:[%s5 + $0x88] sm:$0xff]
  %v4648 = vld [vmem:[%s5 + $0x90] sm:$0xff]
  %v4649 = vld [vmem:[%s5 + $0x98] sm:$0xff]
  %v4650 = vld [vmem:[%s5 + $0xa0] sm:$0xff]
  %v4651 = vld [vmem:[%s5 + $0xa8] sm:$0xff]
  %v4652 = vld [vmem:[%s5 + $0xb0] sm:$0xff]
  %v4653 = vld [vmem:[%s5 + $0xb8] sm:$0xff]
  %v4654 = vld [vmem:[%s5 + $0xc0] sm:$0xff]
  %v4655 = vld [vmem:[%s5 + $0xc8] sm:$0xff]
  %v4656 = vld [vmem:[%s5 + $0xd0] sm:$0xff]
  %v4657 = vld [vmem:[%s5 + $0xd8] sm:$0xff]
  %v4658 = vld [vmem:[%s5 + $0xe0] sm:$0xff]
  %v4659 = vld [vmem:[%s5 + $0xe8] sm:$0xff]
  %v4660 = vld [vmem:[%s5 + $0xf0] sm:$0xff]
  %v4661 = vld [vmem:[%s5 + $0xf8] sm:$0xff]
  %v4694 = vunpack.c.l.b16 %v4630
  %v4695 = vunpack.c.h.b16 %v4630
  %v4696 = vunpack.c.l.b16 %v4631
  %v4697 = vunpack.c.h.b16 %v4631
  %v4698 = vunpack.c.l.b16 %v4632
  %v4699 = vunpack.c.h.b16 %v4632
  %v4700 = vunpack.c.l.b16 %v4633
  %v4701 = vunpack.c.h.b16 %v4633
  %v4702 = vunpack.c.l.b16 %v4634
  %v4703 = vunpack.c.h.b16 %v4634
  %v4704 = vunpack.c.l.b16 %v4635
  %v4705 = vunpack.c.h.b16 %v4635
  %v4706 = vunpack.c.l.b16 %v4636
  %v4707 = vunpack.c.h.b16 %v4636
  %v4708 = vunpack.c.l.b16 %v4637
  %v4709 = vunpack.c.h.b16 %v4637
  %v4710 = vunpack.c.l.b16 %v4638
  %v4711 = vunpack.c.h.b16 %v4638
  %v4712 = vunpack.c.l.b16 %v4639
  %v4713 = vunpack.c.h.b16 %v4639
  %v4714 = vunpack.c.l.b16 %v4640
  %v4715 = vunpack.c.h.b16 %v4640
  %v4716 = vunpack.c.l.b16 %v4641
  %v4717 = vunpack.c.h.b16 %v4641
  %v4718 = vunpack.c.l.b16 %v4642
  %v4719 = vunpack.c.h.b16 %v4642
  %v4720 = vunpack.c.l.b16 %v4643
  %v4721 = vunpack.c.h.b16 %v4643
  %v4722 = vunpack.c.l.b16 %v4644
  %v4723 = vunpack.c.h.b16 %v4644
  %v4724 = vunpack.c.l.b16 %v4645
  %v4725 = vunpack.c.h.b16 %v4645
  %v4726 = vunpack.c.l.b16 %v4646
  %v4727 = vunpack.c.h.b16 %v4646
  %v4728 = vunpack.c.l.b16 %v4647
  %v4729 = vunpack.c.h.b16 %v4647
  %v4730 = vunpack.c.l.b16 %v4648
  %v4731 = vunpack.c.h.b16 %v4648
  %v4732 = vunpack.c.l.b16 %v4649
  %v4733 = vunpack.c.h.b16 %v4649
  %v4734 = vunpack.c.l.b16 %v4650
  %v4735 = vunpack.c.h.b16 %v4650
  %v4736 = vunpack.c.l.b16 %v4651
  %v4737 = vunpack.c.h.b16 %v4651
  %v4738 = vunpack.c.l.b16 %v4652
  %v4739 = vunpack.c.h.b16 %v4652
  %v4740 = vunpack.c.l.b16 %v4653
  %v4741 = vunpack.c.h.b16 %v4653
  %v4742 = vunpack.c.l.b16 %v4654
  %v4743 = vunpack.c.h.b16 %v4654
  %v4744 = vunpack.c.l.b16 %v4655
  %v4745 = vunpack.c.h.b16 %v4655
  %v4746 = vunpack.c.l.b16 %v4656
  %v4747 = vunpack.c.h.b16 %v4656
  %v4748 = vunpack.c.l.b16 %v4657
  %v4749 = vunpack.c.h.b16 %v4657
  %v4750 = vunpack.c.l.b16 %v4658
  %v4751 = vunpack.c.h.b16 %v4658
  %v4752 = vunpack.c.l.b16 %v4659
  %v4753 = vunpack.c.h.b16 %v4659
  %v4754 = vunpack.c.l.b16 %v4660
  %v4755 = vunpack.c.h.b16 %v4660
  %v4756 = vunpack.c.l.b16 %v4661
  %v4757 = vunpack.c.h.b16 %v4661
  %v4758 = vpack.c.b16 %v4698, %v4694
  %v4759 = vpack.c.b16 %v4699, %v4695
  %v4760 = vpack.c.b16 %v4700, %v4696
  %v4761 = vpack.c.b16 %v4701, %v4697
  %v4762 = vpack.c.b16 %v4706, %v4702
  %v4763 = vpack.c.b16 %v4707, %v4703
  %v4764 = vpack.c.b16 %v4708, %v4704
  %v4765 = vpack.c.b16 %v4709, %v4705
  %v4766 = vpack.c.b16 %v4714, %v4710
  %v4767 = vpack.c.b16 %v4715, %v4711
  %v4768 = vpack.c.b16 %v4716, %v4712
  %v4769 = vpack.c.b16 %v4717, %v4713
  %v4770 = vpack.c.b16 %v4722, %v4718
  %v4771 = vpack.c.b16 %v4723, %v4719
  %v4772 = vpack.c.b16 %v4724, %v4720
  %v4773 = vpack.c.b16 %v4725, %v4721
  %v4774 = vpack.c.b16 %v4730, %v4726
  %v4775 = vpack.c.b16 %v4731, %v4727
  %v4776 = vpack.c.b16 %v4732, %v4728
  %v4777 = vpack.c.b16 %v4733, %v4729
  %v4778 = vpack.c.b16 %v4738, %v4734
  %v4779 = vpack.c.b16 %v4739, %v4735
  %v4780 = vpack.c.b16 %v4740, %v4736
  %v4781 = vpack.c.b16 %v4741, %v4737
  %v4782 = vpack.c.b16 %v4746, %v4742
  %v4783 = vpack.c.b16 %v4747, %v4743
  %v4784 = vpack.c.b16 %v4748, %v4744
  %v4785 = vpack.c.b16 %v4749, %v4745
  %v4786 = vpack.c.b16 %v4754, %v4750
  %v4787 = vpack.c.b16 %v4755, %v4751
  %v4788 = vpack.c.b16 %v4756, %v4752
  %v4789 = vpack.c.b16 %v4757, %v4753
  %4822 = vmatprep.subr.bf16.mxu0 %v4759
  %4823 = vmatpush1.bf16.msra.mxu0 %v4758
  %4824 = vmatprep.subr.bf16.mxu0 %v4763
  %4825 = vmatpush1.bf16.msra.mxu0 %v4762
  %4826 = vmatprep.subr.bf16.mxu0 %v4767
  %4827 = vmatpush1.bf16.msra.mxu0 %v4766
  %4828 = vmatprep.subr.bf16.mxu0 %v4771
  %4829 = vmatpush1.bf16.msra.mxu0 %v4770
  %4830 = vmatprep.subr.bf16.mxu0 %v4775
  %4831 = vmatpush1.bf16.msra.mxu0 %v4774
  %4832 = vmatprep.subr.bf16.mxu0 %v4779
  %4833 = vmatpush1.bf16.msra.mxu0 %v4778
  %4834 = vmatprep.subr.bf16.mxu0 %v4783
  %4835 = vmatpush1.bf16.msra.mxu0 %v4782
  %4836 = vmatprep.subr.bf16.mxu0 %v4787
  %4837 = vmatpush1.bf16.msra.mxu0 %v4786
  %4838 = vmatprep.subr.bf16.mxu0 0
  %4839 = vmatpush1.bf16.msra.mxu0 0
  %4840 = vmatprep.subr.bf16.mxu0 0
  %4841 = vmatpush1.bf16.msra.mxu0 0
  %4842 = vmatprep.subr.bf16.mxu0 0
  %4843 = vmatpush1.bf16.msra.mxu0 0
  %4844 = vmatprep.subr.bf16.mxu0 0
  %4845 = vmatpush1.bf16.msra.mxu0 0
  %4846 = vmatprep.subr.bf16.mxu0 0
  %4847 = vmatpush1.bf16.msra.mxu0 0
  %4848 = vmatprep.subr.bf16.mxu0 0
  %4849 = vmatpush1.bf16.msra.mxu0 0
  %4850 = vmatprep.subr.bf16.mxu0 0
  %4851 = vmatpush1.bf16.msra.mxu0 0
  %4852 = vmatprep.subr.bf16.mxu0 0
  %4853 = vmatpush1.bf16.msra.mxu0 0
  %4854 = vmatprep.mubr.bf16.mxu0 0
  %4855 = vmatmul.mubr.bf16.gmra.mrb[0].mxu0 %v4629
  %v4856 = vpop.f32.mrb[0].mxu0
  %v4857 = vadd.f32 0.0, %v4856
  %v4858 = vpop.f32.mrb[0].mxu0
  %v4859 = vadd.f32 0.0, %v4858
  %v4860 = vpop.f32.mrb[0].mxu0
  %v4861 = vpop.f32.mrb[0].mxu0
  %4862 = vdwg.mxu0
  %4863 = vmatprep.subr.bf16.mxu0 %v4761
  %4864 = vmatpush1.bf16.msra.mxu0 %v4760
  %4865 = vmatprep.subr.bf16.mxu0 %v4765
  %4866 = vmatpush1.bf16.msra.mxu0 %v4764
  %4867 = vmatprep.subr.bf16.mxu0 %v4769
  %4868 = vmatpush1.bf16.msra.mxu0 %v4768
  %4869 = vmatprep.subr.bf16.mxu0 %v4773
  %4870 = vmatpush1.bf16.msra.mxu0 %v4772
  %4871 = vmatprep.subr.bf16.mxu0 %v4777
  %4872 = vmatpush1.bf16.msra.mxu0 %v4776
  %4873 = vmatprep.subr.bf16.mxu0 %v4781
  %4874 = vmatpush1.bf16.msra.mxu0 %v4780
  %4875 = vmatprep.subr.bf16.mxu0 %v4785
  %4876 = vmatpush1.bf16.msra.mxu0 %v4784
  %4877 = vmatprep.subr.bf16.mxu0 %v4789
  %4878 = vmatpush1.bf16.msra.mxu0 %v4788
  %4879 = vmatprep.subr.bf16.mxu0 0
  %4880 = vmatpush1.bf16.msra.mxu0 0
  %4881 = vmatprep.subr.bf16.mxu0 0
  %4882 = vmatpush1.bf16.msra.mxu0 0
  %4883 = vmatprep.subr.bf16.mxu0 0
  %4884 = vmatpush1.bf16.msra.mxu0 0
  %4885 = vmatprep.subr.bf16.mxu0 0
  %4886 = vmatpush1.bf16.msra.mxu0 0
  %4887 = vmatprep.subr.bf16.mxu0 0
  %4888 = vmatpush1.bf16.msra.mxu0 0
  %4889 = vmatprep.subr.bf16.mxu0 0
  %4890 = vmatpush1.bf16.msra.mxu0 0
  %4891 = vmatprep.subr.bf16.mxu0 0
  %4892 = vmatpush1.bf16.msra.mxu0 0
  %4893 = vmatprep.subr.bf16.mxu0 0
  %4894 = vmatpush1.bf16.msra.mxu0 0
  %4895 = vmatprep.mubr.bf16.mxu0 0
  %4896 = vmatmul.mubr.bf16.gmra.mrb[0].mxu0 %v4629
  %v4897 = vpop.f32.mrb[0].mxu0
  %v4898 = vadd.f32 0.0, %v4897
  %v4899 = vpop.f32.mrb[0].mxu0
  %v4900 = vadd.f32 0.0, %v4899
  %v4901 = vpop.f32.mrb[0].mxu0
  %v4902 = vpop.f32.mrb[0].mxu0
  %4903 = vdwg.mxu0
  %v4904 = vadd.f32 %v4624, %v4857
  %v4905 = vadd.f32 %v4625, %v4859
  %v4906 = vadd.f32 %v4626, %v4898
  %v4907 = vadd.f32 %v4627, %v4900
  %v4908 = vxor.u32 %v4904, 2147483648
  %v4909 = vmul.f32 %v4908, 1.442695
  %v4910 = vpow.pop %v4909
  %v4911 = vadd.f32 %v4910, 1.0
  %v4912 = vrcp.pop %v4911
  %v4913 = vmul.f32 1.0, %v4912
  %v4914 = vxor.u32 %v4905, 2147483648
  %v4915 = vmul.f32 %v4914, 1.442695
  %v4916 = vpow.pop %v4915
  %v4917 = vadd.f32 %v4916, 1.0
  %v4918 = vrcp.pop %v4917
  %v4919 = vmul.f32 1.0, %v4918
  %v4920 = vtanh.pop %v4906
  %v4921 = vxor.u32 %v4907, 2147483648
  %v4922 = vmul.f32 %v4921, 1.442695
  %v4923 = vpow.pop %v4922
  %v4924 = vadd.f32 %v4923, 1.0
  %v4925 = vrcp.pop %v4924
  %v4926 = vmul.f32 1.0, %v4925
  %v4927 = vld [vmem:[#allocation5] sm:$0xff]
  %v4928 = vmul.f32 %v4919, %v4927
  %v4929 = vmul.f32 %v4913, %v4920
  %v4930 = vadd.f32 %v4928, %v4929
  %v4931 = vtanh.pop %v4930
  %v4932 = vmul.f32 %v4926, %v4931
  %4933 = vst [vmem:[#allocation5] sm:$0xff] %v4930
  %4934 = vst [vmem:[#allocation4] sm:$0xff] %v4932
  %4935 = vst [vmem:[%s2026] sm:$0xff] %v4932
  %v4936 = vld [vmem:[%s2028] sm:$0xff]
  %v4937 = vld [vmem:[%s2028 + $0x8] sm:$0xff]
  %v4938 = vld [vmem:[%s2028 + $0x10] sm:$0xff]
  %v4939 = vld [vmem:[%s2028 + $0x18] sm:$0xff]
  %v4940 = vld [vmem:[#allocation4] sm:$0xff]
  %v4941 = vpack.c.bf16 %v4940, %v4940
  %v4942 = vld [vmem:[%s5] sm:$0xff]
  %v4943 = vld [vmem:[%s5 + $0x8] sm:$0xff]
  %v4944 = vld [vmem:[%s5 + $0x10] sm:$0xff]
  %v4945 = vld [vmem:[%s5 + $0x18] sm:$0xff]
  %v4946 = vld [vmem:[%s5 + $0x20] sm:$0xff]
  %v4947 = vld [vmem:[%s5 + $0x28] sm:$0xff]
  %v4948 = vld [vmem:[%s5 + $0x30] sm:$0xff]
  %v4949 = vld [vmem:[%s5 + $0x38] sm:$0xff]
  %v4950 = vld [vmem:[%s5 + $0x40] sm:$0xff]
  %v4951 = vld [vmem:[%s5 + $0x48] sm:$0xff]
  %v4952 = vld [vmem:[%s5 + $0x50] sm:$0xff]
  %v4953 = vld [vmem:[%s5 + $0x58] sm:$0xff]
  %v4954 = vld [vmem:[%s5 + $0x60] sm:$0xff]
  %v4955 = vld [vmem:[%s5 + $0x68] sm:$0xff]
  %v4956 = vld [vmem:[%s5 + $0x70] sm:$0xff]
  %v4957 = vld [vmem:[%s5 + $0x78] sm:$0xff]
  %v4958 = vld [vmem:[%s5 + $0x80] sm:$0xff]
  %v4959 = vld [vmem:[%s5 + $0x88] sm:$0xff]
  %v4960 = vld [vmem:[%s5 + $0x90] sm:$0xff]
  %v4961 = vld [vmem:[%s5 + $0x98] sm:$0xff]
  %v4962 = vld [vmem:[%s5 + $0xa0] sm:$0xff]
  %v4963 = vld [vmem:[%s5 + $0xa8] sm:$0xff]
  %v4964 = vld [vmem:[%s5 + $0xb0] sm:$0xff]
  %v4965 = vld [vmem:[%s5 + $0xb8] sm:$0xff]
  %v4966 = vld [vmem:[%s5 + $0xc0] sm:$0xff]
  %v4967 = vld [vmem:[%s5 + $0xc8] sm:$0xff]
  %v4968 = vld [vmem:[%s5 + $0xd0] sm:$0xff]
  %v4969 = vld [vmem:[%s5 + $0xd8] sm:$0xff]
  %v4970 = vld [vmem:[%s5 + $0xe0] sm:$0xff]
  %v4971 = vld [vmem:[%s5 + $0xe8] sm:$0xff]
  %v4972 = vld [vmem:[%s5 + $0xf0] sm:$0xff]
  %v4973 = vld [vmem:[%s5 + $0xf8] sm:$0xff]
  %v5006 = vunpack.c.l.b16 %v4942
  %v5007 = vunpack.c.h.b16 %v4942
  %v5008 = vunpack.c.l.b16 %v4943
  %v5009 = vunpack.c.h.b16 %v4943
  %v5010 = vunpack.c.l.b16 %v4944
  %v5011 = vunpack.c.h.b16 %v4944
  %v5012 = vunpack.c.l.b16 %v4945
  %v5013 = vunpack.c.h.b16 %v4945
  %v5014 = vunpack.c.l.b16 %v4946
  %v5015 = vunpack.c.h.b16 %v4946
  %v5016 = vunpack.c.l.b16 %v4947
  %v5017 = vunpack.c.h.b16 %v4947
  %v5018 = vunpack.c.l.b16 %v4948
  %v5019 = vunpack.c.h.b16 %v4948
  %v5020 = vunpack.c.l.b16 %v4949
  %v5021 = vunpack.c.h.b16 %v4949
  %v5022 = vunpack.c.l.b16 %v4950
  %v5023 = vunpack.c.h.b16 %v4950
  %v5024 = vunpack.c.l.b16 %v4951
  %v5025 = vunpack.c.h.b16 %v4951
  %v5026 = vunpack.c.l.b16 %v4952
  %v5027 = vunpack.c.h.b16 %v4952
  %v5028 = vunpack.c.l.b16 %v4953
  %v5029 = vunpack.c.h.b16 %v4953
  %v5030 = vunpack.c.l.b16 %v4954
  %v5031 = vunpack.c.h.b16 %v4954
  %v5032 = vunpack.c.l.b16 %v4955
  %v5033 = vunpack.c.h.b16 %v4955
  %v5034 = vunpack.c.l.b16 %v4956
  %v5035 = vunpack.c.h.b16 %v4956
  %v5036 = vunpack.c.l.b16 %v4957
  %v5037 = vunpack.c.h.b16 %v4957
  %v5038 = vunpack.c.l.b16 %v4958
  %v5039 = vunpack.c.h.b16 %v4958
  %v5040 = vunpack.c.l.b16 %v4959
  %v5041 = vunpack.c.h.b16 %v4959
  %v5042 = vunpack.c.l.b16 %v4960
  %v5043 = vunpack.c.h.b16 %v4960
  %v5044 = vunpack.c.l.b16 %v4961
  %v5045 = vunpack.c.h.b16 %v4961
  %v5046 = vunpack.c.l.b16 %v4962
  %v5047 = vunpack.c.h.b16 %v4962
  %v5048 = vunpack.c.l.b16 %v4963
  %v5049 = vunpack.c.h.b16 %v4963
  %v5050 = vunpack.c.l.b16 %v4964
  %v5051 = vunpack.c.h.b16 %v4964
  %v5052 = vunpack.c.l.b16 %v4965
  %v5053 = vunpack.c.h.b16 %v4965
  %v5054 = vunpack.c.l.b16 %v4966
  %v5055 = vunpack.c.h.b16 %v4966
  %v5056 = vunpack.c.l.b16 %v4967
  %v5057 = vunpack.c.h.b16 %v4967
  %v5058 = vunpack.c.l.b16 %v4968
  %v5059 = vunpack.c.h.b16 %v4968
  %v5060 = vunpack.c.l.b16 %v4969
  %v5061 = vunpack.c.h.b16 %v4969
  %v5062 = vunpack.c.l.b16 %v4970
  %v5063 = vunpack.c.h.b16 %v4970
  %v5064 = vunpack.c.l.b16 %v4971
  %v5065 = vunpack.c.h.b16 %v4971
  %v5066 = vunpack.c.l.b16 %v4972
  %v5067 = vunpack.c.h.b16 %v4972
  %v5068 = vunpack.c.l.b16 %v4973
  %v5069 = vunpack.c.h.b16 %v4973
  %v5070 = vpack.c.b16 %v5010, %v5006
  %v5071 = vpack.c.b16 %v5011, %v5007
  %v5072 = vpack.c.b16 %v5012, %v5008
  %v5073 = vpack.c.b16 %v5013, %v5009
  %v5074 = vpack.c.b16 %v5018, %v5014
  %v5075 = vpack.c.b16 %v5019, %v5015
  %v5076 = vpack.c.b16 %v5020, %v5016
  %v5077 = vpack.c.b16 %v5021, %v5017
  %v5078 = vpack.c.b16 %v5026, %v5022
  %v5079 = vpack.c.b16 %v5027, %v5023
  %v5080 = vpack.c.b16 %v5028, %v5024
  %v5081 = vpack.c.b16 %v5029, %v5025
  %v5082 = vpack.c.b16 %v5034, %v5030
  %v5083 = vpack.c.b16 %v5035, %v5031
  %v5084 = vpack.c.b16 %v5036, %v5032
  %v5085 = vpack.c.b16 %v5037, %v5033
  %v5086 = vpack.c.b16 %v5042, %v5038
  %v5087 = vpack.c.b16 %v5043, %v5039
  %v5088 = vpack.c.b16 %v5044, %v5040
  %v5089 = vpack.c.b16 %v5045, %v5041
  %v5090 = vpack.c.b16 %v5050, %v5046
  %v5091 = vpack.c.b16 %v5051, %v5047
  %v5092 = vpack.c.b16 %v5052, %v5048
  %v5093 = vpack.c.b16 %v5053, %v5049
  %v5094 = vpack.c.b16 %v5058, %v5054
  %v5095 = vpack.c.b16 %v5059, %v5055
  %v5096 = vpack.c.b16 %v5060, %v5056
  %v5097 = vpack.c.b16 %v5061, %v5057
  %v5098 = vpack.c.b16 %v5066, %v5062
  %v5099 = vpack.c.b16 %v5067, %v5063
  %v5100 = vpack.c.b16 %v5068, %v5064
  %v5101 = vpack.c.b16 %v5069, %v5065
  %5134 = vmatprep.subr.bf16.mxu0 %v5071
  %5135 = vmatpush1.bf16.msra.mxu0 %v5070
  %5136 = vmatprep.subr.bf16.mxu0 %v5075
  %5137 = vmatpush1.bf16.msra.mxu0 %v5074
  %5138 = vmatprep.subr.bf16.mxu0 %v5079
  %5139 = vmatpush1.bf16.msra.mxu0 %v5078
  %5140 = vmatprep.subr.bf16.mxu0 %v5083
  %5141 = vmatpush1.bf16.msra.mxu0 %v5082
  %5142 = vmatprep.subr.bf16.mxu0 %v5087
  %5143 = vmatpush1.bf16.msra.mxu0 %v5086
  %5144 = vmatprep.subr.bf16.mxu0 %v5091
  %5145 = vmatpush1.bf16.msra.mxu0 %v5090
  %5146 = vmatprep.subr.bf16.mxu0 %v5095
  %5147 = vmatpush1.bf16.msra.mxu0 %v5094
  %5148 = vmatprep.subr.bf16.mxu0 %v5099
  %5149 = vmatpush1.bf16.msra.mxu0 %v5098
  %5150 = vmatprep.subr.bf16.mxu0 0
  %5151 = vmatpush1.bf16.msra.mxu0 0
  %5152 = vmatprep.subr.bf16.mxu0 0
  %5153 = vmatpush1.bf16.msra.mxu0 0
  %5154 = vmatprep.subr.bf16.mxu0 0
  %5155 = vmatpush1.bf16.msra.mxu0 0
  %5156 = vmatprep.subr.bf16.mxu0 0
  %5157 = vmatpush1.bf16.msra.mxu0 0
  %5158 = vmatprep.subr.bf16.mxu0 0
  %5159 = vmatpush1.bf16.msra.mxu0 0
  %5160 = vmatprep.subr.bf16.mxu0 0
  %5161 = vmatpush1.bf16.msra.mxu0 0
  %5162 = vmatprep.subr.bf16.mxu0 0
  %5163 = vmatpush1.bf16.msra.mxu0 0
  %5164 = vmatprep.subr.bf16.mxu0 0
  %5165 = vmatpush1.bf16.msra.mxu0 0
  %5166 = vmatprep.mubr.bf16.mxu0 0
  %5167 = vmatmul.mubr.bf16.gmra.mrb[0].mxu0 %v4941
  %v5168 = vpop.f32.mrb[0].mxu0
  %v5169 = vadd.f32 0.0, %v5168
  %v5170 = vpop.f32.mrb[0].mxu0
  %v5171 = vadd.f32 0.0, %v5170
  %v5172 = vpop.f32.mrb[0].mxu0
  %v5173 = vpop.f32.mrb[0].mxu0
  %5174 = vdwg.mxu0
  %5175 = vmatprep.subr.bf16.mxu0 %v5073
  %5176 = vmatpush1.bf16.msra.mxu0 %v5072
  %5177 = vmatprep.subr.bf16.mxu0 %v5077
  %5178 = vmatpush1.bf16.msra.mxu0 %v5076
  %5179 = vmatprep.subr.bf16.mxu0 %v5081
  %5180 = vmatpush1.bf16.msra.mxu0 %v5080
  %5181 = vmatprep.subr.bf16.mxu0 %v5085
  %5182 = vmatpush1.bf16.msra.mxu0 %v5084
  %5183 = vmatprep.subr.bf16.mxu0 %v5089
  %5184 = vmatpush1.bf16.msra.mxu0 %v5088
  %5185 = vmatprep.subr.bf16.mxu0 %v5093
  %5186 = vmatpush1.bf16.msra.mxu0 %v5092
  %5187 = vmatprep.subr.bf16.mxu0 %v5097
  %5188 = vmatpush1.bf16.msra.mxu0 %v5096
  %5189 = vmatprep.subr.bf16.mxu0 %v5101
  %5190 = vmatpush1.bf16.msra.mxu0 %v5100
  %5191 = vmatprep.subr.bf16.mxu0 0
  %5192 = vmatpush1.bf16.msra.mxu0 0
  %5193 = vmatprep.subr.bf16.mxu0 0
  %5194 = vmatpush1.bf16.msra.mxu0 0
  %5195 = vmatprep.subr.bf16.mxu0 0
  %5196 = vmatpush1.bf16.msra.mxu0 0
  %5197 = vmatprep.subr.bf16.mxu0 0
  %5198 = vmatpush1.bf16.msra.mxu0 0
  %5199 = vmatprep.subr.bf16.mxu0 0
  %5200 = vmatpush1.bf16.msra.mxu0 0
  %5201 = vmatprep.subr.bf16.mxu0 0
  %5202 = vmatpush1.bf16.msra.mxu0 0
  %5203 = vmatprep.subr.bf16.mxu0 0
  %5204 = vmatpush1.bf16.msra.mxu0 0
  %5205 = vmatprep.subr.bf16.mxu0 0
  %5206 = vmatpush1.bf16.msra.mxu0 0
  %5207 = vmatprep.mubr.bf16.mxu0 0
  %5208 = vmatmul.mubr.bf16.gmra.mrb[0].mxu0 %v4941
  %v5209 = vpop.f32.mrb[0].mxu0
  %v5210 = vadd.f32 0.0, %v5209
  %v5211 = vpop.f32.mrb[0].mxu0
  %v5212 = vadd.f32 0.0, %v5211
  %v5213 = vpop.f32.mrb[0].mxu0
  %v5214 = vpop.f32.mrb[0].mxu0
  %5215 = vdwg.mxu0
  %v5216 = vadd.f32 %v4936, %v5169
  %v5217 = vadd.f32 %v4937, %v5171
  %v5218 = vadd.f32 %v4938, %v5210
  %v5219 = vadd.f32 %v4939, %v5212
  %v5220 = vxor.u32 %v5216, 2147483648
  %v5221 = vmul.f32 %v5220, 1.442695
  %v5222 = vpow.pop %v5221
  %v5223 = vadd.f32 %v5222, 1.0
  %v5224 = vrcp.pop %v5223
  %v5225 = vmul.f32 1.0, %v5224
  %v5226 = vxor.u32 %v5217, 2147483648
  %v5227 = vmul.f32 %v5226, 1.442695
  %v5228 = vpow.pop %v5227
  %v5229 = vadd.f32 %v5228, 1.0
  %v5230 = vrcp.pop %v5229
  %v5231 = vmul.f32 1.0, %v5230
  %v5232 = vtanh.pop %v5218
  %v5233 = vxor.u32 %v5219, 2147483648
  %v5234 = vmul.f32 %v5233, 1.442695
  %v5235 = vpow.pop %v5234
  %v5236 = vadd.f32 %v5235, 1.0
  %v5237 = vrcp.pop %v5236
  %v5238 = vmul.f32 1.0, %v5237
  %v5239 = vld [vmem:[#allocation5] sm:$0xff]
  %v5240 = vmul.f32 %v5231, %v5239
  %v5241 = vmul.f32 %v5225, %v5232
  %v5242 = vadd.f32 %v5240, %v5241
  %v5243 = vtanh.pop %v5242
  %v5244 = vmul.f32 %v5238, %v5243
  %5245 = vst [vmem:[#allocation5] sm:$0xff] %v5242
  %5246 = vst [vmem:[#allocation4] sm:$0xff] %v5244
  %5247 = vst [vmem:[%s2340] sm:$0xff] %v5244
  %v5248 = vld [vmem:[%s2342] sm:$0xff]
  %v5249 = vld [vmem:[%s2342 + $0x8] sm:$0xff]
  %v5250 = vld [vmem:[%s2342 + $0x10] sm:$0xff]
  %v5251 = vld [vmem:[%s2342 + $0x18] sm:$0xff]
  %v5252 = vld [vmem:[#allocation4] sm:$0xff]
  %v5253 = vpack.c.bf16 %v5252, %v5252
  %v5254 = vld [vmem:[%s5] sm:$0xff]
  %v5255 = vld [vmem:[%s5 + $0x8] sm:$0xff]
  %v5256 = vld [vmem:[%s5 + $0x10] sm:$0xff]
  %v5257 = vld [vmem:[%s5 + $0x18] sm:$0xff]
  %v5258 = vld [vmem:[%s5 + $0x20] sm:$0xff]
  %v5259 = vld [vmem:[%s5 + $0x28] sm:$0xff]
  %v5260 = vld [vmem:[%s5 + $0x30] sm:$0xff]
  %v5261 = vld [vmem:[%s5 + $0x38] sm:$0xff]
  %v5262 = vld [vmem:[%s5 + $0x40] sm:$0xff]
  %v5263 = vld [vmem:[%s5 + $0x48] sm:$0xff]
  %v5264 = vld [vmem:[%s5 + $0x50] sm:$0xff]
  %v5265 = vld [vmem:[%s5 + $0x58] sm:$0xff]
  %v5266 = vld [vmem:[%s5 + $0x60] sm:$0xff]
  %v5267 = vld [vmem:[%s5 + $0x68] sm:$0xff]
  %v5268 = vld [vmem:[%s5 + $0x70] sm:$0xff]
  %v5269 = vld [vmem:[%s5 + $0x78] sm:$0xff]
  %v5270 = vld [vmem:[%s5 + $0x80] sm:$0xff]
  %v5271 = vld [vmem:[%s5 + $0x88] sm:$0xff]
  %v5272 = vld [vmem:[%s5 + $0x90] sm:$0xff]
  %v5273 = vld [vmem:[%s5 + $0x98] sm:$0xff]
  %v5274 = vld [vmem:[%s5 + $0xa0] sm:$0xff]
  %v5275 = vld [vmem:[%s5 + $0xa8] sm:$0xff]
  %v5276 = vld [vmem:[%s5 + $0xb0] sm:$0xff]
  %v5277 = vld [vmem:[%s5 + $0xb8] sm:$0xff]
  %v5278 = vld [vmem:[%s5 + $0xc0] sm:$0xff]
  %v5279 = vld [vmem:[%s5 + $0xc8] sm:$0xff]
  %v5280 = vld [vmem:[%s5 + $0xd0] sm:$0xff]
  %v5281 = vld [vmem:[%s5 + $0xd8] sm:$0xff]
  %v5282 = vld [vmem:[%s5 + $0xe0] sm:$0xff]
  %v5283 = vld [vmem:[%s5 + $0xe8] sm:$0xff]
  %v5284 = vld [vmem:[%s5 + $0xf0] sm:$0xff]
  %v5285 = vld [vmem:[%s5 + $0xf8] sm:$0xff]
  %v5318 = vunpack.c.l.b16 %v5254
  %v5319 = vunpack.c.h.b16 %v5254
  %v5320 = vunpack.c.l.b16 %v5255
  %v5321 = vunpack.c.h.b16 %v5255
  %v5322 = vunpack.c.l.b16 %v5256
  %v5323 = vunpack.c.h.b16 %v5256
  %v5324 = vunpack.c.l.b16 %v5257
  %v5325 = vunpack.c.h.b16 %v5257
  %v5326 = vunpack.c.l.b16 %v5258
  %v5327 = vunpack.c.h.b16 %v5258
  %v5328 = vunpack.c.l.b16 %v5259
  %v5329 = vunpack.c.h.b16 %v5259
  %v5330 = vunpack.c.l.b16 %v5260
  %v5331 = vunpack.c.h.b16 %v5260
  %v5332 = vunpack.c.l.b16 %v5261
  %v5333 = vunpack.c.h.b16 %v5261
  %v5334 = vunpack.c.l.b16 %v5262
  %v5335 = vunpack.c.h.b16 %v5262
  %v5336 = vunpack.c.l.b16 %v5263
  %v5337 = vunpack.c.h.b16 %v5263
  %v5338 = vunpack.c.l.b16 %v5264
  %v5339 = vunpack.c.h.b16 %v5264
  %v5340 = vunpack.c.l.b16 %v5265
  %v5341 = vunpack.c.h.b16 %v5265
  %v5342 = vunpack.c.l.b16 %v5266
  %v5343 = vunpack.c.h.b16 %v5266
  %v5344 = vunpack.c.l.b16 %v5267
  %v5345 = vunpack.c.h.b16 %v5267
  %v5346 = vunpack.c.l.b16 %v5268
  %v5347 = vunpack.c.h.b16 %v5268
  %v5348 = vunpack.c.l.b16 %v5269
  %v5349 = vunpack.c.h.b16 %v5269
  %v5350 = vunpack.c.l.b16 %v5270
  %v5351 = vunpack.c.h.b16 %v5270
  %v5352 = vunpack.c.l.b16 %v5271
  %v5353 = vunpack.c.h.b16 %v5271
  %v5354 = vunpack.c.l.b16 %v5272
  %v5355 = vunpack.c.h.b16 %v5272
  %v5356 = vunpack.c.l.b16 %v5273
  %v5357 = vunpack.c.h.b16 %v5273
  %v5358 = vunpack.c.l.b16 %v5274
  %v5359 = vunpack.c.h.b16 %v5274
  %v5360 = vunpack.c.l.b16 %v5275
  %v5361 = vunpack.c.h.b16 %v5275
  %v5362 = vunpack.c.l.b16 %v5276
  %v5363 = vunpack.c.h.b16 %v5276
  %v5364 = vunpack.c.l.b16 %v5277
  %v5365 = vunpack.c.h.b16 %v5277
  %v5366 = vunpack.c.l.b16 %v5278
  %v5367 = vunpack.c.h.b16 %v5278
  %v5368 = vunpack.c.l.b16 %v5279
  %v5369 = vunpack.c.h.b16 %v5279
  %v5370 = vunpack.c.l.b16 %v5280
  %v5371 = vunpack.c.h.b16 %v5280
  %v5372 = vunpack.c.l.b16 %v5281
  %v5373 = vunpack.c.h.b16 %v5281
  %v5374 = vunpack.c.l.b16 %v5282
  %v5375 = vunpack.c.h.b16 %v5282
  %v5376 = vunpack.c.l.b16 %v5283
  %v5377 = vunpack.c.h.b16 %v5283
  %v5378 = vunpack.c.l.b16 %v5284
  %v5379 = vunpack.c.h.b16 %v5284
  %v5380 = vunpack.c.l.b16 %v5285
  %v5381 = vunpack.c.h.b16 %v5285
  %v5382 = vpack.c.b16 %v5322, %v5318
  %v5383 = vpack.c.b16 %v5323, %v5319
  %v5384 = vpack.c.b16 %v5324, %v5320
  %v5385 = vpack.c.b16 %v5325, %v5321
  %v5386 = vpack.c.b16 %v5330, %v5326
  %v5387 = vpack.c.b16 %v5331, %v5327
  %v5388 = vpack.c.b16 %v5332, %v5328
  %v5389 = vpack.c.b16 %v5333, %v5329
  %v5390 = vpack.c.b16 %v5338, %v5334
  %v5391 = vpack.c.b16 %v5339, %v5335
  %v5392 = vpack.c.b16 %v5340, %v5336
  %v5393 = vpack.c.b16 %v5341, %v5337
  %v5394 = vpack.c.b16 %v5346, %v5342
  %v5395 = vpack.c.b16 %v5347, %v5343
  %v5396 = vpack.c.b16 %v5348, %v5344
  %v5397 = vpack.c.b16 %v5349, %v5345
  %v5398 = vpack.c.b16 %v5354, %v5350
  %v5399 = vpack.c.b16 %v5355, %v5351
  %v5400 = vpack.c.b16 %v5356, %v5352
  %v5401 = vpack.c.b16 %v5357, %v5353
  %v5402 = vpack.c.b16 %v5362, %v5358
  %v5403 = vpack.c.b16 %v5363, %v5359
  %v5404 = vpack.c.b16 %v5364, %v5360
  %v5405 = vpack.c.b16 %v5365, %v5361
  %v5406 = vpack.c.b16 %v5370, %v5366
  %v5407 = vpack.c.b16 %v5371, %v5367
  %v5408 = vpack.c.b16 %v5372, %v5368
  %v5409 = vpack.c.b16 %v5373, %v5369
  %v5410 = vpack.c.b16 %v5378, %v5374
  %v5411 = vpack.c.b16 %v5379, %v5375
  %v5412 = vpack.c.b16 %v5380, %v5376
  %v5413 = vpack.c.b16 %v5381, %v5377
  %5446 = vmatprep.subr.bf16.mxu0 %v5383
  %5447 = vmatpush1.bf16.msra.mxu0 %v5382
  %5448 = vmatprep.subr.bf16.mxu0 %v5387
  %5449 = vmatpush1.bf16.msra.mxu0 %v5386
  %5450 = vmatprep.subr.bf16.mxu0 %v5391
  %5451 = vmatpush1.bf16.msra.mxu0 %v5390
  %5452 = vmatprep.subr.bf16.mxu0 %v5395
  %5453 = vmatpush1.bf16.msra.mxu0 %v5394
  %5454 = vmatprep.subr.bf16.mxu0 %v5399
  %5455 = vmatpush1.bf16.msra.mxu0 %v5398
  %5456 = vmatprep.subr.bf16.mxu0 %v5403
  %5457 = vmatpush1.bf16.msra.mxu0 %v5402
  %5458 = vmatprep.subr.bf16.mxu0 %v5407
  %5459 = vmatpush1.bf16.msra.mxu0 %v5406
  %5460 = vmatprep.subr.bf16.mxu0 %v5411
  %5461 = vmatpush1.bf16.msra.mxu0 %v5410
  %5462 = vmatprep.subr.bf16.mxu0 0
  %5463 = vmatpush1.bf16.msra.mxu0 0
  %5464 = vmatprep.subr.bf16.mxu0 0
  %5465 = vmatpush1.bf16.msra.mxu0 0
  %5466 = vmatprep.subr.bf16.mxu0 0
  %5467 = vmatpush1.bf16.msra.mxu0 0
  %5468 = vmatprep.subr.bf16.mxu0 0
  %5469 = vmatpush1.bf16.msra.mxu0 0
  %5470 = vmatprep.subr.bf16.mxu0 0
  %5471 = vmatpush1.bf16.msra.mxu0 0
  %5472 = vmatprep.subr.bf16.mxu0 0
  %5473 = vmatpush1.bf16.msra.mxu0 0
  %5474 = vmatprep.subr.bf16.mxu0 0
  %5475 = vmatpush1.bf16.msra.mxu0 0
  %5476 = vmatprep.subr.bf16.mxu0 0
  %5477 = vmatpush1.bf16.msra.mxu0 0
  %5478 = vmatprep.mubr.bf16.mxu0 0
  %5479 = vmatmul.mubr.bf16.gmra.mrb[0].mxu0 %v5253
  %v5480 = vpop.f32.mrb[0].mxu0
  %v5481 = vadd.f32 0.0, %v5480
  %v5482 = vpop.f32.mrb[0].mxu0
  %v5483 = vadd.f32 0.0, %v5482
  %v5484 = vpop.f32.mrb[0].mxu0
  %v5485 = vpop.f32.mrb[0].mxu0
  %5486 = vdwg.mxu0
  %5487 = vmatprep.subr.bf16.mxu0 %v5385
  %5488 = vmatpush1.bf16.msra.mxu0 %v5384
  %5489 = vmatprep.subr.bf16.mxu0 %v5389
  %5490 = vmatpush1.bf16.msra.mxu0 %v5388
  %5491 = vmatprep.subr.bf16.mxu0 %v5393
  %5492 = vmatpush1.bf16.msra.mxu0 %v5392
  %5493 = vmatprep.subr.bf16.mxu0 %v5397
  %5494 = vmatpush1.bf16.msra.mxu0 %v5396
  %5495 = vmatprep.subr.bf16.mxu0 %v5401
  %5496 = vmatpush1.bf16.msra.mxu0 %v5400
  %5497 = vmatprep.subr.bf16.mxu0 %v5405
  %5498 = vmatpush1.bf16.msra.mxu0 %v5404
  %5499 = vmatprep.subr.bf16.mxu0 %v5409
  %5500 = vmatpush1.bf16.msra.mxu0 %v5408
  %5501 = vmatprep.subr.bf16.mxu0 %v5413
  %5502 = vmatpush1.bf16.msra.mxu0 %v5412
  %5503 = vmatprep.subr.bf16.mxu0 0
  %5504 = vmatpush1.bf16.msra.mxu0 0
  %5505 = vmatprep.subr.bf16.mxu0 0
  %5506 = vmatpush1.bf16.msra.mxu0 0
  %5507 = vmatprep.subr.bf16.mxu0 0
  %5508 = vmatpush1.bf16.msra.mxu0 0
  %5509 = vmatprep.subr.bf16.mxu0 0
  %5510 = vmatpush1.bf16.msra.mxu0 0
  %5511 = vmatprep.subr.bf16.mxu0 0
  %5512 = vmatpush1.bf16.msra.mxu0 0
  %5513 = vmatprep.subr.bf16.mxu0 0
  %5514 = vmatpush1.bf16.msra.mxu0 0
  %5515 = vmatprep.subr.bf16.mxu0 0
  %5516 = vmatpush1.bf16.msra.mxu0 0
  %5517 = vmatprep.subr.bf16.mxu0 0
  %5518 = vmatpush1.bf16.msra.mxu0 0
  %5519 = vmatprep.mubr.bf16.mxu0 0
  %5520 = vmatmul.mubr.bf16.gmra.mrb[0].mxu0 %v5253
  %v5521 = vpop.f32.mrb[0].mxu0
  %v5522 = vadd.f32 0.0, %v5521
  %v5523 = vpop.f32.mrb[0].mxu0
  %v5524 = vadd.f32 0.0, %v5523
  %v5525 = vpop.f32.mrb[0].mxu0
  %v5526 = vpop.f32.mrb[0].mxu0
  %5527 = vdwg.mxu0
  %v5528 = vadd.f32 %v5248, %v5481
  %v5529 = vadd.f32 %v5249, %v5483
  %v5530 = vadd.f32 %v5250, %v5522
  %v5531 = vadd.f32 %v5251, %v5524
  %v5532 = vxor.u32 %v5528, 2147483648
  %v5533 = vmul.f32 %v5532, 1.442695
  %v5534 = vpow.pop %v5533
  %v5535 = vadd.f32 %v5534, 1.0
  %v5536 = vrcp.pop %v5535
  %v5537 = vmul.f32 1.0, %v5536
  %v5538 = vxor.u32 %v5529, 2147483648
  %v5539 = vmul.f32 %v5538, 1.442695
  %v5540 = vpow.pop %v5539
  %v5541 = vadd.f32 %v5540, 1.0
  %v5542 = vrcp.pop %v5541
  %v5543 = vmul.f32 1.0, %v5542
  %v5544 = vtanh.pop %v5530
  %v5545 = vxor.u32 %v5531, 2147483648
  %v5546 = vmul.f32 %v5545, 1.442695
  %v5547 = vpow.pop %v5546
  %v5548 = vadd.f32 %v5547, 1.0
  %v5549 = vrcp.pop %v5548
  %v5550 = vmul.f32 1.0, %v5549
  %v5551 = vld [vmem:[#allocation5] sm:$0xff]
  %v5552 = vmul.f32 %v5543, %v5551
  %v5553 = vmul.f32 %v5537, %v5544
  %v5554 = vadd.f32 %v5552, %v5553
  %v5555 = vtanh.pop %v5554
  %v5556 = vmul.f32 %v5550, %v5555
  %5557 = vst [vmem:[#allocation5] sm:$0xff] %v5554
  %5558 = vst [vmem:[#allocation4] sm:$0xff] %v5556
  %5559 = vst [vmem:[%s2654] sm:$0xff] %v5556
  %v5560 = vld [vmem:[%s2656] sm:$0xff]
  %v5561 = vld [vmem:[%s2656 + $0x8] sm:$0xff]
  %v5562 = vld [vmem:[%s2656 + $0x10] sm:$0xff]
  %v5563 = vld [vmem:[%s2656 + $0x18] sm:$0xff]
  %v5564 = vld [vmem:[#allocation4] sm:$0xff]
  %v5565 = vpack.c.bf16 %v5564, %v5564
  %v5566 = vld [vmem:[%s5] sm:$0xff]
  %v5567 = vld [vmem:[%s5 + $0x8] sm:$0xff]
  %v5568 = vld [vmem:[%s5 + $0x10] sm:$0xff]
  %v5569 = vld [vmem:[%s5 + $0x18] sm:$0xff]
  %v5570 = vld [vmem:[%s5 + $0x20] sm:$0xff]
  %v5571 = vld [vmem:[%s5 + $0x28] sm:$0xff]
  %v5572 = vld [vmem:[%s5 + $0x30] sm:$0xff]
  %v5573 = vld [vmem:[%s5 + $0x38] sm:$0xff]
  %v5574 = vld [vmem:[%s5 + $0x40] sm:$0xff]
  %v5575 = vld [vmem:[%s5 + $0x48] sm:$0xff]
  %v5576 = vld [vmem:[%s5 + $0x50] sm:$0xff]
  %v5577 = vld [vmem:[%s5 + $0x58] sm:$0xff]
  %v5578 = vld [vmem:[%s5 + $0x60] sm:$0xff]
  %v5579 = vld [vmem:[%s5 + $0x68] sm:$0xff]
  %v5580 = vld [vmem:[%s5 + $0x70] sm:$0xff]
  %v5581 = vld [vmem:[%s5 + $0x78] sm:$0xff]
  %v5582 = vld [vmem:[%s5 + $0x80] sm:$0xff]
  %v5583 = vld [vmem:[%s5 + $0x88] sm:$0xff]
  %v5584 = vld [vmem:[%s5 + $0x90] sm:$0xff]
  %v5585 = vld [vmem:[%s5 + $0x98] sm:$0xff]
  %v5586 = vld [vmem:[%s5 + $0xa0] sm:$0xff]
  %v5587 = vld [vmem:[%s5 + $0xa8] sm:$0xff]
  %v5588 = vld [vmem:[%s5 + $0xb0] sm:$0xff]
  %v5589 = vld [vmem:[%s5 + $0xb8] sm:$0xff]
  %v5590 = vld [vmem:[%s5 + $0xc0] sm:$0xff]
  %v5591 = vld [vmem:[%s5 + $0xc8] sm:$0xff]
  %v5592 = vld [vmem:[%s5 + $0xd0] sm:$0xff]
  %v5593 = vld [vmem:[%s5 + $0xd8] sm:$0xff]
  %v5594 = vld [vmem:[%s5 + $0xe0] sm:$0xff]
  %v5595 = vld [vmem:[%s5 + $0xe8] sm:$0xff]
  %v5596 = vld [vmem:[%s5 + $0xf0] sm:$0xff]
  %v5597 = vld [vmem:[%s5 + $0xf8] sm:$0xff]
  %v5630 = vunpack.c.l.b16 %v5566
  %v5631 = vunpack.c.h.b16 %v5566
  %v5632 = vunpack.c.l.b16 %v5567
  %v5633 = vunpack.c.h.b16 %v5567
  %v5634 = vunpack.c.l.b16 %v5568
  %v5635 = vunpack.c.h.b16 %v5568
  %v5636 = vunpack.c.l.b16 %v5569
  %v5637 = vunpack.c.h.b16 %v5569
  %v5638 = vunpack.c.l.b16 %v5570
  %v5639 = vunpack.c.h.b16 %v5570
  %v5640 = vunpack.c.l.b16 %v5571
  %v5641 = vunpack.c.h.b16 %v5571
  %v5642 = vunpack.c.l.b16 %v5572
  %v5643 = vunpack.c.h.b16 %v5572
  %v5644 = vunpack.c.l.b16 %v5573
  %v5645 = vunpack.c.h.b16 %v5573
  %v5646 = vunpack.c.l.b16 %v5574
  %v5647 = vunpack.c.h.b16 %v5574
  %v5648 = vunpack.c.l.b16 %v5575
  %v5649 = vunpack.c.h.b16 %v5575
  %v5650 = vunpack.c.l.b16 %v5576
  %v5651 = vunpack.c.h.b16 %v5576
  %v5652 = vunpack.c.l.b16 %v5577
  %v5653 = vunpack.c.h.b16 %v5577
  %v5654 = vunpack.c.l.b16 %v5578
  %v5655 = vunpack.c.h.b16 %v5578
  %v5656 = vunpack.c.l.b16 %v5579
  %v5657 = vunpack.c.h.b16 %v5579
  %v5658 = vunpack.c.l.b16 %v5580
  %v5659 = vunpack.c.h.b16 %v5580
  %v5660 = vunpack.c.l.b16 %v5581
  %v5661 = vunpack.c.h.b16 %v5581
  %v5662 = vunpack.c.l.b16 %v5582
  %v5663 = vunpack.c.h.b16 %v5582
  %v5664 = vunpack.c.l.b16 %v5583
  %v5665 = vunpack.c.h.b16 %v5583
  %v5666 = vunpack.c.l.b16 %v5584
  %v5667 = vunpack.c.h.b16 %v5584
  %v5668 = vunpack.c.l.b16 %v5585
  %v5669 = vunpack.c.h.b16 %v5585
  %v5670 = vunpack.c.l.b16 %v5586
  %v5671 = vunpack.c.h.b16 %v5586
  %v5672 = vunpack.c.l.b16 %v5587
  %v5673 = vunpack.c.h.b16 %v5587
  %v5674 = vunpack.c.l.b16 %v5588
  %v5675 = vunpack.c.h.b16 %v5588
  %v5676 = vunpack.c.l.b16 %v5589
  %v5677 = vunpack.c.h.b16 %v5589
  %v5678 = vunpack.c.l.b16 %v5590
  %v5679 = vunpack.c.h.b16 %v5590
  %v5680 = vunpack.c.l.b16 %v5591
  %v5681 = vunpack.c.h.b16 %v5591
  %v5682 = vunpack.c.l.b16 %v5592
  %v5683 = vunpack.c.h.b16 %v5592
  %v5684 = vunpack.c.l.b16 %v5593
  %v5685 = vunpack.c.h.b16 %v5593
  %v5686 = vunpack.c.l.b16 %v5594
  %v5687 = vunpack.c.h.b16 %v5594
  %v5688 = vunpack.c.l.b16 %v5595
  %v5689 = vunpack.c.h.b16 %v5595
  %v5690 = vunpack.c.l.b16 %v5596
  %v5691 = vunpack.c.h.b16 %v5596
  %v5692 = vunpack.c.l.b16 %v5597
  %v5693 = vunpack.c.h.b16 %v5597
  %v5694 = vpack.c.b16 %v5634, %v5630
  %v5695 = vpack.c.b16 %v5635, %v5631
  %v5696 = vpack.c.b16 %v5636, %v5632
  %v5697 = vpack.c.b16 %v5637, %v5633
  %v5698 = vpack.c.b16 %v5642, %v5638
  %v5699 = vpack.c.b16 %v5643, %v5639
  %v5700 = vpack.c.b16 %v5644, %v5640
  %v5701 = vpack.c.b16 %v5645, %v5641
  %v5702 = vpack.c.b16 %v5650, %v5646
  %v5703 = vpack.c.b16 %v5651, %v5647
  %v5704 = vpack.c.b16 %v5652, %v5648
  %v5705 = vpack.c.b16 %v5653, %v5649
  %v5706 = vpack.c.b16 %v5658, %v5654
  %v5707 = vpack.c.b16 %v5659, %v5655
  %v5708 = vpack.c.b16 %v5660, %v5656
  %v5709 = vpack.c.b16 %v5661, %v5657
  %v5710 = vpack.c.b16 %v5666, %v5662
  %v5711 = vpack.c.b16 %v5667, %v5663
  %v5712 = vpack.c.b16 %v5668, %v5664
  %v5713 = vpack.c.b16 %v5669, %v5665
  %v5714 = vpack.c.b16 %v5674, %v5670
  %v5715 = vpack.c.b16 %v5675, %v5671
  %v5716 = vpack.c.b16 %v5676, %v5672
  %v5717 = vpack.c.b16 %v5677, %v5673
  %v5718 = vpack.c.b16 %v5682, %v5678
  %v5719 = vpack.c.b16 %v5683, %v5679
  %v5720 = vpack.c.b16 %v5684, %v5680
  %v5721 = vpack.c.b16 %v5685, %v5681
  %v5722 = vpack.c.b16 %v5690, %v5686
  %v5723 = vpack.c.b16 %v5691, %v5687
  %v5724 = vpack.c.b16 %v5692, %v5688
  %v5725 = vpack.c.b16 %v5693, %v5689
  %5758 = vmatprep.subr.bf16.mxu0 %v5695
  %5759 = vmatpush1.bf16.msra.mxu0 %v5694
  %5760 = vmatprep.subr.bf16.mxu0 %v5699
  %5761 = vmatpush1.bf16.msra.mxu0 %v5698
  %5762 = vmatprep.subr.bf16.mxu0 %v5703
  %5763 = vmatpush1.bf16.msra.mxu0 %v5702
  %5764 = vmatprep.subr.bf16.mxu0 %v5707
  %5765 = vmatpush1.bf16.msra.mxu0 %v5706
  %5766 = vmatprep.subr.bf16.mxu0 %v5711
  %5767 = vmatpush1.bf16.msra.mxu0 %v5710
  %5768 = vmatprep.subr.bf16.mxu0 %v5715
  %5769 = vmatpush1.bf16.msra.mxu0 %v5714
  %5770 = vmatprep.subr.bf16.mxu0 %v5719
  %5771 = vmatpush1.bf16.msra.mxu0 %v5718
  %5772 = vmatprep.subr.bf16.mxu0 %v5723
  %5773 = vmatpush1.bf16.msra.mxu0 %v5722
  %5774 = vmatprep.subr.bf16.mxu0 0
  %5775 = vmatpush1.bf16.msra.mxu0 0
  %5776 = vmatprep.subr.bf16.mxu0 0
  %5777 = vmatpush1.bf16.msra.mxu0 0
  %5778 = vmatprep.subr.bf16.mxu0 0
  %5779 = vmatpush1.bf16.msra.mxu0 0
  %5780 = vmatprep.subr.bf16.mxu0 0
  %5781 = vmatpush1.bf16.msra.mxu0 0
  %5782 = vmatprep.subr.bf16.mxu0 0
  %5783 = vmatpush1.bf16.msra.mxu0 0
  %5784 = vmatprep.subr.bf16.mxu0 0
  %5785 = vmatpush1.bf16.msra.mxu0 0
  %5786 = vmatprep.subr.bf16.mxu0 0
  %5787 = vmatpush1.bf16.msra.mxu0 0
  %5788 = vmatprep.subr.bf16.mxu0 0
  %5789 = vmatpush1.bf16.msra.mxu0 0
  %5790 = vmatprep.mubr.bf16.mxu0 0
  %5791 = vmatmul.mubr.bf16.gmra.mrb[0].mxu0 %v5565
  %v5792 = vpop.f32.mrb[0].mxu0
  %v5793 = vadd.f32 0.0, %v5792
  %v5794 = vpop.f32.mrb[0].mxu0
  %v5795 = vadd.f32 0.0, %v5794
  %v5796 = vpop.f32.mrb[0].mxu0
  %v5797 = vpop.f32.mrb[0].mxu0
  %5798 = vdwg.mxu0
  %5799 = vmatprep.subr.bf16.mxu0 %v5697
  %5800 = vmatpush1.bf16.msra.mxu0 %v5696
  %5801 = vmatprep.subr.bf16.mxu0 %v5701
  %5802 = vmatpush1.bf16.msra.mxu0 %v5700
  %5803 = vmatprep.subr.bf16.mxu0 %v5705
  %5804 = vmatpush1.bf16.msra.mxu0 %v5704
  %5805 = vmatprep.subr.bf16.mxu0 %v5709
  %5806 = vmatpush1.bf16.msra.mxu0 %v5708
  %5807 = vmatprep.subr.bf16.mxu0 %v5713
  %5808 = vmatpush1.bf16.msra.mxu0 %v5712
  %5809 = vmatprep.subr.bf16.mxu0 %v5717
  %5810 = vmatpush1.bf16.msra.mxu0 %v5716
  %5811 = vmatprep.subr.bf16.mxu0 %v5721
  %5812 = vmatpush1.bf16.msra.mxu0 %v5720
  %5813 = vmatprep.subr.bf16.mxu0 %v5725
  %5814 = vmatpush1.bf16.msra.mxu0 %v5724
  %5815 = vmatprep.subr.bf16.mxu0 0
  %5816 = vmatpush1.bf16.msra.mxu0 0
  %5817 = vmatprep.subr.bf16.mxu0 0
  %5818 = vmatpush1.bf16.msra.mxu0 0
  %5819 = vmatprep.subr.bf16.mxu0 0
  %5820 = vmatpush1.bf16.msra.mxu0 0
  %5821 = vmatprep.subr.bf16.mxu0 0
  %5822 = vmatpush1.bf16.msra.mxu0 0
  %5823 = vmatprep.subr.bf16.mxu0 0
  %5824 = vmatpush1.bf16.msra.mxu0 0
  %5825 = vmatprep.subr.bf16.mxu0 0
  %5826 = vmatpush1.bf16.msra.mxu0 0
  %5827 = vmatprep.subr.bf16.mxu0 0
  %5828 = vmatpush1.bf16.msra.mxu0 0
  %5829 = vmatprep.subr.bf16.mxu0 0
  %5830 = vmatpush1.bf16.msra.mxu0 0
  %5831 = vmatprep.mubr.bf16.mxu0 0
  %5832 = vmatmul.mubr.bf16.gmra.mrb[0].mxu0 %v5565
  %v5833 = vpop.f32.mrb[0].mxu0
  %v5834 = vadd.f32 0.0, %v5833
  %v5835 = vpop.f32.mrb[0].mxu0
  %v5836 = vadd.f32 0.0, %v5835
  %v5837 = vpop.f32.mrb[0].mxu0
  %v5838 = vpop.f32.mrb[0].mxu0
  %5839 = vdwg.mxu0
  %v5840 = vadd.f32 %v5560, %v5793
  %v5841 = vadd.f32 %v5561, %v5795
  %v5842 = vadd.f32 %v5562, %v5834
  %v5843 = vadd.f32 %v5563, %v5836
  %v5844 = vxor.u32 %v5840, 2147483648
  %v5845 = vmul.f32 %v5844, 1.442695
  %v5846 = vpow.pop %v5845
  %v5847 = vadd.f32 %v5846, 1.0
  %v5848 = vrcp.pop %v5847
  %v5849 = vmul.f32 1.0, %v5848
  %v5850 = vxor.u32 %v5841, 2147483648
  %v5851 = vmul.f32 %v5850, 1.442695
  %v5852 = vpow.pop %v5851
  %v5853 = vadd.f32 %v5852, 1.0
  %v5854 = vrcp.pop %v5853
  %v5855 = vmul.f32 1.0, %v5854
  %v5856 = vtanh.pop %v5842
  %v5857 = vxor.u32 %v5843, 2147483648
  %v5858 = vmul.f32 %v5857, 1.442695
  %v5859 = vpow.pop %v5858
  %v5860 = vadd.f32 %v5859, 1.0
  %v5861 = vrcp.pop %v5860
  %v5862 = vmul.f32 1.0, %v5861
  %v5863 = vld [vmem:[#allocation5] sm:$0xff]
  %v5864 = vmul.f32 %v5855, %v5863
  %v5865 = vmul.f32 %v5849, %v5856
  %v5866 = vadd.f32 %v5864, %v5865
  %v5867 = vtanh.pop %v5866
  %v5868 = vmul.f32 %v5862, %v5867
  %5869 = vst [vmem:[#allocation5] sm:$0xff] %v5866
  %5870 = vst [vmem:[#allocation4] sm:$0xff] %v5868
  %5871 = vst [vmem:[%s2968] sm:$0xff] %v5868
  %v5872 = vld [vmem:[#allocation3] sm:$0xff]
  %v5873 = vld [vmem:[#allocation3 + $0x8] sm:$0xff]
  %v5874 = vld [vmem:[#allocation3 + $0x10] sm:$0xff]
  %v5875 = vld [vmem:[#allocation3 + $0x18] sm:$0xff]
  %v5876 = vld [vmem:[#allocation3 + $0x20] sm:$0xff]
  %v5877 = vld [vmem:[#allocation3 + $0x28] sm:$0xff]
  %v5878 = vld [vmem:[#allocation3 + $0x30] sm:$0xff]
  %v5879 = vld [vmem:[#allocation3 + $0x38] sm:$0xff]
  %v5880 = vpack.c.bf16 %v5873, %v5872
  %v5881 = vpack.c.bf16 %v5875, %v5874
  %v5882 = vpack.c.bf16 %v5877, %v5876
  %v5883 = vpack.c.bf16 %v5879, %v5878
  %v5884 = vld [vmem:[%s7] sm:$0xff]
  %v5885 = vld [vmem:[%s7 + $0x8] sm:$0xff]
  %v5886 = vld [vmem:[%s7 + $0x10] sm:$0xff]
  %v5887 = vld [vmem:[%s7 + $0x18] sm:$0xff]
  %v5888 = vld [vmem:[%s7 + $0x20] sm:$0xff]
  %v5889 = vld [vmem:[%s7 + $0x28] sm:$0xff]
  %v5890 = vld [vmem:[%s7 + $0x30] sm:$0xff]
  %v5891 = vld [vmem:[%s7 + $0x38] sm:$0xff]
  %v5892 = vld [vmem:[%s7 + $0x40] sm:$0xff]
  %v5893 = vld [vmem:[%s7 + $0x48] sm:$0xff]
  %v5894 = vld [vmem:[%s7 + $0x50] sm:$0xff]
  %v5895 = vld [vmem:[%s7 + $0x58] sm:$0xff]
  %v5896 = vld [vmem:[%s7 + $0x60] sm:$0xff]
  %v5897 = vld [vmem:[%s7 + $0x68] sm:$0xff]
  %v5898 = vld [vmem:[%s7 + $0x70] sm:$0xff]
  %v5899 = vld [vmem:[%s7 + $0x78] sm:$0xff]
  %v5900 = vld [vmem:[%s7 + $0x80] sm:$0xff]
  %v5901 = vld [vmem:[%s7 + $0x88] sm:$0xff]
  %v5902 = vld [vmem:[%s7 + $0x90] sm:$0xff]
  %v5903 = vld [vmem:[%s7 + $0x98] sm:$0xff]
  %v5904 = vld [vmem:[%s7 + $0xa0] sm:$0xff]
  %v5905 = vld [vmem:[%s7 + $0xa8] sm:$0xff]
  %v5906 = vld [vmem:[%s7 + $0xb0] sm:$0xff]
  %v5907 = vld [vmem:[%s7 + $0xb8] sm:$0xff]
  %v5908 = vld [vmem:[%s7 + $0xc0] sm:$0xff]
  %v5909 = vld [vmem:[%s7 + $0xc8] sm:$0xff]
  %v5910 = vld [vmem:[%s7 + $0xd0] sm:$0xff]
  %v5911 = vld [vmem:[%s7 + $0xd8] sm:$0xff]
  %v5912 = vld [vmem:[%s7 + $0xe0] sm:$0xff]
  %v5913 = vld [vmem:[%s7 + $0xe8] sm:$0xff]
  %v5914 = vld [vmem:[%s7 + $0xf0] sm:$0xff]
  %v5915 = vld [vmem:[%s7 + $0xf8] sm:$0xff]
  %v5916 = vld [vmem:[%s9] sm:$0xf]
  %v5918 = vlaneseq
  %v5919 = vshrl.u32 %v5918, 7
  %v5920 = vsub.s32 0, %v5919
  %v5921 = vrot.slane %v5916, %v5920
  %v5922 = vlaneseq
  %v5923 = vshrl.u32 %v5922, 7
  %v5924 = vsub.s32 1, %v5923
  %v5925 = vrot.slane %v5916, %v5924
  %v5926 = vlaneseq
  %v5927 = vshrl.u32 %v5926, 7
  %v5928 = vsub.s32 2, %v5927
  %v5929 = vrot.slane %v5916, %v5928
  %v5930 = vlaneseq
  %v5931 = vshrl.u32 %v5930, 7
  %v5932 = vsub.s32 3, %v5931
  %v5933 = vrot.slane %v5916, %v5932
  %v5970 = vunpack.c.l.b16 %v5884
  %v5971 = vunpack.c.h.b16 %v5884
  %v5972 = vunpack.c.l.b16 %v5885
  %v5973 = vunpack.c.h.b16 %v5885
  %v5974 = vunpack.c.l.b16 %v5886
  %v5975 = vunpack.c.h.b16 %v5886
  %v5976 = vunpack.c.l.b16 %v5887
  %v5977 = vunpack.c.h.b16 %v5887
  %v5978 = vunpack.c.l.b16 %v5888
  %v5979 = vunpack.c.h.b16 %v5888
  %v5980 = vunpack.c.l.b16 %v5889
  %v5981 = vunpack.c.h.b16 %v5889
  %v5982 = vunpack.c.l.b16 %v5890
  %v5983 = vunpack.c.h.b16 %v5890
  %v5984 = vunpack.c.l.b16 %v5891
  %v5985 = vunpack.c.h.b16 %v5891
  %v5986 = vunpack.c.l.b16 %v5892
  %v5987 = vunpack.c.h.b16 %v5892
  %v5988 = vunpack.c.l.b16 %v5893
  %v5989 = vunpack.c.h.b16 %v5893
  %v5990 = vunpack.c.l.b16 %v5894
  %v5991 = vunpack.c.h.b16 %v5894
  %v5992 = vunpack.c.l.b16 %v5895
  %v5993 = vunpack.c.h.b16 %v5895
  %v5994 = vunpack.c.l.b16 %v5896
  %v5995 = vunpack.c.h.b16 %v5896
  %v5996 = vunpack.c.l.b16 %v5897
  %v5997 = vunpack.c.h.b16 %v5897
  %v5998 = vunpack.c.l.b16 %v5898
  %v5999 = vunpack.c.h.b16 %v5898
  %v6000 = vunpack.c.l.b16 %v5899
  %v6001 = vunpack.c.h.b16 %v5899
  %v6002 = vunpack.c.l.b16 %v5900
  %v6003 = vunpack.c.h.b16 %v5900
  %v6004 = vunpack.c.l.b16 %v5901
  %v6005 = vunpack.c.h.b16 %v5901
  %v6006 = vunpack.c.l.b16 %v5902
  %v6007 = vunpack.c.h.b16 %v5902
  %v6008 = vunpack.c.l.b16 %v5903
  %v6009 = vunpack.c.h.b16 %v5903
  %v6010 = vunpack.c.l.b16 %v5904
  %v6011 = vunpack.c.h.b16 %v5904
  %v6012 = vunpack.c.l.b16 %v5905
  %v6013 = vunpack.c.h.b16 %v5905
  %v6014 = vunpack.c.l.b16 %v5906
  %v6015 = vunpack.c.h.b16 %v5906
  %v6016 = vunpack.c.l.b16 %v5907
  %v6017 = vunpack.c.h.b16 %v5907
  %v6018 = vunpack.c.l.b16 %v5908
  %v6019 = vunpack.c.h.b16 %v5908
  %v6020 = vunpack.c.l.b16 %v5909
  %v6021 = vunpack.c.h.b16 %v5909
  %v6022 = vunpack.c.l.b16 %v5910
  %v6023 = vunpack.c.h.b16 %v5910
  %v6024 = vunpack.c.l.b16 %v5911
  %v6025 = vunpack.c.h.b16 %v5911
  %v6026 = vunpack.c.l.b16 %v5912
  %v6027 = vunpack.c.h.b16 %v5912
  %v6028 = vunpack.c.l.b16 %v5913
  %v6029 = vunpack.c.h.b16 %v5913
  %v6030 = vunpack.c.l.b16 %v5914
  %v6031 = vunpack.c.h.b16 %v5914
  %v6032 = vunpack.c.l.b16 %v5915
  %v6033 = vunpack.c.h.b16 %v5915
  %v6034 = vpack.c.b16 %v5974, %v5970
  %v6035 = vpack.c.b16 %v5975, %v5971
  %v6036 = vpack.c.b16 %v5976, %v5972
  %v6037 = vpack.c.b16 %v5977, %v5973
  %v6038 = vpack.c.b16 %v5982, %v5978
  %v6039 = vpack.c.b16 %v5983, %v5979
  %v6040 = vpack.c.b16 %v5984, %v5980
  %v6041 = vpack.c.b16 %v5985, %v5981
  %v6042 = vpack.c.b16 %v5990, %v5986
  %v6043 = vpack.c.b16 %v5991, %v5987
  %v6044 = vpack.c.b16 %v5992, %v5988
  %v6045 = vpack.c.b16 %v5993, %v5989
  %v6046 = vpack.c.b16 %v5998, %v5994
  %v6047 = vpack.c.b16 %v5999, %v5995
  %v6048 = vpack.c.b16 %v6000, %v5996
  %v6049 = vpack.c.b16 %v6001, %v5997
  %v6050 = vpack.c.b16 %v6006, %v6002
  %v6051 = vpack.c.b16 %v6007, %v6003
  %v6052 = vpack.c.b16 %v6008, %v6004
  %v6053 = vpack.c.b16 %v6009, %v6005
  %v6054 = vpack.c.b16 %v6014, %v6010
  %v6055 = vpack.c.b16 %v6015, %v6011
  %v6056 = vpack.c.b16 %v6016, %v6012
  %v6057 = vpack.c.b16 %v6017, %v6013
  %v6058 = vpack.c.b16 %v6022, %v6018
  %v6059 = vpack.c.b16 %v6023, %v6019
  %v6060 = vpack.c.b16 %v6024, %v6020
  %v6061 = vpack.c.b16 %v6025, %v6021
  %v6062 = vpack.c.b16 %v6030, %v6026
  %v6063 = vpack.c.b16 %v6031, %v6027
  %v6064 = vpack.c.b16 %v6032, %v6028
  %v6065 = vpack.c.b16 %v6033, %v6029
  %6098 = vmatprep.subr.bf16.mxu0 %v6035
  %6099 = vmatpush1.bf16.msra.mxu0 %v6034
  %6100 = vmatprep.subr.bf16.mxu0 %v6039
  %6101 = vmatpush1.bf16.msra.mxu0 %v6038
  %6102 = vmatprep.subr.bf16.mxu0 %v6043
  %6103 = vmatpush1.bf16.msra.mxu0 %v6042
  %6104 = vmatprep.subr.bf16.mxu0 %v6047
  %6105 = vmatpush1.bf16.msra.mxu0 %v6046
  %6106 = vmatprep.subr.bf16.mxu0 %v6051
  %6107 = vmatpush1.bf16.msra.mxu0 %v6050
  %6108 = vmatprep.subr.bf16.mxu0 %v6055
  %6109 = vmatpush1.bf16.msra.mxu0 %v6054
  %6110 = vmatprep.subr.bf16.mxu0 %v6059
  %6111 = vmatpush1.bf16.msra.mxu0 %v6058
  %6112 = vmatprep.subr.bf16.mxu0 %v6063
  %6113 = vmatpush1.bf16.msra.mxu0 %v6062
  %6114 = vmatprep.subr.bf16.mxu0 0
  %6115 = vmatpush1.bf16.msra.mxu0 0
  %6116 = vmatprep.subr.bf16.mxu0 0
  %6117 = vmatpush1.bf16.msra.mxu0 0
  %6118 = vmatprep.subr.bf16.mxu0 0
  %6119 = vmatpush1.bf16.msra.mxu0 0
  %6120 = vmatprep.subr.bf16.mxu0 0
  %6121 = vmatpush1.bf16.msra.mxu0 0
  %6122 = vmatprep.subr.bf16.mxu0 0
  %6123 = vmatpush1.bf16.msra.mxu0 0
  %6124 = vmatprep.subr.bf16.mxu0 0
  %6125 = vmatpush1.bf16.msra.mxu0 0
  %6126 = vmatprep.subr.bf16.mxu0 0
  %6127 = vmatpush1.bf16.msra.mxu0 0
  %6128 = vmatprep.subr.bf16.mxu0 0
  %6129 = vmatpush1.bf16.msra.mxu0 0
  %6130 = vmatprep.mubr.bf16.mxu0 0
  %6131 = vmatmul.mubr.bf16.gmra.mrb[0].mxu0 %v5880
  %v6132 = vpop.f32.mrb[0].mxu0
  %v6133 = vadd.f32 %v5921, %v6132
  %v6134 = vpop.f32.mrb[0].mxu0
  %v6135 = vadd.f32 %v5925, %v6134
  %v6136 = vpop.f32.mrb[0].mxu0
  %v6137 = vadd.f32 %v5921, %v6136
  %v6138 = vpop.f32.mrb[0].mxu0
  %v6139 = vadd.f32 %v5925, %v6138
  %6140 = vmatprep.mubr.bf16.mxu0 0
  %6141 = vmatmul.mubr.bf16.gmra.mrb[0].mxu0 %v5881
  %v6142 = vpop.f32.mrb[0].mxu0
  %v6143 = vadd.f32 %v5921, %v6142
  %v6144 = vpop.f32.mrb[0].mxu0
  %v6145 = vadd.f32 %v5925, %v6144
  %v6146 = vpop.f32.mrb[0].mxu0
  %v6147 = vadd.f32 %v5921, %v6146
  %v6148 = vpop.f32.mrb[0].mxu0
  %v6149 = vadd.f32 %v5925, %v6148
  %6150 = vmatprep.mubr.bf16.mxu0 0
  %6151 = vmatmul.mubr.bf16.gmra.mrb[0].mxu0 %v5882
  %v6152 = vpop.f32.mrb[0].mxu0
  %v6153 = vadd.f32 %v5921, %v6152
  %v6154 = vpop.f32.mrb[0].mxu0
  %v6155 = vadd.f32 %v5925, %v6154
  %v6156 = vpop.f32.mrb[0].mxu0
  %v6157 = vadd.f32 %v5921, %v6156
  %v6158 = vpop.f32.mrb[0].mxu0
  %v6159 = vadd.f32 %v5925, %v6158
  %6160 = vmatprep.mubr.bf16.mxu0 0
  %6161 = vmatmul.mubr.bf16.gmra.mrb[0].mxu0 %v5883
  %v6162 = vpop.f32.mrb[0].mxu0
  %v6163 = vadd.f32 %v5921, %v6162
  %v6164 = vpop.f32.mrb[0].mxu0
  %v6165 = vadd.f32 %v5925, %v6164
  %v6166 = vpop.f32.mrb[0].mxu0
  %v6167 = vadd.f32 %v5921, %v6166
  %v6168 = vpop.f32.mrb[0].mxu0
  %v6169 = vadd.f32 %v5925, %v6168
  %6170 = vdwg.mxu0
  %6171 = vmatprep.subr.bf16.mxu0 %v6037
  %6172 = vmatpush1.bf16.msra.mxu0 %v6036
  %6173 = vmatprep.subr.bf16.mxu0 %v6041
  %6174 = vmatpush1.bf16.msra.mxu0 %v6040
  %6175 = vmatprep.subr.bf16.mxu0 %v6045
  %6176 = vmatpush1.bf16.msra.mxu0 %v6044
  %6177 = vmatprep.subr.bf16.mxu0 %v6049
  %6178 = vmatpush1.bf16.msra.mxu0 %v6048
  %6179 = vmatprep.subr.bf16.mxu0 %v6053
  %6180 = vmatpush1.bf16.msra.mxu0 %v6052
  %6181 = vmatprep.subr.bf16.mxu0 %v6057
  %6182 = vmatpush1.bf16.msra.mxu0 %v6056
  %6183 = vmatprep.subr.bf16.mxu0 %v6061
  %6184 = vmatpush1.bf16.msra.mxu0 %v6060
  %6185 = vmatprep.subr.bf16.mxu0 %v6065
  %6186 = vmatpush1.bf16.msra.mxu0 %v6064
  %6187 = vmatprep.subr.bf16.mxu0 0
  %6188 = vmatpush1.bf16.msra.mxu0 0
  %6189 = vmatprep.subr.bf16.mxu0 0
  %6190 = vmatpush1.bf16.msra.mxu0 0
  %6191 = vmatprep.subr.bf16.mxu0 0
  %6192 = vmatpush1.bf16.msra.mxu0 0
  %6193 = vmatprep.subr.bf16.mxu0 0
  %6194 = vmatpush1.bf16.msra.mxu0 0
  %6195 = vmatprep.subr.bf16.mxu0 0
  %6196 = vmatpush1.bf16.msra.mxu0 0
  %6197 = vmatprep.subr.bf16.mxu0 0
  %6198 = vmatpush1.bf16.msra.mxu0 0
  %6199 = vmatprep.subr.bf16.mxu0 0
  %6200 = vmatpush1.bf16.msra.mxu0 0
  %6201 = vmatprep.subr.bf16.mxu0 0
  %6202 = vmatpush1.bf16.msra.mxu0 0
  %6203 = vmatprep.mubr.bf16.mxu0 0
  %6204 = vmatmul.mubr.bf16.gmra.mrb[0].mxu0 %v5880
  %v6205 = vpop.f32.mrb[0].mxu0
  %v6206 = vadd.f32 %v5929, %v6205
  %v6207 = vpop.f32.mrb[0].mxu0
  %v6208 = vadd.f32 %v5933, %v6207
  %v6209 = vpop.f32.mrb[0].mxu0
  %v6210 = vadd.f32 %v5929, %v6209
  %v6211 = vpop.f32.mrb[0].mxu0
  %v6212 = vadd.f32 %v5933, %v6211
  %6213 = vmatprep.mubr.bf16.mxu0 0
  %6214 = vmatmul.mubr.bf16.gmra.mrb[0].mxu0 %v5881
  %v6215 = vpop.f32.mrb[0].mxu0
  %v6216 = vadd.f32 %v5929, %v6215
  %v6217 = vpop.f32.mrb[0].mxu0
  %v6218 = vadd.f32 %v5933, %v6217
  %v6219 = vpop.f32.mrb[0].mxu0
  %v6220 = vadd.f32 %v5929, %v6219
  %v6221 = vpop.f32.mrb[0].mxu0
  %v6222 = vadd.f32 %v5933, %v6221
  %6223 = vmatprep.mubr.bf16.mxu0 0
  %6224 = vmatmul.mubr.bf16.gmra.mrb[0].mxu0 %v5882
  %v6225 = vpop.f32.mrb[0].mxu0
  %v6226 = vadd.f32 %v5929, %v6225
  %v6227 = vpop.f32.mrb[0].mxu0
  %v6228 = vadd.f32 %v5933, %v6227
  %v6229 = vpop.f32.mrb[0].mxu0
  %v6230 = vadd.f32 %v5929, %v6229
  %v6231 = vpop.f32.mrb[0].mxu0
  %v6232 = vadd.f32 %v5933, %v6231
  %6233 = vmatprep.mubr.bf16.mxu0 0
  %6234 = vmatmul.mubr.bf16.gmra.mrb[0].mxu0 %v5883
  %v6235 = vpop.f32.mrb[0].mxu0
  %v6236 = vadd.f32 %v5929, %v6235
  %v6237 = vpop.f32.mrb[0].mxu0
  %v6238 = vadd.f32 %v5933, %v6237
  %v6239 = vpop.f32.mrb[0].mxu0
  %v6240 = vadd.f32 %v5929, %v6239
  %v6241 = vpop.f32.mrb[0].mxu0
  %v6242 = vadd.f32 %v5933, %v6241
  %6243 = vdwg.mxu0
  %6244 = vst [vmem:[#allocation2] sm:$0xff] %v6133
  %6245 = vst [vmem:[#allocation2 + $0x8] sm:$0xff] %v6135
  %6246 = vst [vmem:[#allocation2 + $0x10] sm:$0xff] %v6206
  %6247 = vst [vmem:[#allocation2 + $0x18] sm:$0xff] %v6208
  %6248 = vst [vmem:[#allocation2 + $0x20] sm:$0xff] %v6137
  %6249 = vst [vmem:[#allocation2 + $0x28] sm:$0xff] %v6139
  %6250 = vst [vmem:[#allocation2 + $0x30] sm:$0xff] %v6210
  %6251 = vst [vmem:[#allocation2 + $0x38] sm:$0xff] %v6212
  %6252 = vst [vmem:[#allocation2 + $0x40] sm:$0xff] %v6143
  %6253 = vst [vmem:[#allocation2 + $0x48] sm:$0xff] %v6145
  %6254 = vst [vmem:[#allocation2 + $0x50] sm:$0xff] %v6216
  %6255 = vst [vmem:[#allocation2 + $0x58] sm:$0xff] %v6218
  %6256 = vst [vmem:[#allocation2 + $0x60] sm:$0xff] %v6147
  %6257 = vst [vmem:[#allocation2 + $0x68] sm:$0xff] %v6149
  %6258 = vst [vmem:[#allocation2 + $0x70] sm:$0xff] %v6220
  %6259 = vst [vmem:[#allocation2 + $0x78] sm:$0xff] %v6222
  %6260 = vst [vmem:[#allocation2 + $0x80] sm:$0xff] %v6153
  %6261 = vst [vmem:[#allocation2 + $0x88] sm:$0xff] %v6155
  %6262 = vst [vmem:[#allocation2 + $0x90] sm:$0xff] %v6226
  %6263 = vst [vmem:[#allocation2 + $0x98] sm:$0xff] %v6228
  %6264 = vst [vmem:[#allocation2 + $0xa0] sm:$0xff] %v6157
  %6265 = vst [vmem:[#allocation2 + $0xa8] sm:$0xff] %v6159
  %6266 = vst [vmem:[#allocation2 + $0xb0] sm:$0xff] %v6230
  %6267 = vst [vmem:[#allocation2 + $0xb8] sm:$0xff] %v6232
  %6268 = vst [vmem:[#allocation2 + $0xc0] sm:$0xff] %v6163
  %6269 = vst [vmem:[#allocation2 + $0xc8] sm:$0xff] %v6165
  %6270 = vst [vmem:[#allocation2 + $0xd0] sm:$0xff] %v6236
  %6271 = vst [vmem:[#allocation2 + $0xd8] sm:$0xff] %v6238
  %6272 = vst [vmem:[#allocation2 + $0xe0] sm:$0xff] %v6167
  %6273 = vst [vmem:[#allocation2 + $0xe8] sm:$0xff] %v6169
  %6274 = vst [vmem:[#allocation2 + $0xf0] sm:$0xff] %v6240
  %6275 = vst [vmem:[#allocation2 + $0xf8] sm:$0xff] %v6242
  %6276 = vst [vmem:[#allocation4] sm:$0xff] 0.0
  %6277 = vst [vmem:[#allocation5] sm:$0xff] 0.0
  %v6278 = vld [vmem:[#allocation2] sm:$0xff]
  %v6279 = vld [vmem:[#allocation2 + $0x8] sm:$0xff]
  %v6280 = vld [vmem:[#allocation2 + $0x10] sm:$0xff]
  %v6281 = vld [vmem:[#allocation2 + $0x18] sm:$0xff]
  %v6282 = vld [vmem:[#allocation4] sm:$0xff]
  %v6283 = vpack.c.bf16 %v6282, %v6282
  %v6284 = vld [vmem:[%s8] sm:$0xff]
  %v6285 = vld [vmem:[%s8 + $0x8] sm:$0xff]
  %v6286 = vld [vmem:[%s8 + $0x10] sm:$0xff]
  %v6287 = vld [vmem:[%s8 + $0x18] sm:$0xff]
  %v6288 = vld [vmem:[%s8 + $0x20] sm:$0xff]
  %v6289 = vld [vmem:[%s8 + $0x28] sm:$0xff]
  %v6290 = vld [vmem:[%s8 + $0x30] sm:$0xff]
  %v6291 = vld [vmem:[%s8 + $0x38] sm:$0xff]
  %v6292 = vld [vmem:[%s8 + $0x40] sm:$0xff]
  %v6293 = vld [vmem:[%s8 + $0x48] sm:$0xff]
  %v6294 = vld [vmem:[%s8 + $0x50] sm:$0xff]
  %v6295 = vld [vmem:[%s8 + $0x58] sm:$0xff]
  %v6296 = vld [vmem:[%s8 + $0x60] sm:$0xff]
  %v6297 = vld [vmem:[%s8 + $0x68] sm:$0xff]
  %v6298 = vld [vmem:[%s8 + $0x70] sm:$0xff]
  %v6299 = vld [vmem:[%s8 + $0x78] sm:$0xff]
  %v6300 = vld [vmem:[%s8 + $0x80] sm:$0xff]
  %v6301 = vld [vmem:[%s8 + $0x88] sm:$0xff]
  %v6302 = vld [vmem:[%s8 + $0x90] sm:$0xff]
  %v6303 = vld [vmem:[%s8 + $0x98] sm:$0xff]
  %v6304 = vld [vmem:[%s8 + $0xa0] sm:$0xff]
  %v6305 = vld [vmem:[%s8 + $0xa8] sm:$0xff]
  %v6306 = vld [vmem:[%s8 + $0xb0] sm:$0xff]
  %v6307 = vld [vmem:[%s8 + $0xb8] sm:$0xff]
  %v6308 = vld [vmem:[%s8 + $0xc0] sm:$0xff]
  %v6309 = vld [vmem:[%s8 + $0xc8] sm:$0xff]
  %v6310 = vld [vmem:[%s8 + $0xd0] sm:$0xff]
  %v6311 = vld [vmem:[%s8 + $0xd8] sm:$0xff]
  %v6312 = vld [vmem:[%s8 + $0xe0] sm:$0xff]
  %v6313 = vld [vmem:[%s8 + $0xe8] sm:$0xff]
  %v6314 = vld [vmem:[%s8 + $0xf0] sm:$0xff]
  %v6315 = vld [vmem:[%s8 + $0xf8] sm:$0xff]
  %v6348 = vunpack.c.l.b16 %v6284
  %v6349 = vunpack.c.h.b16 %v6284
  %v6350 = vunpack.c.l.b16 %v6285
  %v6351 = vunpack.c.h.b16 %v6285
  %v6352 = vunpack.c.l.b16 %v6286
  %v6353 = vunpack.c.h.b16 %v6286
  %v6354 = vunpack.c.l.b16 %v6287
  %v6355 = vunpack.c.h.b16 %v6287
  %v6356 = vunpack.c.l.b16 %v6288
  %v6357 = vunpack.c.h.b16 %v6288
  %v6358 = vunpack.c.l.b16 %v6289
  %v6359 = vunpack.c.h.b16 %v6289
  %v6360 = vunpack.c.l.b16 %v6290
  %v6361 = vunpack.c.h.b16 %v6290
  %v6362 = vunpack.c.l.b16 %v6291
  %v6363 = vunpack.c.h.b16 %v6291
  %v6364 = vunpack.c.l.b16 %v6292
  %v6365 = vunpack.c.h.b16 %v6292
  %v6366 = vunpack.c.l.b16 %v6293
  %v6367 = vunpack.c.h.b16 %v6293
  %v6368 = vunpack.c.l.b16 %v6294
  %v6369 = vunpack.c.h.b16 %v6294
  %v6370 = vunpack.c.l.b16 %v6295
  %v6371 = vunpack.c.h.b16 %v6295
  %v6372 = vunpack.c.l.b16 %v6296
  %v6373 = vunpack.c.h.b16 %v6296
  %v6374 = vunpack.c.l.b16 %v6297
  %v6375 = vunpack.c.h.b16 %v6297
  %v6376 = vunpack.c.l.b16 %v6298
  %v6377 = vunpack.c.h.b16 %v6298
  %v6378 = vunpack.c.l.b16 %v6299
  %v6379 = vunpack.c.h.b16 %v6299
  %v6380 = vunpack.c.l.b16 %v6300
  %v6381 = vunpack.c.h.b16 %v6300
  %v6382 = vunpack.c.l.b16 %v6301
  %v6383 = vunpack.c.h.b16 %v6301
  %v6384 = vunpack.c.l.b16 %v6302
  %v6385 = vunpack.c.h.b16 %v6302
  %v6386 = vunpack.c.l.b16 %v6303
  %v6387 = vunpack.c.h.b16 %v6303
  %v6388 = vunpack.c.l.b16 %v6304
  %v6389 = vunpack.c.h.b16 %v6304
  %v6390 = vunpack.c.l.b16 %v6305
  %v6391 = vunpack.c.h.b16 %v6305
  %v6392 = vunpack.c.l.b16 %v6306
  %v6393 = vunpack.c.h.b16 %v6306
  %v6394 = vunpack.c.l.b16 %v6307
  %v6395 = vunpack.c.h.b16 %v6307
  %v6396 = vunpack.c.l.b16 %v6308
  %v6397 = vunpack.c.h.b16 %v6308
  %v6398 = vunpack.c.l.b16 %v6309
  %v6399 = vunpack.c.h.b16 %v6309
  %v6400 = vunpack.c.l.b16 %v6310
  %v6401 = vunpack.c.h.b16 %v6310
  %v6402 = vunpack.c.l.b16 %v6311
  %v6403 = vunpack.c.h.b16 %v6311
  %v6404 = vunpack.c.l.b16 %v6312
  %v6405 = vunpack.c.h.b16 %v6312
  %v6406 = vunpack.c.l.b16 %v6313
  %v6407 = vunpack.c.h.b16 %v6313
  %v6408 = vunpack.c.l.b16 %v6314
  %v6409 = vunpack.c.h.b16 %v6314
  %v6410 = vunpack.c.l.b16 %v6315
  %v6411 = vunpack.c.h.b16 %v6315
  %v6412 = vpack.c.b16 %v6352, %v6348
  %v6413 = vpack.c.b16 %v6353, %v6349
  %v6414 = vpack.c.b16 %v6354, %v6350
  %v6415 = vpack.c.b16 %v6355, %v6351
  %v6416 = vpack.c.b16 %v6360, %v6356
  %v6417 = vpack.c.b16 %v6361, %v6357
  %v6418 = vpack.c.b16 %v6362, %v6358
  %v6419 = vpack.c.b16 %v6363, %v6359
  %v6420 = vpack.c.b16 %v6368, %v6364
  %v6421 = vpack.c.b16 %v6369, %v6365
  %v6422 = vpack.c.b16 %v6370, %v6366
  %v6423 = vpack.c.b16 %v6371, %v6367
  %v6424 = vpack.c.b16 %v6376, %v6372
  %v6425 = vpack.c.b16 %v6377, %v6373
  %v6426 = vpack.c.b16 %v6378, %v6374
  %v6427 = vpack.c.b16 %v6379, %v6375
  %v6428 = vpack.c.b16 %v6384, %v6380
  %v6429 = vpack.c.b16 %v6385, %v6381
  %v6430 = vpack.c.b16 %v6386, %v6382
  %v6431 = vpack.c.b16 %v6387, %v6383
  %v6432 = vpack.c.b16 %v6392, %v6388
  %v6433 = vpack.c.b16 %v6393, %v6389
  %v6434 = vpack.c.b16 %v6394, %v6390
  %v6435 = vpack.c.b16 %v6395, %v6391
  %v6436 = vpack.c.b16 %v6400, %v6396
  %v6437 = vpack.c.b16 %v6401, %v6397
  %v6438 = vpack.c.b16 %v6402, %v6398
  %v6439 = vpack.c.b16 %v6403, %v6399
  %v6440 = vpack.c.b16 %v6408, %v6404
  %v6441 = vpack.c.b16 %v6409, %v6405
  %v6442 = vpack.c.b16 %v6410, %v6406
  %v6443 = vpack.c.b16 %v6411, %v6407
  %6476 = vmatprep.subr.bf16.mxu0 %v6413
  %6477 = vmatpush1.bf16.msra.mxu0 %v6412
  %6478 = vmatprep.subr.bf16.mxu0 %v6417
  %6479 = vmatpush1.bf16.msra.mxu0 %v6416
  %6480 = vmatprep.subr.bf16.mxu0 %v6421
  %6481 = vmatpush1.bf16.msra.mxu0 %v6420
  %6482 = vmatprep.subr.bf16.mxu0 %v6425
  %6483 = vmatpush1.bf16.msra.mxu0 %v6424
  %6484 = vmatprep.subr.bf16.mxu0 %v6429
  %6485 = vmatpush1.bf16.msra.mxu0 %v6428
  %6486 = vmatprep.subr.bf16.mxu0 %v6433
  %6487 = vmatpush1.bf16.msra.mxu0 %v6432
  %6488 = vmatprep.subr.bf16.mxu0 %v6437
  %6489 = vmatpush1.bf16.msra.mxu0 %v6436
  %6490 = vmatprep.subr.bf16.mxu0 %v6441
  %6491 = vmatpush1.bf16.msra.mxu0 %v6440
  %6492 = vmatprep.subr.bf16.mxu0 0
  %6493 = vmatpush1.bf16.msra.mxu0 0
  %6494 = vmatprep.subr.bf16.mxu0 0
  %6495 = vmatpush1.bf16.msra.mxu0 0
  %6496 = vmatprep.subr.bf16.mxu0 0
  %6497 = vmatpush1.bf16.msra.mxu0 0
  %6498 = vmatprep.subr.bf16.mxu0 0
  %6499 = vmatpush1.bf16.msra.mxu0 0
  %6500 = vmatprep.subr.bf16.mxu0 0
  %6501 = vmatpush1.bf16.msra.mxu0 0
  %6502 = vmatprep.subr.bf16.mxu0 0
  %6503 = vmatpush1.bf16.msra.mxu0 0
  %6504 = vmatprep.subr.bf16.mxu0 0
  %6505 = vmatpush1.bf16.msra.mxu0 0
  %6506 = vmatprep.subr.bf16.mxu0 0
  %6507 = vmatpush1.bf16.msra.mxu0 0
  %6508 = vmatprep.mubr.bf16.mxu0 0
  %6509 = vmatmul.mubr.bf16.gmra.mrb[0].mxu0 %v6283
  %v6510 = vpop.f32.mrb[0].mxu0
  %v6511 = vadd.f32 0.0, %v6510
  %v6512 = vpop.f32.mrb[0].mxu0
  %v6513 = vadd.f32 0.0, %v6512
  %v6514 = vpop.f32.mrb[0].mxu0
  %v6515 = vpop.f32.mrb[0].mxu0
  %6516 = vdwg.mxu0
  %6517 = vmatprep.subr.bf16.mxu0 %v6415
  %6518 = vmatpush1.bf16.msra.mxu0 %v6414
  %6519 = vmatprep.subr.bf16.mxu0 %v6419
  %6520 = vmatpush1.bf16.msra.mxu0 %v6418
  %6521 = vmatprep.subr.bf16.mxu0 %v6423
  %6522 = vmatpush1.bf16.msra.mxu0 %v6422
  %6523 = vmatprep.subr.bf16.mxu0 %v6427
  %6524 = vmatpush1.bf16.msra.mxu0 %v6426
  %6525 = vmatprep.subr.bf16.mxu0 %v6431
  %6526 = vmatpush1.bf16.msra.mxu0 %v6430
  %6527 = vmatprep.subr.bf16.mxu0 %v6435
  %6528 = vmatpush1.bf16.msra.mxu0 %v6434
  %6529 = vmatprep.subr.bf16.mxu0 %v6439
  %6530 = vmatpush1.bf16.msra.mxu0 %v6438
  %6531 = vmatprep.subr.bf16.mxu0 %v6443
  %6532 = vmatpush1.bf16.msra.mxu0 %v6442
  %6533 = vmatprep.subr.bf16.mxu0 0
  %6534 = vmatpush1.bf16.msra.mxu0 0
  %6535 = vmatprep.subr.bf16.mxu0 0
  %6536 = vmatpush1.bf16.msra.mxu0 0
  %6537 = vmatprep.subr.bf16.mxu0 0
  %6538 = vmatpush1.bf16.msra.mxu0 0
  %6539 = vmatprep.subr.bf16.mxu0 0
  %6540 = vmatpush1.bf16.msra.mxu0 0
  %6541 = vmatprep.subr.bf16.mxu0 0
  %6542 = vmatpush1.bf16.msra.mxu0 0
  %6543 = vmatprep.subr.bf16.mxu0 0
  %6544 = vmatpush1.bf16.msra.mxu0 0
  %6545 = vmatprep.subr.bf16.mxu0 0
  %6546 = vmatpush1.bf16.msra.mxu0 0
  %6547 = vmatprep.subr.bf16.mxu0 0
  %6548 = vmatpush1.bf16.msra.mxu0 0
  %6549 = vmatprep.mubr.bf16.mxu0 0
  %6550 = vmatmul.mubr.bf16.gmra.mrb[0].mxu0 %v6283
  %v6551 = vpop.f32.mrb[0].mxu0
  %v6552 = vadd.f32 0.0, %v6551
  %v6553 = vpop.f32.mrb[0].mxu0
  %v6554 = vadd.f32 0.0, %v6553
  %v6555 = vpop.f32.mrb[0].mxu0
  %v6556 = vpop.f32.mrb[0].mxu0
  %6557 = vdwg.mxu0
  %v6558 = vadd.f32 %v6278, %v6511
  %v6559 = vadd.f32 %v6279, %v6513
  %v6560 = vadd.f32 %v6280, %v6552
  %v6561 = vadd.f32 %v6281, %v6554
  %v6562 = vxor.u32 %v6558, 2147483648
  %v6563 = vmul.f32 %v6562, 1.442695
  %v6564 = vpow.pop %v6563
  %v6565 = vadd.f32 %v6564, 1.0
  %v6566 = vrcp.pop %v6565
  %v6567 = vmul.f32 1.0, %v6566
  %v6568 = vxor.u32 %v6559, 2147483648
  %v6569 = vmul.f32 %v6568, 1.442695
  %v6570 = vpow.pop %v6569
  %v6571 = vadd.f32 %v6570, 1.0
  %v6572 = vrcp.pop %v6571
  %v6573 = vmul.f32 1.0, %v6572
  %v6574 = vtanh.pop %v6560
  %v6575 = vxor.u32 %v6561, 2147483648
  %v6576 = vmul.f32 %v6575, 1.442695
  %v6577 = vpow.pop %v6576
  %v6578 = vadd.f32 %v6577, 1.0
  %v6579 = vrcp.pop %v6578
  %v6580 = vmul.f32 1.0, %v6579
  %v6581 = vld [vmem:[#allocation5] sm:$0xff]
  %v6582 = vmul.f32 %v6573, %v6581
  %v6583 = vmul.f32 %v6567, %v6574
  %v6584 = vadd.f32 %v6582, %v6583
  %v6585 = vtanh.pop %v6584
  %v6586 = vmul.f32 %v6580, %v6585
  %6587 = vst [vmem:[#allocation5] sm:$0xff] %v6584
  %6588 = vst [vmem:[#allocation4] sm:$0xff] %v6586
  %v6589 = vld [vmem:[%s772] sm:$0xff]
  %v6590 = vld [vmem:[%s772 + $0x8] sm:$0xff]
  %v6591 = vld [vmem:[%s772 + $0x10] sm:$0xff]
  %v6592 = vld [vmem:[%s772 + $0x18] sm:$0xff]
  %v6593 = vld [vmem:[#allocation4] sm:$0xff]
  %v6594 = vpack.c.bf16 %v6593, %v6593
  %v6595 = vld [vmem:[%s8] sm:$0xff]
  %v6596 = vld [vmem:[%s8 + $0x8] sm:$0xff]
  %v6597 = vld [vmem:[%s8 + $0x10] sm:$0xff]
  %v6598 = vld [vmem:[%s8 + $0x18] sm:$0xff]
  %v6599 = vld [vmem:[%s8 + $0x20] sm:$0xff]
  %v6600 = vld [vmem:[%s8 + $0x28] sm:$0xff]
  %v6601 = vld [vmem:[%s8 + $0x30] sm:$0xff]
  %v6602 = vld [vmem:[%s8 + $0x38] sm:$0xff]
  %v6603 = vld [vmem:[%s8 + $0x40] sm:$0xff]
  %v6604 = vld [vmem:[%s8 + $0x48] sm:$0xff]
  %v6605 = vld [vmem:[%s8 + $0x50] sm:$0xff]
  %v6606 = vld [vmem:[%s8 + $0x58] sm:$0xff]
  %v6607 = vld [vmem:[%s8 + $0x60] sm:$0xff]
  %v6608 = vld [vmem:[%s8 + $0x68] sm:$0xff]
  %v6609 = vld [vmem:[%s8 + $0x70] sm:$0xff]
  %v6610 = vld [vmem:[%s8 + $0x78] sm:$0xff]
  %v6611 = vld [vmem:[%s8 + $0x80] sm:$0xff]
  %v6612 = vld [vmem:[%s8 + $0x88] sm:$0xff]
  %v6613 = vld [vmem:[%s8 + $0x90] sm:$0xff]
  %v6614 = vld [vmem:[%s8 + $0x98] sm:$0xff]
  %v6615 = vld [vmem:[%s8 + $0xa0] sm:$0xff]
  %v6616 = vld [vmem:[%s8 + $0xa8] sm:$0xff]
  %v6617 = vld [vmem:[%s8 + $0xb0] sm:$0xff]
  %v6618 = vld [vmem:[%s8 + $0xb8] sm:$0xff]
  %v6619 = vld [vmem:[%s8 + $0xc0] sm:$0xff]
  %v6620 = vld [vmem:[%s8 + $0xc8] sm:$0xff]
  %v6621 = vld [vmem:[%s8 + $0xd0] sm:$0xff]
  %v6622 = vld [vmem:[%s8 + $0xd8] sm:$0xff]
  %v6623 = vld [vmem:[%s8 + $0xe0] sm:$0xff]
  %v6624 = vld [vmem:[%s8 + $0xe8] sm:$0xff]
  %v6625 = vld [vmem:[%s8 + $0xf0] sm:$0xff]
  %v6626 = vld [vmem:[%s8 + $0xf8] sm:$0xff]
  %v6659 = vunpack.c.l.b16 %v6595
  %v6660 = vunpack.c.h.b16 %v6595
  %v6661 = vunpack.c.l.b16 %v6596
  %v6662 = vunpack.c.h.b16 %v6596
  %v6663 = vunpack.c.l.b16 %v6597
  %v6664 = vunpack.c.h.b16 %v6597
  %v6665 = vunpack.c.l.b16 %v6598
  %v6666 = vunpack.c.h.b16 %v6598
  %v6667 = vunpack.c.l.b16 %v6599
  %v6668 = vunpack.c.h.b16 %v6599
  %v6669 = vunpack.c.l.b16 %v6600
  %v6670 = vunpack.c.h.b16 %v6600
  %v6671 = vunpack.c.l.b16 %v6601
  %v6672 = vunpack.c.h.b16 %v6601
  %v6673 = vunpack.c.l.b16 %v6602
  %v6674 = vunpack.c.h.b16 %v6602
  %v6675 = vunpack.c.l.b16 %v6603
  %v6676 = vunpack.c.h.b16 %v6603
  %v6677 = vunpack.c.l.b16 %v6604
  %v6678 = vunpack.c.h.b16 %v6604
  %v6679 = vunpack.c.l.b16 %v6605
  %v6680 = vunpack.c.h.b16 %v6605
  %v6681 = vunpack.c.l.b16 %v6606
  %v6682 = vunpack.c.h.b16 %v6606
  %v6683 = vunpack.c.l.b16 %v6607
  %v6684 = vunpack.c.h.b16 %v6607
  %v6685 = vunpack.c.l.b16 %v6608
  %v6686 = vunpack.c.h.b16 %v6608
  %v6687 = vunpack.c.l.b16 %v6609
  %v6688 = vunpack.c.h.b16 %v6609
  %v6689 = vunpack.c.l.b16 %v6610
  %v6690 = vunpack.c.h.b16 %v6610
  %v6691 = vunpack.c.l.b16 %v6611
  %v6692 = vunpack.c.h.b16 %v6611
  %v6693 = vunpack.c.l.b16 %v6612
  %v6694 = vunpack.c.h.b16 %v6612
  %v6695 = vunpack.c.l.b16 %v6613
  %v6696 = vunpack.c.h.b16 %v6613
  %v6697 = vunpack.c.l.b16 %v6614
  %v6698 = vunpack.c.h.b16 %v6614
  %v6699 = vunpack.c.l.b16 %v6615
  %v6700 = vunpack.c.h.b16 %v6615
  %v6701 = vunpack.c.l.b16 %v6616
  %v6702 = vunpack.c.h.b16 %v6616
  %v6703 = vunpack.c.l.b16 %v6617
  %v6704 = vunpack.c.h.b16 %v6617
  %v6705 = vunpack.c.l.b16 %v6618
  %v6706 = vunpack.c.h.b16 %v6618
  %v6707 = vunpack.c.l.b16 %v6619
  %v6708 = vunpack.c.h.b16 %v6619
  %v6709 = vunpack.c.l.b16 %v6620
  %v6710 = vunpack.c.h.b16 %v6620
  %v6711 = vunpack.c.l.b16 %v6621
  %v6712 = vunpack.c.h.b16 %v6621
  %v6713 = vunpack.c.l.b16 %v6622
  %v6714 = vunpack.c.h.b16 %v6622
  %v6715 = vunpack.c.l.b16 %v6623
  %v6716 = vunpack.c.h.b16 %v6623
  %v6717 = vunpack.c.l.b16 %v6624
  %v6718 = vunpack.c.h.b16 %v6624
  %v6719 = vunpack.c.l.b16 %v6625
  %v6720 = vunpack.c.h.b16 %v6625
  %v6721 = vunpack.c.l.b16 %v6626
  %v6722 = vunpack.c.h.b16 %v6626
  %v6723 = vpack.c.b16 %v6663, %v6659
  %v6724 = vpack.c.b16 %v6664, %v6660
  %v6725 = vpack.c.b16 %v6665, %v6661
  %v6726 = vpack.c.b16 %v6666, %v6662
  %v6727 = vpack.c.b16 %v6671, %v6667
  %v6728 = vpack.c.b16 %v6672, %v6668
  %v6729 = vpack.c.b16 %v6673, %v6669
  %v6730 = vpack.c.b16 %v6674, %v6670
  %v6731 = vpack.c.b16 %v6679, %v6675
  %v6732 = vpack.c.b16 %v6680, %v6676
  %v6733 = vpack.c.b16 %v6681, %v6677
  %v6734 = vpack.c.b16 %v6682, %v6678
  %v6735 = vpack.c.b16 %v6687, %v6683
  %v6736 = vpack.c.b16 %v6688, %v6684
  %v6737 = vpack.c.b16 %v6689, %v6685
  %v6738 = vpack.c.b16 %v6690, %v6686
  %v6739 = vpack.c.b16 %v6695, %v6691
  %v6740 = vpack.c.b16 %v6696, %v6692
  %v6741 = vpack.c.b16 %v6697, %v6693
  %v6742 = vpack.c.b16 %v6698, %v6694
  %v6743 = vpack.c.b16 %v6703, %v6699
  %v6744 = vpack.c.b16 %v6704, %v6700
  %v6745 = vpack.c.b16 %v6705, %v6701
  %v6746 = vpack.c.b16 %v6706, %v6702
  %v6747 = vpack.c.b16 %v6711, %v6707
  %v6748 = vpack.c.b16 %v6712, %v6708
  %v6749 = vpack.c.b16 %v6713, %v6709
  %v6750 = vpack.c.b16 %v6714, %v6710
  %v6751 = vpack.c.b16 %v6719, %v6715
  %v6752 = vpack.c.b16 %v6720, %v6716
  %v6753 = vpack.c.b16 %v6721, %v6717
  %v6754 = vpack.c.b16 %v6722, %v6718
  %6787 = vmatprep.subr.bf16.mxu0 %v6724
  %6788 = vmatpush1.bf16.msra.mxu0 %v6723
  %6789 = vmatprep.subr.bf16.mxu0 %v6728
  %6790 = vmatpush1.bf16.msra.mxu0 %v6727
  %6791 = vmatprep.subr.bf16.mxu0 %v6732
  %6792 = vmatpush1.bf16.msra.mxu0 %v6731
  %6793 = vmatprep.subr.bf16.mxu0 %v6736
  %6794 = vmatpush1.bf16.msra.mxu0 %v6735
  %6795 = vmatprep.subr.bf16.mxu0 %v6740
  %6796 = vmatpush1.bf16.msra.mxu0 %v6739
  %6797 = vmatprep.subr.bf16.mxu0 %v6744
  %6798 = vmatpush1.bf16.msra.mxu0 %v6743
  %6799 = vmatprep.subr.bf16.mxu0 %v6748
  %6800 = vmatpush1.bf16.msra.mxu0 %v6747
  %6801 = vmatprep.subr.bf16.mxu0 %v6752
  %6802 = vmatpush1.bf16.msra.mxu0 %v6751
  %6803 = vmatprep.subr.bf16.mxu0 0
  %6804 = vmatpush1.bf16.msra.mxu0 0
  %6805 = vmatprep.subr.bf16.mxu0 0
  %6806 = vmatpush1.bf16.msra.mxu0 0
  %6807 = vmatprep.subr.bf16.mxu0 0
  %6808 = vmatpush1.bf16.msra.mxu0 0
  %6809 = vmatprep.subr.bf16.mxu0 0
  %6810 = vmatpush1.bf16.msra.mxu0 0
  %6811 = vmatprep.subr.bf16.mxu0 0
  %6812 = vmatpush1.bf16.msra.mxu0 0
  %6813 = vmatprep.subr.bf16.mxu0 0
  %6814 = vmatpush1.bf16.msra.mxu0 0
  %6815 = vmatprep.subr.bf16.mxu0 0
  %6816 = vmatpush1.bf16.msra.mxu0 0
  %6817 = vmatprep.subr.bf16.mxu0 0
  %6818 = vmatpush1.bf16.msra.mxu0 0
  %6819 = vmatprep.mubr.bf16.mxu0 0
  %6820 = vmatmul.mubr.bf16.gmra.mrb[0].mxu0 %v6594
  %v6821 = vpop.f32.mrb[0].mxu0
  %v6822 = vadd.f32 0.0, %v6821
  %v6823 = vpop.f32.mrb[0].mxu0
  %v6824 = vadd.f32 0.0, %v6823
  %v6825 = vpop.f32.mrb[0].mxu0
  %v6826 = vpop.f32.mrb[0].mxu0
  %6827 = vdwg.mxu0
  %6828 = vmatprep.subr.bf16.mxu0 %v6726
  %6829 = vmatpush1.bf16.msra.mxu0 %v6725
  %6830 = vmatprep.subr.bf16.mxu0 %v6730
  %6831 = vmatpush1.bf16.msra.mxu0 %v6729
  %6832 = vmatprep.subr.bf16.mxu0 %v6734
  %6833 = vmatpush1.bf16.msra.mxu0 %v6733
  %6834 = vmatprep.subr.bf16.mxu0 %v6738
  %6835 = vmatpush1.bf16.msra.mxu0 %v6737
  %6836 = vmatprep.subr.bf16.mxu0 %v6742
  %6837 = vmatpush1.bf16.msra.mxu0 %v6741
  %6838 = vmatprep.subr.bf16.mxu0 %v6746
  %6839 = vmatpush1.bf16.msra.mxu0 %v6745
  %6840 = vmatprep.subr.bf16.mxu0 %v6750
  %6841 = vmatpush1.bf16.msra.mxu0 %v6749
  %6842 = vmatprep.subr.bf16.mxu0 %v6754
  %6843 = vmatpush1.bf16.msra.mxu0 %v6753
  %6844 = vmatprep.subr.bf16.mxu0 0
  %6845 = vmatpush1.bf16.msra.mxu0 0
  %6846 = vmatprep.subr.bf16.mxu0 0
  %6847 = vmatpush1.bf16.msra.mxu0 0
  %6848 = vmatprep.subr.bf16.mxu0 0
  %6849 = vmatpush1.bf16.msra.mxu0 0
  %6850 = vmatprep.subr.bf16.mxu0 0
  %6851 = vmatpush1.bf16.msra.mxu0 0
  %6852 = vmatprep.subr.bf16.mxu0 0
  %6853 = vmatpush1.bf16.msra.mxu0 0
  %6854 = vmatprep.subr.bf16.mxu0 0
  %6855 = vmatpush1.bf16.msra.mxu0 0
  %6856 = vmatprep.subr.bf16.mxu0 0
  %6857 = vmatpush1.bf16.msra.mxu0 0
  %6858 = vmatprep.subr.bf16.mxu0 0
  %6859 = vmatpush1.bf16.msra.mxu0 0
  %6860 = vmatprep.mubr.bf16.mxu0 0
  %6861 = vmatmul.mubr.bf16.gmra.mrb[0].mxu0 %v6594
  %v6862 = vpop.f32.mrb[0].mxu0
  %v6863 = vadd.f32 0.0, %v6862
  %v6864 = vpop.f32.mrb[0].mxu0
  %v6865 = vadd.f32 0.0, %v6864
  %v6866 = vpop.f32.mrb[0].mxu0
  %v6867 = vpop.f32.mrb[0].mxu0
  %6868 = vdwg.mxu0
  %v6869 = vadd.f32 %v6589, %v6822
  %v6870 = vadd.f32 %v6590, %v6824
  %v6871 = vadd.f32 %v6591, %v6863
  %v6872 = vadd.f32 %v6592, %v6865
  %v6873 = vxor.u32 %v6869, 2147483648
  %v6874 = vmul.f32 %v6873, 1.442695
  %v6875 = vpow.pop %v6874
  %v6876 = vadd.f32 %v6875, 1.0
  %v6877 = vrcp.pop %v6876
  %v6878 = vmul.f32 1.0, %v6877
  %v6879 = vxor.u32 %v6870, 2147483648
  %v6880 = vmul.f32 %v6879, 1.442695
  %v6881 = vpow.pop %v6880
  %v6882 = vadd.f32 %v6881, 1.0
  %v6883 = vrcp.pop %v6882
  %v6884 = vmul.f32 1.0, %v6883
  %v6885 = vtanh.pop %v6871
  %v6886 = vxor.u32 %v6872, 2147483648
  %v6887 = vmul.f32 %v6886, 1.442695
  %v6888 = vpow.pop %v6887
  %v6889 = vadd.f32 %v6888, 1.0
  %v6890 = vrcp.pop %v6889
  %v6891 = vmul.f32 1.0, %v6890
  %v6892 = vld [vmem:[#allocation5] sm:$0xff]
  %v6893 = vmul.f32 %v6884, %v6892
  %v6894 = vmul.f32 %v6878, %v6885
  %v6895 = vadd.f32 %v6893, %v6894
  %v6896 = vtanh.pop %v6895
  %v6897 = vmul.f32 %v6891, %v6896
  %6898 = vst [vmem:[#allocation5] sm:$0xff] %v6895
  %6899 = vst [vmem:[#allocation4] sm:$0xff] %v6897
  %v6900 = vld [vmem:[%s1086] sm:$0xff]
  %v6901 = vld [vmem:[%s1086 + $0x8] sm:$0xff]
  %v6902 = vld [vmem:[%s1086 + $0x10] sm:$0xff]
  %v6903 = vld [vmem:[%s1086 + $0x18] sm:$0xff]
  %v6904 = vld [vmem:[#allocation4] sm:$0xff]
  %v6905 = vpack.c.bf16 %v6904, %v6904
  %v6906 = vld [vmem:[%s8] sm:$0xff]
  %v6907 = vld [vmem:[%s8 + $0x8] sm:$0xff]
  %v6908 = vld [vmem:[%s8 + $0x10] sm:$0xff]
  %v6909 = vld [vmem:[%s8 + $0x18] sm:$0xff]
  %v6910 = vld [vmem:[%s8 + $0x20] sm:$0xff]
  %v6911 = vld [vmem:[%s8 + $0x28] sm:$0xff]
  %v6912 = vld [vmem:[%s8 + $0x30] sm:$0xff]
  %v6913 = vld [vmem:[%s8 + $0x38] sm:$0xff]
  %v6914 = vld [vmem:[%s8 + $0x40] sm:$0xff]
  %v6915 = vld [vmem:[%s8 + $0x48] sm:$0xff]
  %v6916 = vld [vmem:[%s8 + $0x50] sm:$0xff]
  %v6917 = vld [vmem:[%s8 + $0x58] sm:$0xff]
  %v6918 = vld [vmem:[%s8 + $0x60] sm:$0xff]
  %v6919 = vld [vmem:[%s8 + $0x68] sm:$0xff]
  %v6920 = vld [vmem:[%s8 + $0x70] sm:$0xff]
  %v6921 = vld [vmem:[%s8 + $0x78] sm:$0xff]
  %v6922 = vld [vmem:[%s8 + $0x80] sm:$0xff]
  %v6923 = vld [vmem:[%s8 + $0x88] sm:$0xff]
  %v6924 = vld [vmem:[%s8 + $0x90] sm:$0xff]
  %v6925 = vld [vmem:[%s8 + $0x98] sm:$0xff]
  %v6926 = vld [vmem:[%s8 + $0xa0] sm:$0xff]
  %v6927 = vld [vmem:[%s8 + $0xa8] sm:$0xff]
  %v6928 = vld [vmem:[%s8 + $0xb0] sm:$0xff]
  %v6929 = vld [vmem:[%s8 + $0xb8] sm:$0xff]
  %v6930 = vld [vmem:[%s8 + $0xc0] sm:$0xff]
  %v6931 = vld [vmem:[%s8 + $0xc8] sm:$0xff]
  %v6932 = vld [vmem:[%s8 + $0xd0] sm:$0xff]
  %v6933 = vld [vmem:[%s8 + $0xd8] sm:$0xff]
  %v6934 = vld [vmem:[%s8 + $0xe0] sm:$0xff]
  %v6935 = vld [vmem:[%s8 + $0xe8] sm:$0xff]
  %v6936 = vld [vmem:[%s8 + $0xf0] sm:$0xff]
  %v6937 = vld [vmem:[%s8 + $0xf8] sm:$0xff]
  %v6970 = vunpack.c.l.b16 %v6906
  %v6971 = vunpack.c.h.b16 %v6906
  %v6972 = vunpack.c.l.b16 %v6907
  %v6973 = vunpack.c.h.b16 %v6907
  %v6974 = vunpack.c.l.b16 %v6908
  %v6975 = vunpack.c.h.b16 %v6908
  %v6976 = vunpack.c.l.b16 %v6909
  %v6977 = vunpack.c.h.b16 %v6909
  %v6978 = vunpack.c.l.b16 %v6910
  %v6979 = vunpack.c.h.b16 %v6910
  %v6980 = vunpack.c.l.b16 %v6911
  %v6981 = vunpack.c.h.b16 %v6911
  %v6982 = vunpack.c.l.b16 %v6912
  %v6983 = vunpack.c.h.b16 %v6912
  %v6984 = vunpack.c.l.b16 %v6913
  %v6985 = vunpack.c.h.b16 %v6913
  %v6986 = vunpack.c.l.b16 %v6914
  %v6987 = vunpack.c.h.b16 %v6914
  %v6988 = vunpack.c.l.b16 %v6915
  %v6989 = vunpack.c.h.b16 %v6915
  %v6990 = vunpack.c.l.b16 %v6916
  %v6991 = vunpack.c.h.b16 %v6916
  %v6992 = vunpack.c.l.b16 %v6917
  %v6993 = vunpack.c.h.b16 %v6917
  %v6994 = vunpack.c.l.b16 %v6918
  %v6995 = vunpack.c.h.b16 %v6918
  %v6996 = vunpack.c.l.b16 %v6919
  %v6997 = vunpack.c.h.b16 %v6919
  %v6998 = vunpack.c.l.b16 %v6920
  %v6999 = vunpack.c.h.b16 %v6920
  %v7000 = vunpack.c.l.b16 %v6921
  %v7001 = vunpack.c.h.b16 %v6921
  %v7002 = vunpack.c.l.b16 %v6922
  %v7003 = vunpack.c.h.b16 %v6922
  %v7004 = vunpack.c.l.b16 %v6923
  %v7005 = vunpack.c.h.b16 %v6923
  %v7006 = vunpack.c.l.b16 %v6924
  %v7007 = vunpack.c.h.b16 %v6924
  %v7008 = vunpack.c.l.b16 %v6925
  %v7009 = vunpack.c.h.b16 %v6925
  %v7010 = vunpack.c.l.b16 %v6926
  %v7011 = vunpack.c.h.b16 %v6926
  %v7012 = vunpack.c.l.b16 %v6927
  %v7013 = vunpack.c.h.b16 %v6927
  %v7014 = vunpack.c.l.b16 %v6928
  %v7015 = vunpack.c.h.b16 %v6928
  %v7016 = vunpack.c.l.b16 %v6929
  %v7017 = vunpack.c.h.b16 %v6929
  %v7018 = vunpack.c.l.b16 %v6930
  %v7019 = vunpack.c.h.b16 %v6930
  %v7020 = vunpack.c.l.b16 %v6931
  %v7021 = vunpack.c.h.b16 %v6931
  %v7022 = vunpack.c.l.b16 %v6932
  %v7023 = vunpack.c.h.b16 %v6932
  %v7024 = vunpack.c.l.b16 %v6933
  %v7025 = vunpack.c.h.b16 %v6933
  %v7026 = vunpack.c.l.b16 %v6934
  %v7027 = vunpack.c.h.b16 %v6934
  %v7028 = vunpack.c.l.b16 %v6935
  %v7029 = vunpack.c.h.b16 %v6935
  %v7030 = vunpack.c.l.b16 %v6936
  %v7031 = vunpack.c.h.b16 %v6936
  %v7032 = vunpack.c.l.b16 %v6937
  %v7033 = vunpack.c.h.b16 %v6937
  %v7034 = vpack.c.b16 %v6974, %v6970
  %v7035 = vpack.c.b16 %v6975, %v6971
  %v7036 = vpack.c.b16 %v6976, %v6972
  %v7037 = vpack.c.b16 %v6977, %v6973
  %v7038 = vpack.c.b16 %v6982, %v6978
  %v7039 = vpack.c.b16 %v6983, %v6979
  %v7040 = vpack.c.b16 %v6984, %v6980
  %v7041 = vpack.c.b16 %v6985, %v6981
  %v7042 = vpack.c.b16 %v6990, %v6986
  %v7043 = vpack.c.b16 %v6991, %v6987
  %v7044 = vpack.c.b16 %v6992, %v6988
  %v7045 = vpack.c.b16 %v6993, %v6989
  %v7046 = vpack.c.b16 %v6998, %v6994
  %v7047 = vpack.c.b16 %v6999, %v6995
  %v7048 = vpack.c.b16 %v7000, %v6996
  %v7049 = vpack.c.b16 %v7001, %v6997
  %v7050 = vpack.c.b16 %v7006, %v7002
  %v7051 = vpack.c.b16 %v7007, %v7003
  %v7052 = vpack.c.b16 %v7008, %v7004
  %v7053 = vpack.c.b16 %v7009, %v7005
  %v7054 = vpack.c.b16 %v7014, %v7010
  %v7055 = vpack.c.b16 %v7015, %v7011
  %v7056 = vpack.c.b16 %v7016, %v7012
  %v7057 = vpack.c.b16 %v7017, %v7013
  %v7058 = vpack.c.b16 %v7022, %v7018
  %v7059 = vpack.c.b16 %v7023, %v7019
  %v7060 = vpack.c.b16 %v7024, %v7020
  %v7061 = vpack.c.b16 %v7025, %v7021
  %v7062 = vpack.c.b16 %v7030, %v7026
  %v7063 = vpack.c.b16 %v7031, %v7027
  %v7064 = vpack.c.b16 %v7032, %v7028
  %v7065 = vpack.c.b16 %v7033, %v7029
  %7098 = vmatprep.subr.bf16.mxu0 %v7035
  %7099 = vmatpush1.bf16.msra.mxu0 %v7034
  %7100 = vmatprep.subr.bf16.mxu0 %v7039
  %7101 = vmatpush1.bf16.msra.mxu0 %v7038
  %7102 = vmatprep.subr.bf16.mxu0 %v7043
  %7103 = vmatpush1.bf16.msra.mxu0 %v7042
  %7104 = vmatprep.subr.bf16.mxu0 %v7047
  %7105 = vmatpush1.bf16.msra.mxu0 %v7046
  %7106 = vmatprep.subr.bf16.mxu0 %v7051
  %7107 = vmatpush1.bf16.msra.mxu0 %v7050
  %7108 = vmatprep.subr.bf16.mxu0 %v7055
  %7109 = vmatpush1.bf16.msra.mxu0 %v7054
  %7110 = vmatprep.subr.bf16.mxu0 %v7059
  %7111 = vmatpush1.bf16.msra.mxu0 %v7058
  %7112 = vmatprep.subr.bf16.mxu0 %v7063
  %7113 = vmatpush1.bf16.msra.mxu0 %v7062
  %7114 = vmatprep.subr.bf16.mxu0 0
  %7115 = vmatpush1.bf16.msra.mxu0 0
  %7116 = vmatprep.subr.bf16.mxu0 0
  %7117 = vmatpush1.bf16.msra.mxu0 0
  %7118 = vmatprep.subr.bf16.mxu0 0
  %7119 = vmatpush1.bf16.msra.mxu0 0
  %7120 = vmatprep.subr.bf16.mxu0 0
  %7121 = vmatpush1.bf16.msra.mxu0 0
  %7122 = vmatprep.subr.bf16.mxu0 0
  %7123 = vmatpush1.bf16.msra.mxu0 0
  %7124 = vmatprep.subr.bf16.mxu0 0
  %7125 = vmatpush1.bf16.msra.mxu0 0
  %7126 = vmatprep.subr.bf16.mxu0 0
  %7127 = vmatpush1.bf16.msra.mxu0 0
  %7128 = vmatprep.subr.bf16.mxu0 0
  %7129 = vmatpush1.bf16.msra.mxu0 0
  %7130 = vmatprep.mubr.bf16.mxu0 0
  %7131 = vmatmul.mubr.bf16.gmra.mrb[0].mxu0 %v6905
  %v7132 = vpop.f32.mrb[0].mxu0
  %v7133 = vadd.f32 0.0, %v7132
  %v7134 = vpop.f32.mrb[0].mxu0
  %v7135 = vadd.f32 0.0, %v7134
  %v7136 = vpop.f32.mrb[0].mxu0
  %v7137 = vpop.f32.mrb[0].mxu0
  %7138 = vdwg.mxu0
  %7139 = vmatprep.subr.bf16.mxu0 %v7037
  %7140 = vmatpush1.bf16.msra.mxu0 %v7036
  %7141 = vmatprep.subr.bf16.mxu0 %v7041
  %7142 = vmatpush1.bf16.msra.mxu0 %v7040
  %7143 = vmatprep.subr.bf16.mxu0 %v7045
  %7144 = vmatpush1.bf16.msra.mxu0 %v7044
  %7145 = vmatprep.subr.bf16.mxu0 %v7049
  %7146 = vmatpush1.bf16.msra.mxu0 %v7048
  %7147 = vmatprep.subr.bf16.mxu0 %v7053
  %7148 = vmatpush1.bf16.msra.mxu0 %v7052
  %7149 = vmatprep.subr.bf16.mxu0 %v7057
  %7150 = vmatpush1.bf16.msra.mxu0 %v7056
  %7151 = vmatprep.subr.bf16.mxu0 %v7061
  %7152 = vmatpush1.bf16.msra.mxu0 %v7060
  %7153 = vmatprep.subr.bf16.mxu0 %v7065
  %7154 = vmatpush1.bf16.msra.mxu0 %v7064
  %7155 = vmatprep.subr.bf16.mxu0 0
  %7156 = vmatpush1.bf16.msra.mxu0 0
  %7157 = vmatprep.subr.bf16.mxu0 0
  %7158 = vmatpush1.bf16.msra.mxu0 0
  %7159 = vmatprep.subr.bf16.mxu0 0
  %7160 = vmatpush1.bf16.msra.mxu0 0
  %7161 = vmatprep.subr.bf16.mxu0 0
  %7162 = vmatpush1.bf16.msra.mxu0 0
  %7163 = vmatprep.subr.bf16.mxu0 0
  %7164 = vmatpush1.bf16.msra.mxu0 0
  %7165 = vmatprep.subr.bf16.mxu0 0
  %7166 = vmatpush1.bf16.msra.mxu0 0
  %7167 = vmatprep.subr.bf16.mxu0 0
  %7168 = vmatpush1.bf16.msra.mxu0 0
  %7169 = vmatprep.subr.bf16.mxu0 0
  %7170 = vmatpush1.bf16.msra.mxu0 0
  %7171 = vmatprep.mubr.bf16.mxu0 0
  %7172 = vmatmul.mubr.bf16.gmra.mrb[0].mxu0 %v6905
  %v7173 = vpop.f32.mrb[0].mxu0
  %v7174 = vadd.f32 0.0, %v7173
  %v7175 = vpop.f32.mrb[0].mxu0
  %v7176 = vadd.f32 0.0, %v7175
  %v7177 = vpop.f32.mrb[0].mxu0
  %v7178 = vpop.f32.mrb[0].mxu0
  %7179 = vdwg.mxu0
  %v7180 = vadd.f32 %v6900, %v7133
  %v7181 = vadd.f32 %v6901, %v7135
  %v7182 = vadd.f32 %v6902, %v7174
  %v7183 = vadd.f32 %v6903, %v7176
  %v7184 = vxor.u32 %v7180, 2147483648
  %v7185 = vmul.f32 %v7184, 1.442695
  %v7186 = vpow.pop %v7185
  %v7187 = vadd.f32 %v7186, 1.0
  %v7188 = vrcp.pop %v7187
  %v7189 = vmul.f32 1.0, %v7188
  %v7190 = vxor.u32 %v7181, 2147483648
  %v7191 = vmul.f32 %v7190, 1.442695
  %v7192 = vpow.pop %v7191
  %v7193 = vadd.f32 %v7192, 1.0
  %v7194 = vrcp.pop %v7193
  %v7195 = vmul.f32 1.0, %v7194
  %v7196 = vtanh.pop %v7182
  %v7197 = vxor.u32 %v7183, 2147483648
  %v7198 = vmul.f32 %v7197, 1.442695
  %v7199 = vpow.pop %v7198
  %v7200 = vadd.f32 %v7199, 1.0
  %v7201 = vrcp.pop %v7200
  %v7202 = vmul.f32 1.0, %v7201
  %v7203 = vld [vmem:[#allocation5] sm:$0xff]
  %v7204 = vmul.f32 %v7195, %v7203
  %v7205 = vmul.f32 %v7189, %v7196
  %v7206 = vadd.f32 %v7204, %v7205
  %v7207 = vtanh.pop %v7206
  %v7208 = vmul.f32 %v7202, %v7207
  %7209 = vst [vmem:[#allocation5] sm:$0xff] %v7206
  %7210 = vst [vmem:[#allocation4] sm:$0xff] %v7208
  %v7211 = vld [vmem:[%s1400] sm:$0xff]
  %v7212 = vld [vmem:[%s1400 + $0x8] sm:$0xff]
  %v7213 = vld [vmem:[%s1400 + $0x10] sm:$0xff]
  %v7214 = vld [vmem:[%s1400 + $0x18] sm:$0xff]
  %v7215 = vld [vmem:[#allocation4] sm:$0xff]
  %v7216 = vpack.c.bf16 %v7215, %v7215
  %v7217 = vld [vmem:[%s8] sm:$0xff]
  %v7218 = vld [vmem:[%s8 + $0x8] sm:$0xff]
  %v7219 = vld [vmem:[%s8 + $0x10] sm:$0xff]
  %v7220 = vld [vmem:[%s8 + $0x18] sm:$0xff]
  %v7221 = vld [vmem:[%s8 + $0x20] sm:$0xff]
  %v7222 = vld [vmem:[%s8 + $0x28] sm:$0xff]
  %v7223 = vld [vmem:[%s8 + $0x30] sm:$0xff]
  %v7224 = vld [vmem:[%s8 + $0x38] sm:$0xff]
  %v7225 = vld [vmem:[%s8 + $0x40] sm:$0xff]
  %v7226 = vld [vmem:[%s8 + $0x48] sm:$0xff]
  %v7227 = vld [vmem:[%s8 + $0x50] sm:$0xff]
  %v7228 = vld [vmem:[%s8 + $0x58] sm:$0xff]
  %v7229 = vld [vmem:[%s8 + $0x60] sm:$0xff]
  %v7230 = vld [vmem:[%s8 + $0x68] sm:$0xff]
  %v7231 = vld [vmem:[%s8 + $0x70] sm:$0xff]
  %v7232 = vld [vmem:[%s8 + $0x78] sm:$0xff]
  %v7233 = vld [vmem:[%s8 + $0x80] sm:$0xff]
  %v7234 = vld [vmem:[%s8 + $0x88] sm:$0xff]
  %v7235 = vld [vmem:[%s8 + $0x90] sm:$0xff]
  %v7236 = vld [vmem:[%s8 + $0x98] sm:$0xff]
  %v7237 = vld [vmem:[%s8 + $0xa0] sm:$0xff]
  %v7238 = vld [vmem:[%s8 + $0xa8] sm:$0xff]
  %v7239 = vld [vmem:[%s8 + $0xb0] sm:$0xff]
  %v7240 = vld [vmem:[%s8 + $0xb8] sm:$0xff]
  %v7241 = vld [vmem:[%s8 + $0xc0] sm:$0xff]
  %v7242 = vld [vmem:[%s8 + $0xc8] sm:$0xff]
  %v7243 = vld [vmem:[%s8 + $0xd0] sm:$0xff]
  %v7244 = vld [vmem:[%s8 + $0xd8] sm:$0xff]
  %v7245 = vld [vmem:[%s8 + $0xe0] sm:$0xff]
  %v7246 = vld [vmem:[%s8 + $0xe8] sm:$0xff]
  %v7247 = vld [vmem:[%s8 + $0xf0] sm:$0xff]
  %v7248 = vld [vmem:[%s8 + $0xf8] sm:$0xff]
  %v7281 = vunpack.c.l.b16 %v7217
  %v7282 = vunpack.c.h.b16 %v7217
  %v7283 = vunpack.c.l.b16 %v7218
  %v7284 = vunpack.c.h.b16 %v7218
  %v7285 = vunpack.c.l.b16 %v7219
  %v7286 = vunpack.c.h.b16 %v7219
  %v7287 = vunpack.c.l.b16 %v7220
  %v7288 = vunpack.c.h.b16 %v7220
  %v7289 = vunpack.c.l.b16 %v7221
  %v7290 = vunpack.c.h.b16 %v7221
  %v7291 = vunpack.c.l.b16 %v7222
  %v7292 = vunpack.c.h.b16 %v7222
  %v7293 = vunpack.c.l.b16 %v7223
  %v7294 = vunpack.c.h.b16 %v7223
  %v7295 = vunpack.c.l.b16 %v7224
  %v7296 = vunpack.c.h.b16 %v7224
  %v7297 = vunpack.c.l.b16 %v7225
  %v7298 = vunpack.c.h.b16 %v7225
  %v7299 = vunpack.c.l.b16 %v7226
  %v7300 = vunpack.c.h.b16 %v7226
  %v7301 = vunpack.c.l.b16 %v7227
  %v7302 = vunpack.c.h.b16 %v7227
  %v7303 = vunpack.c.l.b16 %v7228
  %v7304 = vunpack.c.h.b16 %v7228
  %v7305 = vunpack.c.l.b16 %v7229
  %v7306 = vunpack.c.h.b16 %v7229
  %v7307 = vunpack.c.l.b16 %v7230
  %v7308 = vunpack.c.h.b16 %v7230
  %v7309 = vunpack.c.l.b16 %v7231
  %v7310 = vunpack.c.h.b16 %v7231
  %v7311 = vunpack.c.l.b16 %v7232
  %v7312 = vunpack.c.h.b16 %v7232
  %v7313 = vunpack.c.l.b16 %v7233
  %v7314 = vunpack.c.h.b16 %v7233
  %v7315 = vunpack.c.l.b16 %v7234
  %v7316 = vunpack.c.h.b16 %v7234
  %v7317 = vunpack.c.l.b16 %v7235
  %v7318 = vunpack.c.h.b16 %v7235
  %v7319 = vunpack.c.l.b16 %v7236
  %v7320 = vunpack.c.h.b16 %v7236
  %v7321 = vunpack.c.l.b16 %v7237
  %v7322 = vunpack.c.h.b16 %v7237
  %v7323 = vunpack.c.l.b16 %v7238
  %v7324 = vunpack.c.h.b16 %v7238
  %v7325 = vunpack.c.l.b16 %v7239
  %v7326 = vunpack.c.h.b16 %v7239
  %v7327 = vunpack.c.l.b16 %v7240
  %v7328 = vunpack.c.h.b16 %v7240
  %v7329 = vunpack.c.l.b16 %v7241
  %v7330 = vunpack.c.h.b16 %v7241
  %v7331 = vunpack.c.l.b16 %v7242
  %v7332 = vunpack.c.h.b16 %v7242
  %v7333 = vunpack.c.l.b16 %v7243
  %v7334 = vunpack.c.h.b16 %v7243
  %v7335 = vunpack.c.l.b16 %v7244
  %v7336 = vunpack.c.h.b16 %v7244
  %v7337 = vunpack.c.l.b16 %v7245
  %v7338 = vunpack.c.h.b16 %v7245
  %v7339 = vunpack.c.l.b16 %v7246
  %v7340 = vunpack.c.h.b16 %v7246
  %v7341 = vunpack.c.l.b16 %v7247
  %v7342 = vunpack.c.h.b16 %v7247
  %v7343 = vunpack.c.l.b16 %v7248
  %v7344 = vunpack.c.h.b16 %v7248
  %v7345 = vpack.c.b16 %v7285, %v7281
  %v7346 = vpack.c.b16 %v7286, %v7282
  %v7347 = vpack.c.b16 %v7287, %v7283
  %v7348 = vpack.c.b16 %v7288, %v7284
  %v7349 = vpack.c.b16 %v7293, %v7289
  %v7350 = vpack.c.b16 %v7294, %v7290
  %v7351 = vpack.c.b16 %v7295, %v7291
  %v7352 = vpack.c.b16 %v7296, %v7292
  %v7353 = vpack.c.b16 %v7301, %v7297
  %v7354 = vpack.c.b16 %v7302, %v7298
  %v7355 = vpack.c.b16 %v7303, %v7299
  %v7356 = vpack.c.b16 %v7304, %v7300
  %v7357 = vpack.c.b16 %v7309, %v7305
  %v7358 = vpack.c.b16 %v7310, %v7306
  %v7359 = vpack.c.b16 %v7311, %v7307
  %v7360 = vpack.c.b16 %v7312, %v7308
  %v7361 = vpack.c.b16 %v7317, %v7313
  %v7362 = vpack.c.b16 %v7318, %v7314
  %v7363 = vpack.c.b16 %v7319, %v7315
  %v7364 = vpack.c.b16 %v7320, %v7316
  %v7365 = vpack.c.b16 %v7325, %v7321
  %v7366 = vpack.c.b16 %v7326, %v7322
  %v7367 = vpack.c.b16 %v7327, %v7323
  %v7368 = vpack.c.b16 %v7328, %v7324
  %v7369 = vpack.c.b16 %v7333, %v7329
  %v7370 = vpack.c.b16 %v7334, %v7330
  %v7371 = vpack.c.b16 %v7335, %v7331
  %v7372 = vpack.c.b16 %v7336, %v7332
  %v7373 = vpack.c.b16 %v7341, %v7337
  %v7374 = vpack.c.b16 %v7342, %v7338
  %v7375 = vpack.c.b16 %v7343, %v7339
  %v7376 = vpack.c.b16 %v7344, %v7340
  %7409 = vmatprep.subr.bf16.mxu0 %v7346
  %7410 = vmatpush1.bf16.msra.mxu0 %v7345
  %7411 = vmatprep.subr.bf16.mxu0 %v7350
  %7412 = vmatpush1.bf16.msra.mxu0 %v7349
  %7413 = vmatprep.subr.bf16.mxu0 %v7354
  %7414 = vmatpush1.bf16.msra.mxu0 %v7353
  %7415 = vmatprep.subr.bf16.mxu0 %v7358
  %7416 = vmatpush1.bf16.msra.mxu0 %v7357
  %7417 = vmatprep.subr.bf16.mxu0 %v7362
  %7418 = vmatpush1.bf16.msra.mxu0 %v7361
  %7419 = vmatprep.subr.bf16.mxu0 %v7366
  %7420 = vmatpush1.bf16.msra.mxu0 %v7365
  %7421 = vmatprep.subr.bf16.mxu0 %v7370
  %7422 = vmatpush1.bf16.msra.mxu0 %v7369
  %7423 = vmatprep.subr.bf16.mxu0 %v7374
  %7424 = vmatpush1.bf16.msra.mxu0 %v7373
  %7425 = vmatprep.subr.bf16.mxu0 0
  %7426 = vmatpush1.bf16.msra.mxu0 0
  %7427 = vmatprep.subr.bf16.mxu0 0
  %7428 = vmatpush1.bf16.msra.mxu0 0
  %7429 = vmatprep.subr.bf16.mxu0 0
  %7430 = vmatpush1.bf16.msra.mxu0 0
  %7431 = vmatprep.subr.bf16.mxu0 0
  %7432 = vmatpush1.bf16.msra.mxu0 0
  %7433 = vmatprep.subr.bf16.mxu0 0
  %7434 = vmatpush1.bf16.msra.mxu0 0
  %7435 = vmatprep.subr.bf16.mxu0 0
  %7436 = vmatpush1.bf16.msra.mxu0 0
  %7437 = vmatprep.subr.bf16.mxu0 0
  %7438 = vmatpush1.bf16.msra.mxu0 0
  %7439 = vmatprep.subr.bf16.mxu0 0
  %7440 = vmatpush1.bf16.msra.mxu0 0
  %7441 = vmatprep.mubr.bf16.mxu0 0
  %7442 = vmatmul.mubr.bf16.gmra.mrb[0].mxu0 %v7216
  %v7443 = vpop.f32.mrb[0].mxu0
  %v7444 = vadd.f32 0.0, %v7443
  %v7445 = vpop.f32.mrb[0].mxu0
  %v7446 = vadd.f32 0.0, %v7445
  %v7447 = vpop.f32.mrb[0].mxu0
  %v7448 = vpop.f32.mrb[0].mxu0
  %7449 = vdwg.mxu0
  %7450 = vmatprep.subr.bf16.mxu0 %v7348
  %7451 = vmatpush1.bf16.msra.mxu0 %v7347
  %7452 = vmatprep.subr.bf16.mxu0 %v7352
  %7453 = vmatpush1.bf16.msra.mxu0 %v7351
  %7454 = vmatprep.subr.bf16.mxu0 %v7356
  %7455 = vmatpush1.bf16.msra.mxu0 %v7355
  %7456 = vmatprep.subr.bf16.mxu0 %v7360
  %7457 = vmatpush1.bf16.msra.mxu0 %v7359
  %7458 = vmatprep.subr.bf16.mxu0 %v7364
  %7459 = vmatpush1.bf16.msra.mxu0 %v7363
  %7460 = vmatprep.subr.bf16.mxu0 %v7368
  %7461 = vmatpush1.bf16.msra.mxu0 %v7367
  %7462 = vmatprep.subr.bf16.mxu0 %v7372
  %7463 = vmatpush1.bf16.msra.mxu0 %v7371
  %7464 = vmatprep.subr.bf16.mxu0 %v7376
  %7465 = vmatpush1.bf16.msra.mxu0 %v7375
  %7466 = vmatprep.subr.bf16.mxu0 0
  %7467 = vmatpush1.bf16.msra.mxu0 0
  %7468 = vmatprep.subr.bf16.mxu0 0
  %7469 = vmatpush1.bf16.msra.mxu0 0
  %7470 = vmatprep.subr.bf16.mxu0 0
  %7471 = vmatpush1.bf16.msra.mxu0 0
  %7472 = vmatprep.subr.bf16.mxu0 0
  %7473 = vmatpush1.bf16.msra.mxu0 0
  %7474 = vmatprep.subr.bf16.mxu0 0
  %7475 = vmatpush1.bf16.msra.mxu0 0
  %7476 = vmatprep.subr.bf16.mxu0 0
  %7477 = vmatpush1.bf16.msra.mxu0 0
  %7478 = vmatprep.subr.bf16.mxu0 0
  %7479 = vmatpush1.bf16.msra.mxu0 0
  %7480 = vmatprep.subr.bf16.mxu0 0
  %7481 = vmatpush1.bf16.msra.mxu0 0
  %7482 = vmatprep.mubr.bf16.mxu0 0
  %7483 = vmatmul.mubr.bf16.gmra.mrb[0].mxu0 %v7216
  %v7484 = vpop.f32.mrb[0].mxu0
  %v7485 = vadd.f32 0.0, %v7484
  %v7486 = vpop.f32.mrb[0].mxu0
  %v7487 = vadd.f32 0.0, %v7486
  %v7488 = vpop.f32.mrb[0].mxu0
  %v7489 = vpop.f32.mrb[0].mxu0
  %7490 = vdwg.mxu0
  %v7491 = vadd.f32 %v7211, %v7444
  %v7492 = vadd.f32 %v7212, %v7446
  %v7493 = vadd.f32 %v7213, %v7485
  %v7494 = vadd.f32 %v7214, %v7487
  %v7495 = vxor.u32 %v7491, 2147483648
  %v7496 = vmul.f32 %v7495, 1.442695
  %v7497 = vpow.pop %v7496
  %v7498 = vadd.f32 %v7497, 1.0
  %v7499 = vrcp.pop %v7498
  %v7500 = vmul.f32 1.0, %v7499
  %v7501 = vxor.u32 %v7492, 2147483648
  %v7502 = vmul.f32 %v7501, 1.442695
  %v7503 = vpow.pop %v7502
  %v7504 = vadd.f32 %v7503, 1.0
  %v7505 = vrcp.pop %v7504
  %v7506 = vmul.f32 1.0, %v7505
  %v7507 = vtanh.pop %v7493
  %v7508 = vxor.u32 %v7494, 2147483648
  %v7509 = vmul.f32 %v7508, 1.442695
  %v7510 = vpow.pop %v7509
  %v7511 = vadd.f32 %v7510, 1.0
  %v7512 = vrcp.pop %v7511
  %v7513 = vmul.f32 1.0, %v7512
  %v7514 = vld [vmem:[#allocation5] sm:$0xff]
  %v7515 = vmul.f32 %v7506, %v7514
  %v7516 = vmul.f32 %v7500, %v7507
  %v7517 = vadd.f32 %v7515, %v7516
  %v7518 = vtanh.pop %v7517
  %v7519 = vmul.f32 %v7513, %v7518
  %7520 = vst [vmem:[#allocation5] sm:$0xff] %v7517
  %7521 = vst [vmem:[#allocation4] sm:$0xff] %v7519
  %v7522 = vld [vmem:[%s1714] sm:$0xff]
  %v7523 = vld [vmem:[%s1714 + $0x8] sm:$0xff]
  %v7524 = vld [vmem:[%s1714 + $0x10] sm:$0xff]
  %v7525 = vld [vmem:[%s1714 + $0x18] sm:$0xff]
  %v7526 = vld [vmem:[#allocation4] sm:$0xff]
  %v7527 = vpack.c.bf16 %v7526, %v7526
  %v7528 = vld [vmem:[%s8] sm:$0xff]
  %v7529 = vld [vmem:[%s8 + $0x8] sm:$0xff]
  %v7530 = vld [vmem:[%s8 + $0x10] sm:$0xff]
  %v7531 = vld [vmem:[%s8 + $0x18] sm:$0xff]
  %v7532 = vld [vmem:[%s8 + $0x20] sm:$0xff]
  %v7533 = vld [vmem:[%s8 + $0x28] sm:$0xff]
  %v7534 = vld [vmem:[%s8 + $0x30] sm:$0xff]
  %v7535 = vld [vmem:[%s8 + $0x38] sm:$0xff]
  %v7536 = vld [vmem:[%s8 + $0x40] sm:$0xff]
  %v7537 = vld [vmem:[%s8 + $0x48] sm:$0xff]
  %v7538 = vld [vmem:[%s8 + $0x50] sm:$0xff]
  %v7539 = vld [vmem:[%s8 + $0x58] sm:$0xff]
  %v7540 = vld [vmem:[%s8 + $0x60] sm:$0xff]
  %v7541 = vld [vmem:[%s8 + $0x68] sm:$0xff]
  %v7542 = vld [vmem:[%s8 + $0x70] sm:$0xff]
  %v7543 = vld [vmem:[%s8 + $0x78] sm:$0xff]
  %v7544 = vld [vmem:[%s8 + $0x80] sm:$0xff]
  %v7545 = vld [vmem:[%s8 + $0x88] sm:$0xff]
  %v7546 = vld [vmem:[%s8 + $0x90] sm:$0xff]
  %v7547 = vld [vmem:[%s8 + $0x98] sm:$0xff]
  %v7548 = vld [vmem:[%s8 + $0xa0] sm:$0xff]
  %v7549 = vld [vmem:[%s8 + $0xa8] sm:$0xff]
  %v7550 = vld [vmem:[%s8 + $0xb0] sm:$0xff]
  %v7551 = vld [vmem:[%s8 + $0xb8] sm:$0xff]
  %v7552 = vld [vmem:[%s8 + $0xc0] sm:$0xff]
  %v7553 = vld [vmem:[%s8 + $0xc8] sm:$0xff]
  %v7554 = vld [vmem:[%s8 + $0xd0] sm:$0xff]
  %v7555 = vld [vmem:[%s8 + $0xd8] sm:$0xff]
  %v7556 = vld [vmem:[%s8 + $0xe0] sm:$0xff]
  %v7557 = vld [vmem:[%s8 + $0xe8] sm:$0xff]
  %v7558 = vld [vmem:[%s8 + $0xf0] sm:$0xff]
  %v7559 = vld [vmem:[%s8 + $0xf8] sm:$0xff]
  %v7592 = vunpack.c.l.b16 %v7528
  %v7593 = vunpack.c.h.b16 %v7528
  %v7594 = vunpack.c.l.b16 %v7529
  %v7595 = vunpack.c.h.b16 %v7529
  %v7596 = vunpack.c.l.b16 %v7530
  %v7597 = vunpack.c.h.b16 %v7530
  %v7598 = vunpack.c.l.b16 %v7531
  %v7599 = vunpack.c.h.b16 %v7531
  %v7600 = vunpack.c.l.b16 %v7532
  %v7601 = vunpack.c.h.b16 %v7532
  %v7602 = vunpack.c.l.b16 %v7533
  %v7603 = vunpack.c.h.b16 %v7533
  %v7604 = vunpack.c.l.b16 %v7534
  %v7605 = vunpack.c.h.b16 %v7534
  %v7606 = vunpack.c.l.b16 %v7535
  %v7607 = vunpack.c.h.b16 %v7535
  %v7608 = vunpack.c.l.b16 %v7536
  %v7609 = vunpack.c.h.b16 %v7536
  %v7610 = vunpack.c.l.b16 %v7537
  %v7611 = vunpack.c.h.b16 %v7537
  %v7612 = vunpack.c.l.b16 %v7538
  %v7613 = vunpack.c.h.b16 %v7538
  %v7614 = vunpack.c.l.b16 %v7539
  %v7615 = vunpack.c.h.b16 %v7539
  %v7616 = vunpack.c.l.b16 %v7540
  %v7617 = vunpack.c.h.b16 %v7540
  %v7618 = vunpack.c.l.b16 %v7541
  %v7619 = vunpack.c.h.b16 %v7541
  %v7620 = vunpack.c.l.b16 %v7542
  %v7621 = vunpack.c.h.b16 %v7542
  %v7622 = vunpack.c.l.b16 %v7543
  %v7623 = vunpack.c.h.b16 %v7543
  %v7624 = vunpack.c.l.b16 %v7544
  %v7625 = vunpack.c.h.b16 %v7544
  %v7626 = vunpack.c.l.b16 %v7545
  %v7627 = vunpack.c.h.b16 %v7545
  %v7628 = vunpack.c.l.b16 %v7546
  %v7629 = vunpack.c.h.b16 %v7546
  %v7630 = vunpack.c.l.b16 %v7547
  %v7631 = vunpack.c.h.b16 %v7547
  %v7632 = vunpack.c.l.b16 %v7548
  %v7633 = vunpack.c.h.b16 %v7548
  %v7634 = vunpack.c.l.b16 %v7549
  %v7635 = vunpack.c.h.b16 %v7549
  %v7636 = vunpack.c.l.b16 %v7550
  %v7637 = vunpack.c.h.b16 %v7550
  %v7638 = vunpack.c.l.b16 %v7551
  %v7639 = vunpack.c.h.b16 %v7551
  %v7640 = vunpack.c.l.b16 %v7552
  %v7641 = vunpack.c.h.b16 %v7552
  %v7642 = vunpack.c.l.b16 %v7553
  %v7643 = vunpack.c.h.b16 %v7553
  %v7644 = vunpack.c.l.b16 %v7554
  %v7645 = vunpack.c.h.b16 %v7554
  %v7646 = vunpack.c.l.b16 %v7555
  %v7647 = vunpack.c.h.b16 %v7555
  %v7648 = vunpack.c.l.b16 %v7556
  %v7649 = vunpack.c.h.b16 %v7556
  %v7650 = vunpack.c.l.b16 %v7557
  %v7651 = vunpack.c.h.b16 %v7557
  %v7652 = vunpack.c.l.b16 %v7558
  %v7653 = vunpack.c.h.b16 %v7558
  %v7654 = vunpack.c.l.b16 %v7559
  %v7655 = vunpack.c.h.b16 %v7559
  %v7656 = vpack.c.b16 %v7596, %v7592
  %v7657 = vpack.c.b16 %v7597, %v7593
  %v7658 = vpack.c.b16 %v7598, %v7594
  %v7659 = vpack.c.b16 %v7599, %v7595
  %v7660 = vpack.c.b16 %v7604, %v7600
  %v7661 = vpack.c.b16 %v7605, %v7601
  %v7662 = vpack.c.b16 %v7606, %v7602
  %v7663 = vpack.c.b16 %v7607, %v7603
  %v7664 = vpack.c.b16 %v7612, %v7608
  %v7665 = vpack.c.b16 %v7613, %v7609
  %v7666 = vpack.c.b16 %v7614, %v7610
  %v7667 = vpack.c.b16 %v7615, %v7611
  %v7668 = vpack.c.b16 %v7620, %v7616
  %v7669 = vpack.c.b16 %v7621, %v7617
  %v7670 = vpack.c.b16 %v7622, %v7618
  %v7671 = vpack.c.b16 %v7623, %v7619
  %v7672 = vpack.c.b16 %v7628, %v7624
  %v7673 = vpack.c.b16 %v7629, %v7625
  %v7674 = vpack.c.b16 %v7630, %v7626
  %v7675 = vpack.c.b16 %v7631, %v7627
  %v7676 = vpack.c.b16 %v7636, %v7632
  %v7677 = vpack.c.b16 %v7637, %v7633
  %v7678 = vpack.c.b16 %v7638, %v7634
  %v7679 = vpack.c.b16 %v7639, %v7635
  %v7680 = vpack.c.b16 %v7644, %v7640
  %v7681 = vpack.c.b16 %v7645, %v7641
  %v7682 = vpack.c.b16 %v7646, %v7642
  %v7683 = vpack.c.b16 %v7647, %v7643
  %v7684 = vpack.c.b16 %v7652, %v7648
  %v7685 = vpack.c.b16 %v7653, %v7649
  %v7686 = vpack.c.b16 %v7654, %v7650
  %v7687 = vpack.c.b16 %v7655, %v7651
  %7720 = vmatprep.subr.bf16.mxu0 %v7657
  %7721 = vmatpush1.bf16.msra.mxu0 %v7656
  %7722 = vmatprep.subr.bf16.mxu0 %v7661
  %7723 = vmatpush1.bf16.msra.mxu0 %v7660
  %7724 = vmatprep.subr.bf16.mxu0 %v7665
  %7725 = vmatpush1.bf16.msra.mxu0 %v7664
  %7726 = vmatprep.subr.bf16.mxu0 %v7669
  %7727 = vmatpush1.bf16.msra.mxu0 %v7668
  %7728 = vmatprep.subr.bf16.mxu0 %v7673
  %7729 = vmatpush1.bf16.msra.mxu0 %v7672
  %7730 = vmatprep.subr.bf16.mxu0 %v7677
  %7731 = vmatpush1.bf16.msra.mxu0 %v7676
  %7732 = vmatprep.subr.bf16.mxu0 %v7681
  %7733 = vmatpush1.bf16.msra.mxu0 %v7680
  %7734 = vmatprep.subr.bf16.mxu0 %v7685
  %7735 = vmatpush1.bf16.msra.mxu0 %v7684
  %7736 = vmatprep.subr.bf16.mxu0 0
  %7737 = vmatpush1.bf16.msra.mxu0 0
  %7738 = vmatprep.subr.bf16.mxu0 0
  %7739 = vmatpush1.bf16.msra.mxu0 0
  %7740 = vmatprep.subr.bf16.mxu0 0
  %7741 = vmatpush1.bf16.msra.mxu0 0
  %7742 = vmatprep.subr.bf16.mxu0 0
  %7743 = vmatpush1.bf16.msra.mxu0 0
  %7744 = vmatprep.subr.bf16.mxu0 0
  %7745 = vmatpush1.bf16.msra.mxu0 0
  %7746 = vmatprep.subr.bf16.mxu0 0
  %7747 = vmatpush1.bf16.msra.mxu0 0
  %7748 = vmatprep.subr.bf16.mxu0 0
  %7749 = vmatpush1.bf16.msra.mxu0 0
  %7750 = vmatprep.subr.bf16.mxu0 0
  %7751 = vmatpush1.bf16.msra.mxu0 0
  %7752 = vmatprep.mubr.bf16.mxu0 0
  %7753 = vmatmul.mubr.bf16.gmra.mrb[0].mxu0 %v7527
  %v7754 = vpop.f32.mrb[0].mxu0
  %v7755 = vadd.f32 0.0, %v7754
  %v7756 = vpop.f32.mrb[0].mxu0
  %v7757 = vadd.f32 0.0, %v7756
  %v7758 = vpop.f32.mrb[0].mxu0
  %v7759 = vpop.f32.mrb[0].mxu0
  %7760 = vdwg.mxu0
  %7761 = vmatprep.subr.bf16.mxu0 %v7659
  %7762 = vmatpush1.bf16.msra.mxu0 %v7658
  %7763 = vmatprep.subr.bf16.mxu0 %v7663
  %7764 = vmatpush1.bf16.msra.mxu0 %v7662
  %7765 = vmatprep.subr.bf16.mxu0 %v7667
  %7766 = vmatpush1.bf16.msra.mxu0 %v7666
  %7767 = vmatprep.subr.bf16.mxu0 %v7671
  %7768 = vmatpush1.bf16.msra.mxu0 %v7670
  %7769 = vmatprep.subr.bf16.mxu0 %v7675
  %7770 = vmatpush1.bf16.msra.mxu0 %v7674
  %7771 = vmatprep.subr.bf16.mxu0 %v7679
  %7772 = vmatpush1.bf16.msra.mxu0 %v7678
  %7773 = vmatprep.subr.bf16.mxu0 %v7683
  %7774 = vmatpush1.bf16.msra.mxu0 %v7682
  %7775 = vmatprep.subr.bf16.mxu0 %v7687
  %7776 = vmatpush1.bf16.msra.mxu0 %v7686
  %7777 = vmatprep.subr.bf16.mxu0 0
  %7778 = vmatpush1.bf16.msra.mxu0 0
  %7779 = vmatprep.subr.bf16.mxu0 0
  %7780 = vmatpush1.bf16.msra.mxu0 0
  %7781 = vmatprep.subr.bf16.mxu0 0
  %7782 = vmatpush1.bf16.msra.mxu0 0
  %7783 = vmatprep.subr.bf16.mxu0 0
  %7784 = vmatpush1.bf16.msra.mxu0 0
  %7785 = vmatprep.subr.bf16.mxu0 0
  %7786 = vmatpush1.bf16.msra.mxu0 0
  %7787 = vmatprep.subr.bf16.mxu0 0
  %7788 = vmatpush1.bf16.msra.mxu0 0
  %7789 = vmatprep.subr.bf16.mxu0 0
  %7790 = vmatpush1.bf16.msra.mxu0 0
  %7791 = vmatprep.subr.bf16.mxu0 0
  %7792 = vmatpush1.bf16.msra.mxu0 0
  %7793 = vmatprep.mubr.bf16.mxu0 0
  %7794 = vmatmul.mubr.bf16.gmra.mrb[0].mxu0 %v7527
  %v7795 = vpop.f32.mrb[0].mxu0
  %v7796 = vadd.f32 0.0, %v7795
  %v7797 = vpop.f32.mrb[0].mxu0
  %v7798 = vadd.f32 0.0, %v7797
  %v7799 = vpop.f32.mrb[0].mxu0
  %v7800 = vpop.f32.mrb[0].mxu0
  %7801 = vdwg.mxu0
  %v7802 = vadd.f32 %v7522, %v7755
  %v7803 = vadd.f32 %v7523, %v7757
  %v7804 = vadd.f32 %v7524, %v7796
  %v7805 = vadd.f32 %v7525, %v7798
  %v7806 = vxor.u32 %v7802, 2147483648
  %v7807 = vmul.f32 %v7806, 1.442695
  %v7808 = vpow.pop %v7807
  %v7809 = vadd.f32 %v7808, 1.0
  %v7810 = vrcp.pop %v7809
  %v7811 = vmul.f32 1.0, %v7810
  %v7812 = vxor.u32 %v7803, 2147483648
  %v7813 = vmul.f32 %v7812, 1.442695
  %v7814 = vpow.pop %v7813
  %v7815 = vadd.f32 %v7814, 1.0
  %v7816 = vrcp.pop %v7815
  %v7817 = vmul.f32 1.0, %v7816
  %v7818 = vtanh.pop %v7804
  %v7819 = vxor.u32 %v7805, 2147483648
  %v7820 = vmul.f32 %v7819, 1.442695
  %v7821 = vpow.pop %v7820
  %v7822 = vadd.f32 %v7821, 1.0
  %v7823 = vrcp.pop %v7822
  %v7824 = vmul.f32 1.0, %v7823
  %v7825 = vld [vmem:[#allocation5] sm:$0xff]
  %v7826 = vmul.f32 %v7817, %v7825
  %v7827 = vmul.f32 %v7811, %v7818
  %v7828 = vadd.f32 %v7826, %v7827
  %v7829 = vtanh.pop %v7828
  %v7830 = vmul.f32 %v7824, %v7829
  %7831 = vst [vmem:[#allocation5] sm:$0xff] %v7828
  %7832 = vst [vmem:[#allocation4] sm:$0xff] %v7830
  %v7833 = vld [vmem:[%s2028] sm:$0xff]
  %v7834 = vld [vmem:[%s2028 + $0x8] sm:$0xff]
  %v7835 = vld [vmem:[%s2028 + $0x10] sm:$0xff]
  %v7836 = vld [vmem:[%s2028 + $0x18] sm:$0xff]
  %v7837 = vld [vmem:[#allocation4] sm:$0xff]
  %v7838 = vpack.c.bf16 %v7837, %v7837
  %v7839 = vld [vmem:[%s8] sm:$0xff]
  %v7840 = vld [vmem:[%s8 + $0x8] sm:$0xff]
  %v7841 = vld [vmem:[%s8 + $0x10] sm:$0xff]
  %v7842 = vld [vmem:[%s8 + $0x18] sm:$0xff]
  %v7843 = vld [vmem:[%s8 + $0x20] sm:$0xff]
  %v7844 = vld [vmem:[%s8 + $0x28] sm:$0xff]
  %v7845 = vld [vmem:[%s8 + $0x30] sm:$0xff]
  %v7846 = vld [vmem:[%s8 + $0x38] sm:$0xff]
  %v7847 = vld [vmem:[%s8 + $0x40] sm:$0xff]
  %v7848 = vld [vmem:[%s8 + $0x48] sm:$0xff]
  %v7849 = vld [vmem:[%s8 + $0x50] sm:$0xff]
  %v7850 = vld [vmem:[%s8 + $0x58] sm:$0xff]
  %v7851 = vld [vmem:[%s8 + $0x60] sm:$0xff]
  %v7852 = vld [vmem:[%s8 + $0x68] sm:$0xff]
  %v7853 = vld [vmem:[%s8 + $0x70] sm:$0xff]
  %v7854 = vld [vmem:[%s8 + $0x78] sm:$0xff]
  %v7855 = vld [vmem:[%s8 + $0x80] sm:$0xff]
  %v7856 = vld [vmem:[%s8 + $0x88] sm:$0xff]
  %v7857 = vld [vmem:[%s8 + $0x90] sm:$0xff]
  %v7858 = vld [vmem:[%s8 + $0x98] sm:$0xff]
  %v7859 = vld [vmem:[%s8 + $0xa0] sm:$0xff]
  %v7860 = vld [vmem:[%s8 + $0xa8] sm:$0xff]
  %v7861 = vld [vmem:[%s8 + $0xb0] sm:$0xff]
  %v7862 = vld [vmem:[%s8 + $0xb8] sm:$0xff]
  %v7863 = vld [vmem:[%s8 + $0xc0] sm:$0xff]
  %v7864 = vld [vmem:[%s8 + $0xc8] sm:$0xff]
  %v7865 = vld [vmem:[%s8 + $0xd0] sm:$0xff]
  %v7866 = vld [vmem:[%s8 + $0xd8] sm:$0xff]
  %v7867 = vld [vmem:[%s8 + $0xe0] sm:$0xff]
  %v7868 = vld [vmem:[%s8 + $0xe8] sm:$0xff]
  %v7869 = vld [vmem:[%s8 + $0xf0] sm:$0xff]
  %v7870 = vld [vmem:[%s8 + $0xf8] sm:$0xff]
  %v7903 = vunpack.c.l.b16 %v7839
  %v7904 = vunpack.c.h.b16 %v7839
  %v7905 = vunpack.c.l.b16 %v7840
  %v7906 = vunpack.c.h.b16 %v7840
  %v7907 = vunpack.c.l.b16 %v7841
  %v7908 = vunpack.c.h.b16 %v7841
  %v7909 = vunpack.c.l.b16 %v7842
  %v7910 = vunpack.c.h.b16 %v7842
  %v7911 = vunpack.c.l.b16 %v7843
  %v7912 = vunpack.c.h.b16 %v7843
  %v7913 = vunpack.c.l.b16 %v7844
  %v7914 = vunpack.c.h.b16 %v7844
  %v7915 = vunpack.c.l.b16 %v7845
  %v7916 = vunpack.c.h.b16 %v7845
  %v7917 = vunpack.c.l.b16 %v7846
  %v7918 = vunpack.c.h.b16 %v7846
  %v7919 = vunpack.c.l.b16 %v7847
  %v7920 = vunpack.c.h.b16 %v7847
  %v7921 = vunpack.c.l.b16 %v7848
  %v7922 = vunpack.c.h.b16 %v7848
  %v7923 = vunpack.c.l.b16 %v7849
  %v7924 = vunpack.c.h.b16 %v7849
  %v7925 = vunpack.c.l.b16 %v7850
  %v7926 = vunpack.c.h.b16 %v7850
  %v7927 = vunpack.c.l.b16 %v7851
  %v7928 = vunpack.c.h.b16 %v7851
  %v7929 = vunpack.c.l.b16 %v7852
  %v7930 = vunpack.c.h.b16 %v7852
  %v7931 = vunpack.c.l.b16 %v7853
  %v7932 = vunpack.c.h.b16 %v7853
  %v7933 = vunpack.c.l.b16 %v7854
  %v7934 = vunpack.c.h.b16 %v7854
  %v7935 = vunpack.c.l.b16 %v7855
  %v7936 = vunpack.c.h.b16 %v7855
  %v7937 = vunpack.c.l.b16 %v7856
  %v7938 = vunpack.c.h.b16 %v7856
  %v7939 = vunpack.c.l.b16 %v7857
  %v7940 = vunpack.c.h.b16 %v7857
  %v7941 = vunpack.c.l.b16 %v7858
  %v7942 = vunpack.c.h.b16 %v7858
  %v7943 = vunpack.c.l.b16 %v7859
  %v7944 = vunpack.c.h.b16 %v7859
  %v7945 = vunpack.c.l.b16 %v7860
  %v7946 = vunpack.c.h.b16 %v7860
  %v7947 = vunpack.c.l.b16 %v7861
  %v7948 = vunpack.c.h.b16 %v7861
  %v7949 = vunpack.c.l.b16 %v7862
  %v7950 = vunpack.c.h.b16 %v7862
  %v7951 = vunpack.c.l.b16 %v7863
  %v7952 = vunpack.c.h.b16 %v7863
  %v7953 = vunpack.c.l.b16 %v7864
  %v7954 = vunpack.c.h.b16 %v7864
  %v7955 = vunpack.c.l.b16 %v7865
  %v7956 = vunpack.c.h.b16 %v7865
  %v7957 = vunpack.c.l.b16 %v7866
  %v7958 = vunpack.c.h.b16 %v7866
  %v7959 = vunpack.c.l.b16 %v7867
  %v7960 = vunpack.c.h.b16 %v7867
  %v7961 = vunpack.c.l.b16 %v7868
  %v7962 = vunpack.c.h.b16 %v7868
  %v7963 = vunpack.c.l.b16 %v7869
  %v7964 = vunpack.c.h.b16 %v7869
  %v7965 = vunpack.c.l.b16 %v7870
  %v7966 = vunpack.c.h.b16 %v7870
  %v7967 = vpack.c.b16 %v7907, %v7903
  %v7968 = vpack.c.b16 %v7908, %v7904
  %v7969 = vpack.c.b16 %v7909, %v7905
  %v7970 = vpack.c.b16 %v7910, %v7906
  %v7971 = vpack.c.b16 %v7915, %v7911
  %v7972 = vpack.c.b16 %v7916, %v7912
  %v7973 = vpack.c.b16 %v7917, %v7913
  %v7974 = vpack.c.b16 %v7918, %v7914
  %v7975 = vpack.c.b16 %v7923, %v7919
  %v7976 = vpack.c.b16 %v7924, %v7920
  %v7977 = vpack.c.b16 %v7925, %v7921
  %v7978 = vpack.c.b16 %v7926, %v7922
  %v7979 = vpack.c.b16 %v7931, %v7927
  %v7980 = vpack.c.b16 %v7932, %v7928
  %v7981 = vpack.c.b16 %v7933, %v7929
  %v7982 = vpack.c.b16 %v7934, %v7930
  %v7983 = vpack.c.b16 %v7939, %v7935
  %v7984 = vpack.c.b16 %v7940, %v7936
  %v7985 = vpack.c.b16 %v7941, %v7937
  %v7986 = vpack.c.b16 %v7942, %v7938
  %v7987 = vpack.c.b16 %v7947, %v7943
  %v7988 = vpack.c.b16 %v7948, %v7944
  %v7989 = vpack.c.b16 %v7949, %v7945
  %v7990 = vpack.c.b16 %v7950, %v7946
  %v7991 = vpack.c.b16 %v7955, %v7951
  %v7992 = vpack.c.b16 %v7956, %v7952
  %v7993 = vpack.c.b16 %v7957, %v7953
  %v7994 = vpack.c.b16 %v7958, %v7954
  %v7995 = vpack.c.b16 %v7963, %v7959
  %v7996 = vpack.c.b16 %v7964, %v7960
  %v7997 = vpack.c.b16 %v7965, %v7961
  %v7998 = vpack.c.b16 %v7966, %v7962
  %8031 = vmatprep.subr.bf16.mxu0 %v7968
  %8032 = vmatpush1.bf16.msra.mxu0 %v7967
  %8033 = vmatprep.subr.bf16.mxu0 %v7972
  %8034 = vmatpush1.bf16.msra.mxu0 %v7971
  %8035 = vmatprep.subr.bf16.mxu0 %v7976
  %8036 = vmatpush1.bf16.msra.mxu0 %v7975
  %8037 = vmatprep.subr.bf16.mxu0 %v7980
  %8038 = vmatpush1.bf16.msra.mxu0 %v7979
  %8039 = vmatprep.subr.bf16.mxu0 %v7984
  %8040 = vmatpush1.bf16.msra.mxu0 %v7983
  %8041 = vmatprep.subr.bf16.mxu0 %v7988
  %8042 = vmatpush1.bf16.msra.mxu0 %v7987
  %8043 = vmatprep.subr.bf16.mxu0 %v7992
  %8044 = vmatpush1.bf16.msra.mxu0 %v7991
  %8045 = vmatprep.subr.bf16.mxu0 %v7996
  %8046 = vmatpush1.bf16.msra.mxu0 %v7995
  %8047 = vmatprep.subr.bf16.mxu0 0
  %8048 = vmatpush1.bf16.msra.mxu0 0
  %8049 = vmatprep.subr.bf16.mxu0 0
  %8050 = vmatpush1.bf16.msra.mxu0 0
  %8051 = vmatprep.subr.bf16.mxu0 0
  %8052 = vmatpush1.bf16.msra.mxu0 0
  %8053 = vmatprep.subr.bf16.mxu0 0
  %8054 = vmatpush1.bf16.msra.mxu0 0
  %8055 = vmatprep.subr.bf16.mxu0 0
  %8056 = vmatpush1.bf16.msra.mxu0 0
  %8057 = vmatprep.subr.bf16.mxu0 0
  %8058 = vmatpush1.bf16.msra.mxu0 0
  %8059 = vmatprep.subr.bf16.mxu0 0
  %8060 = vmatpush1.bf16.msra.mxu0 0
  %8061 = vmatprep.subr.bf16.mxu0 0
  %8062 = vmatpush1.bf16.msra.mxu0 0
  %8063 = vmatprep.mubr.bf16.mxu0 0
  %8064 = vmatmul.mubr.bf16.gmra.mrb[0].mxu0 %v7838
  %v8065 = vpop.f32.mrb[0].mxu0
  %v8066 = vadd.f32 0.0, %v8065
  %v8067 = vpop.f32.mrb[0].mxu0
  %v8068 = vadd.f32 0.0, %v8067
  %v8069 = vpop.f32.mrb[0].mxu0
  %v8070 = vpop.f32.mrb[0].mxu0
  %8071 = vdwg.mxu0
  %8072 = vmatprep.subr.bf16.mxu0 %v7970
  %8073 = vmatpush1.bf16.msra.mxu0 %v7969
  %8074 = vmatprep.subr.bf16.mxu0 %v7974
  %8075 = vmatpush1.bf16.msra.mxu0 %v7973
  %8076 = vmatprep.subr.bf16.mxu0 %v7978
  %8077 = vmatpush1.bf16.msra.mxu0 %v7977
  %8078 = vmatprep.subr.bf16.mxu0 %v7982
  %8079 = vmatpush1.bf16.msra.mxu0 %v7981
  %8080 = vmatprep.subr.bf16.mxu0 %v7986
  %8081 = vmatpush1.bf16.msra.mxu0 %v7985
  %8082 = vmatprep.subr.bf16.mxu0 %v7990
  %8083 = vmatpush1.bf16.msra.mxu0 %v7989
  %8084 = vmatprep.subr.bf16.mxu0 %v7994
  %8085 = vmatpush1.bf16.msra.mxu0 %v7993
  %8086 = vmatprep.subr.bf16.mxu0 %v7998
  %8087 = vmatpush1.bf16.msra.mxu0 %v7997
  %8088 = vmatprep.subr.bf16.mxu0 0
  %8089 = vmatpush1.bf16.msra.mxu0 0
  %8090 = vmatprep.subr.bf16.mxu0 0
  %8091 = vmatpush1.bf16.msra.mxu0 0
  %8092 = vmatprep.subr.bf16.mxu0 0
  %8093 = vmatpush1.bf16.msra.mxu0 0
  %8094 = vmatprep.subr.bf16.mxu0 0
  %8095 = vmatpush1.bf16.msra.mxu0 0
  %8096 = vmatprep.subr.bf16.mxu0 0
  %8097 = vmatpush1.bf16.msra.mxu0 0
  %8098 = vmatprep.subr.bf16.mxu0 0
  %8099 = vmatpush1.bf16.msra.mxu0 0
  %8100 = vmatprep.subr.bf16.mxu0 0
  %8101 = vmatpush1.bf16.msra.mxu0 0
  %8102 = vmatprep.subr.bf16.mxu0 0
  %8103 = vmatpush1.bf16.msra.mxu0 0
  %8104 = vmatprep.mubr.bf16.mxu0 0
  %8105 = vmatmul.mubr.bf16.gmra.mrb[0].mxu0 %v7838
  %v8106 = vpop.f32.mrb[0].mxu0
  %v8107 = vadd.f32 0.0, %v8106
  %v8108 = vpop.f32.mrb[0].mxu0
  %v8109 = vadd.f32 0.0, %v8108
  %v8110 = vpop.f32.mrb[0].mxu0
  %v8111 = vpop.f32.mrb[0].mxu0
  %8112 = vdwg.mxu0
  %v8113 = vadd.f32 %v7833, %v8066
  %v8114 = vadd.f32 %v7834, %v8068
  %v8115 = vadd.f32 %v7835, %v8107
  %v8116 = vadd.f32 %v7836, %v8109
  %v8117 = vxor.u32 %v8113, 2147483648
  %v8118 = vmul.f32 %v8117, 1.442695
  %v8119 = vpow.pop %v8118
  %v8120 = vadd.f32 %v8119, 1.0
  %v8121 = vrcp.pop %v8120
  %v8122 = vmul.f32 1.0, %v8121
  %v8123 = vxor.u32 %v8114, 2147483648
  %v8124 = vmul.f32 %v8123, 1.442695
  %v8125 = vpow.pop %v8124
  %v8126 = vadd.f32 %v8125, 1.0
  %v8127 = vrcp.pop %v8126
  %v8128 = vmul.f32 1.0, %v8127
  %v8129 = vtanh.pop %v8115
  %v8130 = vxor.u32 %v8116, 2147483648
  %v8131 = vmul.f32 %v8130, 1.442695
  %v8132 = vpow.pop %v8131
  %v8133 = vadd.f32 %v8132, 1.0
  %v8134 = vrcp.pop %v8133
  %v8135 = vmul.f32 1.0, %v8134
  %v8136 = vld [vmem:[#allocation5] sm:$0xff]
  %v8137 = vmul.f32 %v8128, %v8136
  %v8138 = vmul.f32 %v8122, %v8129
  %v8139 = vadd.f32 %v8137, %v8138
  %v8140 = vtanh.pop %v8139
  %v8141 = vmul.f32 %v8135, %v8140
  %8142 = vst [vmem:[#allocation5] sm:$0xff] %v8139
  %8143 = vst [vmem:[#allocation4] sm:$0xff] %v8141
  %v8144 = vld [vmem:[%s2342] sm:$0xff]
  %v8145 = vld [vmem:[%s2342 + $0x8] sm:$0xff]
  %v8146 = vld [vmem:[%s2342 + $0x10] sm:$0xff]
  %v8147 = vld [vmem:[%s2342 + $0x18] sm:$0xff]
  %v8148 = vld [vmem:[#allocation4] sm:$0xff]
  %v8149 = vpack.c.bf16 %v8148, %v8148
  %v8150 = vld [vmem:[%s8] sm:$0xff]
  %v8151 = vld [vmem:[%s8 + $0x8] sm:$0xff]
  %v8152 = vld [vmem:[%s8 + $0x10] sm:$0xff]
  %v8153 = vld [vmem:[%s8 + $0x18] sm:$0xff]
  %v8154 = vld [vmem:[%s8 + $0x20] sm:$0xff]
  %v8155 = vld [vmem:[%s8 + $0x28] sm:$0xff]
  %v8156 = vld [vmem:[%s8 + $0x30] sm:$0xff]
  %v8157 = vld [vmem:[%s8 + $0x38] sm:$0xff]
  %v8158 = vld [vmem:[%s8 + $0x40] sm:$0xff]
  %v8159 = vld [vmem:[%s8 + $0x48] sm:$0xff]
  %v8160 = vld [vmem:[%s8 + $0x50] sm:$0xff]
  %v8161 = vld [vmem:[%s8 + $0x58] sm:$0xff]
  %v8162 = vld [vmem:[%s8 + $0x60] sm:$0xff]
  %v8163 = vld [vmem:[%s8 + $0x68] sm:$0xff]
  %v8164 = vld [vmem:[%s8 + $0x70] sm:$0xff]
  %v8165 = vld [vmem:[%s8 + $0x78] sm:$0xff]
  %v8166 = vld [vmem:[%s8 + $0x80] sm:$0xff]
  %v8167 = vld [vmem:[%s8 + $0x88] sm:$0xff]
  %v8168 = vld [vmem:[%s8 + $0x90] sm:$0xff]
  %v8169 = vld [vmem:[%s8 + $0x98] sm:$0xff]
  %v8170 = vld [vmem:[%s8 + $0xa0] sm:$0xff]
  %v8171 = vld [vmem:[%s8 + $0xa8] sm:$0xff]
  %v8172 = vld [vmem:[%s8 + $0xb0] sm:$0xff]
  %v8173 = vld [vmem:[%s8 + $0xb8] sm:$0xff]
  %v8174 = vld [vmem:[%s8 + $0xc0] sm:$0xff]
  %v8175 = vld [vmem:[%s8 + $0xc8] sm:$0xff]
  %v8176 = vld [vmem:[%s8 + $0xd0] sm:$0xff]
  %v8177 = vld [vmem:[%s8 + $0xd8] sm:$0xff]
  %v8178 = vld [vmem:[%s8 + $0xe0] sm:$0xff]
  %v8179 = vld [vmem:[%s8 + $0xe8] sm:$0xff]
  %v8180 = vld [vmem:[%s8 + $0xf0] sm:$0xff]
  %v8181 = vld [vmem:[%s8 + $0xf8] sm:$0xff]
  %v8214 = vunpack.c.l.b16 %v8150
  %v8215 = vunpack.c.h.b16 %v8150
  %v8216 = vunpack.c.l.b16 %v8151
  %v8217 = vunpack.c.h.b16 %v8151
  %v8218 = vunpack.c.l.b16 %v8152
  %v8219 = vunpack.c.h.b16 %v8152
  %v8220 = vunpack.c.l.b16 %v8153
  %v8221 = vunpack.c.h.b16 %v8153
  %v8222 = vunpack.c.l.b16 %v8154
  %v8223 = vunpack.c.h.b16 %v8154
  %v8224 = vunpack.c.l.b16 %v8155
  %v8225 = vunpack.c.h.b16 %v8155
  %v8226 = vunpack.c.l.b16 %v8156
  %v8227 = vunpack.c.h.b16 %v8156
  %v8228 = vunpack.c.l.b16 %v8157
  %v8229 = vunpack.c.h.b16 %v8157
  %v8230 = vunpack.c.l.b16 %v8158
  %v8231 = vunpack.c.h.b16 %v8158
  %v8232 = vunpack.c.l.b16 %v8159
  %v8233 = vunpack.c.h.b16 %v8159
  %v8234 = vunpack.c.l.b16 %v8160
  %v8235 = vunpack.c.h.b16 %v8160
  %v8236 = vunpack.c.l.b16 %v8161
  %v8237 = vunpack.c.h.b16 %v8161
  %v8238 = vunpack.c.l.b16 %v8162
  %v8239 = vunpack.c.h.b16 %v8162
  %v8240 = vunpack.c.l.b16 %v8163
  %v8241 = vunpack.c.h.b16 %v8163
  %v8242 = vunpack.c.l.b16 %v8164
  %v8243 = vunpack.c.h.b16 %v8164
  %v8244 = vunpack.c.l.b16 %v8165
  %v8245 = vunpack.c.h.b16 %v8165
  %v8246 = vunpack.c.l.b16 %v8166
  %v8247 = vunpack.c.h.b16 %v8166
  %v8248 = vunpack.c.l.b16 %v8167
  %v8249 = vunpack.c.h.b16 %v8167
  %v8250 = vunpack.c.l.b16 %v8168
  %v8251 = vunpack.c.h.b16 %v8168
  %v8252 = vunpack.c.l.b16 %v8169
  %v8253 = vunpack.c.h.b16 %v8169
  %v8254 = vunpack.c.l.b16 %v8170
  %v8255 = vunpack.c.h.b16 %v8170
  %v8256 = vunpack.c.l.b16 %v8171
  %v8257 = vunpack.c.h.b16 %v8171
  %v8258 = vunpack.c.l.b16 %v8172
  %v8259 = vunpack.c.h.b16 %v8172
  %v8260 = vunpack.c.l.b16 %v8173
  %v8261 = vunpack.c.h.b16 %v8173
  %v8262 = vunpack.c.l.b16 %v8174
  %v8263 = vunpack.c.h.b16 %v8174
  %v8264 = vunpack.c.l.b16 %v8175
  %v8265 = vunpack.c.h.b16 %v8175
  %v8266 = vunpack.c.l.b16 %v8176
  %v8267 = vunpack.c.h.b16 %v8176
  %v8268 = vunpack.c.l.b16 %v8177
  %v8269 = vunpack.c.h.b16 %v8177
  %v8270 = vunpack.c.l.b16 %v8178
  %v8271 = vunpack.c.h.b16 %v8178
  %v8272 = vunpack.c.l.b16 %v8179
  %v8273 = vunpack.c.h.b16 %v8179
  %v8274 = vunpack.c.l.b16 %v8180
  %v8275 = vunpack.c.h.b16 %v8180
  %v8276 = vunpack.c.l.b16 %v8181
  %v8277 = vunpack.c.h.b16 %v8181
  %v8278 = vpack.c.b16 %v8218, %v8214
  %v8279 = vpack.c.b16 %v8219, %v8215
  %v8280 = vpack.c.b16 %v8220, %v8216
  %v8281 = vpack.c.b16 %v8221, %v8217
  %v8282 = vpack.c.b16 %v8226, %v8222
  %v8283 = vpack.c.b16 %v8227, %v8223
  %v8284 = vpack.c.b16 %v8228, %v8224
  %v8285 = vpack.c.b16 %v8229, %v8225
  %v8286 = vpack.c.b16 %v8234, %v8230
  %v8287 = vpack.c.b16 %v8235, %v8231
  %v8288 = vpack.c.b16 %v8236, %v8232
  %v8289 = vpack.c.b16 %v8237, %v8233
  %v8290 = vpack.c.b16 %v8242, %v8238
  %v8291 = vpack.c.b16 %v8243, %v8239
  %v8292 = vpack.c.b16 %v8244, %v8240
  %v8293 = vpack.c.b16 %v8245, %v8241
  %v8294 = vpack.c.b16 %v8250, %v8246
  %v8295 = vpack.c.b16 %v8251, %v8247
  %v8296 = vpack.c.b16 %v8252, %v8248
  %v8297 = vpack.c.b16 %v8253, %v8249
  %v8298 = vpack.c.b16 %v8258, %v8254
  %v8299 = vpack.c.b16 %v8259, %v8255
  %v8300 = vpack.c.b16 %v8260, %v8256
  %v8301 = vpack.c.b16 %v8261, %v8257
  %v8302 = vpack.c.b16 %v8266, %v8262
  %v8303 = vpack.c.b16 %v8267, %v8263
  %v8304 = vpack.c.b16 %v8268, %v8264
  %v8305 = vpack.c.b16 %v8269, %v8265
  %v8306 = vpack.c.b16 %v8274, %v8270
  %v8307 = vpack.c.b16 %v8275, %v8271
  %v8308 = vpack.c.b16 %v8276, %v8272
  %v8309 = vpack.c.b16 %v8277, %v8273
  %8342 = vmatprep.subr.bf16.mxu0 %v8279
  %8343 = vmatpush1.bf16.msra.mxu0 %v8278
  %8344 = vmatprep.subr.bf16.mxu0 %v8283
  %8345 = vmatpush1.bf16.msra.mxu0 %v8282
  %8346 = vmatprep.subr.bf16.mxu0 %v8287
  %8347 = vmatpush1.bf16.msra.mxu0 %v8286
  %8348 = vmatprep.subr.bf16.mxu0 %v8291
  %8349 = vmatpush1.bf16.msra.mxu0 %v8290
  %8350 = vmatprep.subr.bf16.mxu0 %v8295
  %8351 = vmatpush1.bf16.msra.mxu0 %v8294
  %8352 = vmatprep.subr.bf16.mxu0 %v8299
  %8353 = vmatpush1.bf16.msra.mxu0 %v8298
  %8354 = vmatprep.subr.bf16.mxu0 %v8303
  %8355 = vmatpush1.bf16.msra.mxu0 %v8302
  %8356 = vmatprep.subr.bf16.mxu0 %v8307
  %8357 = vmatpush1.bf16.msra.mxu0 %v8306
  %8358 = vmatprep.subr.bf16.mxu0 0
  %8359 = vmatpush1.bf16.msra.mxu0 0
  %8360 = vmatprep.subr.bf16.mxu0 0
  %8361 = vmatpush1.bf16.msra.mxu0 0
  %8362 = vmatprep.subr.bf16.mxu0 0
  %8363 = vmatpush1.bf16.msra.mxu0 0
  %8364 = vmatprep.subr.bf16.mxu0 0
  %8365 = vmatpush1.bf16.msra.mxu0 0
  %8366 = vmatprep.subr.bf16.mxu0 0
  %8367 = vmatpush1.bf16.msra.mxu0 0
  %8368 = vmatprep.subr.bf16.mxu0 0
  %8369 = vmatpush1.bf16.msra.mxu0 0
  %8370 = vmatprep.subr.bf16.mxu0 0
  %8371 = vmatpush1.bf16.msra.mxu0 0
  %8372 = vmatprep.subr.bf16.mxu0 0
  %8373 = vmatpush1.bf16.msra.mxu0 0
  %8374 = vmatprep.mubr.bf16.mxu0 0
  %8375 = vmatmul.mubr.bf16.gmra.mrb[0].mxu0 %v8149
  %v8376 = vpop.f32.mrb[0].mxu0
  %v8377 = vadd.f32 0.0, %v8376
  %v8378 = vpop.f32.mrb[0].mxu0
  %v8379 = vadd.f32 0.0, %v8378
  %v8380 = vpop.f32.mrb[0].mxu0
  %v8381 = vpop.f32.mrb[0].mxu0
  %8382 = vdwg.mxu0
  %8383 = vmatprep.subr.bf16.mxu0 %v8281
  %8384 = vmatpush1.bf16.msra.mxu0 %v8280
  %8385 = vmatprep.subr.bf16.mxu0 %v8285
  %8386 = vmatpush1.bf16.msra.mxu0 %v8284
  %8387 = vmatprep.subr.bf16.mxu0 %v8289
  %8388 = vmatpush1.bf16.msra.mxu0 %v8288
  %8389 = vmatprep.subr.bf16.mxu0 %v8293
  %8390 = vmatpush1.bf16.msra.mxu0 %v8292
  %8391 = vmatprep.subr.bf16.mxu0 %v8297
  %8392 = vmatpush1.bf16.msra.mxu0 %v8296
  %8393 = vmatprep.subr.bf16.mxu0 %v8301
  %8394 = vmatpush1.bf16.msra.mxu0 %v8300
  %8395 = vmatprep.subr.bf16.mxu0 %v8305
  %8396 = vmatpush1.bf16.msra.mxu0 %v8304
  %8397 = vmatprep.subr.bf16.mxu0 %v8309
  %8398 = vmatpush1.bf16.msra.mxu0 %v8308
  %8399 = vmatprep.subr.bf16.mxu0 0
  %8400 = vmatpush1.bf16.msra.mxu0 0
  %8401 = vmatprep.subr.bf16.mxu0 0
  %8402 = vmatpush1.bf16.msra.mxu0 0
  %8403 = vmatprep.subr.bf16.mxu0 0
  %8404 = vmatpush1.bf16.msra.mxu0 0
  %8405 = vmatprep.subr.bf16.mxu0 0
  %8406 = vmatpush1.bf16.msra.mxu0 0
  %8407 = vmatprep.subr.bf16.mxu0 0
  %8408 = vmatpush1.bf16.msra.mxu0 0
  %8409 = vmatprep.subr.bf16.mxu0 0
  %8410 = vmatpush1.bf16.msra.mxu0 0
  %8411 = vmatprep.subr.bf16.mxu0 0
  %8412 = vmatpush1.bf16.msra.mxu0 0
  %8413 = vmatprep.subr.bf16.mxu0 0
  %8414 = vmatpush1.bf16.msra.mxu0 0
  %8415 = vmatprep.mubr.bf16.mxu0 0
  %8416 = vmatmul.mubr.bf16.gmra.mrb[0].mxu0 %v8149
  %v8417 = vpop.f32.mrb[0].mxu0
  %v8418 = vadd.f32 0.0, %v8417
  %v8419 = vpop.f32.mrb[0].mxu0
  %v8420 = vadd.f32 0.0, %v8419
  %v8421 = vpop.f32.mrb[0].mxu0
  %v8422 = vpop.f32.mrb[0].mxu0
  %8423 = vdwg.mxu0
  %v8424 = vadd.f32 %v8144, %v8377
  %v8425 = vadd.f32 %v8145, %v8379
  %v8426 = vadd.f32 %v8146, %v8418
  %v8427 = vadd.f32 %v8147, %v8420
  %v8428 = vxor.u32 %v8424, 2147483648
  %v8429 = vmul.f32 %v8428, 1.442695
  %v8430 = vpow.pop %v8429
  %v8431 = vadd.f32 %v8430, 1.0
  %v8432 = vrcp.pop %v8431
  %v8433 = vmul.f32 1.0, %v8432
  %v8434 = vxor.u32 %v8425, 2147483648
  %v8435 = vmul.f32 %v8434, 1.442695
  %v8436 = vpow.pop %v8435
  %v8437 = vadd.f32 %v8436, 1.0
  %v8438 = vrcp.pop %v8437
  %v8439 = vmul.f32 1.0, %v8438
  %v8440 = vtanh.pop %v8426
  %v8441 = vxor.u32 %v8427, 2147483648
  %v8442 = vmul.f32 %v8441, 1.442695
  %v8443 = vpow.pop %v8442
  %v8444 = vadd.f32 %v8443, 1.0
  %v8445 = vrcp.pop %v8444
  %v8446 = vmul.f32 1.0, %v8445
  %v8447 = vld [vmem:[#allocation5] sm:$0xff]
  %v8448 = vmul.f32 %v8439, %v8447
  %v8449 = vmul.f32 %v8433, %v8440
  %v8450 = vadd.f32 %v8448, %v8449
  %v8451 = vtanh.pop %v8450
  %v8452 = vmul.f32 %v8446, %v8451
  %8453 = vst [vmem:[#allocation5] sm:$0xff] %v8450
  %8454 = vst [vmem:[#allocation4] sm:$0xff] %v8452
  %v8455 = vld [vmem:[%s2656] sm:$0xff]
  %v8456 = vld [vmem:[%s2656 + $0x8] sm:$0xff]
  %v8457 = vld [vmem:[%s2656 + $0x10] sm:$0xff]
  %v8458 = vld [vmem:[%s2656 + $0x18] sm:$0xff]
  %v8459 = vld [vmem:[#allocation4] sm:$0xff]
  %v8460 = vpack.c.bf16 %v8459, %v8459
  %v8461 = vld [vmem:[%s8] sm:$0xff]
  %v8462 = vld [vmem:[%s8 + $0x8] sm:$0xff]
  %v8463 = vld [vmem:[%s8 + $0x10] sm:$0xff]
  %v8464 = vld [vmem:[%s8 + $0x18] sm:$0xff]
  %v8465 = vld [vmem:[%s8 + $0x20] sm:$0xff]
  %v8466 = vld [vmem:[%s8 + $0x28] sm:$0xff]
  %v8467 = vld [vmem:[%s8 + $0x30] sm:$0xff]
  %v8468 = vld [vmem:[%s8 + $0x38] sm:$0xff]
  %v8469 = vld [vmem:[%s8 + $0x40] sm:$0xff]
  %v8470 = vld [vmem:[%s8 + $0x48] sm:$0xff]
  %v8471 = vld [vmem:[%s8 + $0x50] sm:$0xff]
  %v8472 = vld [vmem:[%s8 + $0x58] sm:$0xff]
  %v8473 = vld [vmem:[%s8 + $0x60] sm:$0xff]
  %v8474 = vld [vmem:[%s8 + $0x68] sm:$0xff]
  %v8475 = vld [vmem:[%s8 + $0x70] sm:$0xff]
  %v8476 = vld [vmem:[%s8 + $0x78] sm:$0xff]
  %v8477 = vld [vmem:[%s8 + $0x80] sm:$0xff]
  %v8478 = vld [vmem:[%s8 + $0x88] sm:$0xff]
  %v8479 = vld [vmem:[%s8 + $0x90] sm:$0xff]
  %v8480 = vld [vmem:[%s8 + $0x98] sm:$0xff]
  %v8481 = vld [vmem:[%s8 + $0xa0] sm:$0xff]
  %v8482 = vld [vmem:[%s8 + $0xa8] sm:$0xff]
  %v8483 = vld [vmem:[%s8 + $0xb0] sm:$0xff]
  %v8484 = vld [vmem:[%s8 + $0xb8] sm:$0xff]
  %v8485 = vld [vmem:[%s8 + $0xc0] sm:$0xff]
  %v8486 = vld [vmem:[%s8 + $0xc8] sm:$0xff]
  %v8487 = vld [vmem:[%s8 + $0xd0] sm:$0xff]
  %v8488 = vld [vmem:[%s8 + $0xd8] sm:$0xff]
  %v8489 = vld [vmem:[%s8 + $0xe0] sm:$0xff]
  %v8490 = vld [vmem:[%s8 + $0xe8] sm:$0xff]
  %v8491 = vld [vmem:[%s8 + $0xf0] sm:$0xff]
  %v8492 = vld [vmem:[%s8 + $0xf8] sm:$0xff]
  %v8525 = vunpack.c.l.b16 %v8461
  %v8526 = vunpack.c.h.b16 %v8461
  %v8527 = vunpack.c.l.b16 %v8462
  %v8528 = vunpack.c.h.b16 %v8462
  %v8529 = vunpack.c.l.b16 %v8463
  %v8530 = vunpack.c.h.b16 %v8463
  %v8531 = vunpack.c.l.b16 %v8464
  %v8532 = vunpack.c.h.b16 %v8464
  %v8533 = vunpack.c.l.b16 %v8465
  %v8534 = vunpack.c.h.b16 %v8465
  %v8535 = vunpack.c.l.b16 %v8466
  %v8536 = vunpack.c.h.b16 %v8466
  %v8537 = vunpack.c.l.b16 %v8467
  %v8538 = vunpack.c.h.b16 %v8467
  %v8539 = vunpack.c.l.b16 %v8468
  %v8540 = vunpack.c.h.b16 %v8468
  %v8541 = vunpack.c.l.b16 %v8469
  %v8542 = vunpack.c.h.b16 %v8469
  %v8543 = vunpack.c.l.b16 %v8470
  %v8544 = vunpack.c.h.b16 %v8470
  %v8545 = vunpack.c.l.b16 %v8471
  %v8546 = vunpack.c.h.b16 %v8471
  %v8547 = vunpack.c.l.b16 %v8472
  %v8548 = vunpack.c.h.b16 %v8472
  %v8549 = vunpack.c.l.b16 %v8473
  %v8550 = vunpack.c.h.b16 %v8473
  %v8551 = vunpack.c.l.b16 %v8474
  %v8552 = vunpack.c.h.b16 %v8474
  %v8553 = vunpack.c.l.b16 %v8475
  %v8554 = vunpack.c.h.b16 %v8475
  %v8555 = vunpack.c.l.b16 %v8476
  %v8556 = vunpack.c.h.b16 %v8476
  %v8557 = vunpack.c.l.b16 %v8477
  %v8558 = vunpack.c.h.b16 %v8477
  %v8559 = vunpack.c.l.b16 %v8478
  %v8560 = vunpack.c.h.b16 %v8478
  %v8561 = vunpack.c.l.b16 %v8479
  %v8562 = vunpack.c.h.b16 %v8479
  %v8563 = vunpack.c.l.b16 %v8480
  %v8564 = vunpack.c.h.b16 %v8480
  %v8565 = vunpack.c.l.b16 %v8481
  %v8566 = vunpack.c.h.b16 %v8481
  %v8567 = vunpack.c.l.b16 %v8482
  %v8568 = vunpack.c.h.b16 %v8482
  %v8569 = vunpack.c.l.b16 %v8483
  %v8570 = vunpack.c.h.b16 %v8483
  %v8571 = vunpack.c.l.b16 %v8484
  %v8572 = vunpack.c.h.b16 %v8484
  %v8573 = vunpack.c.l.b16 %v8485
  %v8574 = vunpack.c.h.b16 %v8485
  %v8575 = vunpack.c.l.b16 %v8486
  %v8576 = vunpack.c.h.b16 %v8486
  %v8577 = vunpack.c.l.b16 %v8487
  %v8578 = vunpack.c.h.b16 %v8487
  %v8579 = vunpack.c.l.b16 %v8488
  %v8580 = vunpack.c.h.b16 %v8488
  %v8581 = vunpack.c.l.b16 %v8489
  %v8582 = vunpack.c.h.b16 %v8489
  %v8583 = vunpack.c.l.b16 %v8490
  %v8584 = vunpack.c.h.b16 %v8490
  %v8585 = vunpack.c.l.b16 %v8491
  %v8586 = vunpack.c.h.b16 %v8491
  %v8587 = vunpack.c.l.b16 %v8492
  %v8588 = vunpack.c.h.b16 %v8492
  %v8589 = vpack.c.b16 %v8529, %v8525
  %v8590 = vpack.c.b16 %v8530, %v8526
  %v8591 = vpack.c.b16 %v8531, %v8527
  %v8592 = vpack.c.b16 %v8532, %v8528
  %v8593 = vpack.c.b16 %v8537, %v8533
  %v8594 = vpack.c.b16 %v8538, %v8534
  %v8595 = vpack.c.b16 %v8539, %v8535
  %v8596 = vpack.c.b16 %v8540, %v8536
  %v8597 = vpack.c.b16 %v8545, %v8541
  %v8598 = vpack.c.b16 %v8546, %v8542
  %v8599 = vpack.c.b16 %v8547, %v8543
  %v8600 = vpack.c.b16 %v8548, %v8544
  %v8601 = vpack.c.b16 %v8553, %v8549
  %v8602 = vpack.c.b16 %v8554, %v8550
  %v8603 = vpack.c.b16 %v8555, %v8551
  %v8604 = vpack.c.b16 %v8556, %v8552
  %v8605 = vpack.c.b16 %v8561, %v8557
  %v8606 = vpack.c.b16 %v8562, %v8558
  %v8607 = vpack.c.b16 %v8563, %v8559
  %v8608 = vpack.c.b16 %v8564, %v8560
  %v8609 = vpack.c.b16 %v8569, %v8565
  %v8610 = vpack.c.b16 %v8570, %v8566
  %v8611 = vpack.c.b16 %v8571, %v8567
  %v8612 = vpack.c.b16 %v8572, %v8568
  %v8613 = vpack.c.b16 %v8577, %v8573
  %v8614 = vpack.c.b16 %v8578, %v8574
  %v8615 = vpack.c.b16 %v8579, %v8575
  %v8616 = vpack.c.b16 %v8580, %v8576
  %v8617 = vpack.c.b16 %v8585, %v8581
  %v8618 = vpack.c.b16 %v8586, %v8582
  %v8619 = vpack.c.b16 %v8587, %v8583
  %v8620 = vpack.c.b16 %v8588, %v8584
  %8653 = vmatprep.subr.bf16.mxu0 %v8590
  %8654 = vmatpush1.bf16.msra.mxu0 %v8589
  %8655 = vmatprep.subr.bf16.mxu0 %v8594
  %8656 = vmatpush1.bf16.msra.mxu0 %v8593
  %8657 = vmatprep.subr.bf16.mxu0 %v8598
  %8658 = vmatpush1.bf16.msra.mxu0 %v8597
  %8659 = vmatprep.subr.bf16.mxu0 %v8602
  %8660 = vmatpush1.bf16.msra.mxu0 %v8601
  %8661 = vmatprep.subr.bf16.mxu0 %v8606
  %8662 = vmatpush1.bf16.msra.mxu0 %v8605
  %8663 = vmatprep.subr.bf16.mxu0 %v8610
  %8664 = vmatpush1.bf16.msra.mxu0 %v8609
  %8665 = vmatprep.subr.bf16.mxu0 %v8614
  %8666 = vmatpush1.bf16.msra.mxu0 %v8613
  %8667 = vmatprep.subr.bf16.mxu0 %v8618
  %8668 = vmatpush1.bf16.msra.mxu0 %v8617
  %8669 = vmatprep.subr.bf16.mxu0 0
  %8670 = vmatpush1.bf16.msra.mxu0 0
  %8671 = vmatprep.subr.bf16.mxu0 0
  %8672 = vmatpush1.bf16.msra.mxu0 0
  %8673 = vmatprep.subr.bf16.mxu0 0
  %8674 = vmatpush1.bf16.msra.mxu0 0
  %8675 = vmatprep.subr.bf16.mxu0 0
  %8676 = vmatpush1.bf16.msra.mxu0 0
  %8677 = vmatprep.subr.bf16.mxu0 0
  %8678 = vmatpush1.bf16.msra.mxu0 0
  %8679 = vmatprep.subr.bf16.mxu0 0
  %8680 = vmatpush1.bf16.msra.mxu0 0
  %8681 = vmatprep.subr.bf16.mxu0 0
  %8682 = vmatpush1.bf16.msra.mxu0 0
  %8683 = vmatprep.subr.bf16.mxu0 0
  %8684 = vmatpush1.bf16.msra.mxu0 0
  %8685 = vmatprep.mubr.bf16.mxu0 0
  %8686 = vmatmul.mubr.bf16.gmra.mrb[0].mxu0 %v8460
  %v8687 = vpop.f32.mrb[0].mxu0
  %v8688 = vadd.f32 0.0, %v8687
  %v8689 = vpop.f32.mrb[0].mxu0
  %v8690 = vadd.f32 0.0, %v8689
  %v8691 = vpop.f32.mrb[0].mxu0
  %v8692 = vpop.f32.mrb[0].mxu0
  %8693 = vdwg.mxu0
  %8694 = vmatprep.subr.bf16.mxu0 %v8592
  %8695 = vmatpush1.bf16.msra.mxu0 %v8591
  %8696 = vmatprep.subr.bf16.mxu0 %v8596
  %8697 = vmatpush1.bf16.msra.mxu0 %v8595
  %8698 = vmatprep.subr.bf16.mxu0 %v8600
  %8699 = vmatpush1.bf16.msra.mxu0 %v8599
  %8700 = vmatprep.subr.bf16.mxu0 %v8604
  %8701 = vmatpush1.bf16.msra.mxu0 %v8603
  %8702 = vmatprep.subr.bf16.mxu0 %v8608
  %8703 = vmatpush1.bf16.msra.mxu0 %v8607
  %8704 = vmatprep.subr.bf16.mxu0 %v8612
  %8705 = vmatpush1.bf16.msra.mxu0 %v8611
  %8706 = vmatprep.subr.bf16.mxu0 %v8616
  %8707 = vmatpush1.bf16.msra.mxu0 %v8615
  %8708 = vmatprep.subr.bf16.mxu0 %v8620
  %8709 = vmatpush1.bf16.msra.mxu0 %v8619
  %8710 = vmatprep.subr.bf16.mxu0 0
  %8711 = vmatpush1.bf16.msra.mxu0 0
  %8712 = vmatprep.subr.bf16.mxu0 0
  %8713 = vmatpush1.bf16.msra.mxu0 0
  %8714 = vmatprep.subr.bf16.mxu0 0
  %8715 = vmatpush1.bf16.msra.mxu0 0
  %8716 = vmatprep.subr.bf16.mxu0 0
  %8717 = vmatpush1.bf16.msra.mxu0 0
  %8718 = vmatprep.subr.bf16.mxu0 0
  %8719 = vmatpush1.bf16.msra.mxu0 0
  %8720 = vmatprep.subr.bf16.mxu0 0
  %8721 = vmatpush1.bf16.msra.mxu0 0
  %8722 = vmatprep.subr.bf16.mxu0 0
  %8723 = vmatpush1.bf16.msra.mxu0 0
  %8724 = vmatprep.subr.bf16.mxu0 0
  %8725 = vmatpush1.bf16.msra.mxu0 0
  %8726 = vmatprep.mubr.bf16.mxu0 0
  %8727 = vmatmul.mubr.bf16.gmra.mrb[0].mxu0 %v8460
  %v8728 = vpop.f32.mrb[0].mxu0
  %v8729 = vadd.f32 0.0, %v8728
  %v8730 = vpop.f32.mrb[0].mxu0
  %v8731 = vadd.f32 0.0, %v8730
  %v8732 = vpop.f32.mrb[0].mxu0
  %v8733 = vpop.f32.mrb[0].mxu0
  %8734 = vdwg.mxu0
  %v8735 = vadd.f32 %v8455, %v8688
  %v8736 = vadd.f32 %v8456, %v8690
  %v8737 = vadd.f32 %v8457, %v8729
  %v8738 = vadd.f32 %v8458, %v8731
  %v8739 = vxor.u32 %v8735, 2147483648
  %v8740 = vmul.f32 %v8739, 1.442695
  %v8741 = vpow.pop %v8740
  %v8742 = vadd.f32 %v8741, 1.0
  %v8743 = vrcp.pop %v8742
  %v8744 = vmul.f32 1.0, %v8743
  %v8745 = vxor.u32 %v8736, 2147483648
  %v8746 = vmul.f32 %v8745, 1.442695
  %v8747 = vpow.pop %v8746
  %v8748 = vadd.f32 %v8747, 1.0
  %v8749 = vrcp.pop %v8748
  %v8750 = vmul.f32 1.0, %v8749
  %v8751 = vtanh.pop %v8737
  %v8752 = vxor.u32 %v8738, 2147483648
  %v8753 = vmul.f32 %v8752, 1.442695
  %v8754 = vpow.pop %v8753
  %v8755 = vadd.f32 %v8754, 1.0
  %v8756 = vrcp.pop %v8755
  %v8757 = vmul.f32 1.0, %v8756
  %v8758 = vld [vmem:[#allocation5] sm:$0xff]
  %v8759 = vmul.f32 %v8750, %v8758
  %v8760 = vmul.f32 %v8744, %v8751
  %v8761 = vadd.f32 %v8759, %v8760
  %v8762 = vtanh.pop %v8761
  %v8763 = vmul.f32 %v8757, %v8762
  %8764 = vst [vmem:[#allocation5] sm:$0xff] %v8761
  %8765 = vst [vmem:[#allocation4] sm:$0xff] %v8763
  %v8766 = vld [vmem:[#allocation4] sm:$0xff]
  %v8767 = vpack.c.bf16 %v8766, %v8766
  %v8768 = vld [vmem:[%s10] sm:$0xf]
  %v8769 = vld [vmem:[%s10 + $0x4] sm:$0xf]
  %v8770 = vld [vmem:[%s10 + $0x8] sm:$0xf]
  %v8771 = vld [vmem:[%s10 + $0xc] sm:$0xf]
  %v8772 = vld [vmem:[%s10 + $0x10] sm:$0xf]
  %v8773 = vld [vmem:[%s10 + $0x14] sm:$0xf]
  %v8774 = vld [vmem:[%s10 + $0x18] sm:$0xf]
  %v8775 = vld [vmem:[%s10 + $0x1c] sm:$0xf]
  %v8776 = vld [vmem:[%s10 + $0x20] sm:$0xf]
  %v8777 = vld [vmem:[%s10 + $0x24] sm:$0xf]
  %v8778 = vld [vmem:[%s10 + $0x28] sm:$0xf]
  %v8779 = vld [vmem:[%s10 + $0x2c] sm:$0xf]
  %v8780 = vld [vmem:[%s10 + $0x30] sm:$0xf]
  %v8781 = vld [vmem:[%s10 + $0x34] sm:$0xf]
  %v8782 = vld [vmem:[%s10 + $0x38] sm:$0xf]
  %v8783 = vld [vmem:[%s10 + $0x3c] sm:$0xf]
  %v8784 = vld [vmem:[%s11] sm:$0x1]
  %v8786 = vlaneseq
  %v8787 = vshrl.u32 %v8786, 7
  %v8788 = vsub.s32 0, %v8787
  %v8789 = vrot.slane %v8784, %v8788
  %v8807 = vunpack.c.l.b16 %v8768
  %v8808 = vunpack.c.l.b16 %v8769
  %v8809 = vunpack.c.l.b16 %v8770
  %v8810 = vunpack.c.l.b16 %v8771
  %v8811 = vunpack.c.l.b16 %v8772
  %v8812 = vunpack.c.l.b16 %v8773
  %v8813 = vunpack.c.l.b16 %v8774
  %v8814 = vunpack.c.l.b16 %v8775
  %v8815 = vunpack.c.l.b16 %v8776
  %v8816 = vunpack.c.l.b16 %v8777
  %v8817 = vunpack.c.l.b16 %v8778
  %v8818 = vunpack.c.l.b16 %v8779
  %v8819 = vunpack.c.l.b16 %v8780
  %v8820 = vunpack.c.l.b16 %v8781
  %v8821 = vunpack.c.l.b16 %v8782
  %v8822 = vunpack.c.l.b16 %v8783
  %v8823 = vpack.c.b16 %v8808, %v8807
  %v8824 = vpack.c.b16 %v8810, %v8809
  %v8825 = vpack.c.b16 %v8812, %v8811
  %v8826 = vpack.c.b16 %v8814, %v8813
  %v8827 = vpack.c.b16 %v8816, %v8815
  %v8828 = vpack.c.b16 %v8818, %v8817
  %v8829 = vpack.c.b16 %v8820, %v8819
  %v8830 = vpack.c.b16 %v8822, %v8821
  %8839 = vmatprep.subr.bf16.mxu0 0
  %8840 = vmatpush1.bf16.msra.mxu0 %v8823
  %8841 = vmatprep.subr.bf16.mxu0 0
  %8842 = vmatpush1.bf16.msra.mxu0 %v8824
  %8843 = vmatprep.subr.bf16.mxu0 0
  %8844 = vmatpush1.bf16.msra.mxu0 %v8825
  %8845 = vmatprep.subr.bf16.mxu0 0
  %8846 = vmatpush1.bf16.msra.mxu0 %v8826
  %8847 = vmatprep.subr.bf16.mxu0 0
  %8848 = vmatpush1.bf16.msra.mxu0 %v8827
  %8849 = vmatprep.subr.bf16.mxu0 0
  %8850 = vmatpush1.bf16.msra.mxu0 %v8828
  %8851 = vmatprep.subr.bf16.mxu0 0
  %8852 = vmatpush1.bf16.msra.mxu0 %v8829
  %8853 = vmatprep.subr.bf16.mxu0 0
  %8854 = vmatpush1.bf16.msra.mxu0 %v8830
  %8855 = vmatprep.subr.bf16.mxu0 0
  %8856 = vmatpush1.bf16.msra.mxu0 0
  %8857 = vmatprep.subr.bf16.mxu0 0
  %8858 = vmatpush1.bf16.msra.mxu0 0
  %8859 = vmatprep.subr.bf16.mxu0 0
  %8860 = vmatpush1.bf16.msra.mxu0 0
  %8861 = vmatprep.subr.bf16.mxu0 0
  %8862 = vmatpush1.bf16.msra.mxu0 0
  %8863 = vmatprep.subr.bf16.mxu0 0
  %8864 = vmatpush1.bf16.msra.mxu0 0
  %8865 = vmatprep.subr.bf16.mxu0 0
  %8866 = vmatpush1.bf16.msra.mxu0 0
  %8867 = vmatprep.subr.bf16.mxu0 0
  %8868 = vmatpush1.bf16.msra.mxu0 0
  %8869 = vmatprep.subr.bf16.mxu0 0
  %8870 = vmatpush1.bf16.msra.mxu0 0
  %8871 = vmatprep.mubr.bf16.mxu0 0
  %8872 = vmatmul.mubr.bf16.gmra.mrb[0].mxu0 %v8767
  %v8873 = vpop.f32.mrb[0].mxu0
  %v8874 = vadd.f32 %v8789, %v8873
  %v8875 = vpop.f32.mrb[0].mxu0
  %v8876 = vpop.f32.mrb[0].mxu0
  %v8877 = vpop.f32.mrb[0].mxu0
  %8878 = vdwg.mxu0
  %v8879 = vmax.f32 %v8874, 0.0
  %v8880 = vpack.c.bf16 %v8879, %v8879
  %v8881 = vld [vmem:[%s12] sm:$0xf]
  %v8882 = vld [vmem:[%s12 + $0x4] sm:$0xf]
  %v8883 = vld [vmem:[%s12 + $0x8] sm:$0xf]
  %v8884 = vld [vmem:[%s12 + $0xc] sm:$0xf]
  %v8885 = vld [vmem:[%s12 + $0x10] sm:$0xf]
  %v8886 = vld [vmem:[%s12 + $0x14] sm:$0xf]
  %v8887 = vld [vmem:[%s12 + $0x18] sm:$0xf]
  %v8888 = vld [vmem:[%s12 + $0x1c] sm:$0xf]
  %v8889 = vld [vmem:[%s12 + $0x20] sm:$0xf]
  %v8890 = vld [vmem:[%s12 + $0x24] sm:$0xf]
  %v8891 = vld [vmem:[%s12 + $0x28] sm:$0xf]
  %v8892 = vld [vmem:[%s12 + $0x2c] sm:$0xf]
  %v8893 = vld [vmem:[%s12 + $0x30] sm:$0xf]
  %v8894 = vld [vmem:[%s12 + $0x34] sm:$0xf]
  %v8895 = vld [vmem:[%s12 + $0x38] sm:$0xf]
  %v8896 = vld [vmem:[%s12 + $0x3c] sm:$0xf]
  %v8897 = vld [vmem:[%s13] sm:$0x1]
  %v8899 = vlaneseq
  %v8900 = vshrl.u32 %v8899, 7
  %v8901 = vsub.s32 0, %v8900
  %v8902 = vrot.slane %v8897, %v8901
  %v8920 = vunpack.c.l.b16 %v8881
  %v8921 = vunpack.c.l.b16 %v8882
  %v8922 = vunpack.c.l.b16 %v8883
  %v8923 = vunpack.c.l.b16 %v8884
  %v8924 = vunpack.c.l.b16 %v8885
  %v8925 = vunpack.c.l.b16 %v8886
  %v8926 = vunpack.c.l.b16 %v8887
  %v8927 = vunpack.c.l.b16 %v8888
  %v8928 = vunpack.c.l.b16 %v8889
  %v8929 = vunpack.c.l.b16 %v8890
  %v8930 = vunpack.c.l.b16 %v8891
  %v8931 = vunpack.c.l.b16 %v8892
  %v8932 = vunpack.c.l.b16 %v8893
  %v8933 = vunpack.c.l.b16 %v8894
  %v8934 = vunpack.c.l.b16 %v8895
  %v8935 = vunpack.c.l.b16 %v8896
  %v8936 = vpack.c.b16 %v8921, %v8920
  %v8937 = vpack.c.b16 %v8923, %v8922
  %v8938 = vpack.c.b16 %v8925, %v8924
  %v8939 = vpack.c.b16 %v8927, %v8926
  %v8940 = vpack.c.b16 %v8929, %v8928
  %v8941 = vpack.c.b16 %v8931, %v8930
  %v8942 = vpack.c.b16 %v8933, %v8932
  %v8943 = vpack.c.b16 %v8935, %v8934
  %8952 = vmatprep.subr.bf16.mxu0 0
  %8953 = vmatpush1.bf16.msra.mxu0 %v8936
  %8954 = vmatprep.subr.bf16.mxu0 0
  %8955 = vmatpush1.bf16.msra.mxu0 %v8937
  %8956 = vmatprep.subr.bf16.mxu0 0
  %8957 = vmatpush1.bf16.msra.mxu0 %v8938
  %8958 = vmatprep.subr.bf16.mxu0 0
  %8959 = vmatpush1.bf16.msra.mxu0 %v8939
  %8960 = vmatprep.subr.bf16.mxu0 0
  %8961 = vmatpush1.bf16.msra.mxu0 %v8940
  %8962 = vmatprep.subr.bf16.mxu0 0
  %8963 = vmatpush1.bf16.msra.mxu0 %v8941
  %8964 = vmatprep.subr.bf16.mxu0 0
  %8965 = vmatpush1.bf16.msra.mxu0 %v8942
  %8966 = vmatprep.subr.bf16.mxu0 0
  %8967 = vmatpush1.bf16.msra.mxu0 %v8943
  %8968 = vmatprep.subr.bf16.mxu0 0
  %8969 = vmatpush1.bf16.msra.mxu0 0
  %8970 = vmatprep.subr.bf16.mxu0 0
  %8971 = vmatpush1.bf16.msra.mxu0 0
  %8972 = vmatprep.subr.bf16.mxu0 0
  %8973 = vmatpush1.bf16.msra.mxu0 0
  %8974 = vmatprep.subr.bf16.mxu0 0
  %8975 = vmatpush1.bf16.msra.mxu0 0
  %8976 = vmatprep.subr.bf16.mxu0 0
  %8977 = vmatpush1.bf16.msra.mxu0 0
  %8978 = vmatprep.subr.bf16.mxu0 0
  %8979 = vmatpush1.bf16.msra.mxu0 0
  %8980 = vmatprep.subr.bf16.mxu0 0
  %8981 = vmatpush1.bf16.msra.mxu0 0
  %8982 = vmatprep.subr.bf16.mxu0 0
  %8983 = vmatpush1.bf16.msra.mxu0 0
  %8984 = vmatprep.mubr.bf16.mxu0 0
  %8985 = vmatmul.mubr.bf16.gmra.mrb[0].mxu0 %v8880
  %v8986 = vpop.f32.mrb[0].mxu0
  %v8987 = vadd.f32 %v8902, %v8986
  %v8988 = vpop.f32.mrb[0].mxu0
  %v8989 = vpop.f32.mrb[0].mxu0
  %v8990 = vpop.f32.mrb[0].mxu0
  %8991 = vdwg.mxu0
  %v8992 = vmax.f32 %v8987, 0.0
  %v8993 = vpack.c.bf16 %v8992, %v8992
  %v8994 = vld [vmem:[%s14] sm:$0xf]
  %v8995 = vld [vmem:[%s14 + $0x4] sm:$0xf]
  %v8996 = vld [vmem:[%s14 + $0x8] sm:$0xf]
  %v8997 = vld [vmem:[%s14 + $0xc] sm:$0xf]
  %v8998 = vld [vmem:[%s14 + $0x10] sm:$0xf]
  %v8999 = vld [vmem:[%s14 + $0x14] sm:$0xf]
  %v9000 = vld [vmem:[%s14 + $0x18] sm:$0xf]
  %v9001 = vld [vmem:[%s14 + $0x1c] sm:$0xf]
  %v9002 = vld [vmem:[%s14 + $0x20] sm:$0xf]
  %v9003 = vld [vmem:[%s14 + $0x24] sm:$0xf]
  %v9004 = vld [vmem:[%s14 + $0x28] sm:$0xf]
  %v9005 = vld [vmem:[%s14 + $0x2c] sm:$0xf]
  %v9006 = vld [vmem:[%s14 + $0x30] sm:$0xf]
  %v9007 = vld [vmem:[%s14 + $0x34] sm:$0xf]
  %v9008 = vld [vmem:[%s14 + $0x38] sm:$0xf]
  %v9009 = vld [vmem:[%s14 + $0x3c] sm:$0xf]
  %v9010 = vld [vmem:[%s15] sm:$0x1]
  %v9012 = vlaneseq
  %v9013 = vshrl.u32 %v9012, 7
  %v9014 = vsub.s32 0, %v9013
  %v9015 = vrot.slane %v9010, %v9014
  %v9033 = vunpack.c.l.b16 %v8994
  %v9034 = vunpack.c.l.b16 %v8995
  %v9035 = vunpack.c.l.b16 %v8996
  %v9036 = vunpack.c.l.b16 %v8997
  %v9037 = vunpack.c.l.b16 %v8998
  %v9038 = vunpack.c.l.b16 %v8999
  %v9039 = vunpack.c.l.b16 %v9000
  %v9040 = vunpack.c.l.b16 %v9001
  %v9041 = vunpack.c.l.b16 %v9002
  %v9042 = vunpack.c.l.b16 %v9003
  %v9043 = vunpack.c.l.b16 %v9004
  %v9044 = vunpack.c.l.b16 %v9005
  %v9045 = vunpack.c.l.b16 %v9006
  %v9046 = vunpack.c.l.b16 %v9007
  %v9047 = vunpack.c.l.b16 %v9008
  %v9048 = vunpack.c.l.b16 %v9009
  %v9049 = vpack.c.b16 %v9034, %v9033
  %v9050 = vpack.c.b16 %v9036, %v9035
  %v9051 = vpack.c.b16 %v9038, %v9037
  %v9052 = vpack.c.b16 %v9040, %v9039
  %v9053 = vpack.c.b16 %v9042, %v9041
  %v9054 = vpack.c.b16 %v9044, %v9043
  %v9055 = vpack.c.b16 %v9046, %v9045
  %v9056 = vpack.c.b16 %v9048, %v9047
  %9065 = vmatprep.subr.bf16.mxu0 0
  %9066 = vmatpush1.bf16.msra.mxu0 %v9049
  %9067 = vmatprep.subr.bf16.mxu0 0
  %9068 = vmatpush1.bf16.msra.mxu0 %v9050
  %9069 = vmatprep.subr.bf16.mxu0 0
  %9070 = vmatpush1.bf16.msra.mxu0 %v9051
  %9071 = vmatprep.subr.bf16.mxu0 0
  %9072 = vmatpush1.bf16.msra.mxu0 %v9052
  %9073 = vmatprep.subr.bf16.mxu0 0
  %9074 = vmatpush1.bf16.msra.mxu0 %v9053
  %9075 = vmatprep.subr.bf16.mxu0 0
  %9076 = vmatpush1.bf16.msra.mxu0 %v9054
  %9077 = vmatprep.subr.bf16.mxu0 0
  %9078 = vmatpush1.bf16.msra.mxu0 %v9055
  %9079 = vmatprep.subr.bf16.mxu0 0
  %9080 = vmatpush1.bf16.msra.mxu0 %v9056
  %9081 = vmatprep.subr.bf16.mxu0 0
  %9082 = vmatpush1.bf16.msra.mxu0 0
  %9083 = vmatprep.subr.bf16.mxu0 0
  %9084 = vmatpush1.bf16.msra.mxu0 0
  %9085 = vmatprep.subr.bf16.mxu0 0
  %9086 = vmatpush1.bf16.msra.mxu0 0
  %9087 = vmatprep.subr.bf16.mxu0 0
  %9088 = vmatpush1.bf16.msra.mxu0 0
  %9089 = vmatprep.subr.bf16.mxu0 0
  %9090 = vmatpush1.bf16.msra.mxu0 0
  %9091 = vmatprep.subr.bf16.mxu0 0
  %9092 = vmatpush1.bf16.msra.mxu0 0
  %9093 = vmatprep.subr.bf16.mxu0 0
  %9094 = vmatpush1.bf16.msra.mxu0 0
  %9095 = vmatprep.subr.bf16.mxu0 0
  %9096 = vmatpush1.bf16.msra.mxu0 0
  %9097 = vmatprep.mubr.bf16.mxu0 0
  %9098 = vmatmul.mubr.bf16.gmra.mrb[0].mxu0 %v8993
  %v9099 = vpop.f32.mrb[0].mxu0
  %v9100 = vadd.f32 %v9015, %v9099
  %v9101 = vpop.f32.mrb[0].mxu0
  %v9102 = vpop.f32.mrb[0].mxu0
  %v9103 = vpop.f32.mrb[0].mxu0
  %9104 = vdwg.mxu0
  %9105 = vst [vmem:[%s16] sm:$0xff] %v9100
  // Predicated region
  $region66: #{forward.1} parent=0 // pred_check
    _
  $region67: #{forward.1} parent=0 // pred_check_branch
    %9107 = sbr.rel (0) target = $region69
  $region68: #{forward.1} parent=0 // pred_region
    _
  $region69: #{forward.1} parent=0 // pred_fallthru
    _
  // Predicated region
  $region70: #{forward.1} parent=0 // pred_check
    _
  $region71: #{forward.1} parent=0 // pred_check_branch
    %9109 = sbr.rel (0) target = $region73
  $region72: #{forward.1} parent=0 // pred_region
    _
  $region73: #{forward.1} parent=0 // pred_fallthru
    _

</llo_original>
